<compile_context>
chip_gen: v5e
topology: v5e:2x2
jax: 0.10.0
libtpu: 0.0.40
codegen_flags: <defaults>
</compile_context>

<pallas_src>
import jax
import jax.numpy as jnp
from jax.experimental import pallas as pl
from jax.experimental.pallas import tpu as pltpu

NUM_CLASSES = 2
HID = 64            # LSTM hidden size per direction
L_IN = 2816         # input length -> 32 * 349 = 11168 flattened features
LSTM_TK = 2816      # K tile for fused gate matmul (K padded 11168->11264, 4 steps)


# --------------------------------------------------------------------------
# Kernel 1: conv-as-matmul + bias + ReLU + maxpool(2)
#   pe / po hold the im2col patches of the even / odd conv output positions,
#   so max(relu(pe@W+b), relu(po@W+b)) == maxpool2(relu(conv(x))).
# --------------------------------------------------------------------------
def _conv_relu_pool_kernel(pe_ref, po_ref, w_ref, b_ref, o_ref):
    w = w_ref[...]
    b = b_ref[...]
    ye = jnp.maximum(
        jnp.dot(pe_ref[...], w, preferred_element_type=jnp.float32) + b, 0.0)
    yo = jnp.maximum(
        jnp.dot(po_ref[...], w, preferred_element_type=jnp.float32) + b, 0.0)
    o_ref[...] = jnp.maximum(ye, yo).astype(o_ref.dtype)


def _conv_relu_pool(pe, po, w, b):
    n = pe.shape[0]
    cout = w.shape[1]
    return pl.pallas_call(
        _conv_relu_pool_kernel,
        out_shape=jax.ShapeDtypeStruct((n, cout), pe.dtype),
    )(pe, po, w, b)


# --------------------------------------------------------------------------
# Kernel 2: fused bidirectional-LSTM gates, single timestep, h0 = c0 = 0.
#   Wg columns are packed as [i_fwd|i_bwd | g_fwd|g_bwd | o_fwd|o_bwd]
#   (each 64 wide) so every gate slice is a 128-lane-aligned chunk and the
#   result h = [h_fwd | h_bwd] comes out in PyTorch's concat order.
# --------------------------------------------------------------------------
def _lstm_gate_kernel(x_ref, w_ref, b_ref, h_ref, acc_ref):
    k = pl.program_id(0)

    @pl.when(k == 0)
    def _():
        acc_ref[...] = jnp.zeros_like(acc_ref)

    acc_ref[...] += jnp.dot(x_ref[...], w_ref[...],
                            preferred_element_type=jnp.float32)

    @pl.when(k == pl.num_programs(0) - 1)
    def _():
        g = acc_ref[...] + b_ref[...]          # [B, 384] = [i | g | o]
        h2 = h_ref.shape[-1]                   # 128 = 2 * HID
        i_gate = jax.nn.sigmoid(g[:, 0:h2])
        c = i_gate * jnp.tanh(g[:, h2:2 * h2])             # f * c0 == 0
        o_gate = jax.nn.sigmoid(g[:, 2 * h2:3 * h2])
        h_ref[...] = (o_gate * jnp.tanh(c)).astype(h_ref.dtype)


def _lstm_single_step(feat, wg_pad, bg):
    B, K = feat.shape
    k_pad, n_cols = wg_pad.shape               # 11264, 384
    h2 = n_cols // 3                           # 128
    feat_pad = jnp.pad(feat, ((0, 0), (0, k_pad - K)))
    grid_k = k_pad // LSTM_TK
    return pl.pallas_call(
        _lstm_gate_kernel,
        out_shape=jax.ShapeDtypeStruct((B, h2), feat.dtype),
        grid=(grid_k,),
        in_specs=[
            pl.BlockSpec((B, LSTM_TK), lambda k: (0, k)),
            pl.BlockSpec((LSTM_TK, n_cols), lambda k: (k, 0)),
            pl.BlockSpec((1, n_cols), lambda k: (0, 0)),
        ],
        out_specs=pl.BlockSpec((B, h2), lambda k: (0, 0)),
        scratch_shapes=[pltpu.VMEM((B, n_cols), jnp.float32)],
        compiler_params=pltpu.CompilerParams(
            dimension_semantics=("arbitrary",)),
    )(feat_pad, wg_pad, bg)


# --------------------------------------------------------------------------
# Kernel 3: fused MLP head fc1 -> fc2 -> fc3 (no activations in the module;
#           dropout is identity at inference).  fc3 is padded to 128 output
#           lanes so the final store is lane-dense; wrapper slices [:, :2].
# --------------------------------------------------------------------------
def _mlp_head_kernel(h_ref, w1_ref, b1_ref, w2_ref, b2_ref, w3_ref, b3_ref,
                     o_ref):
    a = jnp.dot(h_ref[...], w1_ref[...],
                preferred_element_type=jnp.float32) + b1_ref[...]
    a = jnp.dot(a, w2_ref[...],
                preferred_element_type=jnp.float32) + b2_ref[...]
    a = jnp.dot(a, w3_ref[...],
                preferred_element_type=jnp.float32) + b3_ref[...]
    o_ref[...] = a.astype(o_ref.dtype)


def _mlp_head(h, params):
    B = h.shape[0]
    out_pad = params["fc3_wt"].shape[1]        # 128
    return pl.pallas_call(
        _mlp_head_kernel,
        out_shape=jax.ShapeDtypeStruct((B, out_pad), h.dtype),
    )(h, params["fc1_wt"], params["fc1_b"],
      params["fc2_wt"], params["fc2_b"],
      params["fc3_wt"], params["fc3_b"])


# --------------------------------------------------------------------------
# Full forward
# --------------------------------------------------------------------------
def conv_lstm_forward(x, params):
    B, _, L = x.shape
    x2d = x.reshape(B, L)

    # ---- conv1 (1->16, k=5, s=2) + ReLU + maxpool(2) ----
    T1 = (L - 5) // 2 + 1                      # 1406
    P1 = T1 // 2                               # 703
    pe1 = jnp.stack([x2d[:, k: k + 4 * P1: 4] for k in range(5)], axis=-1)
    po1 = jnp.stack([x2d[:, k + 2: k + 2 + 4 * P1: 4] for k in range(5)],
                    axis=-1)
    a1 = _conv_relu_pool(pe1.reshape(B * P1, 5), po1.reshape(B * P1, 5),
                         params["w1"], params["b1"])        # [B*P1, 16]
    a1 = a1.reshape(B, P1, 16)

    # ---- conv2 (16->32, k=5) + ReLU + maxpool(2) ----
    T2 = P1 - 4                                # 699
    P2 = (T2 - 2) // 2 + 1                     # 349
    pe2 = jnp.stack([a1[:, k: k + 2 * P2: 2, :] for k in range(5)], axis=2)
    po2 = jnp.stack([a1[:, k + 1: k + 1 + 2 * P2: 2, :] for k in range(5)],
                    axis=2)
    a2 = _conv_relu_pool(pe2.reshape(B * P2, 5 * 16),
                         po2.reshape(B * P2, 5 * 16),
                         params["w2"], params["b2"])        # [B*P2, 32]
    a2 = a2.reshape(B, P2, 32)

    # flatten in PyTorch (B, C, T) order -> [B, 32*349] = [B, 11168]
    feat = jnp.transpose(a2, (0, 2, 1)).reshape(B, 32 * P2)

    # ---- bidirectional LSTM, single timestep ----
    h = _lstm_single_step(feat, params["wg"], params["bg"])  # [B, 128]

    # ---- fc1 -> (drop) -> fc2 -> (drop) -> fc3 ----
    # TODO(synk): dropout layers are identity at inference; training-mode
    # dropout masking is not implemented.
    logits = _mlp_head(h, params)[:, :NUM_CLASSES]
    return logits


# --------------------------------------------------------------------------
# Parameter packing (one-time, outside the hot path)
# --------------------------------------------------------------------------
def _pack_params(raw):
    p = {}
    p["w1"] = jnp.transpose(raw["conv1_w"][:, 0, :], (1, 0))          # [5, 16]
    p["b1"] = raw["conv1_b"].reshape(1, -1)
    p["w2"] = jnp.transpose(raw["conv2_w"], (2, 1, 0)).reshape(5 * 16, 32)
    p["b2"] = raw["conv2_b"].reshape(1, -1)

    def gcols(w_ih, g):                    # gate g of W_ih, transposed
        return w_ih[g * HID:(g + 1) * HID, :].T                       # [K, 64]

    wf, wb = raw["w_ih_f"], raw["w_ih_b"]
    wg = jnp.concatenate([gcols(wf, 0), gcols(wb, 0),     # i
                          gcols(wf, 2), gcols(wb, 2),     # g (cell)
                          gcols(wf, 3), gcols(wb, 3)],    # o
                         axis=1)                          # [11168, 384]
    k = wg.shape[0]
    k_pad = pl.cdiv(k, LSTM_TK) * LSTM_TK
    p["wg"] = jnp.pad(wg, ((0, k_pad - k), (0, 0)))       # [11264, 384]

    bf = raw["b_ih_f"] + raw["b_hh_f"]
    bb = raw["b_ih_b"] + raw["b_hh_b"]
    p["bg"] = jnp.concatenate(
        [bf[0:HID], bb[0:HID],
         bf[2 * HID:3 * HID], bb[2 * HID:3 * HID],
         bf[3 * HID:4 * HID], bb[3 * HID:4 * HID]]).reshape(1, -1)

    p["fc1_wt"] = raw["fc1_w"].T                          # [128, 256]
    p["fc1_b"] = raw["fc1_b"].reshape(1, -1)
    p["fc2_wt"] = raw["fc2_w"].T                          # [256, 128]
    p["fc2_b"] = raw["fc2_b"].reshape(1, -1)
    # pad fc3 (out=2) to 128 lanes for a dense final store
    p["fc3_wt"] = jnp.zeros((128, 128), jnp.float32).at[
        :, :NUM_CLASSES].set(raw["fc3_w"].T)
    p["fc3_b"] = jnp.zeros((1, 128), jnp.float32).at[
        0, :NUM_CLASSES].set(raw["fc3_b"])
    return p


# --------------------------------------------------------------------------
# Pure-JAX reference (independent path) for the correctness check
# --------------------------------------------------------------------------
def _mm(a, b):
    return jnp.matmul(a, b, precision=jax.lax.Precision.HIGHEST)


def reference_forward(x, raw):
    B = x.shape[0]
    hi = jax.lax.Precision.HIGHEST
    y = jax.lax.conv_general_dilated(
        x, raw["conv1_w"], window_strides=(2,), padding="VALID",
        dimension_numbers=("NCH", "OIH", "NCH"), precision=hi)
    y = jax.nn.relu(y + raw["conv1_b"][None, :, None])
    t = y.shape[-1]
    y = y[..., :(t // 2) * 2].reshape(B, 16, t // 2, 2).max(axis=-1)

    y = jax.lax.conv_general_dilated(
        y, raw["conv2_w"], window_strides=(1,), padding="VALID",
        dimension_numbers=("NCH", "OIH", "NCH"), precision=hi)
    y = jax.nn.relu(y + raw["conv2_b"][None, :, None])
    t = y.shape[-1]
    y = y[..., :(t // 2) * 2].reshape(B, 32, t // 2, 2).max(axis=-1)

    feat = y.reshape(B, -1)

    def cell(w_ih, b_ih, b_hh):
        g = _mm(feat, w_ih.T) + b_ih + b_hh
        i = jax.nn.sigmoid(g[:, 0:HID])
        gg = jnp.tanh(g[:, 2 * HID:3 * HID])
        o = jax.nn.sigmoid(g[:, 3 * HID:4 * HID])
        c = i * gg                               # f * c0 == 0
        return o * jnp.tanh(c)

    h = jnp.concatenate(
        [cell(raw["w_ih_f"], raw["b_ih_f"], raw["b_hh_f"]),
         cell(raw["w_ih_b"], raw["b_ih_b"], raw["b_hh_b"])], axis=1)

    a = _mm(h, raw["fc1_w"].T) + raw["fc1_b"]
    a = _mm(a, raw["fc2_w"].T) + raw["fc2_b"]
    a = _mm(a, raw["fc3_w"].T) + raw["fc3_b"]
    return a


if __name__ == "__main__":
    B = 2
    key = jax.random.PRNGKey(0)
    ks = jax.random.split(key, 17)

    def uinit(k, shape, fan_in):
        bound = 1.0 / jnp.sqrt(jnp.float32(fan_in))
        return jax.random.uniform(k, shape, jnp.float32, -bound, bound)

    raw = {
        "conv1_w": uinit(ks[0], (16, 1, 5), 1 * 5),
        "conv1_b": uinit(ks[1], (16,), 1 * 5),
        "conv2_w": uinit(ks[2], (32, 16, 5), 16 * 5),
        "conv2_b": uinit(ks[3], (32,), 16 * 5),
        # LSTM recurrent weights W_hh never contribute (seq_len=1, h0=0) and
        # are therefore omitted exactly.
        "w_ih_f": uinit(ks[4], (4 * HID, 11168), HID),
        "b_ih_f": uinit(ks[5], (4 * HID,), HID),
        "b_hh_f": uinit(ks[6], (4 * HID,), HID),
        "w_ih_b": uinit(ks[7], (4 * HID, 11168), HID),
        "b_ih_b": uinit(ks[8], (4 * HID,), HID),
        "b_hh_b": uinit(ks[9], (4 * HID,), HID),
        "fc1_w": uinit(ks[10], (256, 128), 128),
        "fc1_b": uinit(ks[11], (256,), 128),
        "fc2_w": uinit(ks[12], (128, 256), 256),
        "fc2_b": uinit(ks[13], (128,), 256),
        "fc3_w": uinit(ks[14], (NUM_CLASSES, 128), 128),
        "fc3_b": uinit(ks[15], (NUM_CLASSES,), 128),
    }
    params = _pack_params(raw)

    x = jax.random.normal(ks[16], (B, 1, L_IN), jnp.float32)

    fwd = jax.jit(conv_lstm_forward)
    y = jax.block_until_ready(fwd(x, params))

    y_ref = reference_forward(x, raw)
    assert y.shape == (B, NUM_CLASSES)
    assert jnp.allclose(y, y_ref, atol=2e-3, rtol=2e-3), float(
        jnp.max(jnp.abs(y - y_ref)))

    print("KERNEL_OK")
</pallas_src>

<mosaic_0001>
module attributes {stable_mosaic.version = 11 : i64} {
  func.func @_conv_relu_pool_kernel(%arg0: memref<1406x5xf32, #tpu.memory_space<vmem>>, %arg1: memref<1406x5xf32, #tpu.memory_space<vmem>>, %arg2: memref<5x16xf32, #tpu.memory_space<vmem>>, %arg3: memref<1x16xf32, #tpu.memory_space<vmem>>, %arg4: memref<1406x16xf32, #tpu.memory_space<vmem>>) attributes {dimension_semantics = [], scalar_prefetch = 0 : i64, scratch_operands = 0 : i64, tpu.core_type = #tpu.core_type<tc>} {
    %c0 = arith.constant 0 : index
    %c0_0 = arith.constant 0 : index
    %0 = vector.load %arg2[%c0, %c0_0] : memref<5x16xf32, #tpu.memory_space<vmem>>, vector<5x16xf32>
    %c0_1 = arith.constant 0 : index
    %c0_2 = arith.constant 0 : index
    %1 = vector.load %arg3[%c0_1, %c0_2] : memref<1x16xf32, #tpu.memory_space<vmem>>, vector<1x16xf32>
    %c0_3 = arith.constant 0 : index
    %c0_4 = arith.constant 0 : index
    %2 = vector.load %arg0[%c0_3, %c0_4] : memref<1406x5xf32, #tpu.memory_space<vmem>>, vector<1406x5xf32>
    %cst = arith.constant dense<0.000000e+00> : vector<1406x16xf32>
    %3 = tpu.matmul %2, %0, %cst {dimension_numbers = #tpu.dot_dimension_numbers<[1], [0], [0], [1], [0, 0, 1, 1], [], []>} : vector<1406x5xf32>, vector<5x16xf32>, vector<1406x16xf32> -> vector<1406x16xf32>
    %4 = vector.broadcast %1 : vector<1x16xf32> to vector<1406x16xf32>
    %5 = arith.addf %3, %4 : vector<1406x16xf32>
    %cst_5 = arith.constant 0.000000e+00 : f32
    %6 = vector.broadcast %cst_5 : f32 to vector<1406x16xf32>
    %7 = arith.maximumf %5, %6 : vector<1406x16xf32>
    %c0_6 = arith.constant 0 : index
    %c0_7 = arith.constant 0 : index
    %8 = vector.load %arg1[%c0_6, %c0_7] : memref<1406x5xf32, #tpu.memory_space<vmem>>, vector<1406x5xf32>
    %cst_8 = arith.constant dense<0.000000e+00> : vector<1406x16xf32>
    %9 = tpu.matmul %8, %0, %cst_8 {dimension_numbers = #tpu.dot_dimension_numbers<[1], [0], [0], [1], [0, 0, 1, 1], [], []>} : vector<1406x5xf32>, vector<5x16xf32>, vector<1406x16xf32> -> vector<1406x16xf32>
    %10 = vector.broadcast %1 : vector<1x16xf32> to vector<1406x16xf32>
    %11 = arith.addf %9, %10 : vector<1406x16xf32>
    %cst_9 = arith.constant 0.000000e+00 : f32
    %12 = vector.broadcast %cst_9 : f32 to vector<1406x16xf32>
    %13 = arith.maximumf %11, %12 : vector<1406x16xf32>
    %14 = arith.maximumf %7, %13 : vector<1406x16xf32>
    %c0_10 = arith.constant 0 : index
    %c0_11 = arith.constant 0 : index
    %15 = vector.load %arg4[%c0_10, %c0_11] : memref<1406x16xf32, #tpu.memory_space<vmem>>, vector<1406x16xf32>
    tpu.vector_store %arg4[%c0_10, %c0_11], %14 {strides = array<i32>} : memref<1406x16xf32, #tpu.memory_space<vmem>>, vector<1406x16xf32>,
    return
  }
}

module attributes {stable_mosaic.version = 11 : i64} {
  func.func @_conv_relu_pool_kernel(%arg0: memref<698x80xf32, #tpu.memory_space<vmem>>, %arg1: memref<698x80xf32, #tpu.memory_space<vmem>>, %arg2: memref<80x32xf32, #tpu.memory_space<vmem>>, %arg3: memref<1x32xf32, #tpu.memory_space<vmem>>, %arg4: memref<698x32xf32, #tpu.memory_space<vmem>>) attributes {dimension_semantics = [], scalar_prefetch = 0 : i64, scratch_operands = 0 : i64, tpu.core_type = #tpu.core_type<tc>} {
    %c0 = arith.constant 0 : index
    %c0_0 = arith.constant 0 : index
    %0 = vector.load %arg2[%c0, %c0_0] : memref<80x32xf32, #tpu.memory_space<vmem>>, vector<80x32xf32>
    %c0_1 = arith.constant 0 : index
    %c0_2 = arith.constant 0 : index
    %1 = vector.load %arg3[%c0_1, %c0_2] : memref<1x32xf32, #tpu.memory_space<vmem>>, vector<1x32xf32>
    %c0_3 = arith.constant 0 : index
    %c0_4 = arith.constant 0 : index
    %2 = vector.load %arg0[%c0_3, %c0_4] : memref<698x80xf32, #tpu.memory_space<vmem>>, vector<698x80xf32>
    %cst = arith.constant dense<0.000000e+00> : vector<698x32xf32>
    %3 = tpu.matmul %2, %0, %cst {dimension_numbers = #tpu.dot_dimension_numbers<[1], [0], [0], [1], [0, 0, 1, 1], [], []>} : vector<698x80xf32>, vector<80x32xf32>, vector<698x32xf32> -> vector<698x32xf32>
    %4 = vector.broadcast %1 : vector<1x32xf32> to vector<698x32xf32>
    %5 = arith.addf %3, %4 : vector<698x32xf32>
    %cst_5 = arith.constant 0.000000e+00 : f32
    %6 = vector.broadcast %cst_5 : f32 to vector<698x32xf32>
    %7 = arith.maximumf %5, %6 : vector<698x32xf32>
    %c0_6 = arith.constant 0 : index
    %c0_7 = arith.constant 0 : index
    %8 = vector.load %arg1[%c0_6, %c0_7] : memref<698x80xf32, #tpu.memory_space<vmem>>, vector<698x80xf32>
    %cst_8 = arith.constant dense<0.000000e+00> : vector<698x32xf32>
    %9 = tpu.matmul %8, %0, %cst_8 {dimension_numbers = #tpu.dot_dimension_numbers<[1], [0], [0], [1], [0, 0, 1, 1], [], []>} : vector<698x80xf32>, vector<80x32xf32>, vector<698x32xf32> -> vector<698x32xf32>
    %10 = vector.broadcast %1 : vector<1x32xf32> to vector<698x32xf32>
    %11 = arith.addf %9, %10 : vector<698x32xf32>
    %cst_9 = arith.constant 0.000000e+00 : f32
    %12 = vector.broadcast %cst_9 : f32 to vector<698x32xf32>
    %13 = arith.maximumf %11, %12 : vector<698x32xf32>
    %14 = arith.maximumf %7, %13 : vector<698x32xf32>
    %c0_10 = arith.constant 0 : index
    %c0_11 = arith.constant 0 : index
    %15 = vector.load %arg4[%c0_10, %c0_11] : memref<698x32xf32, #tpu.memory_space<vmem>>, vector<698x32xf32>
    tpu.vector_store %arg4[%c0_10, %c0_11], %14 {strides = array<i32>} : memref<698x32xf32, #tpu.memory_space<vmem>>, vector<698x32xf32>,
    return
  }
}

module attributes {stable_mosaic.version = 11 : i64} {
  func.func @_lstm_gate_kernel(%arg0: i32, %arg1: memref<2x2816xf32, #tpu.memory_space<vmem>>, %arg2: memref<2816x384xf32, #tpu.memory_space<vmem>>, %arg3: memref<1x384xf32, #tpu.memory_space<vmem>>, %arg4: memref<2x128xf32, #tpu.memory_space<vmem>>, %arg5: memref<2x384xf32, #tpu.memory_space<vmem>>) attributes {dimension_semantics = [#tpu.dimension_semantics<arbitrary>], iteration_bounds = array<i64: 4>, scalar_prefetch = 0 : i64, scratch_operands = 1 : i64, tpu.core_type = #tpu.core_type<tc>, window_params = [{transform_indices = @transform_0, window_bounds = array<i64: 2, 2816>}, {transform_indices = @transform_1, window_bounds = array<i64: 2816, 384>}, {pipeline_mode = #tpu.pipeline_mode<synchronous>, transform_indices = @transform_2, window_bounds = array<i64: 1, 384>}, {pipeline_mode = #tpu.pipeline_mode<synchronous>, transform_indices = @transform_3, window_bounds = array<i64: 2, 128>}]} {
    %c0_i32 = arith.constant 0 : i32
    %0 = arith.cmpi eq, %arg0, %c0_i32 : i32
    %1 = arith.extui %0 : i1 to i32
    %c0_i32_0 = arith.constant 0 : i32
    %2 = arith.cmpi ne, %1, %c0_i32_0 : i32
    scf.if %2 {
      %cst_9 = arith.constant 0.000000e+00 : f32
      %12 = vector.broadcast %cst_9 : f32 to vector<2x384xf32>
      %c0_10 = arith.constant 0 : index
      %c0_11 = arith.constant 0 : index
      %13 = vector.load %arg5[%c0_10, %c0_11] : memref<2x384xf32, #tpu.memory_space<vmem>>, vector<2x384xf32>
      tpu.vector_store %arg5[%c0_10, %c0_11], %12 {strides = array<i32>} : memref<2x384xf32, #tpu.memory_space<vmem>>, vector<2x384xf32>,
    } else {
    }
    %c0 = arith.constant 0 : index
    %c0_1 = arith.constant 0 : index
    %3 = vector.load %arg5[%c0, %c0_1] : memref<2x384xf32, #tpu.memory_space<vmem>>, vector<2x384xf32>
    %c0_2 = arith.constant 0 : index
    %c0_3 = arith.constant 0 : index
    %4 = vector.load %arg1[%c0_2, %c0_3] : memref<2x2816xf32, #tpu.memory_space<vmem>>, vector<2x2816xf32>
    %c0_4 = arith.constant 0 : index
    %c0_5 = arith.constant 0 : index
    %5 = vector.load %arg2[%c0_4, %c0_5] : memref<2816x384xf32, #tpu.memory_space<vmem>>, vector<2816x384xf32>
    %cst = arith.constant dense<0.000000e+00> : vector<2x384xf32>
    %6 = tpu.matmul %4, %5, %cst {dimension_numbers = #tpu.dot_dimension_numbers<[1], [0], [0], [1], [0, 0, 1, 1], [], []>} : vector<2x2816xf32>, vector<2816x384xf32>, vector<2x384xf32> -> vector<2x384xf32>
    %7 = arith.addf %3, %6 : vector<2x384xf32>
    %c0_6 = arith.constant 0 : index
    %c0_7 = arith.constant 0 : index
    %8 = vector.load %arg5[%c0_6, %c0_7] : memref<2x384xf32, #tpu.memory_space<vmem>>, vector<2x384xf32>
    tpu.vector_store %arg5[%c0_6, %c0_7], %7 {strides = array<i32>} : memref<2x384xf32, #tpu.memory_space<vmem>>, vector<2x384xf32>,
    %c3_i32 = arith.constant 3 : i32
    %9 = arith.cmpi eq, %arg0, %c3_i32 : i32
    %10 = arith.extui %9 : i1 to i32
    %c0_i32_8 = arith.constant 0 : i32
    %11 = arith.cmpi ne, %10, %c0_i32_8 : i32
    scf.if %11 {
      %c0_9 = arith.constant 0 : index
      %c0_10 = arith.constant 0 : index
      %12 = vector.load %arg5[%c0_9, %c0_10] : memref<2x384xf32, #tpu.memory_space<vmem>>, vector<2x384xf32>
      %c0_11 = arith.constant 0 : index
      %c0_12 = arith.constant 0 : index
      %13 = vector.load %arg3[%c0_11, %c0_12] : memref<1x384xf32, #tpu.memory_space<vmem>>, vector<1x384xf32>
      %14 = vector.broadcast %13 : vector<1x384xf32> to vector<2x384xf32>
      %15 = arith.addf %12, %14 : vector<2x384xf32>
      %16 = vector.extract_strided_slice %15 {offsets = [0, 0], sizes = [2, 128], strides = [1, 1]} : vector<2x384xf32> to vector<2x128xf32>
      %17 = arith.negf %16 : vector<2x128xf32>
      %18 = math.exp %17 : vector<2x128xf32>
      %cst_13 = arith.constant 1.000000e+00 : f32
      %19 = vector.broadcast %cst_13 : f32 to vector<2x128xf32>
      %20 = arith.addf %19, %18 : vector<2x128xf32>
      %21 = arith.divf %19, %20 : vector<2x128xf32>
      %22 = vector.extract_strided_slice %15 {offsets = [0, 128], sizes = [2, 128], strides = [1, 1]} : vector<2x384xf32> to vector<2x128xf32>
      %23 = math.tanh %22 : vector<2x128xf32>
      %24 = arith.mulf %21, %23 : vector<2x128xf32>
      %25 = vector.extract_strided_slice %15 {offsets = [0, 256], sizes = [2, 128], strides = [1, 1]} : vector<2x384xf32> to vector<2x128xf32>
      %26 = arith.negf %25 : vector<2x128xf32>
      %27 = math.exp %26 : vector<2x128xf32>
      %cst_14 = arith.constant 1.000000e+00 : f32
      %28 = vector.broadcast %cst_14 : f32 to vector<2x128xf32>
      %29 = arith.addf %28, %27 : vector<2x128xf32>
      %30 = arith.divf %28, %29 : vector<2x128xf32>
      %31 = math.tanh %24 : vector<2x128xf32>
      %32 = arith.mulf %30, %31 : vector<2x128xf32>
      %c0_15 = arith.constant 0 : index
      %c0_16 = arith.constant 0 : index
      %33 = vector.load %arg4[%c0_15, %c0_16] : memref<2x128xf32, #tpu.memory_space<vmem>>, vector<2x128xf32>
      tpu.vector_store %arg4[%c0_15, %c0_16], %32 {strides = array<i32>} : memref<2x128xf32, #tpu.memory_space<vmem>>, vector<2x128xf32>,
    } else {
    }
    return
  }
  func.func @transform_0(%arg0: i32) -> (i32, i32) {
    %c0_i32 = arith.constant 0 : i32
    %c0_i32_0 = arith.constant 0 : i32
    return %c0_i32, %arg0 : i32, i32
  }
  func.func @transform_1(%arg0: i32) -> (i32, i32) {
    %c0_i32 = arith.constant 0 : i32
    %c0_i32_0 = arith.constant 0 : i32
    return %arg0, %c0_i32 : i32, i32
  }
  func.func @transform_2(%arg0: i32) -> (i32, i32) {
    %c0_i32 = arith.constant 0 : i32
    %c0_i32_0 = arith.constant 0 : i32
    %c0_i32_1 = arith.constant 0 : i32
    return %c0_i32, %c0_i32_0 : i32, i32
  }
  func.func @transform_3(%arg0: i32) -> (i32, i32) {
    %c0_i32 = arith.constant 0 : i32
    %c0_i32_0 = arith.constant 0 : i32
    %c0_i32_1 = arith.constant 0 : i32
    return %c0_i32, %c0_i32_0 : i32, i32
  }
}

module attributes {stable_mosaic.version = 11 : i64} {
  func.func @_mlp_head_kernel(%arg0: memref<2x128xf32, #tpu.memory_space<vmem>>, %arg1: memref<128x256xf32, #tpu.memory_space<vmem>>, %arg2: memref<1x256xf32, #tpu.memory_space<vmem>>, %arg3: memref<256x128xf32, #tpu.memory_space<vmem>>, %arg4: memref<1x128xf32, #tpu.memory_space<vmem>>, %arg5: memref<128x128xf32, #tpu.memory_space<vmem>>, %arg6: memref<1x128xf32, #tpu.memory_space<vmem>>, %arg7: memref<2x128xf32, #tpu.memory_space<vmem>>) attributes {dimension_semantics = [], scalar_prefetch = 0 : i64, scratch_operands = 0 : i64, tpu.core_type = #tpu.core_type<tc>} {
    %c0 = arith.constant 0 : index
    %c0_0 = arith.constant 0 : index
    %0 = vector.load %arg0[%c0, %c0_0] : memref<2x128xf32, #tpu.memory_space<vmem>>, vector<2x128xf32>
    %c0_1 = arith.constant 0 : index
    %c0_2 = arith.constant 0 : index
    %1 = vector.load %arg1[%c0_1, %c0_2] : memref<128x256xf32, #tpu.memory_space<vmem>>, vector<128x256xf32>
    %cst = arith.constant dense<0.000000e+00> : vector<2x256xf32>
    %2 = tpu.matmul %0, %1, %cst {dimension_numbers = #tpu.dot_dimension_numbers<[1], [0], [0], [1], [0, 0, 1, 1], [], []>} : vector<2x128xf32>, vector<128x256xf32>, vector<2x256xf32> -> vector<2x256xf32>
    %c0_3 = arith.constant 0 : index
    %c0_4 = arith.constant 0 : index
    %3 = vector.load %arg2[%c0_3, %c0_4] : memref<1x256xf32, #tpu.memory_space<vmem>>, vector<1x256xf32>
    %4 = vector.broadcast %3 : vector<1x256xf32> to vector<2x256xf32>
    %5 = arith.addf %2, %4 : vector<2x256xf32>
    %c0_5 = arith.constant 0 : index
    %c0_6 = arith.constant 0 : index
    %6 = vector.load %arg3[%c0_5, %c0_6] : memref<256x128xf32, #tpu.memory_space<vmem>>, vector<256x128xf32>
    %cst_7 = arith.constant dense<0.000000e+00> : vector<2x128xf32>
    %7 = tpu.matmul %5, %6, %cst_7 {dimension_numbers = #tpu.dot_dimension_numbers<[1], [0], [0], [1], [0, 0, 1, 1], [], []>} : vector<2x256xf32>, vector<256x128xf32>, vector<2x128xf32> -> vector<2x128xf32>
    %c0_8 = arith.constant 0 : index
    %c0_9 = arith.constant 0 : index
    %8 = vector.load %arg4[%c0_8, %c0_9] : memref<1x128xf32, #tpu.memory_space<vmem>>, vector<1x128xf32>
    %9 = vector.broadcast %8 : vector<1x128xf32> to vector<2x128xf32>
    %10 = arith.addf %7, %9 : vector<2x128xf32>
    %c0_10 = arith.constant 0 : index
    %c0_11 = arith.constant 0 : index
    %11 = vector.load %arg5[%c0_10, %c0_11] : memref<128x128xf32, #tpu.memory_space<vmem>>, vector<128x128xf32>
    %cst_12 = arith.constant dense<0.000000e+00> : vector<2x128xf32>
    %12 = tpu.matmul %10, %11, %cst_12 {dimension_numbers = #tpu.dot_dimension_numbers<[1], [0], [0], [1], [0, 0, 1, 1], [], []>} : vector<2x128xf32>, vector<128x128xf32>, vector<2x128xf32> -> vector<2x128xf32>
    %c0_13 = arith.constant 0 : index
    %c0_14 = arith.constant 0 : index
    %13 = vector.load %arg6[%c0_13, %c0_14] : memref<1x128xf32, #tpu.memory_space<vmem>>, vector<1x128xf32>
    %14 = vector.broadcast %13 : vector<1x128xf32> to vector<2x128xf32>
    %15 = arith.addf %12, %14 : vector<2x128xf32>
    %c0_15 = arith.constant 0 : index
    %c0_16 = arith.constant 0 : index
    %16 = vector.load %arg7[%c0_15, %c0_16] : memref<2x128xf32, #tpu.memory_space<vmem>>, vector<2x128xf32>
    tpu.vector_store %arg7[%c0_15, %c0_16], %15 {strides = array<i32>} : memref<2x128xf32, #tpu.memory_space<vmem>>, vector<2x128xf32>,
    return
  }
}

</mosaic_0001>

<llo_original>
// kernel: conv_lstm_forward.4
$region0: #{conv_lstm_forward.4}
  #allocation0 [shape = 'u32[]', space=smem, size = 0x4, offset = 0x4, fixed_abs, tag = 'smem constant byte address 0x4 - core index']
  #allocation1 [shape = 'u32[72,128]{1,0:T(1,128)}', space=vmem, size = 0x9000, scoped, tag = 'internal scratch']
  %s0 = inlined_call_operand.vmem [shape: f32[1406,5], index: 0, kind: input, shape index: {}]
  %s1 = inlined_call_operand.vmem [shape: f32[1406,5], index: 1, kind: input, shape index: {}]
  %s2 = inlined_call_operand.hbm [shape: f32[5,16], index: 2, kind: input, shape index: {}]
  %s3 = inlined_call_operand.hbm [shape: f32[1,16], index: 3, kind: input, shape index: {}]
  %s4 = inlined_call_operand.vmem [shape: f32[1406,16], index: 4, kind: output, shape index: {}]
  %s5 = sld [smem:[#allocation0]]
  $region34: #{conv_lstm_forward.4} parent=0
    _
  %s7 = ssub.s32 1, %s5
  %s8 = scalar_select 0, %s7, %s5
  $region1: #{conv_lstm_forward.4} parent=0
    #allocation2 [shape = 'u8[4096]{0}', space=vmem, size = 0x1000, scoped, tag = 'input window, operand 2, single buffered']
    #allocation3 [shape = 's32[1]{0}', space=sflag, size = 0x4, scoped, tag = 'scoped memory for conv_lstm_forward.4']
    #allocation4 [shape = 'u8[512]{0}', space=vmem, size = 0x400, scoped, tag = 'input window, operand 3, single buffered']
    #allocation5 [shape = 's32[1]{0}', space=sflag, size = 0x4, scoped, tag = 'scoped memory for conv_lstm_forward.4']
    %9 = vsyncpa [#allocation3], 0
    %10 = vsyncpa [#allocation5], 0
    // Predicated region
    $region2: #{conv_lstm_forward.4} parent=1 // pred_check
      _
    $region3: #{conv_lstm_forward.4} parent=1 // pred_check_branch
      %12 = sbr.rel (0) target = $region5
    $region4: #{conv_lstm_forward.4} parent=1 // pred_region
      _
    $region5: #{conv_lstm_forward.4} parent=1 // pred_fallthru
      _
    // Predicated region
    $region6: #{conv_lstm_forward.4} parent=1 // pred_check
      _
    $region7: #{conv_lstm_forward.4} parent=1 // pred_check_branch
      %14 = sbr.rel (0) target = $region9
    $region8: #{conv_lstm_forward.4} parent=1 // pred_region
      _
    $region9: #{conv_lstm_forward.4} parent=1 // pred_fallthru
      _
    // Predicated region
    $region10: #{conv_lstm_forward.4} parent=1 // pred_check
      _
    $region11: #{conv_lstm_forward.4} parent=1 // pred_check_branch
      %16 = sbr.rel (0) target = $region13
    $region12: #{conv_lstm_forward.4} parent=1 // pred_region
      %18 = vsyncadd [#allocation3], 0
      %s20 = sshll.u32 %s2, 4
      %s21 = int_to_ptr.hbm [resolvable:$true] %s20
      %s22 = sshll.u32 [#allocation2], 4
      %s23 = int_to_ptr.vmem [resolvable:$true] %s22
      %25 = dma.hbm_to_vmem [thread:$0]  %s21, 128, %s23, [#allocation3]
    $region13: #{conv_lstm_forward.4} parent=1 // pred_fallthru
      _
    // Predicated region
    $region14: #{conv_lstm_forward.4} parent=1 // pred_check
      _
    $region15: #{conv_lstm_forward.4} parent=1 // pred_check_branch
      %27 = sbr.rel (0) target = $region17
    $region16: #{conv_lstm_forward.4} parent=1 // pred_region
      %29 = vsyncadd [#allocation5], 0
      %s31 = sshll.u32 %s3, 4
      %s32 = int_to_ptr.hbm [resolvable:$true] %s31
      %s33 = sshll.u32 [#allocation4], 4
      %s34 = int_to_ptr.vmem [resolvable:$true] %s33
      %36 = dma.hbm_to_vmem [thread:$0]  %s32, 16, %s34, [#allocation5]
    $region17: #{conv_lstm_forward.4} parent=1 // pred_fallthru
      _
    // Predicated region
    $region18: #{conv_lstm_forward.4} parent=1 // pred_check
      _
    $region19: #{conv_lstm_forward.4} parent=1 // pred_check_branch
      %38 = sbr.rel (0) target = $region21
    $region20: #{conv_lstm_forward.4} parent=1 // pred_region
      %40 = dma.done [#allocation3], 128
    $region21: #{conv_lstm_forward.4} parent=1 // pred_fallthru
      _
    // Predicated region
    $region22: #{conv_lstm_forward.4} parent=1 // pred_check
      _
    $region23: #{conv_lstm_forward.4} parent=1 // pred_check_branch
      %42 = sbr.rel (0) target = $region25
    $region24: #{conv_lstm_forward.4} parent=1 // pred_region
      %44 = dma.done [#allocation5], 16
    $region25: #{conv_lstm_forward.4} parent=1 // pred_fallthru
      _
    %v45 = vld [vmem:[#allocation2] sm:$0x1f]
    %v46 = vld [vmem:[#allocation4] sm:$0x1]
    %v47 = vld [vmem:[%s0] sm:$0xff]
    %v48 = vld [vmem:[%s0 + $0x8] sm:$0xff]
    %v49 = vld [vmem:[%s0 + $0x10] sm:$0xff]
    %v50 = vld [vmem:[%s0 + $0x18] sm:$0xff]
    %v51 = vld [vmem:[%s0 + $0x20] sm:$0xff]
    %v52 = vld [vmem:[%s0 + $0x28] sm:$0xff]
    %v53 = vld [vmem:[%s0 + $0x30] sm:$0xff]
    %v54 = vld [vmem:[%s0 + $0x38] sm:$0xff]
    %v55 = vld [vmem:[%s0 + $0x40] sm:$0xff]
    %v56 = vld [vmem:[%s0 + $0x48] sm:$0xff]
    %v57 = vld [vmem:[%s0 + $0x50] sm:$0xff]
    %v58 = vld [vmem:[%s0 + $0x58] sm:$0xff]
    %v59 = vld [vmem:[%s0 + $0x60] sm:$0xff]
    %v60 = vld [vmem:[%s0 + $0x68] sm:$0xff]
    %v61 = vld [vmem:[%s0 + $0x70] sm:$0xff]
    %v62 = vld [vmem:[%s0 + $0x78] sm:$0xff]
    %v63 = vld [vmem:[%s0 + $0x80] sm:$0xff]
    %v64 = vld [vmem:[%s0 + $0x88] sm:$0xff]
    %v65 = vld [vmem:[%s0 + $0x90] sm:$0xff]
    %v66 = vld [vmem:[%s0 + $0x98] sm:$0xff]
    %v67 = vld [vmem:[%s0 + $0xa0] sm:$0xff]
    %v68 = vld [vmem:[%s0 + $0xa8] sm:$0xff]
    %v69 = vld [vmem:[%s0 + $0xb0] sm:$0xff]
    %v70 = vld [vmem:[%s0 + $0xb8] sm:$0xff]
    %v71 = vld [vmem:[%s0 + $0xc0] sm:$0xff]
    %v72 = vld [vmem:[%s0 + $0xc8] sm:$0xff]
    %v73 = vld [vmem:[%s0 + $0xd0] sm:$0xff]
    %v74 = vld [vmem:[%s0 + $0xd8] sm:$0xff]
    %v75 = vld [vmem:[%s0 + $0xe0] sm:$0xff]
    %v76 = vld [vmem:[%s0 + $0xe8] sm:$0xff]
    %v77 = vld [vmem:[%s0 + $0xf0] sm:$0xff]
    %v78 = vld [vmem:[%s0 + $0xf8] sm:$0xff]
    %v79 = vld [vmem:[%s0 + $0x100] sm:$0xff]
    %v80 = vld [vmem:[%s0 + $0x108] sm:$0xff]
    %v81 = vld [vmem:[%s0 + $0x110] sm:$0xff]
    %v82 = vld [vmem:[%s0 + $0x118] sm:$0xff]
    %v83 = vld [vmem:[%s0 + $0x120] sm:$0xff]
    %v84 = vld [vmem:[%s0 + $0x128] sm:$0xff]
    %v85 = vld [vmem:[%s0 + $0x130] sm:$0xff]
    %v86 = vld [vmem:[%s0 + $0x138] sm:$0xff]
    %v87 = vld [vmem:[%s0 + $0x140] sm:$0xff]
    %v88 = vld [vmem:[%s0 + $0x148] sm:$0xff]
    %v89 = vld [vmem:[%s0 + $0x150] sm:$0xff]
    %v90 = vld [vmem:[%s0 + $0x158] sm:$0xff]
    %v91 = vld [vmem:[%s0 + $0x160] sm:$0xff]
    %v92 = vld [vmem:[%s0 + $0x168] sm:$0xff]
    %v93 = vld [vmem:[%s0 + $0x170] sm:$0xff]
    %v94 = vld [vmem:[%s0 + $0x178] sm:$0xff]
    %v95 = vld [vmem:[%s0 + $0x180] sm:$0xff]
    %v96 = vld [vmem:[%s0 + $0x188] sm:$0xff]
    %v97 = vld [vmem:[%s0 + $0x190] sm:$0xff]
    %v98 = vld [vmem:[%s0 + $0x198] sm:$0xff]
    %v99 = vld [vmem:[%s0 + $0x1a0] sm:$0xff]
    %v100 = vld [vmem:[%s0 + $0x1a8] sm:$0xff]
    %v101 = vld [vmem:[%s0 + $0x1b0] sm:$0xff]
    %v102 = vld [vmem:[%s0 + $0x1b8] sm:$0xff]
    %v103 = vld [vmem:[%s0 + $0x1c0] sm:$0xff]
    %v104 = vld [vmem:[%s0 + $0x1c8] sm:$0xff]
    %v105 = vld [vmem:[%s0 + $0x1d0] sm:$0xff]
    %v106 = vld [vmem:[%s0 + $0x1d8] sm:$0xff]
    %v107 = vld [vmem:[%s0 + $0x1e0] sm:$0xff]
    %v108 = vld [vmem:[%s0 + $0x1e8] sm:$0xff]
    %v109 = vld [vmem:[%s0 + $0x1f0] sm:$0xff]
    %v110 = vld [vmem:[%s0 + $0x1f8] sm:$0xff]
    %v111 = vld [vmem:[%s0 + $0x200] sm:$0xff]
    %v112 = vld [vmem:[%s0 + $0x208] sm:$0xff]
    %v113 = vld [vmem:[%s0 + $0x210] sm:$0xff]
    %v114 = vld [vmem:[%s0 + $0x218] sm:$0xff]
    %v115 = vld [vmem:[%s0 + $0x220] sm:$0xff]
    %v116 = vld [vmem:[%s0 + $0x228] sm:$0xff]
    %v117 = vld [vmem:[%s0 + $0x230] sm:$0xff]
    %v118 = vld [vmem:[%s0 + $0x238] sm:$0xff]
    %v119 = vld [vmem:[%s0 + $0x240] sm:$0xff]
    %v120 = vld [vmem:[%s0 + $0x248] sm:$0xff]
    %v121 = vld [vmem:[%s0 + $0x250] sm:$0xff]
    %v122 = vld [vmem:[%s0 + $0x258] sm:$0xff]
    %v123 = vld [vmem:[%s0 + $0x260] sm:$0xff]
    %v124 = vld [vmem:[%s0 + $0x268] sm:$0xff]
    %v125 = vld [vmem:[%s0 + $0x270] sm:$0xff]
    %v126 = vld [vmem:[%s0 + $0x278] sm:$0xff]
    %v127 = vld [vmem:[%s0 + $0x280] sm:$0xff]
    %v128 = vld [vmem:[%s0 + $0x288] sm:$0xff]
    %v129 = vld [vmem:[%s0 + $0x290] sm:$0xff]
    %v130 = vld [vmem:[%s0 + $0x298] sm:$0xff]
    %v131 = vld [vmem:[%s0 + $0x2a0] sm:$0xff]
    %v132 = vld [vmem:[%s0 + $0x2a8] sm:$0xff]
    %v133 = vld [vmem:[%s0 + $0x2b0] sm:$0xff]
    %v134 = vld [vmem:[%s0 + $0x2b8] sm:$0xff]
    %v135 = vld [vmem:[%s0 + $0x2c0] sm:$0xff]
    %v136 = vld [vmem:[%s0 + $0x2c8] sm:$0xff]
    %v137 = vld [vmem:[%s0 + $0x2d0] sm:$0xff]
    %v138 = vld [vmem:[%s0 + $0x2d8] sm:$0xff]
    %v139 = vld [vmem:[%s0 + $0x2e0] sm:$0xff]
    %v140 = vld [vmem:[%s0 + $0x2e8] sm:$0xff]
    %v141 = vld [vmem:[%s0 + $0x2f0] sm:$0xff]
    %v142 = vld [vmem:[%s0 + $0x2f8] sm:$0xff]
    %v143 = vld [vmem:[%s0 + $0x300] sm:$0xff]
    %v144 = vld [vmem:[%s0 + $0x308] sm:$0xff]
    %v145 = vld [vmem:[%s0 + $0x310] sm:$0xff]
    %v146 = vld [vmem:[%s0 + $0x318] sm:$0xff]
    %v147 = vld [vmem:[%s0 + $0x320] sm:$0xff]
    %v148 = vld [vmem:[%s0 + $0x328] sm:$0xff]
    %v149 = vld [vmem:[%s0 + $0x330] sm:$0xff]
    %v150 = vld [vmem:[%s0 + $0x338] sm:$0xff]
    %v151 = vld [vmem:[%s0 + $0x340] sm:$0xff]
    %v152 = vld [vmem:[%s0 + $0x348] sm:$0xff]
    %v153 = vld [vmem:[%s0 + $0x350] sm:$0xff]
    %v154 = vld [vmem:[%s0 + $0x358] sm:$0xff]
    %v155 = vld [vmem:[%s0 + $0x360] sm:$0xff]
    %v156 = vld [vmem:[%s0 + $0x368] sm:$0xff]
    %v157 = vld [vmem:[%s0 + $0x370] sm:$0xff]
    %v158 = vld [vmem:[%s0 + $0x378] sm:$0xff]
    %v159 = vld [vmem:[%s0 + $0x380] sm:$0xff]
    %v160 = vld [vmem:[%s0 + $0x388] sm:$0xff]
    %v161 = vld [vmem:[%s0 + $0x390] sm:$0xff]
    %v162 = vld [vmem:[%s0 + $0x398] sm:$0xff]
    %v163 = vld [vmem:[%s0 + $0x3a0] sm:$0xff]
    %v164 = vld [vmem:[%s0 + $0x3a8] sm:$0xff]
    %v165 = vld [vmem:[%s0 + $0x3b0] sm:$0xff]
    %v166 = vld [vmem:[%s0 + $0x3b8] sm:$0xff]
    %v167 = vld [vmem:[%s0 + $0x3c0] sm:$0xff]
    %v168 = vld [vmem:[%s0 + $0x3c8] sm:$0xff]
    %v169 = vld [vmem:[%s0 + $0x3d0] sm:$0xff]
    %v170 = vld [vmem:[%s0 + $0x3d8] sm:$0xff]
    %v171 = vld [vmem:[%s0 + $0x3e0] sm:$0xff]
    %v172 = vld [vmem:[%s0 + $0x3e8] sm:$0xff]
    %v173 = vld [vmem:[%s0 + $0x3f0] sm:$0xff]
    %v174 = vld [vmem:[%s0 + $0x3f8] sm:$0xff]
    %v175 = vld [vmem:[%s0 + $0x400] sm:$0xff]
    %v176 = vld [vmem:[%s0 + $0x408] sm:$0xff]
    %v177 = vld [vmem:[%s0 + $0x410] sm:$0xff]
    %v178 = vld [vmem:[%s0 + $0x418] sm:$0xff]
    %v179 = vld [vmem:[%s0 + $0x420] sm:$0xff]
    %v180 = vld [vmem:[%s0 + $0x428] sm:$0xff]
    %v181 = vld [vmem:[%s0 + $0x430] sm:$0xff]
    %v182 = vld [vmem:[%s0 + $0x438] sm:$0xff]
    %v183 = vld [vmem:[%s0 + $0x440] sm:$0xff]
    %v184 = vld [vmem:[%s0 + $0x448] sm:$0xff]
    %v185 = vld [vmem:[%s0 + $0x450] sm:$0xff]
    %v186 = vld [vmem:[%s0 + $0x458] sm:$0xff]
    %v187 = vld [vmem:[%s0 + $0x460] sm:$0xff]
    %v188 = vld [vmem:[%s0 + $0x468] sm:$0xff]
    %v189 = vld [vmem:[%s0 + $0x470] sm:$0xff]
    %v190 = vld [vmem:[%s0 + $0x478] sm:$0xff]
    %v191 = vld [vmem:[%s0 + $0x480] sm:$0xff]
    %v192 = vld [vmem:[%s0 + $0x488] sm:$0xff]
    %v193 = vld [vmem:[%s0 + $0x490] sm:$0xff]
    %v194 = vld [vmem:[%s0 + $0x498] sm:$0xff]
    %v195 = vld [vmem:[%s0 + $0x4a0] sm:$0xff]
    %v196 = vld [vmem:[%s0 + $0x4a8] sm:$0xff]
    %v197 = vld [vmem:[%s0 + $0x4b0] sm:$0xff]
    %v198 = vld [vmem:[%s0 + $0x4b8] sm:$0xff]
    %v199 = vld [vmem:[%s0 + $0x4c0] sm:$0xff]
    %v200 = vld [vmem:[%s0 + $0x4c8] sm:$0xff]
    %v201 = vld [vmem:[%s0 + $0x4d0] sm:$0xff]
    %v202 = vld [vmem:[%s0 + $0x4d8] sm:$0xff]
    %v203 = vld [vmem:[%s0 + $0x4e0] sm:$0xff]
    %v204 = vld [vmem:[%s0 + $0x4e8] sm:$0xff]
    %v205 = vld [vmem:[%s0 + $0x4f0] sm:$0xff]
    %v206 = vld [vmem:[%s0 + $0x4f8] sm:$0xff]
    %v207 = vld [vmem:[%s0 + $0x500] sm:$0xff]
    %v208 = vld [vmem:[%s0 + $0x508] sm:$0xff]
    %v209 = vld [vmem:[%s0 + $0x510] sm:$0xff]
    %v210 = vld [vmem:[%s0 + $0x518] sm:$0xff]
    %v211 = vld [vmem:[%s0 + $0x520] sm:$0xff]
    %v212 = vld [vmem:[%s0 + $0x528] sm:$0xff]
    %v213 = vld [vmem:[%s0 + $0x530] sm:$0xff]
    %v214 = vld [vmem:[%s0 + $0x538] sm:$0xff]
    %v215 = vld [vmem:[%s0 + $0x540] sm:$0xff]
    %v216 = vld [vmem:[%s0 + $0x548] sm:$0xff]
    %v217 = vld [vmem:[%s0 + $0x550] sm:$0xff]
    %v218 = vld [vmem:[%s0 + $0x558] sm:$0xff]
    %v219 = vld [vmem:[%s0 + $0x560] sm:$0xff]
    %v220 = vld [vmem:[%s0 + $0x568] sm:$0xff]
    %v221 = vld [vmem:[%s0 + $0x570] sm:$0xff]
    %v222 = vld [vmem:[%s0 + $0x578] sm:$0x3f]
    %v224 = vperm.slane %v46, 0
    %vm226 = vcmask 39936
    %v228 = vsel %vm226, %v47, 0
    %v231 = vsel %vm226, %v48, 0
    %v234 = vsel %vm226, %v49, 0
    %v237 = vsel %vm226, %v50, 0
    %v240 = vsel %vm226, %v51, 0
    %v243 = vsel %vm226, %v52, 0
    %v246 = vsel %vm226, %v53, 0
    %v249 = vsel %vm226, %v54, 0
    %v252 = vsel %vm226, %v55, 0
    %v255 = vsel %vm226, %v56, 0
    %v258 = vsel %vm226, %v57, 0
    %v261 = vsel %vm226, %v58, 0
    %v264 = vsel %vm226, %v59, 0
    %v267 = vsel %vm226, %v60, 0
    %v270 = vsel %vm226, %v61, 0
    %v273 = vsel %vm226, %v62, 0
    %v276 = vsel %vm226, %v63, 0
    %v279 = vsel %vm226, %v64, 0
    %v282 = vsel %vm226, %v65, 0
    %v285 = vsel %vm226, %v66, 0
    %v288 = vsel %vm226, %v67, 0
    %v291 = vsel %vm226, %v68, 0
    %v294 = vsel %vm226, %v69, 0
    %v297 = vsel %vm226, %v70, 0
    %v300 = vsel %vm226, %v71, 0
    %v303 = vsel %vm226, %v72, 0
    %v306 = vsel %vm226, %v73, 0
    %v309 = vsel %vm226, %v74, 0
    %v312 = vsel %vm226, %v75, 0
    %v315 = vsel %vm226, %v76, 0
    %v318 = vsel %vm226, %v77, 0
    %v321 = vsel %vm226, %v78, 0
    %v324 = vsel %vm226, %v79, 0
    %v327 = vsel %vm226, %v80, 0
    %v330 = vsel %vm226, %v81, 0
    %v333 = vsel %vm226, %v82, 0
    %v336 = vsel %vm226, %v83, 0
    %v339 = vsel %vm226, %v84, 0
    %v342 = vsel %vm226, %v85, 0
    %v345 = vsel %vm226, %v86, 0
    %v348 = vsel %vm226, %v87, 0
    %v351 = vsel %vm226, %v88, 0
    %v354 = vsel %vm226, %v89, 0
    %v357 = vsel %vm226, %v90, 0
    %v360 = vsel %vm226, %v91, 0
    %v363 = vsel %vm226, %v92, 0
    %v366 = vsel %vm226, %v93, 0
    %v369 = vsel %vm226, %v94, 0
    %v372 = vsel %vm226, %v95, 0
    %v375 = vsel %vm226, %v96, 0
    %v378 = vsel %vm226, %v97, 0
    %v381 = vsel %vm226, %v98, 0
    %v384 = vsel %vm226, %v99, 0
    %v387 = vsel %vm226, %v100, 0
    %v390 = vsel %vm226, %v101, 0
    %v393 = vsel %vm226, %v102, 0
    %v396 = vsel %vm226, %v103, 0
    %v399 = vsel %vm226, %v104, 0
    %v402 = vsel %vm226, %v105, 0
    %v405 = vsel %vm226, %v106, 0
    %v408 = vsel %vm226, %v107, 0
    %v411 = vsel %vm226, %v108, 0
    %v414 = vsel %vm226, %v109, 0
    %v417 = vsel %vm226, %v110, 0
    %v420 = vsel %vm226, %v111, 0
    %v423 = vsel %vm226, %v112, 0
    %v426 = vsel %vm226, %v113, 0
    %v429 = vsel %vm226, %v114, 0
    %v432 = vsel %vm226, %v115, 0
    %v435 = vsel %vm226, %v116, 0
    %v438 = vsel %vm226, %v117, 0
    %v441 = vsel %vm226, %v118, 0
    %v444 = vsel %vm226, %v119, 0
    %v447 = vsel %vm226, %v120, 0
    %v450 = vsel %vm226, %v121, 0
    %v453 = vsel %vm226, %v122, 0
    %v456 = vsel %vm226, %v123, 0
    %v459 = vsel %vm226, %v124, 0
    %v462 = vsel %vm226, %v125, 0
    %v465 = vsel %vm226, %v126, 0
    %v468 = vsel %vm226, %v127, 0
    %v471 = vsel %vm226, %v128, 0
    %v474 = vsel %vm226, %v129, 0
    %v477 = vsel %vm226, %v130, 0
    %v480 = vsel %vm226, %v131, 0
    %v483 = vsel %vm226, %v132, 0
    %v486 = vsel %vm226, %v133, 0
    %v489 = vsel %vm226, %v134, 0
    %v492 = vsel %vm226, %v135, 0
    %v495 = vsel %vm226, %v136, 0
    %v498 = vsel %vm226, %v137, 0
    %v501 = vsel %vm226, %v138, 0
    %v504 = vsel %vm226, %v139, 0
    %v507 = vsel %vm226, %v140, 0
    %v510 = vsel %vm226, %v141, 0
    %v513 = vsel %vm226, %v142, 0
    %v516 = vsel %vm226, %v143, 0
    %v519 = vsel %vm226, %v144, 0
    %v522 = vsel %vm226, %v145, 0
    %v525 = vsel %vm226, %v146, 0
    %v528 = vsel %vm226, %v147, 0
    %v531 = vsel %vm226, %v148, 0
    %v534 = vsel %vm226, %v149, 0
    %v537 = vsel %vm226, %v150, 0
    %v540 = vsel %vm226, %v151, 0
    %v543 = vsel %vm226, %v152, 0
    %v546 = vsel %vm226, %v153, 0
    %v549 = vsel %vm226, %v154, 0
    %v552 = vsel %vm226, %v155, 0
    %v555 = vsel %vm226, %v156, 0
    %v558 = vsel %vm226, %v157, 0
    %v561 = vsel %vm226, %v158, 0
    %v564 = vsel %vm226, %v159, 0
    %v567 = vsel %vm226, %v160, 0
    %v570 = vsel %vm226, %v161, 0
    %v573 = vsel %vm226, %v162, 0
    %v576 = vsel %vm226, %v163, 0
    %v579 = vsel %vm226, %v164, 0
    %v582 = vsel %vm226, %v165, 0
    %v585 = vsel %vm226, %v166, 0
    %v588 = vsel %vm226, %v167, 0
    %v591 = vsel %vm226, %v168, 0
    %v594 = vsel %vm226, %v169, 0
    %v597 = vsel %vm226, %v170, 0
    %v600 = vsel %vm226, %v171, 0
    %v603 = vsel %vm226, %v172, 0
    %v606 = vsel %vm226, %v173, 0
    %v609 = vsel %vm226, %v174, 0
    %v612 = vsel %vm226, %v175, 0
    %v615 = vsel %vm226, %v176, 0
    %v618 = vsel %vm226, %v177, 0
    %v621 = vsel %vm226, %v178, 0
    %v624 = vsel %vm226, %v179, 0
    %v627 = vsel %vm226, %v180, 0
    %v630 = vsel %vm226, %v181, 0
    %v633 = vsel %vm226, %v182, 0
    %v636 = vsel %vm226, %v183, 0
    %v639 = vsel %vm226, %v184, 0
    %v642 = vsel %vm226, %v185, 0
    %v645 = vsel %vm226, %v186, 0
    %v648 = vsel %vm226, %v187, 0
    %v651 = vsel %vm226, %v188, 0
    %v654 = vsel %vm226, %v189, 0
    %v657 = vsel %vm226, %v190, 0
    %v660 = vsel %vm226, %v191, 0
    %v663 = vsel %vm226, %v192, 0
    %v666 = vsel %vm226, %v193, 0
    %v669 = vsel %vm226, %v194, 0
    %v672 = vsel %vm226, %v195, 0
    %v675 = vsel %vm226, %v196, 0
    %v678 = vsel %vm226, %v197, 0
    %v681 = vsel %vm226, %v198, 0
    %v684 = vsel %vm226, %v199, 0
    %v687 = vsel %vm226, %v200, 0
    %v690 = vsel %vm226, %v201, 0
    %v693 = vsel %vm226, %v202, 0
    %v696 = vsel %vm226, %v203, 0
    %v699 = vsel %vm226, %v204, 0
    %v702 = vsel %vm226, %v205, 0
    %v705 = vsel %vm226, %v206, 0
    %v708 = vsel %vm226, %v207, 0
    %v711 = vsel %vm226, %v208, 0
    %v714 = vsel %vm226, %v209, 0
    %v717 = vsel %vm226, %v210, 0
    %v720 = vsel %vm226, %v211, 0
    %v723 = vsel %vm226, %v212, 0
    %v726 = vsel %vm226, %v213, 0
    %v729 = vsel %vm226, %v214, 0
    %v732 = vsel %vm226, %v215, 0
    %v735 = vsel %vm226, %v216, 0
    %v738 = vsel %vm226, %v217, 0
    %v741 = vsel %vm226, %v218, 0
    %v744 = vsel %vm226, %v219, 0
    %v747 = vsel %vm226, %v220, 0
    %v750 = vsel %vm226, %v221, 0
    %v753 = vsel %vm226, %v222, 0
    %vm755 = vcmask 1044480
    %v757 = vsel %vm755, %v45, 0
    %759 = vmatpush.msra.mxu0 0.0
    %760 = vmatpush.msra.mxu0 0.0
    %761 = vmatpush.msra.mxu0 0.0
    %762 = vmatpush.msra.mxu0 0.0
    %763 = vmatpush.msra.mxu0 0.0
    %764 = vmatpush.msra.mxu0 0.0
    %765 = vmatpush.msra.mxu0 0.0
    %766 = vmatpush.msra.mxu0 0.0
    %767 = vmatpush.msra.mxu0 0.0
    %768 = vmatpush.msra.mxu0 0.0
    %769 = vmatpush.msra.mxu0 0.0
    %770 = vmatpush.msra.mxu0 0.0
    %771 = vmatpush.msra.mxu0 0.0
    %772 = vmatpush.msra.mxu0 0.0
    %773 = vmatpush.msra.mxu0 0.0
    %774 = vmatpush.msra.mxu0 %v757
    %775 = vmatmul.f32.gmra.mxu0 %v228
    %v776 = vpop.f32.mrf.mxu0
    %v777 = vadd.f32 %v224, %v776
    %778 = vmatmul.f32.gmra.mxu0 %v231
    %v779 = vpop.f32.mrf.mxu0
    %v780 = vadd.f32 %v224, %v779
    %781 = vmatmul.f32.gmra.mxu0 %v234
    %v782 = vpop.f32.mrf.mxu0
    %v783 = vadd.f32 %v224, %v782
    %784 = vmatmul.f32.gmra.mxu0 %v237
    %v785 = vpop.f32.mrf.mxu0
    %v786 = vadd.f32 %v224, %v785
    %787 = vmatmul.f32.gmra.mxu0 %v240
    %v788 = vpop.f32.mrf.mxu0
    %v789 = vadd.f32 %v224, %v788
    %790 = vmatmul.f32.gmra.mxu0 %v243
    %v791 = vpop.f32.mrf.mxu0
    %v792 = vadd.f32 %v224, %v791
    %793 = vmatmul.f32.gmra.mxu0 %v246
    %v794 = vpop.f32.mrf.mxu0
    %v795 = vadd.f32 %v224, %v794
    %796 = vmatmul.f32.gmra.mxu0 %v249
    %v797 = vpop.f32.mrf.mxu0
    %v798 = vadd.f32 %v224, %v797
    %799 = vmatmul.f32.gmra.mxu0 %v252
    %v800 = vpop.f32.mrf.mxu0
    %v801 = vadd.f32 %v224, %v800
    %802 = vmatmul.f32.gmra.mxu0 %v255
    %v803 = vpop.f32.mrf.mxu0
    %v804 = vadd.f32 %v224, %v803
    %805 = vmatmul.f32.gmra.mxu0 %v258
    %v806 = vpop.f32.mrf.mxu0
    %v807 = vadd.f32 %v224, %v806
    %808 = vmatmul.f32.gmra.mxu0 %v261
    %v809 = vpop.f32.mrf.mxu0
    %v810 = vadd.f32 %v224, %v809
    %811 = vmatmul.f32.gmra.mxu0 %v264
    %v812 = vpop.f32.mrf.mxu0
    %v813 = vadd.f32 %v224, %v812
    %814 = vmatmul.f32.gmra.mxu0 %v267
    %v815 = vpop.f32.mrf.mxu0
    %v816 = vadd.f32 %v224, %v815
    %817 = vmatmul.f32.gmra.mxu0 %v270
    %v818 = vpop.f32.mrf.mxu0
    %v819 = vadd.f32 %v224, %v818
    %820 = vmatmul.f32.gmra.mxu0 %v273
    %v821 = vpop.f32.mrf.mxu0
    %v822 = vadd.f32 %v224, %v821
    %823 = vmatmul.f32.gmra.mxu0 %v276
    %v824 = vpop.f32.mrf.mxu0
    %v825 = vadd.f32 %v224, %v824
    %826 = vmatmul.f32.gmra.mxu0 %v279
    %v827 = vpop.f32.mrf.mxu0
    %v828 = vadd.f32 %v224, %v827
    %829 = vmatmul.f32.gmra.mxu0 %v282
    %v830 = vpop.f32.mrf.mxu0
    %v831 = vadd.f32 %v224, %v830
    %832 = vmatmul.f32.gmra.mxu0 %v285
    %v833 = vpop.f32.mrf.mxu0
    %v834 = vadd.f32 %v224, %v833
    %835 = vmatmul.f32.gmra.mxu0 %v288
    %v836 = vpop.f32.mrf.mxu0
    %v837 = vadd.f32 %v224, %v836
    %838 = vmatmul.f32.gmra.mxu0 %v291
    %v839 = vpop.f32.mrf.mxu0
    %v840 = vadd.f32 %v224, %v839
    %841 = vmatmul.f32.gmra.mxu0 %v294
    %v842 = vpop.f32.mrf.mxu0
    %v843 = vadd.f32 %v224, %v842
    %844 = vmatmul.f32.gmra.mxu0 %v297
    %v845 = vpop.f32.mrf.mxu0
    %v846 = vadd.f32 %v224, %v845
    %847 = vmatmul.f32.gmra.mxu0 %v300
    %v848 = vpop.f32.mrf.mxu0
    %v849 = vadd.f32 %v224, %v848
    %850 = vmatmul.f32.gmra.mxu0 %v303
    %v851 = vpop.f32.mrf.mxu0
    %v852 = vadd.f32 %v224, %v851
    %853 = vmatmul.f32.gmra.mxu0 %v306
    %v854 = vpop.f32.mrf.mxu0
    %v855 = vadd.f32 %v224, %v854
    %856 = vmatmul.f32.gmra.mxu0 %v309
    %v857 = vpop.f32.mrf.mxu0
    %v858 = vadd.f32 %v224, %v857
    %859 = vmatmul.f32.gmra.mxu0 %v312
    %v860 = vpop.f32.mrf.mxu0
    %v861 = vadd.f32 %v224, %v860
    %862 = vmatmul.f32.gmra.mxu0 %v315
    %v863 = vpop.f32.mrf.mxu0
    %v864 = vadd.f32 %v224, %v863
    %865 = vmatmul.f32.gmra.mxu0 %v318
    %v866 = vpop.f32.mrf.mxu0
    %v867 = vadd.f32 %v224, %v866
    %868 = vmatmul.f32.gmra.mxu0 %v321
    %v869 = vpop.f32.mrf.mxu0
    %v870 = vadd.f32 %v224, %v869
    %871 = vmatmul.f32.gmra.mxu0 %v324
    %v872 = vpop.f32.mrf.mxu0
    %v873 = vadd.f32 %v224, %v872
    %874 = vmatmul.f32.gmra.mxu0 %v327
    %v875 = vpop.f32.mrf.mxu0
    %v876 = vadd.f32 %v224, %v875
    %877 = vmatmul.f32.gmra.mxu0 %v330
    %v878 = vpop.f32.mrf.mxu0
    %v879 = vadd.f32 %v224, %v878
    %880 = vmatmul.f32.gmra.mxu0 %v333
    %v881 = vpop.f32.mrf.mxu0
    %v882 = vadd.f32 %v224, %v881
    %883 = vmatmul.f32.gmra.mxu0 %v336
    %v884 = vpop.f32.mrf.mxu0
    %v885 = vadd.f32 %v224, %v884
    %886 = vmatmul.f32.gmra.mxu0 %v339
    %v887 = vpop.f32.mrf.mxu0
    %v888 = vadd.f32 %v224, %v887
    %889 = vmatmul.f32.gmra.mxu0 %v342
    %v890 = vpop.f32.mrf.mxu0
    %v891 = vadd.f32 %v224, %v890
    %892 = vmatmul.f32.gmra.mxu0 %v345
    %v893 = vpop.f32.mrf.mxu0
    %v894 = vadd.f32 %v224, %v893
    %895 = vmatmul.f32.gmra.mxu0 %v348
    %v896 = vpop.f32.mrf.mxu0
    %v897 = vadd.f32 %v224, %v896
    %898 = vmatmul.f32.gmra.mxu0 %v351
    %v899 = vpop.f32.mrf.mxu0
    %v900 = vadd.f32 %v224, %v899
    %901 = vmatmul.f32.gmra.mxu0 %v354
    %v902 = vpop.f32.mrf.mxu0
    %v903 = vadd.f32 %v224, %v902
    %904 = vmatmul.f32.gmra.mxu0 %v357
    %v905 = vpop.f32.mrf.mxu0
    %v906 = vadd.f32 %v224, %v905
    %907 = vmatmul.f32.gmra.mxu0 %v360
    %v908 = vpop.f32.mrf.mxu0
    %v909 = vadd.f32 %v224, %v908
    %910 = vmatmul.f32.gmra.mxu0 %v363
    %v911 = vpop.f32.mrf.mxu0
    %v912 = vadd.f32 %v224, %v911
    %913 = vmatmul.f32.gmra.mxu0 %v366
    %v914 = vpop.f32.mrf.mxu0
    %v915 = vadd.f32 %v224, %v914
    %916 = vmatmul.f32.gmra.mxu0 %v369
    %v917 = vpop.f32.mrf.mxu0
    %v918 = vadd.f32 %v224, %v917
    %919 = vmatmul.f32.gmra.mxu0 %v372
    %v920 = vpop.f32.mrf.mxu0
    %v921 = vadd.f32 %v224, %v920
    %922 = vmatmul.f32.gmra.mxu0 %v375
    %v923 = vpop.f32.mrf.mxu0
    %v924 = vadd.f32 %v224, %v923
    %925 = vmatmul.f32.gmra.mxu0 %v378
    %v926 = vpop.f32.mrf.mxu0
    %v927 = vadd.f32 %v224, %v926
    %928 = vmatmul.f32.gmra.mxu0 %v381
    %v929 = vpop.f32.mrf.mxu0
    %v930 = vadd.f32 %v224, %v929
    %931 = vmatmul.f32.gmra.mxu0 %v384
    %v932 = vpop.f32.mrf.mxu0
    %v933 = vadd.f32 %v224, %v932
    %934 = vmatmul.f32.gmra.mxu0 %v387
    %v935 = vpop.f32.mrf.mxu0
    %v936 = vadd.f32 %v224, %v935
    %937 = vmatmul.f32.gmra.mxu0 %v390
    %v938 = vpop.f32.mrf.mxu0
    %v939 = vadd.f32 %v224, %v938
    %940 = vmatmul.f32.gmra.mxu0 %v393
    %v941 = vpop.f32.mrf.mxu0
    %v942 = vadd.f32 %v224, %v941
    %943 = vmatmul.f32.gmra.mxu0 %v396
    %v944 = vpop.f32.mrf.mxu0
    %v945 = vadd.f32 %v224, %v944
    %946 = vmatmul.f32.gmra.mxu0 %v399
    %v947 = vpop.f32.mrf.mxu0
    %v948 = vadd.f32 %v224, %v947
    %949 = vmatmul.f32.gmra.mxu0 %v402
    %v950 = vpop.f32.mrf.mxu0
    %v951 = vadd.f32 %v224, %v950
    %952 = vmatmul.f32.gmra.mxu0 %v405
    %v953 = vpop.f32.mrf.mxu0
    %v954 = vadd.f32 %v224, %v953
    %955 = vmatmul.f32.gmra.mxu0 %v408
    %v956 = vpop.f32.mrf.mxu0
    %v957 = vadd.f32 %v224, %v956
    %958 = vmatmul.f32.gmra.mxu0 %v411
    %v959 = vpop.f32.mrf.mxu0
    %v960 = vadd.f32 %v224, %v959
    %961 = vmatmul.f32.gmra.mxu0 %v414
    %v962 = vpop.f32.mrf.mxu0
    %v963 = vadd.f32 %v224, %v962
    %964 = vmatmul.f32.gmra.mxu0 %v417
    %v965 = vpop.f32.mrf.mxu0
    %v966 = vadd.f32 %v224, %v965
    %967 = vmatmul.f32.gmra.mxu0 %v420
    %v968 = vpop.f32.mrf.mxu0
    %v969 = vadd.f32 %v224, %v968
    %970 = vmatmul.f32.gmra.mxu0 %v423
    %v971 = vpop.f32.mrf.mxu0
    %v972 = vadd.f32 %v224, %v971
    %973 = vmatmul.f32.gmra.mxu0 %v426
    %v974 = vpop.f32.mrf.mxu0
    %v975 = vadd.f32 %v224, %v974
    %976 = vmatmul.f32.gmra.mxu0 %v429
    %v977 = vpop.f32.mrf.mxu0
    %v978 = vadd.f32 %v224, %v977
    %979 = vmatmul.f32.gmra.mxu0 %v432
    %v980 = vpop.f32.mrf.mxu0
    %v981 = vadd.f32 %v224, %v980
    %982 = vmatmul.f32.gmra.mxu0 %v435
    %v983 = vpop.f32.mrf.mxu0
    %v984 = vadd.f32 %v224, %v983
    %985 = vmatmul.f32.gmra.mxu0 %v438
    %v986 = vpop.f32.mrf.mxu0
    %v987 = vadd.f32 %v224, %v986
    %988 = vmatmul.f32.gmra.mxu0 %v441
    %v989 = vpop.f32.mrf.mxu0
    %v990 = vadd.f32 %v224, %v989
    %991 = vmatmul.f32.gmra.mxu0 %v444
    %v992 = vpop.f32.mrf.mxu0
    %v993 = vadd.f32 %v224, %v992
    %994 = vmatmul.f32.gmra.mxu0 %v447
    %v995 = vpop.f32.mrf.mxu0
    %v996 = vadd.f32 %v224, %v995
    %997 = vmatmul.f32.gmra.mxu0 %v450
    %v998 = vpop.f32.mrf.mxu0
    %v999 = vadd.f32 %v224, %v998
    %1000 = vmatmul.f32.gmra.mxu0 %v453
    %v1001 = vpop.f32.mrf.mxu0
    %v1002 = vadd.f32 %v224, %v1001
    %1003 = vmatmul.f32.gmra.mxu0 %v456
    %v1004 = vpop.f32.mrf.mxu0
    %v1005 = vadd.f32 %v224, %v1004
    %1006 = vmatmul.f32.gmra.mxu0 %v459
    %v1007 = vpop.f32.mrf.mxu0
    %v1008 = vadd.f32 %v224, %v1007
    %1009 = vmatmul.f32.gmra.mxu0 %v462
    %v1010 = vpop.f32.mrf.mxu0
    %v1011 = vadd.f32 %v224, %v1010
    %1012 = vmatmul.f32.gmra.mxu0 %v465
    %v1013 = vpop.f32.mrf.mxu0
    %v1014 = vadd.f32 %v224, %v1013
    %1015 = vmatmul.f32.gmra.mxu0 %v468
    %v1016 = vpop.f32.mrf.mxu0
    %v1017 = vadd.f32 %v224, %v1016
    %1018 = vmatmul.f32.gmra.mxu0 %v471
    %v1019 = vpop.f32.mrf.mxu0
    %v1020 = vadd.f32 %v224, %v1019
    %1021 = vmatmul.f32.gmra.mxu0 %v474
    %v1022 = vpop.f32.mrf.mxu0
    %v1023 = vadd.f32 %v224, %v1022
    %1024 = vmatmul.f32.gmra.mxu0 %v477
    %v1025 = vpop.f32.mrf.mxu0
    %v1026 = vadd.f32 %v224, %v1025
    %1027 = vmatmul.f32.gmra.mxu0 %v480
    %v1028 = vpop.f32.mrf.mxu0
    %v1029 = vadd.f32 %v224, %v1028
    %1030 = vmatmul.f32.gmra.mxu0 %v483
    %v1031 = vpop.f32.mrf.mxu0
    %v1032 = vadd.f32 %v224, %v1031
    %1033 = vmatmul.f32.gmra.mxu0 %v486
    %v1034 = vpop.f32.mrf.mxu0
    %v1035 = vadd.f32 %v224, %v1034
    %1036 = vmatmul.f32.gmra.mxu0 %v489
    %v1037 = vpop.f32.mrf.mxu0
    %v1038 = vadd.f32 %v224, %v1037
    %1039 = vmatmul.f32.gmra.mxu0 %v492
    %v1040 = vpop.f32.mrf.mxu0
    %v1041 = vadd.f32 %v224, %v1040
    %1042 = vmatmul.f32.gmra.mxu0 %v495
    %v1043 = vpop.f32.mrf.mxu0
    %v1044 = vadd.f32 %v224, %v1043
    %1045 = vmatmul.f32.gmra.mxu0 %v498
    %v1046 = vpop.f32.mrf.mxu0
    %v1047 = vadd.f32 %v224, %v1046
    %1048 = vmatmul.f32.gmra.mxu0 %v501
    %v1049 = vpop.f32.mrf.mxu0
    %v1050 = vadd.f32 %v224, %v1049
    %1051 = vmatmul.f32.gmra.mxu0 %v504
    %v1052 = vpop.f32.mrf.mxu0
    %v1053 = vadd.f32 %v224, %v1052
    %1054 = vmatmul.f32.gmra.mxu0 %v507
    %v1055 = vpop.f32.mrf.mxu0
    %v1056 = vadd.f32 %v224, %v1055
    %1057 = vmatmul.f32.gmra.mxu0 %v510
    %v1058 = vpop.f32.mrf.mxu0
    %v1059 = vadd.f32 %v224, %v1058
    %1060 = vmatmul.f32.gmra.mxu0 %v513
    %v1061 = vpop.f32.mrf.mxu0
    %v1062 = vadd.f32 %v224, %v1061
    %1063 = vmatmul.f32.gmra.mxu0 %v516
    %v1064 = vpop.f32.mrf.mxu0
    %v1065 = vadd.f32 %v224, %v1064
    %1066 = vmatmul.f32.gmra.mxu0 %v519
    %v1067 = vpop.f32.mrf.mxu0
    %v1068 = vadd.f32 %v224, %v1067
    %1069 = vmatmul.f32.gmra.mxu0 %v522
    %v1070 = vpop.f32.mrf.mxu0
    %v1071 = vadd.f32 %v224, %v1070
    %1072 = vmatmul.f32.gmra.mxu0 %v525
    %v1073 = vpop.f32.mrf.mxu0
    %v1074 = vadd.f32 %v224, %v1073
    %1075 = vmatmul.f32.gmra.mxu0 %v528
    %v1076 = vpop.f32.mrf.mxu0
    %v1077 = vadd.f32 %v224, %v1076
    %1078 = vmatmul.f32.gmra.mxu0 %v531
    %v1079 = vpop.f32.mrf.mxu0
    %v1080 = vadd.f32 %v224, %v1079
    %1081 = vmatmul.f32.gmra.mxu0 %v534
    %v1082 = vpop.f32.mrf.mxu0
    %v1083 = vadd.f32 %v224, %v1082
    %1084 = vmatmul.f32.gmra.mxu0 %v537
    %v1085 = vpop.f32.mrf.mxu0
    %v1086 = vadd.f32 %v224, %v1085
    %1087 = vmatmul.f32.gmra.mxu0 %v540
    %v1088 = vpop.f32.mrf.mxu0
    %v1089 = vadd.f32 %v224, %v1088
    %1090 = vmatmul.f32.gmra.mxu0 %v543
    %v1091 = vpop.f32.mrf.mxu0
    %v1092 = vadd.f32 %v224, %v1091
    %1093 = vmatmul.f32.gmra.mxu0 %v546
    %v1094 = vpop.f32.mrf.mxu0
    %v1095 = vadd.f32 %v224, %v1094
    %1096 = vmatmul.f32.gmra.mxu0 %v549
    %v1097 = vpop.f32.mrf.mxu0
    %v1098 = vadd.f32 %v224, %v1097
    %1099 = vmatmul.f32.gmra.mxu0 %v552
    %v1100 = vpop.f32.mrf.mxu0
    %v1101 = vadd.f32 %v224, %v1100
    %1102 = vmatmul.f32.gmra.mxu0 %v555
    %v1103 = vpop.f32.mrf.mxu0
    %v1104 = vadd.f32 %v224, %v1103
    %1105 = vmatmul.f32.gmra.mxu0 %v558
    %v1106 = vpop.f32.mrf.mxu0
    %v1107 = vadd.f32 %v224, %v1106
    %1108 = vmatmul.f32.gmra.mxu0 %v561
    %v1109 = vpop.f32.mrf.mxu0
    %v1110 = vadd.f32 %v224, %v1109
    %1111 = vmatmul.f32.gmra.mxu0 %v564
    %v1112 = vpop.f32.mrf.mxu0
    %v1113 = vadd.f32 %v224, %v1112
    %1114 = vmatmul.f32.gmra.mxu0 %v567
    %v1115 = vpop.f32.mrf.mxu0
    %v1116 = vadd.f32 %v224, %v1115
    %1117 = vmatmul.f32.gmra.mxu0 %v570
    %v1118 = vpop.f32.mrf.mxu0
    %v1119 = vadd.f32 %v224, %v1118
    %1120 = vmatmul.f32.gmra.mxu0 %v573
    %v1121 = vpop.f32.mrf.mxu0
    %v1122 = vadd.f32 %v224, %v1121
    %1123 = vmatmul.f32.gmra.mxu0 %v576
    %v1124 = vpop.f32.mrf.mxu0
    %v1125 = vadd.f32 %v224, %v1124
    %1126 = vmatmul.f32.gmra.mxu0 %v579
    %v1127 = vpop.f32.mrf.mxu0
    %v1128 = vadd.f32 %v224, %v1127
    %1129 = vmatmul.f32.gmra.mxu0 %v582
    %v1130 = vpop.f32.mrf.mxu0
    %v1131 = vadd.f32 %v224, %v1130
    %1132 = vmatmul.f32.gmra.mxu0 %v585
    %v1133 = vpop.f32.mrf.mxu0
    %v1134 = vadd.f32 %v224, %v1133
    %1135 = vmatmul.f32.gmra.mxu0 %v588
    %v1136 = vpop.f32.mrf.mxu0
    %v1137 = vadd.f32 %v224, %v1136
    %1138 = vmatmul.f32.gmra.mxu0 %v591
    %v1139 = vpop.f32.mrf.mxu0
    %v1140 = vadd.f32 %v224, %v1139
    %1141 = vmatmul.f32.gmra.mxu0 %v594
    %v1142 = vpop.f32.mrf.mxu0
    %v1143 = vadd.f32 %v224, %v1142
    %1144 = vmatmul.f32.gmra.mxu0 %v597
    %v1145 = vpop.f32.mrf.mxu0
    %v1146 = vadd.f32 %v224, %v1145
    %1147 = vmatmul.f32.gmra.mxu0 %v600
    %v1148 = vpop.f32.mrf.mxu0
    %v1149 = vadd.f32 %v224, %v1148
    %1150 = vmatmul.f32.gmra.mxu0 %v603
    %v1151 = vpop.f32.mrf.mxu0
    %v1152 = vadd.f32 %v224, %v1151
    %1153 = vmatmul.f32.gmra.mxu0 %v606
    %v1154 = vpop.f32.mrf.mxu0
    %v1155 = vadd.f32 %v224, %v1154
    %1156 = vmatmul.f32.gmra.mxu0 %v609
    %v1157 = vpop.f32.mrf.mxu0
    %v1158 = vadd.f32 %v224, %v1157
    %1159 = vmatmul.f32.gmra.mxu0 %v612
    %v1160 = vpop.f32.mrf.mxu0
    %v1161 = vadd.f32 %v224, %v1160
    %1162 = vmatmul.f32.gmra.mxu0 %v615
    %v1163 = vpop.f32.mrf.mxu0
    %v1164 = vadd.f32 %v224, %v1163
    %1165 = vmatmul.f32.gmra.mxu0 %v618
    %v1166 = vpop.f32.mrf.mxu0
    %v1167 = vadd.f32 %v224, %v1166
    %1168 = vmatmul.f32.gmra.mxu0 %v621
    %v1169 = vpop.f32.mrf.mxu0
    %v1170 = vadd.f32 %v224, %v1169
    %1171 = vmatmul.f32.gmra.mxu0 %v624
    %v1172 = vpop.f32.mrf.mxu0
    %v1173 = vadd.f32 %v224, %v1172
    %1174 = vmatmul.f32.gmra.mxu0 %v627
    %v1175 = vpop.f32.mrf.mxu0
    %v1176 = vadd.f32 %v224, %v1175
    %1177 = vmatmul.f32.gmra.mxu0 %v630
    %v1178 = vpop.f32.mrf.mxu0
    %v1179 = vadd.f32 %v224, %v1178
    %1180 = vmatmul.f32.gmra.mxu0 %v633
    %v1181 = vpop.f32.mrf.mxu0
    %v1182 = vadd.f32 %v224, %v1181
    %1183 = vmatmul.f32.gmra.mxu0 %v636
    %v1184 = vpop.f32.mrf.mxu0
    %v1185 = vadd.f32 %v224, %v1184
    %1186 = vmatmul.f32.gmra.mxu0 %v639
    %v1187 = vpop.f32.mrf.mxu0
    %v1188 = vadd.f32 %v224, %v1187
    %1189 = vmatmul.f32.gmra.mxu0 %v642
    %v1190 = vpop.f32.mrf.mxu0
    %v1191 = vadd.f32 %v224, %v1190
    %1192 = vmatmul.f32.gmra.mxu0 %v645
    %v1193 = vpop.f32.mrf.mxu0
    %v1194 = vadd.f32 %v224, %v1193
    %1195 = vmatmul.f32.gmra.mxu0 %v648
    %v1196 = vpop.f32.mrf.mxu0
    %v1197 = vadd.f32 %v224, %v1196
    %1198 = vmatmul.f32.gmra.mxu0 %v651
    %v1199 = vpop.f32.mrf.mxu0
    %v1200 = vadd.f32 %v224, %v1199
    %1201 = vmatmul.f32.gmra.mxu0 %v654
    %v1202 = vpop.f32.mrf.mxu0
    %v1203 = vadd.f32 %v224, %v1202
    %1204 = vmatmul.f32.gmra.mxu0 %v657
    %v1205 = vpop.f32.mrf.mxu0
    %v1206 = vadd.f32 %v224, %v1205
    %1207 = vmatmul.f32.gmra.mxu0 %v660
    %v1208 = vpop.f32.mrf.mxu0
    %v1209 = vadd.f32 %v224, %v1208
    %1210 = vmatmul.f32.gmra.mxu0 %v663
    %v1211 = vpop.f32.mrf.mxu0
    %v1212 = vadd.f32 %v224, %v1211
    %1213 = vmatmul.f32.gmra.mxu0 %v666
    %v1214 = vpop.f32.mrf.mxu0
    %v1215 = vadd.f32 %v224, %v1214
    %1216 = vmatmul.f32.gmra.mxu0 %v669
    %v1217 = vpop.f32.mrf.mxu0
    %v1218 = vadd.f32 %v224, %v1217
    %1219 = vmatmul.f32.gmra.mxu0 %v672
    %v1220 = vpop.f32.mrf.mxu0
    %v1221 = vadd.f32 %v224, %v1220
    %1222 = vmatmul.f32.gmra.mxu0 %v675
    %v1223 = vpop.f32.mrf.mxu0
    %v1224 = vadd.f32 %v224, %v1223
    %1225 = vmatmul.f32.gmra.mxu0 %v678
    %v1226 = vpop.f32.mrf.mxu0
    %v1227 = vadd.f32 %v224, %v1226
    %1228 = vmatmul.f32.gmra.mxu0 %v681
    %v1229 = vpop.f32.mrf.mxu0
    %v1230 = vadd.f32 %v224, %v1229
    %1231 = vmatmul.f32.gmra.mxu0 %v684
    %v1232 = vpop.f32.mrf.mxu0
    %v1233 = vadd.f32 %v224, %v1232
    %1234 = vmatmul.f32.gmra.mxu0 %v687
    %v1235 = vpop.f32.mrf.mxu0
    %v1236 = vadd.f32 %v224, %v1235
    %1237 = vmatmul.f32.gmra.mxu0 %v690
    %v1238 = vpop.f32.mrf.mxu0
    %v1239 = vadd.f32 %v224, %v1238
    %1240 = vmatmul.f32.gmra.mxu0 %v693
    %v1241 = vpop.f32.mrf.mxu0
    %v1242 = vadd.f32 %v224, %v1241
    %1243 = vmatmul.f32.gmra.mxu0 %v696
    %v1244 = vpop.f32.mrf.mxu0
    %v1245 = vadd.f32 %v224, %v1244
    %1246 = vmatmul.f32.gmra.mxu0 %v699
    %v1247 = vpop.f32.mrf.mxu0
    %v1248 = vadd.f32 %v224, %v1247
    %1249 = vmatmul.f32.gmra.mxu0 %v702
    %v1250 = vpop.f32.mrf.mxu0
    %v1251 = vadd.f32 %v224, %v1250
    %1252 = vmatmul.f32.gmra.mxu0 %v705
    %v1253 = vpop.f32.mrf.mxu0
    %v1254 = vadd.f32 %v224, %v1253
    %1255 = vmatmul.f32.gmra.mxu0 %v708
    %v1256 = vpop.f32.mrf.mxu0
    %v1257 = vadd.f32 %v224, %v1256
    %1258 = vmatmul.f32.gmra.mxu0 %v711
    %v1259 = vpop.f32.mrf.mxu0
    %v1260 = vadd.f32 %v224, %v1259
    %1261 = vmatmul.f32.gmra.mxu0 %v714
    %v1262 = vpop.f32.mrf.mxu0
    %v1263 = vadd.f32 %v224, %v1262
    %1264 = vmatmul.f32.gmra.mxu0 %v717
    %v1265 = vpop.f32.mrf.mxu0
    %v1266 = vadd.f32 %v224, %v1265
    %1267 = vmatmul.f32.gmra.mxu0 %v720
    %v1268 = vpop.f32.mrf.mxu0
    %v1269 = vadd.f32 %v224, %v1268
    %1270 = vmatmul.f32.gmra.mxu0 %v723
    %v1271 = vpop.f32.mrf.mxu0
    %v1272 = vadd.f32 %v224, %v1271
    %1273 = vmatmul.f32.gmra.mxu0 %v726
    %v1274 = vpop.f32.mrf.mxu0
    %v1275 = vadd.f32 %v224, %v1274
    %1276 = vmatmul.f32.gmra.mxu0 %v729
    %v1277 = vpop.f32.mrf.mxu0
    %v1278 = vadd.f32 %v224, %v1277
    %1279 = vmatmul.f32.gmra.mxu0 %v732
    %v1280 = vpop.f32.mrf.mxu0
    %v1281 = vadd.f32 %v224, %v1280
    %1282 = vmatmul.f32.gmra.mxu0 %v735
    %v1283 = vpop.f32.mrf.mxu0
    %v1284 = vadd.f32 %v224, %v1283
    %1285 = vmatmul.f32.gmra.mxu0 %v738
    %v1286 = vpop.f32.mrf.mxu0
    %v1287 = vadd.f32 %v224, %v1286
    %1288 = vmatmul.f32.gmra.mxu0 %v741
    %v1289 = vpop.f32.mrf.mxu0
    %v1290 = vadd.f32 %v224, %v1289
    %1291 = vmatmul.f32.gmra.mxu0 %v744
    %v1292 = vpop.f32.mrf.mxu0
    %v1293 = vadd.f32 %v224, %v1292
    %1294 = vmatmul.f32.gmra.mxu0 %v747
    %v1295 = vpop.f32.mrf.mxu0
    %v1296 = vadd.f32 %v224, %v1295
    %1297 = vmatmul.f32.gmra.mxu0 %v750
    %v1298 = vpop.f32.mrf.mxu0
    %v1299 = vadd.f32 %v224, %v1298
    %1300 = vmatmul.f32.gmra.mxu0 %v753
    %v1301 = vpop.f32.mrf.mxu0
    %v1302 = vadd.f32 %v224, %v1301
    %1303 = vdwg.mxu0
    %v1304 = vmax.f32 %v777, 0.0
    %v1305 = vmax.f32 %v780, 0.0
    %v1306 = vmax.f32 %v783, 0.0
    %v1307 = vmax.f32 %v786, 0.0
    %v1308 = vmax.f32 %v789, 0.0
    %v1309 = vmax.f32 %v792, 0.0
    %v1310 = vmax.f32 %v795, 0.0
    %v1311 = vmax.f32 %v798, 0.0
    %v1312 = vmax.f32 %v801, 0.0
    %v1313 = vmax.f32 %v804, 0.0
    %v1314 = vmax.f32 %v807, 0.0
    %v1315 = vmax.f32 %v810, 0.0
    %v1316 = vmax.f32 %v813, 0.0
    %v1317 = vmax.f32 %v816, 0.0
    %v1318 = vmax.f32 %v819, 0.0
    %v1319 = vmax.f32 %v822, 0.0
    %v1320 = vmax.f32 %v825, 0.0
    %v1321 = vmax.f32 %v828, 0.0
    %v1322 = vmax.f32 %v831, 0.0
    %v1323 = vmax.f32 %v834, 0.0
    %v1324 = vmax.f32 %v837, 0.0
    %v1325 = vmax.f32 %v840, 0.0
    %v1326 = vmax.f32 %v843, 0.0
    %v1327 = vmax.f32 %v846, 0.0
    %v1328 = vmax.f32 %v849, 0.0
    %v1329 = vmax.f32 %v852, 0.0
    %v1330 = vmax.f32 %v855, 0.0
    %v1331 = vmax.f32 %v858, 0.0
    %v1332 = vmax.f32 %v861, 0.0
    %v1333 = vmax.f32 %v864, 0.0
    %v1334 = vmax.f32 %v867, 0.0
    %v1335 = vmax.f32 %v870, 0.0
    %v1336 = vmax.f32 %v873, 0.0
    %v1337 = vmax.f32 %v876, 0.0
    %v1338 = vmax.f32 %v879, 0.0
    %v1339 = vmax.f32 %v882, 0.0
    %v1340 = vmax.f32 %v885, 0.0
    %v1341 = vmax.f32 %v888, 0.0
    %v1342 = vmax.f32 %v891, 0.0
    %v1343 = vmax.f32 %v894, 0.0
    %v1344 = vmax.f32 %v897, 0.0
    %v1345 = vmax.f32 %v900, 0.0
    %v1346 = vmax.f32 %v903, 0.0
    %v1347 = vmax.f32 %v906, 0.0
    %v1348 = vmax.f32 %v909, 0.0
    %v1349 = vmax.f32 %v912, 0.0
    %v1350 = vmax.f32 %v915, 0.0
    %v1351 = vmax.f32 %v918, 0.0
    %v1352 = vmax.f32 %v921, 0.0
    %v1353 = vmax.f32 %v924, 0.0
    %v1354 = vmax.f32 %v927, 0.0
    %v1355 = vmax.f32 %v930, 0.0
    %v1356 = vmax.f32 %v933, 0.0
    %v1357 = vmax.f32 %v936, 0.0
    %v1358 = vmax.f32 %v939, 0.0
    %v1359 = vmax.f32 %v942, 0.0
    %v1360 = vmax.f32 %v945, 0.0
    %v1361 = vmax.f32 %v948, 0.0
    %v1362 = vmax.f32 %v951, 0.0
    %v1363 = vmax.f32 %v954, 0.0
    %v1364 = vmax.f32 %v957, 0.0
    %v1365 = vmax.f32 %v960, 0.0
    %v1366 = vmax.f32 %v963, 0.0
    %v1367 = vmax.f32 %v966, 0.0
    %v1368 = vmax.f32 %v969, 0.0
    %v1369 = vmax.f32 %v972, 0.0
    %v1370 = vmax.f32 %v975, 0.0
    %v1371 = vmax.f32 %v978, 0.0
    %v1372 = vmax.f32 %v981, 0.0
    %v1373 = vmax.f32 %v984, 0.0
    %v1374 = vmax.f32 %v987, 0.0
    %v1375 = vmax.f32 %v990, 0.0
    %v1376 = vmax.f32 %v993, 0.0
    %v1377 = vmax.f32 %v996, 0.0
    %v1378 = vmax.f32 %v999, 0.0
    %v1379 = vmax.f32 %v1002, 0.0
    %v1380 = vmax.f32 %v1005, 0.0
    %v1381 = vmax.f32 %v1008, 0.0
    %v1382 = vmax.f32 %v1011, 0.0
    %v1383 = vmax.f32 %v1014, 0.0
    %v1384 = vmax.f32 %v1017, 0.0
    %v1385 = vmax.f32 %v1020, 0.0
    %v1386 = vmax.f32 %v1023, 0.0
    %v1387 = vmax.f32 %v1026, 0.0
    %v1388 = vmax.f32 %v1029, 0.0
    %v1389 = vmax.f32 %v1032, 0.0
    %v1390 = vmax.f32 %v1035, 0.0
    %v1391 = vmax.f32 %v1038, 0.0
    %v1392 = vmax.f32 %v1041, 0.0
    %v1393 = vmax.f32 %v1044, 0.0
    %v1394 = vmax.f32 %v1047, 0.0
    %v1395 = vmax.f32 %v1050, 0.0
    %v1396 = vmax.f32 %v1053, 0.0
    %v1397 = vmax.f32 %v1056, 0.0
    %v1398 = vmax.f32 %v1059, 0.0
    %v1399 = vmax.f32 %v1062, 0.0
    %v1400 = vmax.f32 %v1065, 0.0
    %v1401 = vmax.f32 %v1068, 0.0
    %v1402 = vmax.f32 %v1071, 0.0
    %v1403 = vmax.f32 %v1074, 0.0
    %v1404 = vmax.f32 %v1077, 0.0
    %v1405 = vmax.f32 %v1080, 0.0
    %v1406 = vmax.f32 %v1083, 0.0
    %v1407 = vmax.f32 %v1086, 0.0
    %v1408 = vmax.f32 %v1089, 0.0
    %v1409 = vmax.f32 %v1092, 0.0
    %v1410 = vmax.f32 %v1095, 0.0
    %v1411 = vmax.f32 %v1098, 0.0
    %v1412 = vmax.f32 %v1101, 0.0
    %v1413 = vmax.f32 %v1104, 0.0
    %v1414 = vmax.f32 %v1107, 0.0
    %v1415 = vmax.f32 %v1110, 0.0
    %v1416 = vmax.f32 %v1113, 0.0
    %v1417 = vmax.f32 %v1116, 0.0
    %v1418 = vmax.f32 %v1119, 0.0
    %v1419 = vmax.f32 %v1122, 0.0
    %v1420 = vmax.f32 %v1125, 0.0
    %v1421 = vmax.f32 %v1128, 0.0
    %v1422 = vmax.f32 %v1131, 0.0
    %v1423 = vmax.f32 %v1134, 0.0
    %v1424 = vmax.f32 %v1137, 0.0
    %v1425 = vmax.f32 %v1140, 0.0
    %v1426 = vmax.f32 %v1143, 0.0
    %v1427 = vmax.f32 %v1146, 0.0
    %v1428 = vmax.f32 %v1149, 0.0
    %v1429 = vmax.f32 %v1152, 0.0
    %v1430 = vmax.f32 %v1155, 0.0
    %v1431 = vmax.f32 %v1158, 0.0
    %v1432 = vmax.f32 %v1161, 0.0
    %v1433 = vmax.f32 %v1164, 0.0
    %v1434 = vmax.f32 %v1167, 0.0
    %v1435 = vmax.f32 %v1170, 0.0
    %v1436 = vmax.f32 %v1173, 0.0
    %v1437 = vmax.f32 %v1176, 0.0
    %v1438 = vmax.f32 %v1179, 0.0
    %v1439 = vmax.f32 %v1182, 0.0
    %v1440 = vmax.f32 %v1185, 0.0
    %v1441 = vmax.f32 %v1188, 0.0
    %v1442 = vmax.f32 %v1191, 0.0
    %v1443 = vmax.f32 %v1194, 0.0
    %v1444 = vmax.f32 %v1197, 0.0
    %v1445 = vmax.f32 %v1200, 0.0
    %v1446 = vmax.f32 %v1203, 0.0
    %v1447 = vmax.f32 %v1206, 0.0
    %v1448 = vmax.f32 %v1209, 0.0
    %v1449 = vmax.f32 %v1212, 0.0
    %v1450 = vmax.f32 %v1215, 0.0
    %v1451 = vmax.f32 %v1218, 0.0
    %v1452 = vmax.f32 %v1221, 0.0
    %v1453 = vmax.f32 %v1224, 0.0
    %v1454 = vmax.f32 %v1227, 0.0
    %v1455 = vmax.f32 %v1230, 0.0
    %v1456 = vmax.f32 %v1233, 0.0
    %v1457 = vmax.f32 %v1236, 0.0
    %v1458 = vmax.f32 %v1239, 0.0
    %v1459 = vmax.f32 %v1242, 0.0
    %v1460 = vmax.f32 %v1245, 0.0
    %v1461 = vmax.f32 %v1248, 0.0
    %v1462 = vmax.f32 %v1251, 0.0
    %v1463 = vmax.f32 %v1254, 0.0
    %v1464 = vmax.f32 %v1257, 0.0
    %v1465 = vmax.f32 %v1260, 0.0
    %v1466 = vmax.f32 %v1263, 0.0
    %v1467 = vmax.f32 %v1266, 0.0
    %v1468 = vmax.f32 %v1269, 0.0
    %v1469 = vmax.f32 %v1272, 0.0
    %v1470 = vmax.f32 %v1275, 0.0
    %v1471 = vmax.f32 %v1278, 0.0
    %v1472 = vmax.f32 %v1281, 0.0
    %v1473 = vmax.f32 %v1284, 0.0
    %v1474 = vmax.f32 %v1287, 0.0
    %v1475 = vmax.f32 %v1290, 0.0
    %v1476 = vmax.f32 %v1293, 0.0
    %v1477 = vmax.f32 %v1296, 0.0
    %v1478 = vmax.f32 %v1299, 0.0
    %v1479 = vmax.f32 %v1302, 0.0
    %v1480 = vld [vmem:[%s1] sm:$0xff]
    %v1481 = vld [vmem:[%s1 + $0x8] sm:$0xff]
    %v1482 = vld [vmem:[%s1 + $0x10] sm:$0xff]
    %v1483 = vld [vmem:[%s1 + $0x18] sm:$0xff]
    %v1484 = vld [vmem:[%s1 + $0x20] sm:$0xff]
    %v1485 = vld [vmem:[%s1 + $0x28] sm:$0xff]
    %v1486 = vld [vmem:[%s1 + $0x30] sm:$0xff]
    %v1487 = vld [vmem:[%s1 + $0x38] sm:$0xff]
    %v1488 = vld [vmem:[%s1 + $0x40] sm:$0xff]
    %v1489 = vld [vmem:[%s1 + $0x48] sm:$0xff]
    %v1490 = vld [vmem:[%s1 + $0x50] sm:$0xff]
    %v1491 = vld [vmem:[%s1 + $0x58] sm:$0xff]
    %v1492 = vld [vmem:[%s1 + $0x60] sm:$0xff]
    %v1493 = vld [vmem:[%s1 + $0x68] sm:$0xff]
    %v1494 = vld [vmem:[%s1 + $0x70] sm:$0xff]
    %v1495 = vld [vmem:[%s1 + $0x78] sm:$0xff]
    %v1496 = vld [vmem:[%s1 + $0x80] sm:$0xff]
    %v1497 = vld [vmem:[%s1 + $0x88] sm:$0xff]
    %v1498 = vld [vmem:[%s1 + $0x90] sm:$0xff]
    %v1499 = vld [vmem:[%s1 + $0x98] sm:$0xff]
    %v1500 = vld [vmem:[%s1 + $0xa0] sm:$0xff]
    %v1501 = vld [vmem:[%s1 + $0xa8] sm:$0xff]
    %v1502 = vld [vmem:[%s1 + $0xb0] sm:$0xff]
    %v1503 = vld [vmem:[%s1 + $0xb8] sm:$0xff]
    %v1504 = vld [vmem:[%s1 + $0xc0] sm:$0xff]
    %v1505 = vld [vmem:[%s1 + $0xc8] sm:$0xff]
    %v1506 = vld [vmem:[%s1 + $0xd0] sm:$0xff]
    %v1507 = vld [vmem:[%s1 + $0xd8] sm:$0xff]
    %v1508 = vld [vmem:[%s1 + $0xe0] sm:$0xff]
    %v1509 = vld [vmem:[%s1 + $0xe8] sm:$0xff]
    %v1510 = vld [vmem:[%s1 + $0xf0] sm:$0xff]
    %v1511 = vld [vmem:[%s1 + $0xf8] sm:$0xff]
    %v1512 = vld [vmem:[%s1 + $0x100] sm:$0xff]
    %v1513 = vld [vmem:[%s1 + $0x108] sm:$0xff]
    %v1514 = vld [vmem:[%s1 + $0x110] sm:$0xff]
    %v1515 = vld [vmem:[%s1 + $0x118] sm:$0xff]
    %v1516 = vld [vmem:[%s1 + $0x120] sm:$0xff]
    %v1517 = vld [vmem:[%s1 + $0x128] sm:$0xff]
    %v1518 = vld [vmem:[%s1 + $0x130] sm:$0xff]
    %v1519 = vld [vmem:[%s1 + $0x138] sm:$0xff]
    %v1520 = vld [vmem:[%s1 + $0x140] sm:$0xff]
    %v1521 = vld [vmem:[%s1 + $0x148] sm:$0xff]
    %v1522 = vld [vmem:[%s1 + $0x150] sm:$0xff]
    %v1523 = vld [vmem:[%s1 + $0x158] sm:$0xff]
    %v1524 = vld [vmem:[%s1 + $0x160] sm:$0xff]
    %v1525 = vld [vmem:[%s1 + $0x168] sm:$0xff]
    %v1526 = vld [vmem:[%s1 + $0x170] sm:$0xff]
    %v1527 = vld [vmem:[%s1 + $0x178] sm:$0xff]
    %v1528 = vld [vmem:[%s1 + $0x180] sm:$0xff]
    %v1529 = vld [vmem:[%s1 + $0x188] sm:$0xff]
    %v1530 = vld [vmem:[%s1 + $0x190] sm:$0xff]
    %v1531 = vld [vmem:[%s1 + $0x198] sm:$0xff]
    %v1532 = vld [vmem:[%s1 + $0x1a0] sm:$0xff]
    %v1533 = vld [vmem:[%s1 + $0x1a8] sm:$0xff]
    %v1534 = vld [vmem:[%s1 + $0x1b0] sm:$0xff]
    %v1535 = vld [vmem:[%s1 + $0x1b8] sm:$0xff]
    %v1536 = vld [vmem:[%s1 + $0x1c0] sm:$0xff]
    %v1537 = vld [vmem:[%s1 + $0x1c8] sm:$0xff]
    %v1538 = vld [vmem:[%s1 + $0x1d0] sm:$0xff]
    %v1539 = vld [vmem:[%s1 + $0x1d8] sm:$0xff]
    %v1540 = vld [vmem:[%s1 + $0x1e0] sm:$0xff]
    %v1541 = vld [vmem:[%s1 + $0x1e8] sm:$0xff]
    %v1542 = vld [vmem:[%s1 + $0x1f0] sm:$0xff]
    %v1543 = vld [vmem:[%s1 + $0x1f8] sm:$0xff]
    %v1544 = vld [vmem:[%s1 + $0x200] sm:$0xff]
    %v1545 = vld [vmem:[%s1 + $0x208] sm:$0xff]
    %v1546 = vld [vmem:[%s1 + $0x210] sm:$0xff]
    %v1547 = vld [vmem:[%s1 + $0x218] sm:$0xff]
    %v1548 = vld [vmem:[%s1 + $0x220] sm:$0xff]
    %v1549 = vld [vmem:[%s1 + $0x228] sm:$0xff]
    %v1550 = vld [vmem:[%s1 + $0x230] sm:$0xff]
    %v1551 = vld [vmem:[%s1 + $0x238] sm:$0xff]
    %v1552 = vld [vmem:[%s1 + $0x240] sm:$0xff]
    %v1553 = vld [vmem:[%s1 + $0x248] sm:$0xff]
    %v1554 = vld [vmem:[%s1 + $0x250] sm:$0xff]
    %v1555 = vld [vmem:[%s1 + $0x258] sm:$0xff]
    %v1556 = vld [vmem:[%s1 + $0x260] sm:$0xff]
    %v1557 = vld [vmem:[%s1 + $0x268] sm:$0xff]
    %v1558 = vld [vmem:[%s1 + $0x270] sm:$0xff]
    %v1559 = vld [vmem:[%s1 + $0x278] sm:$0xff]
    %v1560 = vld [vmem:[%s1 + $0x280] sm:$0xff]
    %v1561 = vld [vmem:[%s1 + $0x288] sm:$0xff]
    %v1562 = vld [vmem:[%s1 + $0x290] sm:$0xff]
    %v1563 = vld [vmem:[%s1 + $0x298] sm:$0xff]
    %v1564 = vld [vmem:[%s1 + $0x2a0] sm:$0xff]
    %v1565 = vld [vmem:[%s1 + $0x2a8] sm:$0xff]
    %v1566 = vld [vmem:[%s1 + $0x2b0] sm:$0xff]
    %v1567 = vld [vmem:[%s1 + $0x2b8] sm:$0xff]
    %v1568 = vld [vmem:[%s1 + $0x2c0] sm:$0xff]
    %v1569 = vld [vmem:[%s1 + $0x2c8] sm:$0xff]
    %v1570 = vld [vmem:[%s1 + $0x2d0] sm:$0xff]
    %v1571 = vld [vmem:[%s1 + $0x2d8] sm:$0xff]
    %v1572 = vld [vmem:[%s1 + $0x2e0] sm:$0xff]
    %v1573 = vld [vmem:[%s1 + $0x2e8] sm:$0xff]
    %v1574 = vld [vmem:[%s1 + $0x2f0] sm:$0xff]
    %v1575 = vld [vmem:[%s1 + $0x2f8] sm:$0xff]
    %v1576 = vld [vmem:[%s1 + $0x300] sm:$0xff]
    %v1577 = vld [vmem:[%s1 + $0x308] sm:$0xff]
    %v1578 = vld [vmem:[%s1 + $0x310] sm:$0xff]
    %v1579 = vld [vmem:[%s1 + $0x318] sm:$0xff]
    %v1580 = vld [vmem:[%s1 + $0x320] sm:$0xff]
    %v1581 = vld [vmem:[%s1 + $0x328] sm:$0xff]
    %v1582 = vld [vmem:[%s1 + $0x330] sm:$0xff]
    %v1583 = vld [vmem:[%s1 + $0x338] sm:$0xff]
    %v1584 = vld [vmem:[%s1 + $0x340] sm:$0xff]
    %v1585 = vld [vmem:[%s1 + $0x348] sm:$0xff]
    %v1586 = vld [vmem:[%s1 + $0x350] sm:$0xff]
    %v1587 = vld [vmem:[%s1 + $0x358] sm:$0xff]
    %v1588 = vld [vmem:[%s1 + $0x360] sm:$0xff]
    %v1589 = vld [vmem:[%s1 + $0x368] sm:$0xff]
    %v1590 = vld [vmem:[%s1 + $0x370] sm:$0xff]
    %v1591 = vld [vmem:[%s1 + $0x378] sm:$0xff]
    %v1592 = vld [vmem:[%s1 + $0x380] sm:$0xff]
    %v1593 = vld [vmem:[%s1 + $0x388] sm:$0xff]
    %v1594 = vld [vmem:[%s1 + $0x390] sm:$0xff]
    %v1595 = vld [vmem:[%s1 + $0x398] sm:$0xff]
    %v1596 = vld [vmem:[%s1 + $0x3a0] sm:$0xff]
    %v1597 = vld [vmem:[%s1 + $0x3a8] sm:$0xff]
    %v1598 = vld [vmem:[%s1 + $0x3b0] sm:$0xff]
    %v1599 = vld [vmem:[%s1 + $0x3b8] sm:$0xff]
    %v1600 = vld [vmem:[%s1 + $0x3c0] sm:$0xff]
    %v1601 = vld [vmem:[%s1 + $0x3c8] sm:$0xff]
    %v1602 = vld [vmem:[%s1 + $0x3d0] sm:$0xff]
    %v1603 = vld [vmem:[%s1 + $0x3d8] sm:$0xff]
    %v1604 = vld [vmem:[%s1 + $0x3e0] sm:$0xff]
    %v1605 = vld [vmem:[%s1 + $0x3e8] sm:$0xff]
    %v1606 = vld [vmem:[%s1 + $0x3f0] sm:$0xff]
    %v1607 = vld [vmem:[%s1 + $0x3f8] sm:$0xff]
    %v1608 = vld [vmem:[%s1 + $0x400] sm:$0xff]
    %v1609 = vld [vmem:[%s1 + $0x408] sm:$0xff]
    %v1610 = vld [vmem:[%s1 + $0x410] sm:$0xff]
    %v1611 = vld [vmem:[%s1 + $0x418] sm:$0xff]
    %v1612 = vld [vmem:[%s1 + $0x420] sm:$0xff]
    %v1613 = vld [vmem:[%s1 + $0x428] sm:$0xff]
    %v1614 = vld [vmem:[%s1 + $0x430] sm:$0xff]
    %v1615 = vld [vmem:[%s1 + $0x438] sm:$0xff]
    %v1616 = vld [vmem:[%s1 + $0x440] sm:$0xff]
    %v1617 = vld [vmem:[%s1 + $0x448] sm:$0xff]
    %v1618 = vld [vmem:[%s1 + $0x450] sm:$0xff]
    %v1619 = vld [vmem:[%s1 + $0x458] sm:$0xff]
    %v1620 = vld [vmem:[%s1 + $0x460] sm:$0xff]
    %v1621 = vld [vmem:[%s1 + $0x468] sm:$0xff]
    %v1622 = vld [vmem:[%s1 + $0x470] sm:$0xff]
    %v1623 = vld [vmem:[%s1 + $0x478] sm:$0xff]
    %v1624 = vld [vmem:[%s1 + $0x480] sm:$0xff]
    %v1625 = vld [vmem:[%s1 + $0x488] sm:$0xff]
    %v1626 = vld [vmem:[%s1 + $0x490] sm:$0xff]
    %v1627 = vld [vmem:[%s1 + $0x498] sm:$0xff]
    %v1628 = vld [vmem:[%s1 + $0x4a0] sm:$0xff]
    %v1629 = vld [vmem:[%s1 + $0x4a8] sm:$0xff]
    %v1630 = vld [vmem:[%s1 + $0x4b0] sm:$0xff]
    %v1631 = vld [vmem:[%s1 + $0x4b8] sm:$0xff]
    %v1632 = vld [vmem:[%s1 + $0x4c0] sm:$0xff]
    %v1633 = vld [vmem:[%s1 + $0x4c8] sm:$0xff]
    %v1634 = vld [vmem:[%s1 + $0x4d0] sm:$0xff]
    %v1635 = vld [vmem:[%s1 + $0x4d8] sm:$0xff]
    %v1636 = vld [vmem:[%s1 + $0x4e0] sm:$0xff]
    %v1637 = vld [vmem:[%s1 + $0x4e8] sm:$0xff]
    %v1638 = vld [vmem:[%s1 + $0x4f0] sm:$0xff]
    %v1639 = vld [vmem:[%s1 + $0x4f8] sm:$0xff]
    %v1640 = vld [vmem:[%s1 + $0x500] sm:$0xff]
    %v1641 = vld [vmem:[%s1 + $0x508] sm:$0xff]
    %v1642 = vld [vmem:[%s1 + $0x510] sm:$0xff]
    %v1643 = vld [vmem:[%s1 + $0x518] sm:$0xff]
    %v1644 = vld [vmem:[%s1 + $0x520] sm:$0xff]
    %v1645 = vld [vmem:[%s1 + $0x528] sm:$0xff]
    %v1646 = vld [vmem:[%s1 + $0x530] sm:$0xff]
    %v1647 = vld [vmem:[%s1 + $0x538] sm:$0xff]
    %v1648 = vld [vmem:[%s1 + $0x540] sm:$0xff]
    %v1649 = vld [vmem:[%s1 + $0x548] sm:$0xff]
    %v1650 = vld [vmem:[%s1 + $0x550] sm:$0xff]
    %v1651 = vld [vmem:[%s1 + $0x558] sm:$0xff]
    %v1652 = vld [vmem:[%s1 + $0x560] sm:$0xff]
    %v1653 = vld [vmem:[%s1 + $0x568] sm:$0xff]
    %v1654 = vld [vmem:[%s1 + $0x570] sm:$0xff]
    %v1655 = vld [vmem:[%s1 + $0x578] sm:$0x3f]
    %v1657 = vsel %vm226, %v1480, 0
    %v1660 = vsel %vm226, %v1481, 0
    %v1663 = vsel %vm226, %v1482, 0
    %v1666 = vsel %vm226, %v1483, 0
    %v1669 = vsel %vm226, %v1484, 0
    %v1672 = vsel %vm226, %v1485, 0
    %v1675 = vsel %vm226, %v1486, 0
    %v1678 = vsel %vm226, %v1487, 0
    %v1681 = vsel %vm226, %v1488, 0
    %v1684 = vsel %vm226, %v1489, 0
    %v1687 = vsel %vm226, %v1490, 0
    %v1690 = vsel %vm226, %v1491, 0
    %v1693 = vsel %vm226, %v1492, 0
    %v1696 = vsel %vm226, %v1493, 0
    %v1699 = vsel %vm226, %v1494, 0
    %v1702 = vsel %vm226, %v1495, 0
    %v1705 = vsel %vm226, %v1496, 0
    %v1708 = vsel %vm226, %v1497, 0
    %v1711 = vsel %vm226, %v1498, 0
    %v1714 = vsel %vm226, %v1499, 0
    %v1717 = vsel %vm226, %v1500, 0
    %v1720 = vsel %vm226, %v1501, 0
    %v1723 = vsel %vm226, %v1502, 0
    %v1726 = vsel %vm226, %v1503, 0
    %v1729 = vsel %vm226, %v1504, 0
    %v1732 = vsel %vm226, %v1505, 0
    %v1735 = vsel %vm226, %v1506, 0
    %v1738 = vsel %vm226, %v1507, 0
    %v1741 = vsel %vm226, %v1508, 0
    %v1744 = vsel %vm226, %v1509, 0
    %v1747 = vsel %vm226, %v1510, 0
    %v1750 = vsel %vm226, %v1511, 0
    %v1753 = vsel %vm226, %v1512, 0
    %v1756 = vsel %vm226, %v1513, 0
    %v1759 = vsel %vm226, %v1514, 0
    %v1762 = vsel %vm226, %v1515, 0
    %v1765 = vsel %vm226, %v1516, 0
    %v1768 = vsel %vm226, %v1517, 0
    %v1771 = vsel %vm226, %v1518, 0
    %v1774 = vsel %vm226, %v1519, 0
    %v1777 = vsel %vm226, %v1520, 0
    %v1780 = vsel %vm226, %v1521, 0
    %v1783 = vsel %vm226, %v1522, 0
    %v1786 = vsel %vm226, %v1523, 0
    %v1789 = vsel %vm226, %v1524, 0
    %v1792 = vsel %vm226, %v1525, 0
    %v1795 = vsel %vm226, %v1526, 0
    %v1798 = vsel %vm226, %v1527, 0
    %v1801 = vsel %vm226, %v1528, 0
    %v1804 = vsel %vm226, %v1529, 0
    %v1807 = vsel %vm226, %v1530, 0
    %v1810 = vsel %vm226, %v1531, 0
    %v1813 = vsel %vm226, %v1532, 0
    %v1816 = vsel %vm226, %v1533, 0
    %v1819 = vsel %vm226, %v1534, 0
    %v1822 = vsel %vm226, %v1535, 0
    %v1825 = vsel %vm226, %v1536, 0
    %v1828 = vsel %vm226, %v1537, 0
    %v1831 = vsel %vm226, %v1538, 0
    %v1834 = vsel %vm226, %v1539, 0
    %v1837 = vsel %vm226, %v1540, 0
    %v1840 = vsel %vm226, %v1541, 0
    %v1843 = vsel %vm226, %v1542, 0
    %v1846 = vsel %vm226, %v1543, 0
    %v1849 = vsel %vm226, %v1544, 0
    %v1852 = vsel %vm226, %v1545, 0
    %v1855 = vsel %vm226, %v1546, 0
    %v1858 = vsel %vm226, %v1547, 0
    %v1861 = vsel %vm226, %v1548, 0
    %v1864 = vsel %vm226, %v1549, 0
    %v1867 = vsel %vm226, %v1550, 0
    %v1870 = vsel %vm226, %v1551, 0
    %v1873 = vsel %vm226, %v1552, 0
    %v1876 = vsel %vm226, %v1553, 0
    %v1879 = vsel %vm226, %v1554, 0
    %v1882 = vsel %vm226, %v1555, 0
    %v1885 = vsel %vm226, %v1556, 0
    %v1888 = vsel %vm226, %v1557, 0
    %v1891 = vsel %vm226, %v1558, 0
    %v1894 = vsel %vm226, %v1559, 0
    %v1897 = vsel %vm226, %v1560, 0
    %v1900 = vsel %vm226, %v1561, 0
    %v1903 = vsel %vm226, %v1562, 0
    %v1906 = vsel %vm226, %v1563, 0
    %v1909 = vsel %vm226, %v1564, 0
    %v1912 = vsel %vm226, %v1565, 0
    %v1915 = vsel %vm226, %v1566, 0
    %v1918 = vsel %vm226, %v1567, 0
    %v1921 = vsel %vm226, %v1568, 0
    %v1924 = vsel %vm226, %v1569, 0
    %v1927 = vsel %vm226, %v1570, 0
    %v1930 = vsel %vm226, %v1571, 0
    %v1933 = vsel %vm226, %v1572, 0
    %v1936 = vsel %vm226, %v1573, 0
    %v1939 = vsel %vm226, %v1574, 0
    %v1942 = vsel %vm226, %v1575, 0
    %v1945 = vsel %vm226, %v1576, 0
    %v1948 = vsel %vm226, %v1577, 0
    %v1951 = vsel %vm226, %v1578, 0
    %v1954 = vsel %vm226, %v1579, 0
    %v1957 = vsel %vm226, %v1580, 0
    %v1960 = vsel %vm226, %v1581, 0
    %v1963 = vsel %vm226, %v1582, 0
    %v1966 = vsel %vm226, %v1583, 0
    %v1969 = vsel %vm226, %v1584, 0
    %v1972 = vsel %vm226, %v1585, 0
    %v1975 = vsel %vm226, %v1586, 0
    %v1978 = vsel %vm226, %v1587, 0
    %v1981 = vsel %vm226, %v1588, 0
    %v1984 = vsel %vm226, %v1589, 0
    %v1987 = vsel %vm226, %v1590, 0
    %v1990 = vsel %vm226, %v1591, 0
    %v1993 = vsel %vm226, %v1592, 0
    %v1996 = vsel %vm226, %v1593, 0
    %v1999 = vsel %vm226, %v1594, 0
    %v2002 = vsel %vm226, %v1595, 0
    %v2005 = vsel %vm226, %v1596, 0
    %v2008 = vsel %vm226, %v1597, 0
    %v2011 = vsel %vm226, %v1598, 0
    %v2014 = vsel %vm226, %v1599, 0
    %v2017 = vsel %vm226, %v1600, 0
    %v2020 = vsel %vm226, %v1601, 0
    %v2023 = vsel %vm226, %v1602, 0
    %v2026 = vsel %vm226, %v1603, 0
    %v2029 = vsel %vm226, %v1604, 0
    %v2032 = vsel %vm226, %v1605, 0
    %v2035 = vsel %vm226, %v1606, 0
    %v2038 = vsel %vm226, %v1607, 0
    %v2041 = vsel %vm226, %v1608, 0
    %v2044 = vsel %vm226, %v1609, 0
    %v2047 = vsel %vm226, %v1610, 0
    %v2050 = vsel %vm226, %v1611, 0
    %v2053 = vsel %vm226, %v1612, 0
    %v2056 = vsel %vm226, %v1613, 0
    %v2059 = vsel %vm226, %v1614, 0
    %v2062 = vsel %vm226, %v1615, 0
    %v2065 = vsel %vm226, %v1616, 0
    %v2068 = vsel %vm226, %v1617, 0
    %v2071 = vsel %vm226, %v1618, 0
    %v2074 = vsel %vm226, %v1619, 0
    %v2077 = vsel %vm226, %v1620, 0
    %v2080 = vsel %vm226, %v1621, 0
    %v2083 = vsel %vm226, %v1622, 0
    %v2086 = vsel %vm226, %v1623, 0
    %v2089 = vsel %vm226, %v1624, 0
    %v2092 = vsel %vm226, %v1625, 0
    %v2095 = vsel %vm226, %v1626, 0
    %v2098 = vsel %vm226, %v1627, 0
    %v2101 = vsel %vm226, %v1628, 0
    %v2104 = vsel %vm226, %v1629, 0
    %v2107 = vsel %vm226, %v1630, 0
    %v2110 = vsel %vm226, %v1631, 0
    %v2113 = vsel %vm226, %v1632, 0
    %v2116 = vsel %vm226, %v1633, 0
    %v2119 = vsel %vm226, %v1634, 0
    %v2122 = vsel %vm226, %v1635, 0
    %v2125 = vsel %vm226, %v1636, 0
    %v2128 = vsel %vm226, %v1637, 0
    %v2131 = vsel %vm226, %v1638, 0
    %v2134 = vsel %vm226, %v1639, 0
    %v2137 = vsel %vm226, %v1640, 0
    %v2140 = vsel %vm226, %v1641, 0
    %v2143 = vsel %vm226, %v1642, 0
    %v2146 = vsel %vm226, %v1643, 0
    %v2149 = vsel %vm226, %v1644, 0
    %v2152 = vsel %vm226, %v1645, 0
    %v2155 = vsel %vm226, %v1646, 0
    %v2158 = vsel %vm226, %v1647, 0
    %v2161 = vsel %vm226, %v1648, 0
    %v2164 = vsel %vm226, %v1649, 0
    %v2167 = vsel %vm226, %v1650, 0
    %v2170 = vsel %vm226, %v1651, 0
    %v2173 = vsel %vm226, %v1652, 0
    %v2176 = vsel %vm226, %v1653, 0
    %v2179 = vsel %vm226, %v1654, 0
    %v2182 = vsel %vm226, %v1655, 0
    %2184 = vmatpush.msra.mxu0 0.0
    %2185 = vmatpush.msra.mxu0 0.0
    %2186 = vmatpush.msra.mxu0 0.0
    %2187 = vmatpush.msra.mxu0 0.0
    %2188 = vmatpush.msra.mxu0 0.0
    %2189 = vmatpush.msra.mxu0 0.0
    %2190 = vmatpush.msra.mxu0 0.0
    %2191 = vmatpush.msra.mxu0 0.0
    %2192 = vmatpush.msra.mxu0 0.0
    %2193 = vmatpush.msra.mxu0 0.0
    %2194 = vmatpush.msra.mxu0 0.0
    %2195 = vmatpush.msra.mxu0 0.0
    %2196 = vmatpush.msra.mxu0 0.0
    %2197 = vmatpush.msra.mxu0 0.0
    %2198 = vmatpush.msra.mxu0 0.0
    %2199 = vmatpush.msra.mxu0 %v757
    %2200 = vmatmul.f32.gmra.mxu0 %v1657
    %v2201 = vpop.f32.mrf.mxu0
    %v2202 = vadd.f32 %v224, %v2201
    %2203 = vmatmul.f32.gmra.mxu0 %v1660
    %v2204 = vpop.f32.mrf.mxu0
    %v2205 = vadd.f32 %v224, %v2204
    %2206 = vmatmul.f32.gmra.mxu0 %v1663
    %v2207 = vpop.f32.mrf.mxu0
    %v2208 = vadd.f32 %v224, %v2207
    %2209 = vmatmul.f32.gmra.mxu0 %v1666
    %v2210 = vpop.f32.mrf.mxu0
    %v2211 = vadd.f32 %v224, %v2210
    %2212 = vmatmul.f32.gmra.mxu0 %v1669
    %v2213 = vpop.f32.mrf.mxu0
    %v2214 = vadd.f32 %v224, %v2213
    %2215 = vmatmul.f32.gmra.mxu0 %v1672
    %v2216 = vpop.f32.mrf.mxu0
    %v2217 = vadd.f32 %v224, %v2216
    %2218 = vmatmul.f32.gmra.mxu0 %v1675
    %v2219 = vpop.f32.mrf.mxu0
    %v2220 = vadd.f32 %v224, %v2219
    %2221 = vmatmul.f32.gmra.mxu0 %v1678
    %v2222 = vpop.f32.mrf.mxu0
    %v2223 = vadd.f32 %v224, %v2222
    %2224 = vmatmul.f32.gmra.mxu0 %v1681
    %v2225 = vpop.f32.mrf.mxu0
    %v2226 = vadd.f32 %v224, %v2225
    %2227 = vmatmul.f32.gmra.mxu0 %v1684
    %v2228 = vpop.f32.mrf.mxu0
    %v2229 = vadd.f32 %v224, %v2228
    %2230 = vmatmul.f32.gmra.mxu0 %v1687
    %v2231 = vpop.f32.mrf.mxu0
    %v2232 = vadd.f32 %v224, %v2231
    %2233 = vmatmul.f32.gmra.mxu0 %v1690
    %v2234 = vpop.f32.mrf.mxu0
    %v2235 = vadd.f32 %v224, %v2234
    %2236 = vmatmul.f32.gmra.mxu0 %v1693
    %v2237 = vpop.f32.mrf.mxu0
    %v2238 = vadd.f32 %v224, %v2237
    %2239 = vmatmul.f32.gmra.mxu0 %v1696
    %v2240 = vpop.f32.mrf.mxu0
    %v2241 = vadd.f32 %v224, %v2240
    %2242 = vmatmul.f32.gmra.mxu0 %v1699
    %v2243 = vpop.f32.mrf.mxu0
    %v2244 = vadd.f32 %v224, %v2243
    %2245 = vmatmul.f32.gmra.mxu0 %v1702
    %v2246 = vpop.f32.mrf.mxu0
    %v2247 = vadd.f32 %v224, %v2246
    %2248 = vmatmul.f32.gmra.mxu0 %v1705
    %v2249 = vpop.f32.mrf.mxu0
    %v2250 = vadd.f32 %v224, %v2249
    %2251 = vmatmul.f32.gmra.mxu0 %v1708
    %v2252 = vpop.f32.mrf.mxu0
    %v2253 = vadd.f32 %v224, %v2252
    %2254 = vmatmul.f32.gmra.mxu0 %v1711
    %v2255 = vpop.f32.mrf.mxu0
    %v2256 = vadd.f32 %v224, %v2255
    %2257 = vmatmul.f32.gmra.mxu0 %v1714
    %v2258 = vpop.f32.mrf.mxu0
    %v2259 = vadd.f32 %v224, %v2258
    %2260 = vmatmul.f32.gmra.mxu0 %v1717
    %v2261 = vpop.f32.mrf.mxu0
    %v2262 = vadd.f32 %v224, %v2261
    %2263 = vmatmul.f32.gmra.mxu0 %v1720
    %v2264 = vpop.f32.mrf.mxu0
    %v2265 = vadd.f32 %v224, %v2264
    %2266 = vmatmul.f32.gmra.mxu0 %v1723
    %v2267 = vpop.f32.mrf.mxu0
    %v2268 = vadd.f32 %v224, %v2267
    %2269 = vmatmul.f32.gmra.mxu0 %v1726
    %v2270 = vpop.f32.mrf.mxu0
    %v2271 = vadd.f32 %v224, %v2270
    %2272 = vmatmul.f32.gmra.mxu0 %v1729
    %v2273 = vpop.f32.mrf.mxu0
    %v2274 = vadd.f32 %v224, %v2273
    %2275 = vmatmul.f32.gmra.mxu0 %v1732
    %v2276 = vpop.f32.mrf.mxu0
    %v2277 = vadd.f32 %v224, %v2276
    %2278 = vmatmul.f32.gmra.mxu0 %v1735
    %v2279 = vpop.f32.mrf.mxu0
    %v2280 = vadd.f32 %v224, %v2279
    %2281 = vmatmul.f32.gmra.mxu0 %v1738
    %v2282 = vpop.f32.mrf.mxu0
    %v2283 = vadd.f32 %v224, %v2282
    %2284 = vmatmul.f32.gmra.mxu0 %v1741
    %v2285 = vpop.f32.mrf.mxu0
    %v2286 = vadd.f32 %v224, %v2285
    %2287 = vmatmul.f32.gmra.mxu0 %v1744
    %v2288 = vpop.f32.mrf.mxu0
    %v2289 = vadd.f32 %v224, %v2288
    %2290 = vmatmul.f32.gmra.mxu0 %v1747
    %v2291 = vpop.f32.mrf.mxu0
    %v2292 = vadd.f32 %v224, %v2291
    %2293 = vmatmul.f32.gmra.mxu0 %v1750
    %v2294 = vpop.f32.mrf.mxu0
    %v2295 = vadd.f32 %v224, %v2294
    %2296 = vmatmul.f32.gmra.mxu0 %v1753
    %v2297 = vpop.f32.mrf.mxu0
    %v2298 = vadd.f32 %v224, %v2297
    %2299 = vmatmul.f32.gmra.mxu0 %v1756
    %v2300 = vpop.f32.mrf.mxu0
    %v2301 = vadd.f32 %v224, %v2300
    %2302 = vmatmul.f32.gmra.mxu0 %v1759
    %v2303 = vpop.f32.mrf.mxu0
    %v2304 = vadd.f32 %v224, %v2303
    %2305 = vmatmul.f32.gmra.mxu0 %v1762
    %v2306 = vpop.f32.mrf.mxu0
    %v2307 = vadd.f32 %v224, %v2306
    %2308 = vmatmul.f32.gmra.mxu0 %v1765
    %v2309 = vpop.f32.mrf.mxu0
    %v2310 = vadd.f32 %v224, %v2309
    %2311 = vmatmul.f32.gmra.mxu0 %v1768
    %v2312 = vpop.f32.mrf.mxu0
    %v2313 = vadd.f32 %v224, %v2312
    %2314 = vmatmul.f32.gmra.mxu0 %v1771
    %v2315 = vpop.f32.mrf.mxu0
    %v2316 = vadd.f32 %v224, %v2315
    %2317 = vmatmul.f32.gmra.mxu0 %v1774
    %v2318 = vpop.f32.mrf.mxu0
    %v2319 = vadd.f32 %v224, %v2318
    %2320 = vmatmul.f32.gmra.mxu0 %v1777
    %v2321 = vpop.f32.mrf.mxu0
    %v2322 = vadd.f32 %v224, %v2321
    %2323 = vmatmul.f32.gmra.mxu0 %v1780
    %v2324 = vpop.f32.mrf.mxu0
    %v2325 = vadd.f32 %v224, %v2324
    %2326 = vmatmul.f32.gmra.mxu0 %v1783
    %v2327 = vpop.f32.mrf.mxu0
    %v2328 = vadd.f32 %v224, %v2327
    %2329 = vmatmul.f32.gmra.mxu0 %v1786
    %v2330 = vpop.f32.mrf.mxu0
    %v2331 = vadd.f32 %v224, %v2330
    %2332 = vmatmul.f32.gmra.mxu0 %v1789
    %v2333 = vpop.f32.mrf.mxu0
    %v2334 = vadd.f32 %v224, %v2333
    %2335 = vmatmul.f32.gmra.mxu0 %v1792
    %v2336 = vpop.f32.mrf.mxu0
    %v2337 = vadd.f32 %v224, %v2336
    %2338 = vmatmul.f32.gmra.mxu0 %v1795
    %v2339 = vpop.f32.mrf.mxu0
    %v2340 = vadd.f32 %v224, %v2339
    %2341 = vmatmul.f32.gmra.mxu0 %v1798
    %v2342 = vpop.f32.mrf.mxu0
    %v2343 = vadd.f32 %v224, %v2342
    %2344 = vmatmul.f32.gmra.mxu0 %v1801
    %v2345 = vpop.f32.mrf.mxu0
    %v2346 = vadd.f32 %v224, %v2345
    %2347 = vmatmul.f32.gmra.mxu0 %v1804
    %v2348 = vpop.f32.mrf.mxu0
    %v2349 = vadd.f32 %v224, %v2348
    %2350 = vmatmul.f32.gmra.mxu0 %v1807
    %v2351 = vpop.f32.mrf.mxu0
    %v2352 = vadd.f32 %v224, %v2351
    %2353 = vmatmul.f32.gmra.mxu0 %v1810
    %v2354 = vpop.f32.mrf.mxu0
    %v2355 = vadd.f32 %v224, %v2354
    %2356 = vmatmul.f32.gmra.mxu0 %v1813
    %v2357 = vpop.f32.mrf.mxu0
    %v2358 = vadd.f32 %v224, %v2357
    %2359 = vmatmul.f32.gmra.mxu0 %v1816
    %v2360 = vpop.f32.mrf.mxu0
    %v2361 = vadd.f32 %v224, %v2360
    %2362 = vmatmul.f32.gmra.mxu0 %v1819
    %v2363 = vpop.f32.mrf.mxu0
    %v2364 = vadd.f32 %v224, %v2363
    %2365 = vmatmul.f32.gmra.mxu0 %v1822
    %v2366 = vpop.f32.mrf.mxu0
    %v2367 = vadd.f32 %v224, %v2366
    %2368 = vmatmul.f32.gmra.mxu0 %v1825
    %v2369 = vpop.f32.mrf.mxu0
    %v2370 = vadd.f32 %v224, %v2369
    %2371 = vmatmul.f32.gmra.mxu0 %v1828
    %v2372 = vpop.f32.mrf.mxu0
    %v2373 = vadd.f32 %v224, %v2372
    %2374 = vmatmul.f32.gmra.mxu0 %v1831
    %v2375 = vpop.f32.mrf.mxu0
    %v2376 = vadd.f32 %v224, %v2375
    %2377 = vmatmul.f32.gmra.mxu0 %v1834
    %v2378 = vpop.f32.mrf.mxu0
    %v2379 = vadd.f32 %v224, %v2378
    %2380 = vmatmul.f32.gmra.mxu0 %v1837
    %v2381 = vpop.f32.mrf.mxu0
    %v2382 = vadd.f32 %v224, %v2381
    %2383 = vmatmul.f32.gmra.mxu0 %v1840
    %v2384 = vpop.f32.mrf.mxu0
    %v2385 = vadd.f32 %v224, %v2384
    %2386 = vmatmul.f32.gmra.mxu0 %v1843
    %v2387 = vpop.f32.mrf.mxu0
    %v2388 = vadd.f32 %v224, %v2387
    %2389 = vmatmul.f32.gmra.mxu0 %v1846
    %v2390 = vpop.f32.mrf.mxu0
    %v2391 = vadd.f32 %v224, %v2390
    %2392 = vmatmul.f32.gmra.mxu0 %v1849
    %v2393 = vpop.f32.mrf.mxu0
    %v2394 = vadd.f32 %v224, %v2393
    %2395 = vmatmul.f32.gmra.mxu0 %v1852
    %v2396 = vpop.f32.mrf.mxu0
    %v2397 = vadd.f32 %v224, %v2396
    %2398 = vmatmul.f32.gmra.mxu0 %v1855
    %v2399 = vpop.f32.mrf.mxu0
    %v2400 = vadd.f32 %v224, %v2399
    %2401 = vmatmul.f32.gmra.mxu0 %v1858
    %v2402 = vpop.f32.mrf.mxu0
    %v2403 = vadd.f32 %v224, %v2402
    %2404 = vmatmul.f32.gmra.mxu0 %v1861
    %v2405 = vpop.f32.mrf.mxu0
    %v2406 = vadd.f32 %v224, %v2405
    %2407 = vmatmul.f32.gmra.mxu0 %v1864
    %v2408 = vpop.f32.mrf.mxu0
    %v2409 = vadd.f32 %v224, %v2408
    %2410 = vmatmul.f32.gmra.mxu0 %v1867
    %v2411 = vpop.f32.mrf.mxu0
    %v2412 = vadd.f32 %v224, %v2411
    %2413 = vmatmul.f32.gmra.mxu0 %v1870
    %v2414 = vpop.f32.mrf.mxu0
    %v2415 = vadd.f32 %v224, %v2414
    %2416 = vmatmul.f32.gmra.mxu0 %v1873
    %v2417 = vpop.f32.mrf.mxu0
    %v2418 = vadd.f32 %v224, %v2417
    %2419 = vmatmul.f32.gmra.mxu0 %v1876
    %v2420 = vpop.f32.mrf.mxu0
    %v2421 = vadd.f32 %v224, %v2420
    %2422 = vmatmul.f32.gmra.mxu0 %v1879
    %v2423 = vpop.f32.mrf.mxu0
    %v2424 = vadd.f32 %v224, %v2423
    %2425 = vmatmul.f32.gmra.mxu0 %v1882
    %v2426 = vpop.f32.mrf.mxu0
    %v2427 = vadd.f32 %v224, %v2426
    %2428 = vmatmul.f32.gmra.mxu0 %v1885
    %v2429 = vpop.f32.mrf.mxu0
    %v2430 = vadd.f32 %v224, %v2429
    %2431 = vmatmul.f32.gmra.mxu0 %v1888
    %v2432 = vpop.f32.mrf.mxu0
    %v2433 = vadd.f32 %v224, %v2432
    %2434 = vmatmul.f32.gmra.mxu0 %v1891
    %v2435 = vpop.f32.mrf.mxu0
    %v2436 = vadd.f32 %v224, %v2435
    %2437 = vmatmul.f32.gmra.mxu0 %v1894
    %v2438 = vpop.f32.mrf.mxu0
    %v2439 = vadd.f32 %v224, %v2438
    %2440 = vmatmul.f32.gmra.mxu0 %v1897
    %v2441 = vpop.f32.mrf.mxu0
    %v2442 = vadd.f32 %v224, %v2441
    %2443 = vmatmul.f32.gmra.mxu0 %v1900
    %v2444 = vpop.f32.mrf.mxu0
    %v2445 = vadd.f32 %v224, %v2444
    %2446 = vmatmul.f32.gmra.mxu0 %v1903
    %v2447 = vpop.f32.mrf.mxu0
    %v2448 = vadd.f32 %v224, %v2447
    %2449 = vmatmul.f32.gmra.mxu0 %v1906
    %v2450 = vpop.f32.mrf.mxu0
    %v2451 = vadd.f32 %v224, %v2450
    %2452 = vmatmul.f32.gmra.mxu0 %v1909
    %v2453 = vpop.f32.mrf.mxu0
    %v2454 = vadd.f32 %v224, %v2453
    %2455 = vmatmul.f32.gmra.mxu0 %v1912
    %v2456 = vpop.f32.mrf.mxu0
    %v2457 = vadd.f32 %v224, %v2456
    %2458 = vmatmul.f32.gmra.mxu0 %v1915
    %v2459 = vpop.f32.mrf.mxu0
    %v2460 = vadd.f32 %v224, %v2459
    %2461 = vmatmul.f32.gmra.mxu0 %v1918
    %v2462 = vpop.f32.mrf.mxu0
    %v2463 = vadd.f32 %v224, %v2462
    %2464 = vmatmul.f32.gmra.mxu0 %v1921
    %v2465 = vpop.f32.mrf.mxu0
    %v2466 = vadd.f32 %v224, %v2465
    %2467 = vmatmul.f32.gmra.mxu0 %v1924
    %v2468 = vpop.f32.mrf.mxu0
    %v2469 = vadd.f32 %v224, %v2468
    %2470 = vmatmul.f32.gmra.mxu0 %v1927
    %v2471 = vpop.f32.mrf.mxu0
    %v2472 = vadd.f32 %v224, %v2471
    %2473 = vmatmul.f32.gmra.mxu0 %v1930
    %v2474 = vpop.f32.mrf.mxu0
    %v2475 = vadd.f32 %v224, %v2474
    %2476 = vmatmul.f32.gmra.mxu0 %v1933
    %v2477 = vpop.f32.mrf.mxu0
    %v2478 = vadd.f32 %v224, %v2477
    %2479 = vmatmul.f32.gmra.mxu0 %v1936
    %v2480 = vpop.f32.mrf.mxu0
    %v2481 = vadd.f32 %v224, %v2480
    %2482 = vmatmul.f32.gmra.mxu0 %v1939
    %v2483 = vpop.f32.mrf.mxu0
    %v2484 = vadd.f32 %v224, %v2483
    %2485 = vmatmul.f32.gmra.mxu0 %v1942
    %v2486 = vpop.f32.mrf.mxu0
    %v2487 = vadd.f32 %v224, %v2486
    %2488 = vmatmul.f32.gmra.mxu0 %v1945
    %v2489 = vpop.f32.mrf.mxu0
    %v2490 = vadd.f32 %v224, %v2489
    %2491 = vmatmul.f32.gmra.mxu0 %v1948
    %v2492 = vpop.f32.mrf.mxu0
    %v2493 = vadd.f32 %v224, %v2492
    %2494 = vmatmul.f32.gmra.mxu0 %v1951
    %v2495 = vpop.f32.mrf.mxu0
    %v2496 = vadd.f32 %v224, %v2495
    %2497 = vmatmul.f32.gmra.mxu0 %v1954
    %v2498 = vpop.f32.mrf.mxu0
    %v2499 = vadd.f32 %v224, %v2498
    %2500 = vmatmul.f32.gmra.mxu0 %v1957
    %v2501 = vpop.f32.mrf.mxu0
    %v2502 = vadd.f32 %v224, %v2501
    %2503 = vmatmul.f32.gmra.mxu0 %v1960
    %v2504 = vpop.f32.mrf.mxu0
    %v2505 = vadd.f32 %v224, %v2504
    %2506 = vmatmul.f32.gmra.mxu0 %v1963
    %v2507 = vpop.f32.mrf.mxu0
    %v2508 = vadd.f32 %v224, %v2507
    %2509 = vmatmul.f32.gmra.mxu0 %v1966
    %v2510 = vpop.f32.mrf.mxu0
    %v2511 = vadd.f32 %v224, %v2510
    %2512 = vmatmul.f32.gmra.mxu0 %v1969
    %v2513 = vpop.f32.mrf.mxu0
    %v2514 = vadd.f32 %v224, %v2513
    %2515 = vmatmul.f32.gmra.mxu0 %v1972
    %v2516 = vpop.f32.mrf.mxu0
    %v2517 = vadd.f32 %v224, %v2516
    %2518 = vmatmul.f32.gmra.mxu0 %v1975
    %v2519 = vpop.f32.mrf.mxu0
    %v2520 = vadd.f32 %v224, %v2519
    %2521 = vmatmul.f32.gmra.mxu0 %v1978
    %v2522 = vpop.f32.mrf.mxu0
    %v2523 = vadd.f32 %v224, %v2522
    %2524 = vmatmul.f32.gmra.mxu0 %v1981
    %v2525 = vpop.f32.mrf.mxu0
    %v2526 = vadd.f32 %v224, %v2525
    %2527 = vmatmul.f32.gmra.mxu0 %v1984
    %v2528 = vpop.f32.mrf.mxu0
    %v2529 = vadd.f32 %v224, %v2528
    %2530 = vmatmul.f32.gmra.mxu0 %v1987
    %v2531 = vpop.f32.mrf.mxu0
    %v2532 = vadd.f32 %v224, %v2531
    %2533 = vmatmul.f32.gmra.mxu0 %v1990
    %v2534 = vpop.f32.mrf.mxu0
    %v2535 = vadd.f32 %v224, %v2534
    %2536 = vmatmul.f32.gmra.mxu0 %v1993
    %v2537 = vpop.f32.mrf.mxu0
    %v2538 = vadd.f32 %v224, %v2537
    %2539 = vmatmul.f32.gmra.mxu0 %v1996
    %v2540 = vpop.f32.mrf.mxu0
    %v2541 = vadd.f32 %v224, %v2540
    %2542 = vmatmul.f32.gmra.mxu0 %v1999
    %v2543 = vpop.f32.mrf.mxu0
    %v2544 = vadd.f32 %v224, %v2543
    %2545 = vmatmul.f32.gmra.mxu0 %v2002
    %v2546 = vpop.f32.mrf.mxu0
    %v2547 = vadd.f32 %v224, %v2546
    %2548 = vmatmul.f32.gmra.mxu0 %v2005
    %v2549 = vpop.f32.mrf.mxu0
    %v2550 = vadd.f32 %v224, %v2549
    %2551 = vmatmul.f32.gmra.mxu0 %v2008
    %v2552 = vpop.f32.mrf.mxu0
    %v2553 = vadd.f32 %v224, %v2552
    %2554 = vmatmul.f32.gmra.mxu0 %v2011
    %v2555 = vpop.f32.mrf.mxu0
    %v2556 = vadd.f32 %v224, %v2555
    %2557 = vmatmul.f32.gmra.mxu0 %v2014
    %v2558 = vpop.f32.mrf.mxu0
    %v2559 = vadd.f32 %v224, %v2558
    %2560 = vmatmul.f32.gmra.mxu0 %v2017
    %v2561 = vpop.f32.mrf.mxu0
    %v2562 = vadd.f32 %v224, %v2561
    %2563 = vmatmul.f32.gmra.mxu0 %v2020
    %v2564 = vpop.f32.mrf.mxu0
    %v2565 = vadd.f32 %v224, %v2564
    %2566 = vmatmul.f32.gmra.mxu0 %v2023
    %v2567 = vpop.f32.mrf.mxu0
    %v2568 = vadd.f32 %v224, %v2567
    %2569 = vmatmul.f32.gmra.mxu0 %v2026
    %v2570 = vpop.f32.mrf.mxu0
    %v2571 = vadd.f32 %v224, %v2570
    %2572 = vmatmul.f32.gmra.mxu0 %v2029
    %v2573 = vpop.f32.mrf.mxu0
    %v2574 = vadd.f32 %v224, %v2573
    %2575 = vmatmul.f32.gmra.mxu0 %v2032
    %v2576 = vpop.f32.mrf.mxu0
    %v2577 = vadd.f32 %v224, %v2576
    %2578 = vmatmul.f32.gmra.mxu0 %v2035
    %v2579 = vpop.f32.mrf.mxu0
    %v2580 = vadd.f32 %v224, %v2579
    %2581 = vmatmul.f32.gmra.mxu0 %v2038
    %v2582 = vpop.f32.mrf.mxu0
    %v2583 = vadd.f32 %v224, %v2582
    %2584 = vmatmul.f32.gmra.mxu0 %v2041
    %v2585 = vpop.f32.mrf.mxu0
    %v2586 = vadd.f32 %v224, %v2585
    %2587 = vmatmul.f32.gmra.mxu0 %v2044
    %v2588 = vpop.f32.mrf.mxu0
    %v2589 = vadd.f32 %v224, %v2588
    %2590 = vmatmul.f32.gmra.mxu0 %v2047
    %v2591 = vpop.f32.mrf.mxu0
    %v2592 = vadd.f32 %v224, %v2591
    %2593 = vmatmul.f32.gmra.mxu0 %v2050
    %v2594 = vpop.f32.mrf.mxu0
    %v2595 = vadd.f32 %v224, %v2594
    %2596 = vmatmul.f32.gmra.mxu0 %v2053
    %v2597 = vpop.f32.mrf.mxu0
    %v2598 = vadd.f32 %v224, %v2597
    %2599 = vmatmul.f32.gmra.mxu0 %v2056
    %v2600 = vpop.f32.mrf.mxu0
    %v2601 = vadd.f32 %v224, %v2600
    %2602 = vmatmul.f32.gmra.mxu0 %v2059
    %v2603 = vpop.f32.mrf.mxu0
    %v2604 = vadd.f32 %v224, %v2603
    %2605 = vmatmul.f32.gmra.mxu0 %v2062
    %v2606 = vpop.f32.mrf.mxu0
    %v2607 = vadd.f32 %v224, %v2606
    %2608 = vmatmul.f32.gmra.mxu0 %v2065
    %v2609 = vpop.f32.mrf.mxu0
    %v2610 = vadd.f32 %v224, %v2609
    %2611 = vmatmul.f32.gmra.mxu0 %v2068
    %v2612 = vpop.f32.mrf.mxu0
    %v2613 = vadd.f32 %v224, %v2612
    %2614 = vmatmul.f32.gmra.mxu0 %v2071
    %v2615 = vpop.f32.mrf.mxu0
    %v2616 = vadd.f32 %v224, %v2615
    %2617 = vmatmul.f32.gmra.mxu0 %v2074
    %v2618 = vpop.f32.mrf.mxu0
    %v2619 = vadd.f32 %v224, %v2618
    %2620 = vmatmul.f32.gmra.mxu0 %v2077
    %v2621 = vpop.f32.mrf.mxu0
    %v2622 = vadd.f32 %v224, %v2621
    %2623 = vmatmul.f32.gmra.mxu0 %v2080
    %v2624 = vpop.f32.mrf.mxu0
    %v2625 = vadd.f32 %v224, %v2624
    %2626 = vmatmul.f32.gmra.mxu0 %v2083
    %v2627 = vpop.f32.mrf.mxu0
    %v2628 = vadd.f32 %v224, %v2627
    %2629 = vmatmul.f32.gmra.mxu0 %v2086
    %v2630 = vpop.f32.mrf.mxu0
    %v2631 = vadd.f32 %v224, %v2630
    %2632 = vmatmul.f32.gmra.mxu0 %v2089
    %v2633 = vpop.f32.mrf.mxu0
    %v2634 = vadd.f32 %v224, %v2633
    %2635 = vmatmul.f32.gmra.mxu0 %v2092
    %v2636 = vpop.f32.mrf.mxu0
    %v2637 = vadd.f32 %v224, %v2636
    %2638 = vmatmul.f32.gmra.mxu0 %v2095
    %v2639 = vpop.f32.mrf.mxu0
    %v2640 = vadd.f32 %v224, %v2639
    %2641 = vmatmul.f32.gmra.mxu0 %v2098
    %v2642 = vpop.f32.mrf.mxu0
    %v2643 = vadd.f32 %v224, %v2642
    %2644 = vmatmul.f32.gmra.mxu0 %v2101
    %v2645 = vpop.f32.mrf.mxu0
    %v2646 = vadd.f32 %v224, %v2645
    %2647 = vmatmul.f32.gmra.mxu0 %v2104
    %v2648 = vpop.f32.mrf.mxu0
    %v2649 = vadd.f32 %v224, %v2648
    %2650 = vmatmul.f32.gmra.mxu0 %v2107
    %v2651 = vpop.f32.mrf.mxu0
    %v2652 = vadd.f32 %v224, %v2651
    %2653 = vmatmul.f32.gmra.mxu0 %v2110
    %v2654 = vpop.f32.mrf.mxu0
    %v2655 = vadd.f32 %v224, %v2654
    %2656 = vmatmul.f32.gmra.mxu0 %v2113
    %v2657 = vpop.f32.mrf.mxu0
    %v2658 = vadd.f32 %v224, %v2657
    %2659 = vmatmul.f32.gmra.mxu0 %v2116
    %v2660 = vpop.f32.mrf.mxu0
    %v2661 = vadd.f32 %v224, %v2660
    %2662 = vmatmul.f32.gmra.mxu0 %v2119
    %v2663 = vpop.f32.mrf.mxu0
    %v2664 = vadd.f32 %v224, %v2663
    %2665 = vmatmul.f32.gmra.mxu0 %v2122
    %v2666 = vpop.f32.mrf.mxu0
    %v2667 = vadd.f32 %v224, %v2666
    %2668 = vmatmul.f32.gmra.mxu0 %v2125
    %v2669 = vpop.f32.mrf.mxu0
    %v2670 = vadd.f32 %v224, %v2669
    %2671 = vmatmul.f32.gmra.mxu0 %v2128
    %v2672 = vpop.f32.mrf.mxu0
    %v2673 = vadd.f32 %v224, %v2672
    %2674 = vmatmul.f32.gmra.mxu0 %v2131
    %v2675 = vpop.f32.mrf.mxu0
    %v2676 = vadd.f32 %v224, %v2675
    %2677 = vmatmul.f32.gmra.mxu0 %v2134
    %v2678 = vpop.f32.mrf.mxu0
    %v2679 = vadd.f32 %v224, %v2678
    %2680 = vmatmul.f32.gmra.mxu0 %v2137
    %v2681 = vpop.f32.mrf.mxu0
    %v2682 = vadd.f32 %v224, %v2681
    %2683 = vmatmul.f32.gmra.mxu0 %v2140
    %v2684 = vpop.f32.mrf.mxu0
    %v2685 = vadd.f32 %v224, %v2684
    %2686 = vmatmul.f32.gmra.mxu0 %v2143
    %v2687 = vpop.f32.mrf.mxu0
    %v2688 = vadd.f32 %v224, %v2687
    %2689 = vmatmul.f32.gmra.mxu0 %v2146
    %v2690 = vpop.f32.mrf.mxu0
    %v2691 = vadd.f32 %v224, %v2690
    %2692 = vmatmul.f32.gmra.mxu0 %v2149
    %v2693 = vpop.f32.mrf.mxu0
    %v2694 = vadd.f32 %v224, %v2693
    %2695 = vmatmul.f32.gmra.mxu0 %v2152
    %v2696 = vpop.f32.mrf.mxu0
    %v2697 = vadd.f32 %v224, %v2696
    %2698 = vmatmul.f32.gmra.mxu0 %v2155
    %v2699 = vpop.f32.mrf.mxu0
    %v2700 = vadd.f32 %v224, %v2699
    %2701 = vmatmul.f32.gmra.mxu0 %v2158
    %v2702 = vpop.f32.mrf.mxu0
    %v2703 = vadd.f32 %v224, %v2702
    %2704 = vmatmul.f32.gmra.mxu0 %v2161
    %v2705 = vpop.f32.mrf.mxu0
    %v2706 = vadd.f32 %v224, %v2705
    %2707 = vmatmul.f32.gmra.mxu0 %v2164
    %v2708 = vpop.f32.mrf.mxu0
    %v2709 = vadd.f32 %v224, %v2708
    %2710 = vmatmul.f32.gmra.mxu0 %v2167
    %v2711 = vpop.f32.mrf.mxu0
    %v2712 = vadd.f32 %v224, %v2711
    %2713 = vmatmul.f32.gmra.mxu0 %v2170
    %v2714 = vpop.f32.mrf.mxu0
    %v2715 = vadd.f32 %v224, %v2714
    %2716 = vmatmul.f32.gmra.mxu0 %v2173
    %v2717 = vpop.f32.mrf.mxu0
    %v2718 = vadd.f32 %v224, %v2717
    %2719 = vmatmul.f32.gmra.mxu0 %v2176
    %v2720 = vpop.f32.mrf.mxu0
    %v2721 = vadd.f32 %v224, %v2720
    %2722 = vmatmul.f32.gmra.mxu0 %v2179
    %v2723 = vpop.f32.mrf.mxu0
    %v2724 = vadd.f32 %v224, %v2723
    %2725 = vmatmul.f32.gmra.mxu0 %v2182
    %v2726 = vpop.f32.mrf.mxu0
    %v2727 = vadd.f32 %v224, %v2726
    %2728 = vdwg.mxu0
    %v2729 = vmax.f32 %v2202, 0.0
    %v2730 = vmax.f32 %v2205, 0.0
    %v2731 = vmax.f32 %v2208, 0.0
    %v2732 = vmax.f32 %v2211, 0.0
    %v2733 = vmax.f32 %v2214, 0.0
    %v2734 = vmax.f32 %v2217, 0.0
    %v2735 = vmax.f32 %v2220, 0.0
    %v2736 = vmax.f32 %v2223, 0.0
    %v2737 = vmax.f32 %v2226, 0.0
    %v2738 = vmax.f32 %v2229, 0.0
    %v2739 = vmax.f32 %v2232, 0.0
    %v2740 = vmax.f32 %v2235, 0.0
    %v2741 = vmax.f32 %v2238, 0.0
    %v2742 = vmax.f32 %v2241, 0.0
    %v2743 = vmax.f32 %v2244, 0.0
    %v2744 = vmax.f32 %v2247, 0.0
    %v2745 = vmax.f32 %v2250, 0.0
    %v2746 = vmax.f32 %v2253, 0.0
    %v2747 = vmax.f32 %v2256, 0.0
    %v2748 = vmax.f32 %v2259, 0.0
    %v2749 = vmax.f32 %v2262, 0.0
    %v2750 = vmax.f32 %v2265, 0.0
    %v2751 = vmax.f32 %v2268, 0.0
    %v2752 = vmax.f32 %v2271, 0.0
    %v2753 = vmax.f32 %v2274, 0.0
    %v2754 = vmax.f32 %v2277, 0.0
    %v2755 = vmax.f32 %v2280, 0.0
    %v2756 = vmax.f32 %v2283, 0.0
    %v2757 = vmax.f32 %v2286, 0.0
    %v2758 = vmax.f32 %v2289, 0.0
    %v2759 = vmax.f32 %v2292, 0.0
    %v2760 = vmax.f32 %v2295, 0.0
    %v2761 = vmax.f32 %v2298, 0.0
    %v2762 = vmax.f32 %v2301, 0.0
    %v2763 = vmax.f32 %v2304, 0.0
    %v2764 = vmax.f32 %v2307, 0.0
    %v2765 = vmax.f32 %v2310, 0.0
    %v2766 = vmax.f32 %v2313, 0.0
    %v2767 = vmax.f32 %v2316, 0.0
    %v2768 = vmax.f32 %v2319, 0.0
    %v2769 = vmax.f32 %v2322, 0.0
    %v2770 = vmax.f32 %v2325, 0.0
    %v2771 = vmax.f32 %v2328, 0.0
    %v2772 = vmax.f32 %v2331, 0.0
    %v2773 = vmax.f32 %v2334, 0.0
    %v2774 = vmax.f32 %v2337, 0.0
    %v2775 = vmax.f32 %v2340, 0.0
    %v2776 = vmax.f32 %v2343, 0.0
    %v2777 = vmax.f32 %v2346, 0.0
    %v2778 = vmax.f32 %v2349, 0.0
    %v2779 = vmax.f32 %v2352, 0.0
    %v2780 = vmax.f32 %v2355, 0.0
    %v2781 = vmax.f32 %v2358, 0.0
    %v2782 = vmax.f32 %v2361, 0.0
    %v2783 = vmax.f32 %v2364, 0.0
    %v2784 = vmax.f32 %v2367, 0.0
    %v2785 = vmax.f32 %v2370, 0.0
    %v2786 = vmax.f32 %v2373, 0.0
    %v2787 = vmax.f32 %v2376, 0.0
    %v2788 = vmax.f32 %v2379, 0.0
    %v2789 = vmax.f32 %v2382, 0.0
    %v2790 = vmax.f32 %v2385, 0.0
    %v2791 = vmax.f32 %v2388, 0.0
    %v2792 = vmax.f32 %v2391, 0.0
    %v2793 = vmax.f32 %v2394, 0.0
    %v2794 = vmax.f32 %v2397, 0.0
    %v2795 = vmax.f32 %v2400, 0.0
    %v2796 = vmax.f32 %v2403, 0.0
    %v2797 = vmax.f32 %v2406, 0.0
    %v2798 = vmax.f32 %v2409, 0.0
    %v2799 = vmax.f32 %v2412, 0.0
    %v2800 = vmax.f32 %v2415, 0.0
    %v2801 = vmax.f32 %v2418, 0.0
    %v2802 = vmax.f32 %v2421, 0.0
    %v2803 = vmax.f32 %v2424, 0.0
    %v2804 = vmax.f32 %v2427, 0.0
    %v2805 = vmax.f32 %v2430, 0.0
    %v2806 = vmax.f32 %v2433, 0.0
    %v2807 = vmax.f32 %v2436, 0.0
    %v2808 = vmax.f32 %v2439, 0.0
    %v2809 = vmax.f32 %v2442, 0.0
    %v2810 = vmax.f32 %v2445, 0.0
    %v2811 = vmax.f32 %v2448, 0.0
    %v2812 = vmax.f32 %v2451, 0.0
    %v2813 = vmax.f32 %v2454, 0.0
    %v2814 = vmax.f32 %v2457, 0.0
    %v2815 = vmax.f32 %v2460, 0.0
    %v2816 = vmax.f32 %v2463, 0.0
    %v2817 = vmax.f32 %v2466, 0.0
    %v2818 = vmax.f32 %v2469, 0.0
    %v2819 = vmax.f32 %v2472, 0.0
    %v2820 = vmax.f32 %v2475, 0.0
    %v2821 = vmax.f32 %v2478, 0.0
    %v2822 = vmax.f32 %v2481, 0.0
    %v2823 = vmax.f32 %v2484, 0.0
    %v2824 = vmax.f32 %v2487, 0.0
    %v2825 = vmax.f32 %v2490, 0.0
    %v2826 = vmax.f32 %v2493, 0.0
    %v2827 = vmax.f32 %v2496, 0.0
    %v2828 = vmax.f32 %v2499, 0.0
    %v2829 = vmax.f32 %v2502, 0.0
    %v2830 = vmax.f32 %v2505, 0.0
    %v2831 = vmax.f32 %v2508, 0.0
    %v2832 = vmax.f32 %v2511, 0.0
    %v2833 = vmax.f32 %v2514, 0.0
    %v2834 = vmax.f32 %v2517, 0.0
    %v2835 = vmax.f32 %v2520, 0.0
    %v2836 = vmax.f32 %v2523, 0.0
    %v2837 = vmax.f32 %v2526, 0.0
    %v2838 = vmax.f32 %v2529, 0.0
    %v2839 = vmax.f32 %v2532, 0.0
    %v2840 = vmax.f32 %v2535, 0.0
    %v2841 = vmax.f32 %v2538, 0.0
    %v2842 = vmax.f32 %v2541, 0.0
    %v2843 = vmax.f32 %v2544, 0.0
    %v2844 = vmax.f32 %v2547, 0.0
    %v2845 = vmax.f32 %v2550, 0.0
    %v2846 = vmax.f32 %v2553, 0.0
    %v2847 = vmax.f32 %v2556, 0.0
    %v2848 = vmax.f32 %v2559, 0.0
    %v2849 = vmax.f32 %v2562, 0.0
    %v2850 = vmax.f32 %v2565, 0.0
    %v2851 = vmax.f32 %v2568, 0.0
    %v2852 = vmax.f32 %v2571, 0.0
    %v2853 = vmax.f32 %v2574, 0.0
    %v2854 = vmax.f32 %v2577, 0.0
    %v2855 = vmax.f32 %v2580, 0.0
    %v2856 = vmax.f32 %v2583, 0.0
    %v2857 = vmax.f32 %v2586, 0.0
    %v2858 = vmax.f32 %v2589, 0.0
    %v2859 = vmax.f32 %v2592, 0.0
    %v2860 = vmax.f32 %v2595, 0.0
    %v2861 = vmax.f32 %v2598, 0.0
    %v2862 = vmax.f32 %v2601, 0.0
    %v2863 = vmax.f32 %v2604, 0.0
    %v2864 = vmax.f32 %v2607, 0.0
    %v2865 = vmax.f32 %v2610, 0.0
    %v2866 = vmax.f32 %v2613, 0.0
    %v2867 = vmax.f32 %v2616, 0.0
    %v2868 = vmax.f32 %v2619, 0.0
    %v2869 = vmax.f32 %v2622, 0.0
    %v2870 = vmax.f32 %v2625, 0.0
    %v2871 = vmax.f32 %v2628, 0.0
    %v2872 = vmax.f32 %v2631, 0.0
    %v2873 = vmax.f32 %v2634, 0.0
    %v2874 = vmax.f32 %v2637, 0.0
    %v2875 = vmax.f32 %v2640, 0.0
    %v2876 = vmax.f32 %v2643, 0.0
    %v2877 = vmax.f32 %v2646, 0.0
    %v2878 = vmax.f32 %v2649, 0.0
    %v2879 = vmax.f32 %v2652, 0.0
    %v2880 = vmax.f32 %v2655, 0.0
    %v2881 = vmax.f32 %v2658, 0.0
    %v2882 = vmax.f32 %v2661, 0.0
    %v2883 = vmax.f32 %v2664, 0.0
    %v2884 = vmax.f32 %v2667, 0.0
    %v2885 = vmax.f32 %v2670, 0.0
    %v2886 = vmax.f32 %v2673, 0.0
    %v2887 = vmax.f32 %v2676, 0.0
    %v2888 = vmax.f32 %v2679, 0.0
    %v2889 = vmax.f32 %v2682, 0.0
    %v2890 = vmax.f32 %v2685, 0.0
    %v2891 = vmax.f32 %v2688, 0.0
    %v2892 = vmax.f32 %v2691, 0.0
    %v2893 = vmax.f32 %v2694, 0.0
    %v2894 = vmax.f32 %v2697, 0.0
    %v2895 = vmax.f32 %v2700, 0.0
    %v2896 = vmax.f32 %v2703, 0.0
    %v2897 = vmax.f32 %v2706, 0.0
    %v2898 = vmax.f32 %v2709, 0.0
    %v2899 = vmax.f32 %v2712, 0.0
    %v2900 = vmax.f32 %v2715, 0.0
    %v2901 = vmax.f32 %v2718, 0.0
    %v2902 = vmax.f32 %v2721, 0.0
    %v2903 = vmax.f32 %v2724, 0.0
    %v2904 = vmax.f32 %v2727, 0.0
    %v2905 = vmax.f32 %v1304, %v2729
    %v2906 = vmax.f32 %v1305, %v2730
    %v2907 = vmax.f32 %v1306, %v2731
    %v2908 = vmax.f32 %v1307, %v2732
    %v2909 = vmax.f32 %v1308, %v2733
    %v2910 = vmax.f32 %v1309, %v2734
    %v2911 = vmax.f32 %v1310, %v2735
    %v2912 = vmax.f32 %v1311, %v2736
    %v2913 = vmax.f32 %v1312, %v2737
    %v2914 = vmax.f32 %v1313, %v2738
    %v2915 = vmax.f32 %v1314, %v2739
    %v2916 = vmax.f32 %v1315, %v2740
    %v2917 = vmax.f32 %v1316, %v2741
    %v2918 = vmax.f32 %v1317, %v2742
    %v2919 = vmax.f32 %v1318, %v2743
    %v2920 = vmax.f32 %v1319, %v2744
    %v2921 = vmax.f32 %v1320, %v2745
    %v2922 = vmax.f32 %v1321, %v2746
    %v2923 = vmax.f32 %v1322, %v2747
    %v2924 = vmax.f32 %v1323, %v2748
    %v2925 = vmax.f32 %v1324, %v2749
    %v2926 = vmax.f32 %v1325, %v2750
    %v2927 = vmax.f32 %v1326, %v2751
    %v2928 = vmax.f32 %v1327, %v2752
    %v2929 = vmax.f32 %v1328, %v2753
    %v2930 = vmax.f32 %v1329, %v2754
    %v2931 = vmax.f32 %v1330, %v2755
    %v2932 = vmax.f32 %v1331, %v2756
    %v2933 = vmax.f32 %v1332, %v2757
    %v2934 = vmax.f32 %v1333, %v2758
    %v2935 = vmax.f32 %v1334, %v2759
    %v2936 = vmax.f32 %v1335, %v2760
    %v2937 = vmax.f32 %v1336, %v2761
    %v2938 = vmax.f32 %v1337, %v2762
    %v2939 = vmax.f32 %v1338, %v2763
    %v2940 = vmax.f32 %v1339, %v2764
    %v2941 = vmax.f32 %v1340, %v2765
    %v2942 = vmax.f32 %v1341, %v2766
    %v2943 = vmax.f32 %v1342, %v2767
    %v2944 = vmax.f32 %v1343, %v2768
    %v2945 = vmax.f32 %v1344, %v2769
    %v2946 = vmax.f32 %v1345, %v2770
    %v2947 = vmax.f32 %v1346, %v2771
    %v2948 = vmax.f32 %v1347, %v2772
    %v2949 = vmax.f32 %v1348, %v2773
    %v2950 = vmax.f32 %v1349, %v2774
    %v2951 = vmax.f32 %v1350, %v2775
    %v2952 = vmax.f32 %v1351, %v2776
    %v2953 = vmax.f32 %v1352, %v2777
    %v2954 = vmax.f32 %v1353, %v2778
    %v2955 = vmax.f32 %v1354, %v2779
    %v2956 = vmax.f32 %v1355, %v2780
    %v2957 = vmax.f32 %v1356, %v2781
    %v2958 = vmax.f32 %v1357, %v2782
    %v2959 = vmax.f32 %v1358, %v2783
    %v2960 = vmax.f32 %v1359, %v2784
    %v2961 = vmax.f32 %v1360, %v2785
    %v2962 = vmax.f32 %v1361, %v2786
    %v2963 = vmax.f32 %v1362, %v2787
    %v2964 = vmax.f32 %v1363, %v2788
    %v2965 = vmax.f32 %v1364, %v2789
    %v2966 = vmax.f32 %v1365, %v2790
    %v2967 = vmax.f32 %v1366, %v2791
    %v2968 = vmax.f32 %v1367, %v2792
    %v2969 = vmax.f32 %v1368, %v2793
    %v2970 = vmax.f32 %v1369, %v2794
    %v2971 = vmax.f32 %v1370, %v2795
    %v2972 = vmax.f32 %v1371, %v2796
    %v2973 = vmax.f32 %v1372, %v2797
    %v2974 = vmax.f32 %v1373, %v2798
    %v2975 = vmax.f32 %v1374, %v2799
    %v2976 = vmax.f32 %v1375, %v2800
    %v2977 = vmax.f32 %v1376, %v2801
    %v2978 = vmax.f32 %v1377, %v2802
    %v2979 = vmax.f32 %v1378, %v2803
    %v2980 = vmax.f32 %v1379, %v2804
    %v2981 = vmax.f32 %v1380, %v2805
    %v2982 = vmax.f32 %v1381, %v2806
    %v2983 = vmax.f32 %v1382, %v2807
    %v2984 = vmax.f32 %v1383, %v2808
    %v2985 = vmax.f32 %v1384, %v2809
    %v2986 = vmax.f32 %v1385, %v2810
    %v2987 = vmax.f32 %v1386, %v2811
    %v2988 = vmax.f32 %v1387, %v2812
    %v2989 = vmax.f32 %v1388, %v2813
    %v2990 = vmax.f32 %v1389, %v2814
    %v2991 = vmax.f32 %v1390, %v2815
    %v2992 = vmax.f32 %v1391, %v2816
    %v2993 = vmax.f32 %v1392, %v2817
    %v2994 = vmax.f32 %v1393, %v2818
    %v2995 = vmax.f32 %v1394, %v2819
    %v2996 = vmax.f32 %v1395, %v2820
    %v2997 = vmax.f32 %v1396, %v2821
    %v2998 = vmax.f32 %v1397, %v2822
    %v2999 = vmax.f32 %v1398, %v2823
    %v3000 = vmax.f32 %v1399, %v2824
    %v3001 = vmax.f32 %v1400, %v2825
    %v3002 = vmax.f32 %v1401, %v2826
    %v3003 = vmax.f32 %v1402, %v2827
    %v3004 = vmax.f32 %v1403, %v2828
    %v3005 = vmax.f32 %v1404, %v2829
    %v3006 = vmax.f32 %v1405, %v2830
    %v3007 = vmax.f32 %v1406, %v2831
    %v3008 = vmax.f32 %v1407, %v2832
    %v3009 = vmax.f32 %v1408, %v2833
    %v3010 = vmax.f32 %v1409, %v2834
    %v3011 = vmax.f32 %v1410, %v2835
    %v3012 = vmax.f32 %v1411, %v2836
    %v3013 = vmax.f32 %v1412, %v2837
    %v3014 = vmax.f32 %v1413, %v2838
    %v3015 = vmax.f32 %v1414, %v2839
    %v3016 = vmax.f32 %v1415, %v2840
    %v3017 = vmax.f32 %v1416, %v2841
    %v3018 = vmax.f32 %v1417, %v2842
    %v3019 = vmax.f32 %v1418, %v2843
    %v3020 = vmax.f32 %v1419, %v2844
    %v3021 = vmax.f32 %v1420, %v2845
    %v3022 = vmax.f32 %v1421, %v2846
    %v3023 = vmax.f32 %v1422, %v2847
    %v3024 = vmax.f32 %v1423, %v2848
    %v3025 = vmax.f32 %v1424, %v2849
    %v3026 = vmax.f32 %v1425, %v2850
    %v3027 = vmax.f32 %v1426, %v2851
    %v3028 = vmax.f32 %v1427, %v2852
    %v3029 = vmax.f32 %v1428, %v2853
    %v3030 = vmax.f32 %v1429, %v2854
    %v3031 = vmax.f32 %v1430, %v2855
    %v3032 = vmax.f32 %v1431, %v2856
    %v3033 = vmax.f32 %v1432, %v2857
    %v3034 = vmax.f32 %v1433, %v2858
    %v3035 = vmax.f32 %v1434, %v2859
    %v3036 = vmax.f32 %v1435, %v2860
    %v3037 = vmax.f32 %v1436, %v2861
    %v3038 = vmax.f32 %v1437, %v2862
    %v3039 = vmax.f32 %v1438, %v2863
    %v3040 = vmax.f32 %v1439, %v2864
    %v3041 = vmax.f32 %v1440, %v2865
    %v3042 = vmax.f32 %v1441, %v2866
    %v3043 = vmax.f32 %v1442, %v2867
    %v3044 = vmax.f32 %v1443, %v2868
    %v3045 = vmax.f32 %v1444, %v2869
    %v3046 = vmax.f32 %v1445, %v2870
    %v3047 = vmax.f32 %v1446, %v2871
    %v3048 = vmax.f32 %v1447, %v2872
    %v3049 = vmax.f32 %v1448, %v2873
    %v3050 = vmax.f32 %v1449, %v2874
    %v3051 = vmax.f32 %v1450, %v2875
    %v3052 = vmax.f32 %v1451, %v2876
    %v3053 = vmax.f32 %v1452, %v2877
    %v3054 = vmax.f32 %v1453, %v2878
    %v3055 = vmax.f32 %v1454, %v2879
    %v3056 = vmax.f32 %v1455, %v2880
    %v3057 = vmax.f32 %v1456, %v2881
    %v3058 = vmax.f32 %v1457, %v2882
    %v3059 = vmax.f32 %v1458, %v2883
    %v3060 = vmax.f32 %v1459, %v2884
    %v3061 = vmax.f32 %v1460, %v2885
    %v3062 = vmax.f32 %v1461, %v2886
    %v3063 = vmax.f32 %v1462, %v2887
    %v3064 = vmax.f32 %v1463, %v2888
    %v3065 = vmax.f32 %v1464, %v2889
    %v3066 = vmax.f32 %v1465, %v2890
    %v3067 = vmax.f32 %v1466, %v2891
    %v3068 = vmax.f32 %v1467, %v2892
    %v3069 = vmax.f32 %v1468, %v2893
    %v3070 = vmax.f32 %v1469, %v2894
    %v3071 = vmax.f32 %v1470, %v2895
    %v3072 = vmax.f32 %v1471, %v2896
    %v3073 = vmax.f32 %v1472, %v2897
    %v3074 = vmax.f32 %v1473, %v2898
    %v3075 = vmax.f32 %v1474, %v2899
    %v3076 = vmax.f32 %v1475, %v2900
    %v3077 = vmax.f32 %v1476, %v2901
    %v3078 = vmax.f32 %v1477, %v2902
    %v3079 = vmax.f32 %v1478, %v2903
    %v3080 = vmax.f32 %v1479, %v2904
    %vm3081 = vcmask 130048
    %3082 = vst.msk [vmem:[%s4] sm:$0xff] %vm3081, %v2905
    %3083 = vst.msk [vmem:[%s4 + $0x8] sm:$0xff] %vm3081, %v2906
    %3084 = vst.msk [vmem:[%s4 + $0x10] sm:$0xff] %vm3081, %v2907
    %3085 = vst.msk [vmem:[%s4 + $0x18] sm:$0xff] %vm3081, %v2908
    %3086 = vst.msk [vmem:[%s4 + $0x20] sm:$0xff] %vm3081, %v2909
    %3087 = vst.msk [vmem:[%s4 + $0x28] sm:$0xff] %vm3081, %v2910
    %3088 = vst.msk [vmem:[%s4 + $0x30] sm:$0xff] %vm3081, %v2911
    %3089 = vst.msk [vmem:[%s4 + $0x38] sm:$0xff] %vm3081, %v2912
    %3090 = vst.msk [vmem:[%s4 + $0x40] sm:$0xff] %vm3081, %v2913
    %3091 = vst.msk [vmem:[%s4 + $0x48] sm:$0xff] %vm3081, %v2914
    %3092 = vst.msk [vmem:[%s4 + $0x50] sm:$0xff] %vm3081, %v2915
    %3093 = vst.msk [vmem:[%s4 + $0x58] sm:$0xff] %vm3081, %v2916
    %3094 = vst.msk [vmem:[%s4 + $0x60] sm:$0xff] %vm3081, %v2917
    %3095 = vst.msk [vmem:[%s4 + $0x68] sm:$0xff] %vm3081, %v2918
    %3096 = vst.msk [vmem:[%s4 + $0x70] sm:$0xff] %vm3081, %v2919
    %3097 = vst.msk [vmem:[%s4 + $0x78] sm:$0xff] %vm3081, %v2920
    %3098 = vst.msk [vmem:[%s4 + $0x80] sm:$0xff] %vm3081, %v2921
    %3099 = vst.msk [vmem:[%s4 + $0x88] sm:$0xff] %vm3081, %v2922
    %3100 = vst.msk [vmem:[%s4 + $0x90] sm:$0xff] %vm3081, %v2923
    %3101 = vst.msk [vmem:[%s4 + $0x98] sm:$0xff] %vm3081, %v2924
    %3102 = vst.msk [vmem:[%s4 + $0xa0] sm:$0xff] %vm3081, %v2925
    %3103 = vst.msk [vmem:[%s4 + $0xa8] sm:$0xff] %vm3081, %v2926
    %3104 = vst.msk [vmem:[%s4 + $0xb0] sm:$0xff] %vm3081, %v2927
    %3105 = vst.msk [vmem:[%s4 + $0xb8] sm:$0xff] %vm3081, %v2928
    %3106 = vst.msk [vmem:[%s4 + $0xc0] sm:$0xff] %vm3081, %v2929
    %3107 = vst.msk [vmem:[%s4 + $0xc8] sm:$0xff] %vm3081, %v2930
    %3108 = vst.msk [vmem:[%s4 + $0xd0] sm:$0xff] %vm3081, %v2931
    %3109 = vst.msk [vmem:[%s4 + $0xd8] sm:$0xff] %vm3081, %v2932
    %3110 = vst.msk [vmem:[%s4 + $0xe0] sm:$0xff] %vm3081, %v2933
    %3111 = vst.msk [vmem:[%s4 + $0xe8] sm:$0xff] %vm3081, %v2934
    %3112 = vst.msk [vmem:[%s4 + $0xf0] sm:$0xff] %vm3081, %v2935
    %3113 = vst.msk [vmem:[%s4 + $0xf8] sm:$0xff] %vm3081, %v2936
    %3114 = vst.msk [vmem:[%s4 + $0x100] sm:$0xff] %vm3081, %v2937
    %3115 = vst.msk [vmem:[%s4 + $0x108] sm:$0xff] %vm3081, %v2938
    %3116 = vst.msk [vmem:[%s4 + $0x110] sm:$0xff] %vm3081, %v2939
    %3117 = vst.msk [vmem:[%s4 + $0x118] sm:$0xff] %vm3081, %v2940
    %3118 = vst.msk [vmem:[%s4 + $0x120] sm:$0xff] %vm3081, %v2941
    %3119 = vst.msk [vmem:[%s4 + $0x128] sm:$0xff] %vm3081, %v2942
    %3120 = vst.msk [vmem:[%s4 + $0x130] sm:$0xff] %vm3081, %v2943
    %3121 = vst.msk [vmem:[%s4 + $0x138] sm:$0xff] %vm3081, %v2944
    %3122 = vst.msk [vmem:[%s4 + $0x140] sm:$0xff] %vm3081, %v2945
    %3123 = vst.msk [vmem:[%s4 + $0x148] sm:$0xff] %vm3081, %v2946
    %3124 = vst.msk [vmem:[%s4 + $0x150] sm:$0xff] %vm3081, %v2947
    %3125 = vst.msk [vmem:[%s4 + $0x158] sm:$0xff] %vm3081, %v2948
    %3126 = vst.msk [vmem:[%s4 + $0x160] sm:$0xff] %vm3081, %v2949
    %3127 = vst.msk [vmem:[%s4 + $0x168] sm:$0xff] %vm3081, %v2950
    %3128 = vst.msk [vmem:[%s4 + $0x170] sm:$0xff] %vm3081, %v2951
    %3129 = vst.msk [vmem:[%s4 + $0x178] sm:$0xff] %vm3081, %v2952
    %3130 = vst.msk [vmem:[%s4 + $0x180] sm:$0xff] %vm3081, %v2953
    %3131 = vst.msk [vmem:[%s4 + $0x188] sm:$0xff] %vm3081, %v2954
    %3132 = vst.msk [vmem:[%s4 + $0x190] sm:$0xff] %vm3081, %v2955
    %3133 = vst.msk [vmem:[%s4 + $0x198] sm:$0xff] %vm3081, %v2956
    %3134 = vst.msk [vmem:[%s4 + $0x1a0] sm:$0xff] %vm3081, %v2957
    %3135 = vst.msk [vmem:[%s4 + $0x1a8] sm:$0xff] %vm3081, %v2958
    %3136 = vst.msk [vmem:[%s4 + $0x1b0] sm:$0xff] %vm3081, %v2959
    %3137 = vst.msk [vmem:[%s4 + $0x1b8] sm:$0xff] %vm3081, %v2960
    %3138 = vst.msk [vmem:[%s4 + $0x1c0] sm:$0xff] %vm3081, %v2961
    %3139 = vst.msk [vmem:[%s4 + $0x1c8] sm:$0xff] %vm3081, %v2962
    %3140 = vst.msk [vmem:[%s4 + $0x1d0] sm:$0xff] %vm3081, %v2963
    %3141 = vst.msk [vmem:[%s4 + $0x1d8] sm:$0xff] %vm3081, %v2964
    %3142 = vst.msk [vmem:[%s4 + $0x1e0] sm:$0xff] %vm3081, %v2965
    %3143 = vst.msk [vmem:[%s4 + $0x1e8] sm:$0xff] %vm3081, %v2966
    %3144 = vst.msk [vmem:[%s4 + $0x1f0] sm:$0xff] %vm3081, %v2967
    %3145 = vst.msk [vmem:[%s4 + $0x1f8] sm:$0xff] %vm3081, %v2968
    %3146 = vst.msk [vmem:[%s4 + $0x200] sm:$0xff] %vm3081, %v2969
    %3147 = vst.msk [vmem:[%s4 + $0x208] sm:$0xff] %vm3081, %v2970
    %3148 = vst.msk [vmem:[%s4 + $0x210] sm:$0xff] %vm3081, %v2971
    %3149 = vst.msk [vmem:[%s4 + $0x218] sm:$0xff] %vm3081, %v2972
    %3150 = vst.msk [vmem:[%s4 + $0x220] sm:$0xff] %vm3081, %v2973
    %3151 = vst.msk [vmem:[%s4 + $0x228] sm:$0xff] %vm3081, %v2974
    %3152 = vst.msk [vmem:[%s4 + $0x230] sm:$0xff] %vm3081, %v2975
    %3153 = vst.msk [vmem:[%s4 + $0x238] sm:$0xff] %vm3081, %v2976
    %3154 = vst.msk [vmem:[%s4 + $0x240] sm:$0xff] %vm3081, %v2977
    %3155 = vst.msk [vmem:[%s4 + $0x248] sm:$0xff] %vm3081, %v2978
    %3156 = vst.msk [vmem:[%s4 + $0x250] sm:$0xff] %vm3081, %v2979
    %3157 = vst.msk [vmem:[%s4 + $0x258] sm:$0xff] %vm3081, %v2980
    %3158 = vst.msk [vmem:[%s4 + $0x260] sm:$0xff] %vm3081, %v2981
    %3159 = vst.msk [vmem:[%s4 + $0x268] sm:$0xff] %vm3081, %v2982
    %3160 = vst.msk [vmem:[%s4 + $0x270] sm:$0xff] %vm3081, %v2983
    %3161 = vst.msk [vmem:[%s4 + $0x278] sm:$0xff] %vm3081, %v2984
    %3162 = vst.msk [vmem:[%s4 + $0x280] sm:$0xff] %vm3081, %v2985
    %3163 = vst.msk [vmem:[%s4 + $0x288] sm:$0xff] %vm3081, %v2986
    %3164 = vst.msk [vmem:[%s4 + $0x290] sm:$0xff] %vm3081, %v2987
    %3165 = vst.msk [vmem:[%s4 + $0x298] sm:$0xff] %vm3081, %v2988
    %3166 = vst.msk [vmem:[%s4 + $0x2a0] sm:$0xff] %vm3081, %v2989
    %3167 = vst.msk [vmem:[%s4 + $0x2a8] sm:$0xff] %vm3081, %v2990
    %3168 = vst.msk [vmem:[%s4 + $0x2b0] sm:$0xff] %vm3081, %v2991
    %3169 = vst.msk [vmem:[%s4 + $0x2b8] sm:$0xff] %vm3081, %v2992
    %3170 = vst.msk [vmem:[%s4 + $0x2c0] sm:$0xff] %vm3081, %v2993
    %3171 = vst.msk [vmem:[%s4 + $0x2c8] sm:$0xff] %vm3081, %v2994
    %3172 = vst.msk [vmem:[%s4 + $0x2d0] sm:$0xff] %vm3081, %v2995
    %3173 = vst.msk [vmem:[%s4 + $0x2d8] sm:$0xff] %vm3081, %v2996
    %3174 = vst.msk [vmem:[%s4 + $0x2e0] sm:$0xff] %vm3081, %v2997
    %3175 = vst.msk [vmem:[%s4 + $0x2e8] sm:$0xff] %vm3081, %v2998
    %3176 = vst.msk [vmem:[%s4 + $0x2f0] sm:$0xff] %vm3081, %v2999
    %3177 = vst.msk [vmem:[%s4 + $0x2f8] sm:$0xff] %vm3081, %v3000
    %3178 = vst.msk [vmem:[%s4 + $0x300] sm:$0xff] %vm3081, %v3001
    %3179 = vst.msk [vmem:[%s4 + $0x308] sm:$0xff] %vm3081, %v3002
    %3180 = vst.msk [vmem:[%s4 + $0x310] sm:$0xff] %vm3081, %v3003
    %3181 = vst.msk [vmem:[%s4 + $0x318] sm:$0xff] %vm3081, %v3004
    %3182 = vst.msk [vmem:[%s4 + $0x320] sm:$0xff] %vm3081, %v3005
    %3183 = vst.msk [vmem:[%s4 + $0x328] sm:$0xff] %vm3081, %v3006
    %3184 = vst.msk [vmem:[%s4 + $0x330] sm:$0xff] %vm3081, %v3007
    %3185 = vst.msk [vmem:[%s4 + $0x338] sm:$0xff] %vm3081, %v3008
    %3186 = vst.msk [vmem:[%s4 + $0x340] sm:$0xff] %vm3081, %v3009
    %3187 = vst.msk [vmem:[%s4 + $0x348] sm:$0xff] %vm3081, %v3010
    %3188 = vst.msk [vmem:[%s4 + $0x350] sm:$0xff] %vm3081, %v3011
    %3189 = vst.msk [vmem:[%s4 + $0x358] sm:$0xff] %vm3081, %v3012
    %3190 = vst.msk [vmem:[%s4 + $0x360] sm:$0xff] %vm3081, %v3013
    %3191 = vst.msk [vmem:[%s4 + $0x368] sm:$0xff] %vm3081, %v3014
    %3192 = vst.msk [vmem:[%s4 + $0x370] sm:$0xff] %vm3081, %v3015
    %3193 = vst.msk [vmem:[%s4 + $0x378] sm:$0xff] %vm3081, %v3016
    %3194 = vst.msk [vmem:[%s4 + $0x380] sm:$0xff] %vm3081, %v3017
    %3195 = vst.msk [vmem:[%s4 + $0x388] sm:$0xff] %vm3081, %v3018
    %3196 = vst.msk [vmem:[%s4 + $0x390] sm:$0xff] %vm3081, %v3019
    %3197 = vst.msk [vmem:[%s4 + $0x398] sm:$0xff] %vm3081, %v3020
    %3198 = vst.msk [vmem:[%s4 + $0x3a0] sm:$0xff] %vm3081, %v3021
    %3199 = vst.msk [vmem:[%s4 + $0x3a8] sm:$0xff] %vm3081, %v3022
    %3200 = vst.msk [vmem:[%s4 + $0x3b0] sm:$0xff] %vm3081, %v3023
    %3201 = vst.msk [vmem:[%s4 + $0x3b8] sm:$0xff] %vm3081, %v3024
    %3202 = vst.msk [vmem:[%s4 + $0x3c0] sm:$0xff] %vm3081, %v3025
    %3203 = vst.msk [vmem:[%s4 + $0x3c8] sm:$0xff] %vm3081, %v3026
    %3204 = vst.msk [vmem:[%s4 + $0x3d0] sm:$0xff] %vm3081, %v3027
    %3205 = vst.msk [vmem:[%s4 + $0x3d8] sm:$0xff] %vm3081, %v3028
    %3206 = vst.msk [vmem:[%s4 + $0x3e0] sm:$0xff] %vm3081, %v3029
    %3207 = vst.msk [vmem:[%s4 + $0x3e8] sm:$0xff] %vm3081, %v3030
    %3208 = vst.msk [vmem:[%s4 + $0x3f0] sm:$0xff] %vm3081, %v3031
    %3209 = vst.msk [vmem:[%s4 + $0x3f8] sm:$0xff] %vm3081, %v3032
    %3210 = vst.msk [vmem:[%s4 + $0x400] sm:$0xff] %vm3081, %v3033
    %3211 = vst.msk [vmem:[%s4 + $0x408] sm:$0xff] %vm3081, %v3034
    %3212 = vst.msk [vmem:[%s4 + $0x410] sm:$0xff] %vm3081, %v3035
    %3213 = vst.msk [vmem:[%s4 + $0x418] sm:$0xff] %vm3081, %v3036
    %3214 = vst.msk [vmem:[%s4 + $0x420] sm:$0xff] %vm3081, %v3037
    %3215 = vst.msk [vmem:[%s4 + $0x428] sm:$0xff] %vm3081, %v3038
    %3216 = vst.msk [vmem:[%s4 + $0x430] sm:$0xff] %vm3081, %v3039
    %3217 = vst.msk [vmem:[%s4 + $0x438] sm:$0xff] %vm3081, %v3040
    %3218 = vst.msk [vmem:[%s4 + $0x440] sm:$0xff] %vm3081, %v3041
    %3219 = vst.msk [vmem:[%s4 + $0x448] sm:$0xff] %vm3081, %v3042
    %3220 = vst.msk [vmem:[%s4 + $0x450] sm:$0xff] %vm3081, %v3043
    %3221 = vst.msk [vmem:[%s4 + $0x458] sm:$0xff] %vm3081, %v3044
    %3222 = vst.msk [vmem:[%s4 + $0x460] sm:$0xff] %vm3081, %v3045
    %3223 = vst.msk [vmem:[%s4 + $0x468] sm:$0xff] %vm3081, %v3046
    %3224 = vst.msk [vmem:[%s4 + $0x470] sm:$0xff] %vm3081, %v3047
    %3225 = vst.msk [vmem:[%s4 + $0x478] sm:$0xff] %vm3081, %v3048
    %3226 = vst.msk [vmem:[%s4 + $0x480] sm:$0xff] %vm3081, %v3049
    %3227 = vst.msk [vmem:[%s4 + $0x488] sm:$0xff] %vm3081, %v3050
    %3228 = vst.msk [vmem:[%s4 + $0x490] sm:$0xff] %vm3081, %v3051
    %3229 = vst.msk [vmem:[%s4 + $0x498] sm:$0xff] %vm3081, %v3052
    %3230 = vst.msk [vmem:[%s4 + $0x4a0] sm:$0xff] %vm3081, %v3053
    %3231 = vst.msk [vmem:[%s4 + $0x4a8] sm:$0xff] %vm3081, %v3054
    %3232 = vst.msk [vmem:[%s4 + $0x4b0] sm:$0xff] %vm3081, %v3055
    %3233 = vst.msk [vmem:[%s4 + $0x4b8] sm:$0xff] %vm3081, %v3056
    %3234 = vst.msk [vmem:[%s4 + $0x4c0] sm:$0xff] %vm3081, %v3057
    %3235 = vst.msk [vmem:[%s4 + $0x4c8] sm:$0xff] %vm3081, %v3058
    %3236 = vst.msk [vmem:[%s4 + $0x4d0] sm:$0xff] %vm3081, %v3059
    %3237 = vst.msk [vmem:[%s4 + $0x4d8] sm:$0xff] %vm3081, %v3060
    %3238 = vst.msk [vmem:[%s4 + $0x4e0] sm:$0xff] %vm3081, %v3061
    %3239 = vst.msk [vmem:[%s4 + $0x4e8] sm:$0xff] %vm3081, %v3062
    %3240 = vst.msk [vmem:[%s4 + $0x4f0] sm:$0xff] %vm3081, %v3063
    %3241 = vst.msk [vmem:[%s4 + $0x4f8] sm:$0xff] %vm3081, %v3064
    %3242 = vst.msk [vmem:[%s4 + $0x500] sm:$0xff] %vm3081, %v3065
    %3243 = vst.msk [vmem:[%s4 + $0x508] sm:$0xff] %vm3081, %v3066
    %3244 = vst.msk [vmem:[%s4 + $0x510] sm:$0xff] %vm3081, %v3067
    %3245 = vst.msk [vmem:[%s4 + $0x518] sm:$0xff] %vm3081, %v3068
    %3246 = vst.msk [vmem:[%s4 + $0x520] sm:$0xff] %vm3081, %v3069
    %3247 = vst.msk [vmem:[%s4 + $0x528] sm:$0xff] %vm3081, %v3070
    %3248 = vst.msk [vmem:[%s4 + $0x530] sm:$0xff] %vm3081, %v3071
    %3249 = vst.msk [vmem:[%s4 + $0x538] sm:$0xff] %vm3081, %v3072
    %3250 = vst.msk [vmem:[%s4 + $0x540] sm:$0xff] %vm3081, %v3073
    %3251 = vst.msk [vmem:[%s4 + $0x548] sm:$0xff] %vm3081, %v3074
    %3252 = vst.msk [vmem:[%s4 + $0x550] sm:$0xff] %vm3081, %v3075
    %3253 = vst.msk [vmem:[%s4 + $0x558] sm:$0xff] %vm3081, %v3076
    %3254 = vst.msk [vmem:[%s4 + $0x560] sm:$0xff] %vm3081, %v3077
    %3255 = vst.msk [vmem:[%s4 + $0x568] sm:$0xff] %vm3081, %v3078
    %3256 = vst.msk [vmem:[%s4 + $0x570] sm:$0xff] %vm3081, %v3079
    %vm3257 = vcmask 128000
    %3258 = vst.msk [vmem:[%s4 + $0x578] sm:$0x3f] %vm3257, %v3080
    // Predicated region
    $region26: #{conv_lstm_forward.4} parent=1 // pred_check
      _
    $region27: #{conv_lstm_forward.4} parent=1 // pred_check_branch
      %3260 = sbr.rel (0) target = $region29
    $region28: #{conv_lstm_forward.4} parent=1 // pred_region
      _
    $region29: #{conv_lstm_forward.4} parent=1 // pred_fallthru
      _
    // Predicated region
    $region30: #{conv_lstm_forward.4} parent=1 // pred_check
      _
    $region31: #{conv_lstm_forward.4} parent=1 // pred_check_branch
      %3262 = sbr.rel (0) target = $region33
    $region32: #{conv_lstm_forward.4} parent=1 // pred_region
      _
    $region33: #{conv_lstm_forward.4} parent=1 // pred_fallthru
      _
    %3263 = vsyncpa [#allocation3], 1
    %3264 = vsyncpa [#allocation5], 1

// kernel: conv_lstm_forward.5
$region0: #{conv_lstm_forward.5}
  #allocation0 [shape = 'u32[]', space=smem, size = 0x4, offset = 0x4, fixed_abs, tag = 'smem constant byte address 0x4 - core index']
  #allocation1 [shape = 'u32[72,128]{1,0:T(1,128)}', space=vmem, size = 0x9000, scoped, tag = 'internal scratch']
  %s0 = inlined_call_operand.vmem [shape: f32[698,80], index: 0, kind: input, shape index: {}]
  %s1 = inlined_call_operand.vmem [shape: f32[698,80], index: 1, kind: input, shape index: {}]
  %s2 = inlined_call_operand.vmem [shape: f32[80,32], index: 2, kind: input, shape index: {}]
  %s3 = inlined_call_operand.hbm [shape: f32[1,32], index: 3, kind: input, shape index: {}]
  %s4 = inlined_call_operand.vmem [shape: f32[698,32], index: 4, kind: output, shape index: {}]
  %s5 = sld [smem:[#allocation0]]
  $region30: #{conv_lstm_forward.5} parent=0
    _
  %s7 = ssub.s32 1, %s5
  %s8 = scalar_select 0, %s7, %s5
  $region1: #{conv_lstm_forward.5} parent=0
    #allocation2 [shape = 'u8[512]{0}', space=vmem, size = 0x400, scoped, tag = 'input window, operand 3, single buffered']
    #allocation3 [shape = 's32[1]{0}', space=sflag, size = 0x4, scoped, tag = 'scoped memory for conv_lstm_forward.5']
    %9 = vsyncpa [#allocation3], 0
    // Predicated region
    $region2: #{conv_lstm_forward.5} parent=1 // pred_check
      _
    $region3: #{conv_lstm_forward.5} parent=1 // pred_check_branch
      %11 = sbr.rel (0) target = $region5
    $region4: #{conv_lstm_forward.5} parent=1 // pred_region
      _
    $region5: #{conv_lstm_forward.5} parent=1 // pred_fallthru
      _
    // Predicated region
    $region6: #{conv_lstm_forward.5} parent=1 // pred_check
      _
    $region7: #{conv_lstm_forward.5} parent=1 // pred_check_branch
      %13 = sbr.rel (0) target = $region9
    $region8: #{conv_lstm_forward.5} parent=1 // pred_region
      _
    $region9: #{conv_lstm_forward.5} parent=1 // pred_fallthru
      _
    // Predicated region
    $region10: #{conv_lstm_forward.5} parent=1 // pred_check
      _
    $region11: #{conv_lstm_forward.5} parent=1 // pred_check_branch
      %15 = sbr.rel (0) target = $region13
    $region12: #{conv_lstm_forward.5} parent=1 // pred_region
      _
    $region13: #{conv_lstm_forward.5} parent=1 // pred_fallthru
      _
    // Predicated region
    $region14: #{conv_lstm_forward.5} parent=1 // pred_check
      _
    $region15: #{conv_lstm_forward.5} parent=1 // pred_check_branch
      %17 = sbr.rel (0) target = $region17
    $region16: #{conv_lstm_forward.5} parent=1 // pred_region
      %19 = vsyncadd [#allocation3], 0
      %s21 = sshll.u32 %s3, 4
      %s22 = int_to_ptr.hbm [resolvable:$true] %s21
      %s23 = sshll.u32 [#allocation2], 4
      %s24 = int_to_ptr.vmem [resolvable:$true] %s23
      %26 = dma.hbm_to_vmem [thread:$0]  %s22, 16, %s24, [#allocation3]
    $region17: #{conv_lstm_forward.5} parent=1 // pred_fallthru
      _
    // Predicated region
    $region18: #{conv_lstm_forward.5} parent=1 // pred_check
      _
    $region19: #{conv_lstm_forward.5} parent=1 // pred_check_branch
      %28 = sbr.rel (0) target = $region21
    $region20: #{conv_lstm_forward.5} parent=1 // pred_region
      %30 = dma.done [#allocation3], 16
    $region21: #{conv_lstm_forward.5} parent=1 // pred_fallthru
      _
    %v31 = vld [vmem:[%s2] sm:$0xff]
    %v32 = vld [vmem:[%s2 + $0x8] sm:$0xff]
    %v33 = vld [vmem:[%s2 + $0x10] sm:$0xff]
    %v34 = vld [vmem:[%s2 + $0x18] sm:$0xff]
    %v35 = vld [vmem:[%s2 + $0x20] sm:$0xff]
    %v36 = vld [vmem:[%s2 + $0x28] sm:$0xff]
    %v37 = vld [vmem:[%s2 + $0x30] sm:$0xff]
    %v38 = vld [vmem:[%s2 + $0x38] sm:$0xff]
    %v39 = vld [vmem:[%s2 + $0x40] sm:$0xff]
    %v40 = vld [vmem:[%s2 + $0x48] sm:$0xff]
    %v41 = vld [vmem:[#allocation2] sm:$0x1]
    %v42 = vld [vmem:[%s0] sm:$0xff]
    %v43 = vld [vmem:[%s0 + $0x8] sm:$0xff]
    %v44 = vld [vmem:[%s0 + $0x10] sm:$0xff]
    %v45 = vld [vmem:[%s0 + $0x18] sm:$0xff]
    %v46 = vld [vmem:[%s0 + $0x20] sm:$0xff]
    %v47 = vld [vmem:[%s0 + $0x28] sm:$0xff]
    %v48 = vld [vmem:[%s0 + $0x30] sm:$0xff]
    %v49 = vld [vmem:[%s0 + $0x38] sm:$0xff]
    %v50 = vld [vmem:[%s0 + $0x40] sm:$0xff]
    %v51 = vld [vmem:[%s0 + $0x48] sm:$0xff]
    %v52 = vld [vmem:[%s0 + $0x50] sm:$0xff]
    %v53 = vld [vmem:[%s0 + $0x58] sm:$0xff]
    %v54 = vld [vmem:[%s0 + $0x60] sm:$0xff]
    %v55 = vld [vmem:[%s0 + $0x68] sm:$0xff]
    %v56 = vld [vmem:[%s0 + $0x70] sm:$0xff]
    %v57 = vld [vmem:[%s0 + $0x78] sm:$0xff]
    %v58 = vld [vmem:[%s0 + $0x80] sm:$0xff]
    %v59 = vld [vmem:[%s0 + $0x88] sm:$0xff]
    %v60 = vld [vmem:[%s0 + $0x90] sm:$0xff]
    %v61 = vld [vmem:[%s0 + $0x98] sm:$0xff]
    %v62 = vld [vmem:[%s0 + $0xa0] sm:$0xff]
    %v63 = vld [vmem:[%s0 + $0xa8] sm:$0xff]
    %v64 = vld [vmem:[%s0 + $0xb0] sm:$0xff]
    %v65 = vld [vmem:[%s0 + $0xb8] sm:$0xff]
    %v66 = vld [vmem:[%s0 + $0xc0] sm:$0xff]
    %v67 = vld [vmem:[%s0 + $0xc8] sm:$0xff]
    %v68 = vld [vmem:[%s0 + $0xd0] sm:$0xff]
    %v69 = vld [vmem:[%s0 + $0xd8] sm:$0xff]
    %v70 = vld [vmem:[%s0 + $0xe0] sm:$0xff]
    %v71 = vld [vmem:[%s0 + $0xe8] sm:$0xff]
    %v72 = vld [vmem:[%s0 + $0xf0] sm:$0xff]
    %v73 = vld [vmem:[%s0 + $0xf8] sm:$0xff]
    %v74 = vld [vmem:[%s0 + $0x100] sm:$0xff]
    %v75 = vld [vmem:[%s0 + $0x108] sm:$0xff]
    %v76 = vld [vmem:[%s0 + $0x110] sm:$0xff]
    %v77 = vld [vmem:[%s0 + $0x118] sm:$0xff]
    %v78 = vld [vmem:[%s0 + $0x120] sm:$0xff]
    %v79 = vld [vmem:[%s0 + $0x128] sm:$0xff]
    %v80 = vld [vmem:[%s0 + $0x130] sm:$0xff]
    %v81 = vld [vmem:[%s0 + $0x138] sm:$0xff]
    %v82 = vld [vmem:[%s0 + $0x140] sm:$0xff]
    %v83 = vld [vmem:[%s0 + $0x148] sm:$0xff]
    %v84 = vld [vmem:[%s0 + $0x150] sm:$0xff]
    %v85 = vld [vmem:[%s0 + $0x158] sm:$0xff]
    %v86 = vld [vmem:[%s0 + $0x160] sm:$0xff]
    %v87 = vld [vmem:[%s0 + $0x168] sm:$0xff]
    %v88 = vld [vmem:[%s0 + $0x170] sm:$0xff]
    %v89 = vld [vmem:[%s0 + $0x178] sm:$0xff]
    %v90 = vld [vmem:[%s0 + $0x180] sm:$0xff]
    %v91 = vld [vmem:[%s0 + $0x188] sm:$0xff]
    %v92 = vld [vmem:[%s0 + $0x190] sm:$0xff]
    %v93 = vld [vmem:[%s0 + $0x198] sm:$0xff]
    %v94 = vld [vmem:[%s0 + $0x1a0] sm:$0xff]
    %v95 = vld [vmem:[%s0 + $0x1a8] sm:$0xff]
    %v96 = vld [vmem:[%s0 + $0x1b0] sm:$0xff]
    %v97 = vld [vmem:[%s0 + $0x1b8] sm:$0xff]
    %v98 = vld [vmem:[%s0 + $0x1c0] sm:$0xff]
    %v99 = vld [vmem:[%s0 + $0x1c8] sm:$0xff]
    %v100 = vld [vmem:[%s0 + $0x1d0] sm:$0xff]
    %v101 = vld [vmem:[%s0 + $0x1d8] sm:$0xff]
    %v102 = vld [vmem:[%s0 + $0x1e0] sm:$0xff]
    %v103 = vld [vmem:[%s0 + $0x1e8] sm:$0xff]
    %v104 = vld [vmem:[%s0 + $0x1f0] sm:$0xff]
    %v105 = vld [vmem:[%s0 + $0x1f8] sm:$0xff]
    %v106 = vld [vmem:[%s0 + $0x200] sm:$0xff]
    %v107 = vld [vmem:[%s0 + $0x208] sm:$0xff]
    %v108 = vld [vmem:[%s0 + $0x210] sm:$0xff]
    %v109 = vld [vmem:[%s0 + $0x218] sm:$0xff]
    %v110 = vld [vmem:[%s0 + $0x220] sm:$0xff]
    %v111 = vld [vmem:[%s0 + $0x228] sm:$0xff]
    %v112 = vld [vmem:[%s0 + $0x230] sm:$0xff]
    %v113 = vld [vmem:[%s0 + $0x238] sm:$0xff]
    %v114 = vld [vmem:[%s0 + $0x240] sm:$0xff]
    %v115 = vld [vmem:[%s0 + $0x248] sm:$0xff]
    %v116 = vld [vmem:[%s0 + $0x250] sm:$0xff]
    %v117 = vld [vmem:[%s0 + $0x258] sm:$0xff]
    %v118 = vld [vmem:[%s0 + $0x260] sm:$0xff]
    %v119 = vld [vmem:[%s0 + $0x268] sm:$0xff]
    %v120 = vld [vmem:[%s0 + $0x270] sm:$0xff]
    %v121 = vld [vmem:[%s0 + $0x278] sm:$0xff]
    %v122 = vld [vmem:[%s0 + $0x280] sm:$0xff]
    %v123 = vld [vmem:[%s0 + $0x288] sm:$0xff]
    %v124 = vld [vmem:[%s0 + $0x290] sm:$0xff]
    %v125 = vld [vmem:[%s0 + $0x298] sm:$0xff]
    %v126 = vld [vmem:[%s0 + $0x2a0] sm:$0xff]
    %v127 = vld [vmem:[%s0 + $0x2a8] sm:$0xff]
    %v128 = vld [vmem:[%s0 + $0x2b0] sm:$0xff]
    %v129 = vld [vmem:[%s0 + $0x2b8] sm:$0x3]
    %v131 = vperm.slane %v41, 0
    %vm133 = vcmask 654336
    %v135 = vsel %vm133, %v42, 0
    %v138 = vsel %vm133, %v43, 0
    %v141 = vsel %vm133, %v44, 0
    %v144 = vsel %vm133, %v45, 0
    %v147 = vsel %vm133, %v46, 0
    %v150 = vsel %vm133, %v47, 0
    %v153 = vsel %vm133, %v48, 0
    %v156 = vsel %vm133, %v49, 0
    %v159 = vsel %vm133, %v50, 0
    %v162 = vsel %vm133, %v51, 0
    %v165 = vsel %vm133, %v52, 0
    %v168 = vsel %vm133, %v53, 0
    %v171 = vsel %vm133, %v54, 0
    %v174 = vsel %vm133, %v55, 0
    %v177 = vsel %vm133, %v56, 0
    %v180 = vsel %vm133, %v57, 0
    %v183 = vsel %vm133, %v58, 0
    %v186 = vsel %vm133, %v59, 0
    %v189 = vsel %vm133, %v60, 0
    %v192 = vsel %vm133, %v61, 0
    %v195 = vsel %vm133, %v62, 0
    %v198 = vsel %vm133, %v63, 0
    %v201 = vsel %vm133, %v64, 0
    %v204 = vsel %vm133, %v65, 0
    %v207 = vsel %vm133, %v66, 0
    %v210 = vsel %vm133, %v67, 0
    %v213 = vsel %vm133, %v68, 0
    %v216 = vsel %vm133, %v69, 0
    %v219 = vsel %vm133, %v70, 0
    %v222 = vsel %vm133, %v71, 0
    %v225 = vsel %vm133, %v72, 0
    %v228 = vsel %vm133, %v73, 0
    %v231 = vsel %vm133, %v74, 0
    %v234 = vsel %vm133, %v75, 0
    %v237 = vsel %vm133, %v76, 0
    %v240 = vsel %vm133, %v77, 0
    %v243 = vsel %vm133, %v78, 0
    %v246 = vsel %vm133, %v79, 0
    %v249 = vsel %vm133, %v80, 0
    %v252 = vsel %vm133, %v81, 0
    %v255 = vsel %vm133, %v82, 0
    %v258 = vsel %vm133, %v83, 0
    %v261 = vsel %vm133, %v84, 0
    %v264 = vsel %vm133, %v85, 0
    %v267 = vsel %vm133, %v86, 0
    %v270 = vsel %vm133, %v87, 0
    %v273 = vsel %vm133, %v88, 0
    %v276 = vsel %vm133, %v89, 0
    %v279 = vsel %vm133, %v90, 0
    %v282 = vsel %vm133, %v91, 0
    %v285 = vsel %vm133, %v92, 0
    %v288 = vsel %vm133, %v93, 0
    %v291 = vsel %vm133, %v94, 0
    %v294 = vsel %vm133, %v95, 0
    %v297 = vsel %vm133, %v96, 0
    %v300 = vsel %vm133, %v97, 0
    %v303 = vsel %vm133, %v98, 0
    %v306 = vsel %vm133, %v99, 0
    %v309 = vsel %vm133, %v100, 0
    %v312 = vsel %vm133, %v101, 0
    %v315 = vsel %vm133, %v102, 0
    %v318 = vsel %vm133, %v103, 0
    %v321 = vsel %vm133, %v104, 0
    %v324 = vsel %vm133, %v105, 0
    %v327 = vsel %vm133, %v106, 0
    %v330 = vsel %vm133, %v107, 0
    %v333 = vsel %vm133, %v108, 0
    %v336 = vsel %vm133, %v109, 0
    %v339 = vsel %vm133, %v110, 0
    %v342 = vsel %vm133, %v111, 0
    %v345 = vsel %vm133, %v112, 0
    %v348 = vsel %vm133, %v113, 0
    %v351 = vsel %vm133, %v114, 0
    %v354 = vsel %vm133, %v115, 0
    %v357 = vsel %vm133, %v116, 0
    %v360 = vsel %vm133, %v117, 0
    %v363 = vsel %vm133, %v118, 0
    %v366 = vsel %vm133, %v119, 0
    %v369 = vsel %vm133, %v120, 0
    %v372 = vsel %vm133, %v121, 0
    %v375 = vsel %vm133, %v122, 0
    %v378 = vsel %vm133, %v123, 0
    %v381 = vsel %vm133, %v124, 0
    %v384 = vsel %vm133, %v125, 0
    %v387 = vsel %vm133, %v126, 0
    %v390 = vsel %vm133, %v127, 0
    %v393 = vsel %vm133, %v128, 0
    %v396 = vsel %vm133, %v129, 0
    %398 = vmatpush.msra.mxu0 0.0
    %399 = vmatpush.msra.mxu0 0.0
    %400 = vmatpush.msra.mxu0 0.0
    %401 = vmatpush.msra.mxu0 0.0
    %402 = vmatpush.msra.mxu0 0.0
    %403 = vmatpush.msra.mxu0 0.0
    %404 = vmatpush.msra.mxu0 %v40
    %405 = vmatpush.msra.mxu0 %v39
    %406 = vmatpush.msra.mxu0 %v38
    %407 = vmatpush.msra.mxu0 %v37
    %408 = vmatpush.msra.mxu0 %v36
    %409 = vmatpush.msra.mxu0 %v35
    %410 = vmatpush.msra.mxu0 %v34
    %411 = vmatpush.msra.mxu0 %v33
    %412 = vmatpush.msra.mxu0 %v32
    %413 = vmatpush.msra.mxu0 %v31
    %414 = vmatmul.f32.gmra.mxu0 %v135
    %v415 = vpop.f32.mrf.mxu0
    %v416 = vadd.f32 %v131, %v415
    %417 = vmatmul.f32.gmra.mxu0 %v138
    %v418 = vpop.f32.mrf.mxu0
    %v419 = vadd.f32 %v131, %v418
    %420 = vmatmul.f32.gmra.mxu0 %v141
    %v421 = vpop.f32.mrf.mxu0
    %v422 = vadd.f32 %v131, %v421
    %423 = vmatmul.f32.gmra.mxu0 %v144
    %v424 = vpop.f32.mrf.mxu0
    %v425 = vadd.f32 %v131, %v424
    %426 = vmatmul.f32.gmra.mxu0 %v147
    %v427 = vpop.f32.mrf.mxu0
    %v428 = vadd.f32 %v131, %v427
    %429 = vmatmul.f32.gmra.mxu0 %v150
    %v430 = vpop.f32.mrf.mxu0
    %v431 = vadd.f32 %v131, %v430
    %432 = vmatmul.f32.gmra.mxu0 %v153
    %v433 = vpop.f32.mrf.mxu0
    %v434 = vadd.f32 %v131, %v433
    %435 = vmatmul.f32.gmra.mxu0 %v156
    %v436 = vpop.f32.mrf.mxu0
    %v437 = vadd.f32 %v131, %v436
    %438 = vmatmul.f32.gmra.mxu0 %v159
    %v439 = vpop.f32.mrf.mxu0
    %v440 = vadd.f32 %v131, %v439
    %441 = vmatmul.f32.gmra.mxu0 %v162
    %v442 = vpop.f32.mrf.mxu0
    %v443 = vadd.f32 %v131, %v442
    %444 = vmatmul.f32.gmra.mxu0 %v165
    %v445 = vpop.f32.mrf.mxu0
    %v446 = vadd.f32 %v131, %v445
    %447 = vmatmul.f32.gmra.mxu0 %v168
    %v448 = vpop.f32.mrf.mxu0
    %v449 = vadd.f32 %v131, %v448
    %450 = vmatmul.f32.gmra.mxu0 %v171
    %v451 = vpop.f32.mrf.mxu0
    %v452 = vadd.f32 %v131, %v451
    %453 = vmatmul.f32.gmra.mxu0 %v174
    %v454 = vpop.f32.mrf.mxu0
    %v455 = vadd.f32 %v131, %v454
    %456 = vmatmul.f32.gmra.mxu0 %v177
    %v457 = vpop.f32.mrf.mxu0
    %v458 = vadd.f32 %v131, %v457
    %459 = vmatmul.f32.gmra.mxu0 %v180
    %v460 = vpop.f32.mrf.mxu0
    %v461 = vadd.f32 %v131, %v460
    %462 = vmatmul.f32.gmra.mxu0 %v183
    %v463 = vpop.f32.mrf.mxu0
    %v464 = vadd.f32 %v131, %v463
    %465 = vmatmul.f32.gmra.mxu0 %v186
    %v466 = vpop.f32.mrf.mxu0
    %v467 = vadd.f32 %v131, %v466
    %468 = vmatmul.f32.gmra.mxu0 %v189
    %v469 = vpop.f32.mrf.mxu0
    %v470 = vadd.f32 %v131, %v469
    %471 = vmatmul.f32.gmra.mxu0 %v192
    %v472 = vpop.f32.mrf.mxu0
    %v473 = vadd.f32 %v131, %v472
    %474 = vmatmul.f32.gmra.mxu0 %v195
    %v475 = vpop.f32.mrf.mxu0
    %v476 = vadd.f32 %v131, %v475
    %477 = vmatmul.f32.gmra.mxu0 %v198
    %v478 = vpop.f32.mrf.mxu0
    %v479 = vadd.f32 %v131, %v478
    %480 = vmatmul.f32.gmra.mxu0 %v201
    %v481 = vpop.f32.mrf.mxu0
    %v482 = vadd.f32 %v131, %v481
    %483 = vmatmul.f32.gmra.mxu0 %v204
    %v484 = vpop.f32.mrf.mxu0
    %v485 = vadd.f32 %v131, %v484
    %486 = vmatmul.f32.gmra.mxu0 %v207
    %v487 = vpop.f32.mrf.mxu0
    %v488 = vadd.f32 %v131, %v487
    %489 = vmatmul.f32.gmra.mxu0 %v210
    %v490 = vpop.f32.mrf.mxu0
    %v491 = vadd.f32 %v131, %v490
    %492 = vmatmul.f32.gmra.mxu0 %v213
    %v493 = vpop.f32.mrf.mxu0
    %v494 = vadd.f32 %v131, %v493
    %495 = vmatmul.f32.gmra.mxu0 %v216
    %v496 = vpop.f32.mrf.mxu0
    %v497 = vadd.f32 %v131, %v496
    %498 = vmatmul.f32.gmra.mxu0 %v219
    %v499 = vpop.f32.mrf.mxu0
    %v500 = vadd.f32 %v131, %v499
    %501 = vmatmul.f32.gmra.mxu0 %v222
    %v502 = vpop.f32.mrf.mxu0
    %v503 = vadd.f32 %v131, %v502
    %504 = vmatmul.f32.gmra.mxu0 %v225
    %v505 = vpop.f32.mrf.mxu0
    %v506 = vadd.f32 %v131, %v505
    %507 = vmatmul.f32.gmra.mxu0 %v228
    %v508 = vpop.f32.mrf.mxu0
    %v509 = vadd.f32 %v131, %v508
    %510 = vmatmul.f32.gmra.mxu0 %v231
    %v511 = vpop.f32.mrf.mxu0
    %v512 = vadd.f32 %v131, %v511
    %513 = vmatmul.f32.gmra.mxu0 %v234
    %v514 = vpop.f32.mrf.mxu0
    %v515 = vadd.f32 %v131, %v514
    %516 = vmatmul.f32.gmra.mxu0 %v237
    %v517 = vpop.f32.mrf.mxu0
    %v518 = vadd.f32 %v131, %v517
    %519 = vmatmul.f32.gmra.mxu0 %v240
    %v520 = vpop.f32.mrf.mxu0
    %v521 = vadd.f32 %v131, %v520
    %522 = vmatmul.f32.gmra.mxu0 %v243
    %v523 = vpop.f32.mrf.mxu0
    %v524 = vadd.f32 %v131, %v523
    %525 = vmatmul.f32.gmra.mxu0 %v246
    %v526 = vpop.f32.mrf.mxu0
    %v527 = vadd.f32 %v131, %v526
    %528 = vmatmul.f32.gmra.mxu0 %v249
    %v529 = vpop.f32.mrf.mxu0
    %v530 = vadd.f32 %v131, %v529
    %531 = vmatmul.f32.gmra.mxu0 %v252
    %v532 = vpop.f32.mrf.mxu0
    %v533 = vadd.f32 %v131, %v532
    %534 = vmatmul.f32.gmra.mxu0 %v255
    %v535 = vpop.f32.mrf.mxu0
    %v536 = vadd.f32 %v131, %v535
    %537 = vmatmul.f32.gmra.mxu0 %v258
    %v538 = vpop.f32.mrf.mxu0
    %v539 = vadd.f32 %v131, %v538
    %540 = vmatmul.f32.gmra.mxu0 %v261
    %v541 = vpop.f32.mrf.mxu0
    %v542 = vadd.f32 %v131, %v541
    %543 = vmatmul.f32.gmra.mxu0 %v264
    %v544 = vpop.f32.mrf.mxu0
    %v545 = vadd.f32 %v131, %v544
    %546 = vmatmul.f32.gmra.mxu0 %v267
    %v547 = vpop.f32.mrf.mxu0
    %v548 = vadd.f32 %v131, %v547
    %549 = vmatmul.f32.gmra.mxu0 %v270
    %v550 = vpop.f32.mrf.mxu0
    %v551 = vadd.f32 %v131, %v550
    %552 = vmatmul.f32.gmra.mxu0 %v273
    %v553 = vpop.f32.mrf.mxu0
    %v554 = vadd.f32 %v131, %v553
    %555 = vmatmul.f32.gmra.mxu0 %v276
    %v556 = vpop.f32.mrf.mxu0
    %v557 = vadd.f32 %v131, %v556
    %558 = vmatmul.f32.gmra.mxu0 %v279
    %v559 = vpop.f32.mrf.mxu0
    %v560 = vadd.f32 %v131, %v559
    %561 = vmatmul.f32.gmra.mxu0 %v282
    %v562 = vpop.f32.mrf.mxu0
    %v563 = vadd.f32 %v131, %v562
    %564 = vmatmul.f32.gmra.mxu0 %v285
    %v565 = vpop.f32.mrf.mxu0
    %v566 = vadd.f32 %v131, %v565
    %567 = vmatmul.f32.gmra.mxu0 %v288
    %v568 = vpop.f32.mrf.mxu0
    %v569 = vadd.f32 %v131, %v568
    %570 = vmatmul.f32.gmra.mxu0 %v291
    %v571 = vpop.f32.mrf.mxu0
    %v572 = vadd.f32 %v131, %v571
    %573 = vmatmul.f32.gmra.mxu0 %v294
    %v574 = vpop.f32.mrf.mxu0
    %v575 = vadd.f32 %v131, %v574
    %576 = vmatmul.f32.gmra.mxu0 %v297
    %v577 = vpop.f32.mrf.mxu0
    %v578 = vadd.f32 %v131, %v577
    %579 = vmatmul.f32.gmra.mxu0 %v300
    %v580 = vpop.f32.mrf.mxu0
    %v581 = vadd.f32 %v131, %v580
    %582 = vmatmul.f32.gmra.mxu0 %v303
    %v583 = vpop.f32.mrf.mxu0
    %v584 = vadd.f32 %v131, %v583
    %585 = vmatmul.f32.gmra.mxu0 %v306
    %v586 = vpop.f32.mrf.mxu0
    %v587 = vadd.f32 %v131, %v586
    %588 = vmatmul.f32.gmra.mxu0 %v309
    %v589 = vpop.f32.mrf.mxu0
    %v590 = vadd.f32 %v131, %v589
    %591 = vmatmul.f32.gmra.mxu0 %v312
    %v592 = vpop.f32.mrf.mxu0
    %v593 = vadd.f32 %v131, %v592
    %594 = vmatmul.f32.gmra.mxu0 %v315
    %v595 = vpop.f32.mrf.mxu0
    %v596 = vadd.f32 %v131, %v595
    %597 = vmatmul.f32.gmra.mxu0 %v318
    %v598 = vpop.f32.mrf.mxu0
    %v599 = vadd.f32 %v131, %v598
    %600 = vmatmul.f32.gmra.mxu0 %v321
    %v601 = vpop.f32.mrf.mxu0
    %v602 = vadd.f32 %v131, %v601
    %603 = vmatmul.f32.gmra.mxu0 %v324
    %v604 = vpop.f32.mrf.mxu0
    %v605 = vadd.f32 %v131, %v604
    %606 = vmatmul.f32.gmra.mxu0 %v327
    %v607 = vpop.f32.mrf.mxu0
    %v608 = vadd.f32 %v131, %v607
    %609 = vmatmul.f32.gmra.mxu0 %v330
    %v610 = vpop.f32.mrf.mxu0
    %v611 = vadd.f32 %v131, %v610
    %612 = vmatmul.f32.gmra.mxu0 %v333
    %v613 = vpop.f32.mrf.mxu0
    %v614 = vadd.f32 %v131, %v613
    %615 = vmatmul.f32.gmra.mxu0 %v336
    %v616 = vpop.f32.mrf.mxu0
    %v617 = vadd.f32 %v131, %v616
    %618 = vmatmul.f32.gmra.mxu0 %v339
    %v619 = vpop.f32.mrf.mxu0
    %v620 = vadd.f32 %v131, %v619
    %621 = vmatmul.f32.gmra.mxu0 %v342
    %v622 = vpop.f32.mrf.mxu0
    %v623 = vadd.f32 %v131, %v622
    %624 = vmatmul.f32.gmra.mxu0 %v345
    %v625 = vpop.f32.mrf.mxu0
    %v626 = vadd.f32 %v131, %v625
    %627 = vmatmul.f32.gmra.mxu0 %v348
    %v628 = vpop.f32.mrf.mxu0
    %v629 = vadd.f32 %v131, %v628
    %630 = vmatmul.f32.gmra.mxu0 %v351
    %v631 = vpop.f32.mrf.mxu0
    %v632 = vadd.f32 %v131, %v631
    %633 = vmatmul.f32.gmra.mxu0 %v354
    %v634 = vpop.f32.mrf.mxu0
    %v635 = vadd.f32 %v131, %v634
    %636 = vmatmul.f32.gmra.mxu0 %v357
    %v637 = vpop.f32.mrf.mxu0
    %v638 = vadd.f32 %v131, %v637
    %639 = vmatmul.f32.gmra.mxu0 %v360
    %v640 = vpop.f32.mrf.mxu0
    %v641 = vadd.f32 %v131, %v640
    %642 = vmatmul.f32.gmra.mxu0 %v363
    %v643 = vpop.f32.mrf.mxu0
    %v644 = vadd.f32 %v131, %v643
    %645 = vmatmul.f32.gmra.mxu0 %v366
    %v646 = vpop.f32.mrf.mxu0
    %v647 = vadd.f32 %v131, %v646
    %648 = vmatmul.f32.gmra.mxu0 %v369
    %v649 = vpop.f32.mrf.mxu0
    %v650 = vadd.f32 %v131, %v649
    %651 = vmatmul.f32.gmra.mxu0 %v372
    %v652 = vpop.f32.mrf.mxu0
    %v653 = vadd.f32 %v131, %v652
    %654 = vmatmul.f32.gmra.mxu0 %v375
    %v655 = vpop.f32.mrf.mxu0
    %v656 = vadd.f32 %v131, %v655
    %657 = vmatmul.f32.gmra.mxu0 %v378
    %v658 = vpop.f32.mrf.mxu0
    %v659 = vadd.f32 %v131, %v658
    %660 = vmatmul.f32.gmra.mxu0 %v381
    %v661 = vpop.f32.mrf.mxu0
    %v662 = vadd.f32 %v131, %v661
    %663 = vmatmul.f32.gmra.mxu0 %v384
    %v664 = vpop.f32.mrf.mxu0
    %v665 = vadd.f32 %v131, %v664
    %666 = vmatmul.f32.gmra.mxu0 %v387
    %v667 = vpop.f32.mrf.mxu0
    %v668 = vadd.f32 %v131, %v667
    %669 = vmatmul.f32.gmra.mxu0 %v390
    %v670 = vpop.f32.mrf.mxu0
    %v671 = vadd.f32 %v131, %v670
    %672 = vmatmul.f32.gmra.mxu0 %v393
    %v673 = vpop.f32.mrf.mxu0
    %v674 = vadd.f32 %v131, %v673
    %675 = vmatmul.f32.gmra.mxu0 %v396
    %v676 = vpop.f32.mrf.mxu0
    %v677 = vadd.f32 %v131, %v676
    %678 = vdwg.mxu0
    %v679 = vmax.f32 %v416, 0.0
    %v680 = vmax.f32 %v419, 0.0
    %v681 = vmax.f32 %v422, 0.0
    %v682 = vmax.f32 %v425, 0.0
    %v683 = vmax.f32 %v428, 0.0
    %v684 = vmax.f32 %v431, 0.0
    %v685 = vmax.f32 %v434, 0.0
    %v686 = vmax.f32 %v437, 0.0
    %v687 = vmax.f32 %v440, 0.0
    %v688 = vmax.f32 %v443, 0.0
    %v689 = vmax.f32 %v446, 0.0
    %v690 = vmax.f32 %v449, 0.0
    %v691 = vmax.f32 %v452, 0.0
    %v692 = vmax.f32 %v455, 0.0
    %v693 = vmax.f32 %v458, 0.0
    %v694 = vmax.f32 %v461, 0.0
    %v695 = vmax.f32 %v464, 0.0
    %v696 = vmax.f32 %v467, 0.0
    %v697 = vmax.f32 %v470, 0.0
    %v698 = vmax.f32 %v473, 0.0
    %v699 = vmax.f32 %v476, 0.0
    %v700 = vmax.f32 %v479, 0.0
    %v701 = vmax.f32 %v482, 0.0
    %v702 = vmax.f32 %v485, 0.0
    %v703 = vmax.f32 %v488, 0.0
    %v704 = vmax.f32 %v491, 0.0
    %v705 = vmax.f32 %v494, 0.0
    %v706 = vmax.f32 %v497, 0.0
    %v707 = vmax.f32 %v500, 0.0
    %v708 = vmax.f32 %v503, 0.0
    %v709 = vmax.f32 %v506, 0.0
    %v710 = vmax.f32 %v509, 0.0
    %v711 = vmax.f32 %v512, 0.0
    %v712 = vmax.f32 %v515, 0.0
    %v713 = vmax.f32 %v518, 0.0
    %v714 = vmax.f32 %v521, 0.0
    %v715 = vmax.f32 %v524, 0.0
    %v716 = vmax.f32 %v527, 0.0
    %v717 = vmax.f32 %v530, 0.0
    %v718 = vmax.f32 %v533, 0.0
    %v719 = vmax.f32 %v536, 0.0
    %v720 = vmax.f32 %v539, 0.0
    %v721 = vmax.f32 %v542, 0.0
    %v722 = vmax.f32 %v545, 0.0
    %v723 = vmax.f32 %v548, 0.0
    %v724 = vmax.f32 %v551, 0.0
    %v725 = vmax.f32 %v554, 0.0
    %v726 = vmax.f32 %v557, 0.0
    %v727 = vmax.f32 %v560, 0.0
    %v728 = vmax.f32 %v563, 0.0
    %v729 = vmax.f32 %v566, 0.0
    %v730 = vmax.f32 %v569, 0.0
    %v731 = vmax.f32 %v572, 0.0
    %v732 = vmax.f32 %v575, 0.0
    %v733 = vmax.f32 %v578, 0.0
    %v734 = vmax.f32 %v581, 0.0
    %v735 = vmax.f32 %v584, 0.0
    %v736 = vmax.f32 %v587, 0.0
    %v737 = vmax.f32 %v590, 0.0
    %v738 = vmax.f32 %v593, 0.0
    %v739 = vmax.f32 %v596, 0.0
    %v740 = vmax.f32 %v599, 0.0
    %v741 = vmax.f32 %v602, 0.0
    %v742 = vmax.f32 %v605, 0.0
    %v743 = vmax.f32 %v608, 0.0
    %v744 = vmax.f32 %v611, 0.0
    %v745 = vmax.f32 %v614, 0.0
    %v746 = vmax.f32 %v617, 0.0
    %v747 = vmax.f32 %v620, 0.0
    %v748 = vmax.f32 %v623, 0.0
    %v749 = vmax.f32 %v626, 0.0
    %v750 = vmax.f32 %v629, 0.0
    %v751 = vmax.f32 %v632, 0.0
    %v752 = vmax.f32 %v635, 0.0
    %v753 = vmax.f32 %v638, 0.0
    %v754 = vmax.f32 %v641, 0.0
    %v755 = vmax.f32 %v644, 0.0
    %v756 = vmax.f32 %v647, 0.0
    %v757 = vmax.f32 %v650, 0.0
    %v758 = vmax.f32 %v653, 0.0
    %v759 = vmax.f32 %v656, 0.0
    %v760 = vmax.f32 %v659, 0.0
    %v761 = vmax.f32 %v662, 0.0
    %v762 = vmax.f32 %v665, 0.0
    %v763 = vmax.f32 %v668, 0.0
    %v764 = vmax.f32 %v671, 0.0
    %v765 = vmax.f32 %v674, 0.0
    %v766 = vmax.f32 %v677, 0.0
    %v767 = vld [vmem:[%s1] sm:$0xff]
    %v768 = vld [vmem:[%s1 + $0x8] sm:$0xff]
    %v769 = vld [vmem:[%s1 + $0x10] sm:$0xff]
    %v770 = vld [vmem:[%s1 + $0x18] sm:$0xff]
    %v771 = vld [vmem:[%s1 + $0x20] sm:$0xff]
    %v772 = vld [vmem:[%s1 + $0x28] sm:$0xff]
    %v773 = vld [vmem:[%s1 + $0x30] sm:$0xff]
    %v774 = vld [vmem:[%s1 + $0x38] sm:$0xff]
    %v775 = vld [vmem:[%s1 + $0x40] sm:$0xff]
    %v776 = vld [vmem:[%s1 + $0x48] sm:$0xff]
    %v777 = vld [vmem:[%s1 + $0x50] sm:$0xff]
    %v778 = vld [vmem:[%s1 + $0x58] sm:$0xff]
    %v779 = vld [vmem:[%s1 + $0x60] sm:$0xff]
    %v780 = vld [vmem:[%s1 + $0x68] sm:$0xff]
    %v781 = vld [vmem:[%s1 + $0x70] sm:$0xff]
    %v782 = vld [vmem:[%s1 + $0x78] sm:$0xff]
    %v783 = vld [vmem:[%s1 + $0x80] sm:$0xff]
    %v784 = vld [vmem:[%s1 + $0x88] sm:$0xff]
    %v785 = vld [vmem:[%s1 + $0x90] sm:$0xff]
    %v786 = vld [vmem:[%s1 + $0x98] sm:$0xff]
    %v787 = vld [vmem:[%s1 + $0xa0] sm:$0xff]
    %v788 = vld [vmem:[%s1 + $0xa8] sm:$0xff]
    %v789 = vld [vmem:[%s1 + $0xb0] sm:$0xff]
    %v790 = vld [vmem:[%s1 + $0xb8] sm:$0xff]
    %v791 = vld [vmem:[%s1 + $0xc0] sm:$0xff]
    %v792 = vld [vmem:[%s1 + $0xc8] sm:$0xff]
    %v793 = vld [vmem:[%s1 + $0xd0] sm:$0xff]
    %v794 = vld [vmem:[%s1 + $0xd8] sm:$0xff]
    %v795 = vld [vmem:[%s1 + $0xe0] sm:$0xff]
    %v796 = vld [vmem:[%s1 + $0xe8] sm:$0xff]
    %v797 = vld [vmem:[%s1 + $0xf0] sm:$0xff]
    %v798 = vld [vmem:[%s1 + $0xf8] sm:$0xff]
    %v799 = vld [vmem:[%s1 + $0x100] sm:$0xff]
    %v800 = vld [vmem:[%s1 + $0x108] sm:$0xff]
    %v801 = vld [vmem:[%s1 + $0x110] sm:$0xff]
    %v802 = vld [vmem:[%s1 + $0x118] sm:$0xff]
    %v803 = vld [vmem:[%s1 + $0x120] sm:$0xff]
    %v804 = vld [vmem:[%s1 + $0x128] sm:$0xff]
    %v805 = vld [vmem:[%s1 + $0x130] sm:$0xff]
    %v806 = vld [vmem:[%s1 + $0x138] sm:$0xff]
    %v807 = vld [vmem:[%s1 + $0x140] sm:$0xff]
    %v808 = vld [vmem:[%s1 + $0x148] sm:$0xff]
    %v809 = vld [vmem:[%s1 + $0x150] sm:$0xff]
    %v810 = vld [vmem:[%s1 + $0x158] sm:$0xff]
    %v811 = vld [vmem:[%s1 + $0x160] sm:$0xff]
    %v812 = vld [vmem:[%s1 + $0x168] sm:$0xff]
    %v813 = vld [vmem:[%s1 + $0x170] sm:$0xff]
    %v814 = vld [vmem:[%s1 + $0x178] sm:$0xff]
    %v815 = vld [vmem:[%s1 + $0x180] sm:$0xff]
    %v816 = vld [vmem:[%s1 + $0x188] sm:$0xff]
    %v817 = vld [vmem:[%s1 + $0x190] sm:$0xff]
    %v818 = vld [vmem:[%s1 + $0x198] sm:$0xff]
    %v819 = vld [vmem:[%s1 + $0x1a0] sm:$0xff]
    %v820 = vld [vmem:[%s1 + $0x1a8] sm:$0xff]
    %v821 = vld [vmem:[%s1 + $0x1b0] sm:$0xff]
    %v822 = vld [vmem:[%s1 + $0x1b8] sm:$0xff]
    %v823 = vld [vmem:[%s1 + $0x1c0] sm:$0xff]
    %v824 = vld [vmem:[%s1 + $0x1c8] sm:$0xff]
    %v825 = vld [vmem:[%s1 + $0x1d0] sm:$0xff]
    %v826 = vld [vmem:[%s1 + $0x1d8] sm:$0xff]
    %v827 = vld [vmem:[%s1 + $0x1e0] sm:$0xff]
    %v828 = vld [vmem:[%s1 + $0x1e8] sm:$0xff]
    %v829 = vld [vmem:[%s1 + $0x1f0] sm:$0xff]
    %v830 = vld [vmem:[%s1 + $0x1f8] sm:$0xff]
    %v831 = vld [vmem:[%s1 + $0x200] sm:$0xff]
    %v832 = vld [vmem:[%s1 + $0x208] sm:$0xff]
    %v833 = vld [vmem:[%s1 + $0x210] sm:$0xff]
    %v834 = vld [vmem:[%s1 + $0x218] sm:$0xff]
    %v835 = vld [vmem:[%s1 + $0x220] sm:$0xff]
    %v836 = vld [vmem:[%s1 + $0x228] sm:$0xff]
    %v837 = vld [vmem:[%s1 + $0x230] sm:$0xff]
    %v838 = vld [vmem:[%s1 + $0x238] sm:$0xff]
    %v839 = vld [vmem:[%s1 + $0x240] sm:$0xff]
    %v840 = vld [vmem:[%s1 + $0x248] sm:$0xff]
    %v841 = vld [vmem:[%s1 + $0x250] sm:$0xff]
    %v842 = vld [vmem:[%s1 + $0x258] sm:$0xff]
    %v843 = vld [vmem:[%s1 + $0x260] sm:$0xff]
    %v844 = vld [vmem:[%s1 + $0x268] sm:$0xff]
    %v845 = vld [vmem:[%s1 + $0x270] sm:$0xff]
    %v846 = vld [vmem:[%s1 + $0x278] sm:$0xff]
    %v847 = vld [vmem:[%s1 + $0x280] sm:$0xff]
    %v848 = vld [vmem:[%s1 + $0x288] sm:$0xff]
    %v849 = vld [vmem:[%s1 + $0x290] sm:$0xff]
    %v850 = vld [vmem:[%s1 + $0x298] sm:$0xff]
    %v851 = vld [vmem:[%s1 + $0x2a0] sm:$0xff]
    %v852 = vld [vmem:[%s1 + $0x2a8] sm:$0xff]
    %v853 = vld [vmem:[%s1 + $0x2b0] sm:$0xff]
    %v854 = vld [vmem:[%s1 + $0x2b8] sm:$0x3]
    %v856 = vsel %vm133, %v767, 0
    %v859 = vsel %vm133, %v768, 0
    %v862 = vsel %vm133, %v769, 0
    %v865 = vsel %vm133, %v770, 0
    %v868 = vsel %vm133, %v771, 0
    %v871 = vsel %vm133, %v772, 0
    %v874 = vsel %vm133, %v773, 0
    %v877 = vsel %vm133, %v774, 0
    %v880 = vsel %vm133, %v775, 0
    %v883 = vsel %vm133, %v776, 0
    %v886 = vsel %vm133, %v777, 0
    %v889 = vsel %vm133, %v778, 0
    %v892 = vsel %vm133, %v779, 0
    %v895 = vsel %vm133, %v780, 0
    %v898 = vsel %vm133, %v781, 0
    %v901 = vsel %vm133, %v782, 0
    %v904 = vsel %vm133, %v783, 0
    %v907 = vsel %vm133, %v784, 0
    %v910 = vsel %vm133, %v785, 0
    %v913 = vsel %vm133, %v786, 0
    %v916 = vsel %vm133, %v787, 0
    %v919 = vsel %vm133, %v788, 0
    %v922 = vsel %vm133, %v789, 0
    %v925 = vsel %vm133, %v790, 0
    %v928 = vsel %vm133, %v791, 0
    %v931 = vsel %vm133, %v792, 0
    %v934 = vsel %vm133, %v793, 0
    %v937 = vsel %vm133, %v794, 0
    %v940 = vsel %vm133, %v795, 0
    %v943 = vsel %vm133, %v796, 0
    %v946 = vsel %vm133, %v797, 0
    %v949 = vsel %vm133, %v798, 0
    %v952 = vsel %vm133, %v799, 0
    %v955 = vsel %vm133, %v800, 0
    %v958 = vsel %vm133, %v801, 0
    %v961 = vsel %vm133, %v802, 0
    %v964 = vsel %vm133, %v803, 0
    %v967 = vsel %vm133, %v804, 0
    %v970 = vsel %vm133, %v805, 0
    %v973 = vsel %vm133, %v806, 0
    %v976 = vsel %vm133, %v807, 0
    %v979 = vsel %vm133, %v808, 0
    %v982 = vsel %vm133, %v809, 0
    %v985 = vsel %vm133, %v810, 0
    %v988 = vsel %vm133, %v811, 0
    %v991 = vsel %vm133, %v812, 0
    %v994 = vsel %vm133, %v813, 0
    %v997 = vsel %vm133, %v814, 0
    %v1000 = vsel %vm133, %v815, 0
    %v1003 = vsel %vm133, %v816, 0
    %v1006 = vsel %vm133, %v817, 0
    %v1009 = vsel %vm133, %v818, 0
    %v1012 = vsel %vm133, %v819, 0
    %v1015 = vsel %vm133, %v820, 0
    %v1018 = vsel %vm133, %v821, 0
    %v1021 = vsel %vm133, %v822, 0
    %v1024 = vsel %vm133, %v823, 0
    %v1027 = vsel %vm133, %v824, 0
    %v1030 = vsel %vm133, %v825, 0
    %v1033 = vsel %vm133, %v826, 0
    %v1036 = vsel %vm133, %v827, 0
    %v1039 = vsel %vm133, %v828, 0
    %v1042 = vsel %vm133, %v829, 0
    %v1045 = vsel %vm133, %v830, 0
    %v1048 = vsel %vm133, %v831, 0
    %v1051 = vsel %vm133, %v832, 0
    %v1054 = vsel %vm133, %v833, 0
    %v1057 = vsel %vm133, %v834, 0
    %v1060 = vsel %vm133, %v835, 0
    %v1063 = vsel %vm133, %v836, 0
    %v1066 = vsel %vm133, %v837, 0
    %v1069 = vsel %vm133, %v838, 0
    %v1072 = vsel %vm133, %v839, 0
    %v1075 = vsel %vm133, %v840, 0
    %v1078 = vsel %vm133, %v841, 0
    %v1081 = vsel %vm133, %v842, 0
    %v1084 = vsel %vm133, %v843, 0
    %v1087 = vsel %vm133, %v844, 0
    %v1090 = vsel %vm133, %v845, 0
    %v1093 = vsel %vm133, %v846, 0
    %v1096 = vsel %vm133, %v847, 0
    %v1099 = vsel %vm133, %v848, 0
    %v1102 = vsel %vm133, %v849, 0
    %v1105 = vsel %vm133, %v850, 0
    %v1108 = vsel %vm133, %v851, 0
    %v1111 = vsel %vm133, %v852, 0
    %v1114 = vsel %vm133, %v853, 0
    %v1117 = vsel %vm133, %v854, 0
    %1119 = vmatpush.msra.mxu0 0.0
    %1120 = vmatpush.msra.mxu0 0.0
    %1121 = vmatpush.msra.mxu0 0.0
    %1122 = vmatpush.msra.mxu0 0.0
    %1123 = vmatpush.msra.mxu0 0.0
    %1124 = vmatpush.msra.mxu0 0.0
    %1125 = vmatpush.msra.mxu0 %v40
    %1126 = vmatpush.msra.mxu0 %v39
    %1127 = vmatpush.msra.mxu0 %v38
    %1128 = vmatpush.msra.mxu0 %v37
    %1129 = vmatpush.msra.mxu0 %v36
    %1130 = vmatpush.msra.mxu0 %v35
    %1131 = vmatpush.msra.mxu0 %v34
    %1132 = vmatpush.msra.mxu0 %v33
    %1133 = vmatpush.msra.mxu0 %v32
    %1134 = vmatpush.msra.mxu0 %v31
    %1135 = vmatmul.f32.gmra.mxu0 %v856
    %v1136 = vpop.f32.mrf.mxu0
    %v1137 = vadd.f32 %v131, %v1136
    %1138 = vmatmul.f32.gmra.mxu0 %v859
    %v1139 = vpop.f32.mrf.mxu0
    %v1140 = vadd.f32 %v131, %v1139
    %1141 = vmatmul.f32.gmra.mxu0 %v862
    %v1142 = vpop.f32.mrf.mxu0
    %v1143 = vadd.f32 %v131, %v1142
    %1144 = vmatmul.f32.gmra.mxu0 %v865
    %v1145 = vpop.f32.mrf.mxu0
    %v1146 = vadd.f32 %v131, %v1145
    %1147 = vmatmul.f32.gmra.mxu0 %v868
    %v1148 = vpop.f32.mrf.mxu0
    %v1149 = vadd.f32 %v131, %v1148
    %1150 = vmatmul.f32.gmra.mxu0 %v871
    %v1151 = vpop.f32.mrf.mxu0
    %v1152 = vadd.f32 %v131, %v1151
    %1153 = vmatmul.f32.gmra.mxu0 %v874
    %v1154 = vpop.f32.mrf.mxu0
    %v1155 = vadd.f32 %v131, %v1154
    %1156 = vmatmul.f32.gmra.mxu0 %v877
    %v1157 = vpop.f32.mrf.mxu0
    %v1158 = vadd.f32 %v131, %v1157
    %1159 = vmatmul.f32.gmra.mxu0 %v880
    %v1160 = vpop.f32.mrf.mxu0
    %v1161 = vadd.f32 %v131, %v1160
    %1162 = vmatmul.f32.gmra.mxu0 %v883
    %v1163 = vpop.f32.mrf.mxu0
    %v1164 = vadd.f32 %v131, %v1163
    %1165 = vmatmul.f32.gmra.mxu0 %v886
    %v1166 = vpop.f32.mrf.mxu0
    %v1167 = vadd.f32 %v131, %v1166
    %1168 = vmatmul.f32.gmra.mxu0 %v889
    %v1169 = vpop.f32.mrf.mxu0
    %v1170 = vadd.f32 %v131, %v1169
    %1171 = vmatmul.f32.gmra.mxu0 %v892
    %v1172 = vpop.f32.mrf.mxu0
    %v1173 = vadd.f32 %v131, %v1172
    %1174 = vmatmul.f32.gmra.mxu0 %v895
    %v1175 = vpop.f32.mrf.mxu0
    %v1176 = vadd.f32 %v131, %v1175
    %1177 = vmatmul.f32.gmra.mxu0 %v898
    %v1178 = vpop.f32.mrf.mxu0
    %v1179 = vadd.f32 %v131, %v1178
    %1180 = vmatmul.f32.gmra.mxu0 %v901
    %v1181 = vpop.f32.mrf.mxu0
    %v1182 = vadd.f32 %v131, %v1181
    %1183 = vmatmul.f32.gmra.mxu0 %v904
    %v1184 = vpop.f32.mrf.mxu0
    %v1185 = vadd.f32 %v131, %v1184
    %1186 = vmatmul.f32.gmra.mxu0 %v907
    %v1187 = vpop.f32.mrf.mxu0
    %v1188 = vadd.f32 %v131, %v1187
    %1189 = vmatmul.f32.gmra.mxu0 %v910
    %v1190 = vpop.f32.mrf.mxu0
    %v1191 = vadd.f32 %v131, %v1190
    %1192 = vmatmul.f32.gmra.mxu0 %v913
    %v1193 = vpop.f32.mrf.mxu0
    %v1194 = vadd.f32 %v131, %v1193
    %1195 = vmatmul.f32.gmra.mxu0 %v916
    %v1196 = vpop.f32.mrf.mxu0
    %v1197 = vadd.f32 %v131, %v1196
    %1198 = vmatmul.f32.gmra.mxu0 %v919
    %v1199 = vpop.f32.mrf.mxu0
    %v1200 = vadd.f32 %v131, %v1199
    %1201 = vmatmul.f32.gmra.mxu0 %v922
    %v1202 = vpop.f32.mrf.mxu0
    %v1203 = vadd.f32 %v131, %v1202
    %1204 = vmatmul.f32.gmra.mxu0 %v925
    %v1205 = vpop.f32.mrf.mxu0
    %v1206 = vadd.f32 %v131, %v1205
    %1207 = vmatmul.f32.gmra.mxu0 %v928
    %v1208 = vpop.f32.mrf.mxu0
    %v1209 = vadd.f32 %v131, %v1208
    %1210 = vmatmul.f32.gmra.mxu0 %v931
    %v1211 = vpop.f32.mrf.mxu0
    %v1212 = vadd.f32 %v131, %v1211
    %1213 = vmatmul.f32.gmra.mxu0 %v934
    %v1214 = vpop.f32.mrf.mxu0
    %v1215 = vadd.f32 %v131, %v1214
    %1216 = vmatmul.f32.gmra.mxu0 %v937
    %v1217 = vpop.f32.mrf.mxu0
    %v1218 = vadd.f32 %v131, %v1217
    %1219 = vmatmul.f32.gmra.mxu0 %v940
    %v1220 = vpop.f32.mrf.mxu0
    %v1221 = vadd.f32 %v131, %v1220
    %1222 = vmatmul.f32.gmra.mxu0 %v943
    %v1223 = vpop.f32.mrf.mxu0
    %v1224 = vadd.f32 %v131, %v1223
    %1225 = vmatmul.f32.gmra.mxu0 %v946
    %v1226 = vpop.f32.mrf.mxu0
    %v1227 = vadd.f32 %v131, %v1226
    %1228 = vmatmul.f32.gmra.mxu0 %v949
    %v1229 = vpop.f32.mrf.mxu0
    %v1230 = vadd.f32 %v131, %v1229
    %1231 = vmatmul.f32.gmra.mxu0 %v952
    %v1232 = vpop.f32.mrf.mxu0
    %v1233 = vadd.f32 %v131, %v1232
    %1234 = vmatmul.f32.gmra.mxu0 %v955
    %v1235 = vpop.f32.mrf.mxu0
    %v1236 = vadd.f32 %v131, %v1235
    %1237 = vmatmul.f32.gmra.mxu0 %v958
    %v1238 = vpop.f32.mrf.mxu0
    %v1239 = vadd.f32 %v131, %v1238
    %1240 = vmatmul.f32.gmra.mxu0 %v961
    %v1241 = vpop.f32.mrf.mxu0
    %v1242 = vadd.f32 %v131, %v1241
    %1243 = vmatmul.f32.gmra.mxu0 %v964
    %v1244 = vpop.f32.mrf.mxu0
    %v1245 = vadd.f32 %v131, %v1244
    %1246 = vmatmul.f32.gmra.mxu0 %v967
    %v1247 = vpop.f32.mrf.mxu0
    %v1248 = vadd.f32 %v131, %v1247
    %1249 = vmatmul.f32.gmra.mxu0 %v970
    %v1250 = vpop.f32.mrf.mxu0
    %v1251 = vadd.f32 %v131, %v1250
    %1252 = vmatmul.f32.gmra.mxu0 %v973
    %v1253 = vpop.f32.mrf.mxu0
    %v1254 = vadd.f32 %v131, %v1253
    %1255 = vmatmul.f32.gmra.mxu0 %v976
    %v1256 = vpop.f32.mrf.mxu0
    %v1257 = vadd.f32 %v131, %v1256
    %1258 = vmatmul.f32.gmra.mxu0 %v979
    %v1259 = vpop.f32.mrf.mxu0
    %v1260 = vadd.f32 %v131, %v1259
    %1261 = vmatmul.f32.gmra.mxu0 %v982
    %v1262 = vpop.f32.mrf.mxu0
    %v1263 = vadd.f32 %v131, %v1262
    %1264 = vmatmul.f32.gmra.mxu0 %v985
    %v1265 = vpop.f32.mrf.mxu0
    %v1266 = vadd.f32 %v131, %v1265
    %1267 = vmatmul.f32.gmra.mxu0 %v988
    %v1268 = vpop.f32.mrf.mxu0
    %v1269 = vadd.f32 %v131, %v1268
    %1270 = vmatmul.f32.gmra.mxu0 %v991
    %v1271 = vpop.f32.mrf.mxu0
    %v1272 = vadd.f32 %v131, %v1271
    %1273 = vmatmul.f32.gmra.mxu0 %v994
    %v1274 = vpop.f32.mrf.mxu0
    %v1275 = vadd.f32 %v131, %v1274
    %1276 = vmatmul.f32.gmra.mxu0 %v997
    %v1277 = vpop.f32.mrf.mxu0
    %v1278 = vadd.f32 %v131, %v1277
    %1279 = vmatmul.f32.gmra.mxu0 %v1000
    %v1280 = vpop.f32.mrf.mxu0
    %v1281 = vadd.f32 %v131, %v1280
    %1282 = vmatmul.f32.gmra.mxu0 %v1003
    %v1283 = vpop.f32.mrf.mxu0
    %v1284 = vadd.f32 %v131, %v1283
    %1285 = vmatmul.f32.gmra.mxu0 %v1006
    %v1286 = vpop.f32.mrf.mxu0
    %v1287 = vadd.f32 %v131, %v1286
    %1288 = vmatmul.f32.gmra.mxu0 %v1009
    %v1289 = vpop.f32.mrf.mxu0
    %v1290 = vadd.f32 %v131, %v1289
    %1291 = vmatmul.f32.gmra.mxu0 %v1012
    %v1292 = vpop.f32.mrf.mxu0
    %v1293 = vadd.f32 %v131, %v1292
    %1294 = vmatmul.f32.gmra.mxu0 %v1015
    %v1295 = vpop.f32.mrf.mxu0
    %v1296 = vadd.f32 %v131, %v1295
    %1297 = vmatmul.f32.gmra.mxu0 %v1018
    %v1298 = vpop.f32.mrf.mxu0
    %v1299 = vadd.f32 %v131, %v1298
    %1300 = vmatmul.f32.gmra.mxu0 %v1021
    %v1301 = vpop.f32.mrf.mxu0
    %v1302 = vadd.f32 %v131, %v1301
    %1303 = vmatmul.f32.gmra.mxu0 %v1024
    %v1304 = vpop.f32.mrf.mxu0
    %v1305 = vadd.f32 %v131, %v1304
    %1306 = vmatmul.f32.gmra.mxu0 %v1027
    %v1307 = vpop.f32.mrf.mxu0
    %v1308 = vadd.f32 %v131, %v1307
    %1309 = vmatmul.f32.gmra.mxu0 %v1030
    %v1310 = vpop.f32.mrf.mxu0
    %v1311 = vadd.f32 %v131, %v1310
    %1312 = vmatmul.f32.gmra.mxu0 %v1033
    %v1313 = vpop.f32.mrf.mxu0
    %v1314 = vadd.f32 %v131, %v1313
    %1315 = vmatmul.f32.gmra.mxu0 %v1036
    %v1316 = vpop.f32.mrf.mxu0
    %v1317 = vadd.f32 %v131, %v1316
    %1318 = vmatmul.f32.gmra.mxu0 %v1039
    %v1319 = vpop.f32.mrf.mxu0
    %v1320 = vadd.f32 %v131, %v1319
    %1321 = vmatmul.f32.gmra.mxu0 %v1042
    %v1322 = vpop.f32.mrf.mxu0
    %v1323 = vadd.f32 %v131, %v1322
    %1324 = vmatmul.f32.gmra.mxu0 %v1045
    %v1325 = vpop.f32.mrf.mxu0
    %v1326 = vadd.f32 %v131, %v1325
    %1327 = vmatmul.f32.gmra.mxu0 %v1048
    %v1328 = vpop.f32.mrf.mxu0
    %v1329 = vadd.f32 %v131, %v1328
    %1330 = vmatmul.f32.gmra.mxu0 %v1051
    %v1331 = vpop.f32.mrf.mxu0
    %v1332 = vadd.f32 %v131, %v1331
    %1333 = vmatmul.f32.gmra.mxu0 %v1054
    %v1334 = vpop.f32.mrf.mxu0
    %v1335 = vadd.f32 %v131, %v1334
    %1336 = vmatmul.f32.gmra.mxu0 %v1057
    %v1337 = vpop.f32.mrf.mxu0
    %v1338 = vadd.f32 %v131, %v1337
    %1339 = vmatmul.f32.gmra.mxu0 %v1060
    %v1340 = vpop.f32.mrf.mxu0
    %v1341 = vadd.f32 %v131, %v1340
    %1342 = vmatmul.f32.gmra.mxu0 %v1063
    %v1343 = vpop.f32.mrf.mxu0
    %v1344 = vadd.f32 %v131, %v1343
    %1345 = vmatmul.f32.gmra.mxu0 %v1066
    %v1346 = vpop.f32.mrf.mxu0
    %v1347 = vadd.f32 %v131, %v1346
    %1348 = vmatmul.f32.gmra.mxu0 %v1069
    %v1349 = vpop.f32.mrf.mxu0
    %v1350 = vadd.f32 %v131, %v1349
    %1351 = vmatmul.f32.gmra.mxu0 %v1072
    %v1352 = vpop.f32.mrf.mxu0
    %v1353 = vadd.f32 %v131, %v1352
    %1354 = vmatmul.f32.gmra.mxu0 %v1075
    %v1355 = vpop.f32.mrf.mxu0
    %v1356 = vadd.f32 %v131, %v1355
    %1357 = vmatmul.f32.gmra.mxu0 %v1078
    %v1358 = vpop.f32.mrf.mxu0
    %v1359 = vadd.f32 %v131, %v1358
    %1360 = vmatmul.f32.gmra.mxu0 %v1081
    %v1361 = vpop.f32.mrf.mxu0
    %v1362 = vadd.f32 %v131, %v1361
    %1363 = vmatmul.f32.gmra.mxu0 %v1084
    %v1364 = vpop.f32.mrf.mxu0
    %v1365 = vadd.f32 %v131, %v1364
    %1366 = vmatmul.f32.gmra.mxu0 %v1087
    %v1367 = vpop.f32.mrf.mxu0
    %v1368 = vadd.f32 %v131, %v1367
    %1369 = vmatmul.f32.gmra.mxu0 %v1090
    %v1370 = vpop.f32.mrf.mxu0
    %v1371 = vadd.f32 %v131, %v1370
    %1372 = vmatmul.f32.gmra.mxu0 %v1093
    %v1373 = vpop.f32.mrf.mxu0
    %v1374 = vadd.f32 %v131, %v1373
    %1375 = vmatmul.f32.gmra.mxu0 %v1096
    %v1376 = vpop.f32.mrf.mxu0
    %v1377 = vadd.f32 %v131, %v1376
    %1378 = vmatmul.f32.gmra.mxu0 %v1099
    %v1379 = vpop.f32.mrf.mxu0
    %v1380 = vadd.f32 %v131, %v1379
    %1381 = vmatmul.f32.gmra.mxu0 %v1102
    %v1382 = vpop.f32.mrf.mxu0
    %v1383 = vadd.f32 %v131, %v1382
    %1384 = vmatmul.f32.gmra.mxu0 %v1105
    %v1385 = vpop.f32.mrf.mxu0
    %v1386 = vadd.f32 %v131, %v1385
    %1387 = vmatmul.f32.gmra.mxu0 %v1108
    %v1388 = vpop.f32.mrf.mxu0
    %v1389 = vadd.f32 %v131, %v1388
    %1390 = vmatmul.f32.gmra.mxu0 %v1111
    %v1391 = vpop.f32.mrf.mxu0
    %v1392 = vadd.f32 %v131, %v1391
    %1393 = vmatmul.f32.gmra.mxu0 %v1114
    %v1394 = vpop.f32.mrf.mxu0
    %v1395 = vadd.f32 %v131, %v1394
    %1396 = vmatmul.f32.gmra.mxu0 %v1117
    %v1397 = vpop.f32.mrf.mxu0
    %v1398 = vadd.f32 %v131, %v1397
    %1399 = vdwg.mxu0
    %v1400 = vmax.f32 %v1137, 0.0
    %v1401 = vmax.f32 %v1140, 0.0
    %v1402 = vmax.f32 %v1143, 0.0
    %v1403 = vmax.f32 %v1146, 0.0
    %v1404 = vmax.f32 %v1149, 0.0
    %v1405 = vmax.f32 %v1152, 0.0
    %v1406 = vmax.f32 %v1155, 0.0
    %v1407 = vmax.f32 %v1158, 0.0
    %v1408 = vmax.f32 %v1161, 0.0
    %v1409 = vmax.f32 %v1164, 0.0
    %v1410 = vmax.f32 %v1167, 0.0
    %v1411 = vmax.f32 %v1170, 0.0
    %v1412 = vmax.f32 %v1173, 0.0
    %v1413 = vmax.f32 %v1176, 0.0
    %v1414 = vmax.f32 %v1179, 0.0
    %v1415 = vmax.f32 %v1182, 0.0
    %v1416 = vmax.f32 %v1185, 0.0
    %v1417 = vmax.f32 %v1188, 0.0
    %v1418 = vmax.f32 %v1191, 0.0
    %v1419 = vmax.f32 %v1194, 0.0
    %v1420 = vmax.f32 %v1197, 0.0
    %v1421 = vmax.f32 %v1200, 0.0
    %v1422 = vmax.f32 %v1203, 0.0
    %v1423 = vmax.f32 %v1206, 0.0
    %v1424 = vmax.f32 %v1209, 0.0
    %v1425 = vmax.f32 %v1212, 0.0
    %v1426 = vmax.f32 %v1215, 0.0
    %v1427 = vmax.f32 %v1218, 0.0
    %v1428 = vmax.f32 %v1221, 0.0
    %v1429 = vmax.f32 %v1224, 0.0
    %v1430 = vmax.f32 %v1227, 0.0
    %v1431 = vmax.f32 %v1230, 0.0
    %v1432 = vmax.f32 %v1233, 0.0
    %v1433 = vmax.f32 %v1236, 0.0
    %v1434 = vmax.f32 %v1239, 0.0
    %v1435 = vmax.f32 %v1242, 0.0
    %v1436 = vmax.f32 %v1245, 0.0
    %v1437 = vmax.f32 %v1248, 0.0
    %v1438 = vmax.f32 %v1251, 0.0
    %v1439 = vmax.f32 %v1254, 0.0
    %v1440 = vmax.f32 %v1257, 0.0
    %v1441 = vmax.f32 %v1260, 0.0
    %v1442 = vmax.f32 %v1263, 0.0
    %v1443 = vmax.f32 %v1266, 0.0
    %v1444 = vmax.f32 %v1269, 0.0
    %v1445 = vmax.f32 %v1272, 0.0
    %v1446 = vmax.f32 %v1275, 0.0
    %v1447 = vmax.f32 %v1278, 0.0
    %v1448 = vmax.f32 %v1281, 0.0
    %v1449 = vmax.f32 %v1284, 0.0
    %v1450 = vmax.f32 %v1287, 0.0
    %v1451 = vmax.f32 %v1290, 0.0
    %v1452 = vmax.f32 %v1293, 0.0
    %v1453 = vmax.f32 %v1296, 0.0
    %v1454 = vmax.f32 %v1299, 0.0
    %v1455 = vmax.f32 %v1302, 0.0
    %v1456 = vmax.f32 %v1305, 0.0
    %v1457 = vmax.f32 %v1308, 0.0
    %v1458 = vmax.f32 %v1311, 0.0
    %v1459 = vmax.f32 %v1314, 0.0
    %v1460 = vmax.f32 %v1317, 0.0
    %v1461 = vmax.f32 %v1320, 0.0
    %v1462 = vmax.f32 %v1323, 0.0
    %v1463 = vmax.f32 %v1326, 0.0
    %v1464 = vmax.f32 %v1329, 0.0
    %v1465 = vmax.f32 %v1332, 0.0
    %v1466 = vmax.f32 %v1335, 0.0
    %v1467 = vmax.f32 %v1338, 0.0
    %v1468 = vmax.f32 %v1341, 0.0
    %v1469 = vmax.f32 %v1344, 0.0
    %v1470 = vmax.f32 %v1347, 0.0
    %v1471 = vmax.f32 %v1350, 0.0
    %v1472 = vmax.f32 %v1353, 0.0
    %v1473 = vmax.f32 %v1356, 0.0
    %v1474 = vmax.f32 %v1359, 0.0
    %v1475 = vmax.f32 %v1362, 0.0
    %v1476 = vmax.f32 %v1365, 0.0
    %v1477 = vmax.f32 %v1368, 0.0
    %v1478 = vmax.f32 %v1371, 0.0
    %v1479 = vmax.f32 %v1374, 0.0
    %v1480 = vmax.f32 %v1377, 0.0
    %v1481 = vmax.f32 %v1380, 0.0
    %v1482 = vmax.f32 %v1383, 0.0
    %v1483 = vmax.f32 %v1386, 0.0
    %v1484 = vmax.f32 %v1389, 0.0
    %v1485 = vmax.f32 %v1392, 0.0
    %v1486 = vmax.f32 %v1395, 0.0
    %v1487 = vmax.f32 %v1398, 0.0
    %v1488 = vmax.f32 %v679, %v1400
    %v1489 = vmax.f32 %v680, %v1401
    %v1490 = vmax.f32 %v681, %v1402
    %v1491 = vmax.f32 %v682, %v1403
    %v1492 = vmax.f32 %v683, %v1404
    %v1493 = vmax.f32 %v684, %v1405
    %v1494 = vmax.f32 %v685, %v1406
    %v1495 = vmax.f32 %v686, %v1407
    %v1496 = vmax.f32 %v687, %v1408
    %v1497 = vmax.f32 %v688, %v1409
    %v1498 = vmax.f32 %v689, %v1410
    %v1499 = vmax.f32 %v690, %v1411
    %v1500 = vmax.f32 %v691, %v1412
    %v1501 = vmax.f32 %v692, %v1413
    %v1502 = vmax.f32 %v693, %v1414
    %v1503 = vmax.f32 %v694, %v1415
    %v1504 = vmax.f32 %v695, %v1416
    %v1505 = vmax.f32 %v696, %v1417
    %v1506 = vmax.f32 %v697, %v1418
    %v1507 = vmax.f32 %v698, %v1419
    %v1508 = vmax.f32 %v699, %v1420
    %v1509 = vmax.f32 %v700, %v1421
    %v1510 = vmax.f32 %v701, %v1422
    %v1511 = vmax.f32 %v702, %v1423
    %v1512 = vmax.f32 %v703, %v1424
    %v1513 = vmax.f32 %v704, %v1425
    %v1514 = vmax.f32 %v705, %v1426
    %v1515 = vmax.f32 %v706, %v1427
    %v1516 = vmax.f32 %v707, %v1428
    %v1517 = vmax.f32 %v708, %v1429
    %v1518 = vmax.f32 %v709, %v1430
    %v1519 = vmax.f32 %v710, %v1431
    %v1520 = vmax.f32 %v711, %v1432
    %v1521 = vmax.f32 %v712, %v1433
    %v1522 = vmax.f32 %v713, %v1434
    %v1523 = vmax.f32 %v714, %v1435
    %v1524 = vmax.f32 %v715, %v1436
    %v1525 = vmax.f32 %v716, %v1437
    %v1526 = vmax.f32 %v717, %v1438
    %v1527 = vmax.f32 %v718, %v1439
    %v1528 = vmax.f32 %v719, %v1440
    %v1529 = vmax.f32 %v720, %v1441
    %v1530 = vmax.f32 %v721, %v1442
    %v1531 = vmax.f32 %v722, %v1443
    %v1532 = vmax.f32 %v723, %v1444
    %v1533 = vmax.f32 %v724, %v1445
    %v1534 = vmax.f32 %v725, %v1446
    %v1535 = vmax.f32 %v726, %v1447
    %v1536 = vmax.f32 %v727, %v1448
    %v1537 = vmax.f32 %v728, %v1449
    %v1538 = vmax.f32 %v729, %v1450
    %v1539 = vmax.f32 %v730, %v1451
    %v1540 = vmax.f32 %v731, %v1452
    %v1541 = vmax.f32 %v732, %v1453
    %v1542 = vmax.f32 %v733, %v1454
    %v1543 = vmax.f32 %v734, %v1455
    %v1544 = vmax.f32 %v735, %v1456
    %v1545 = vmax.f32 %v736, %v1457
    %v1546 = vmax.f32 %v737, %v1458
    %v1547 = vmax.f32 %v738, %v1459
    %v1548 = vmax.f32 %v739, %v1460
    %v1549 = vmax.f32 %v740, %v1461
    %v1550 = vmax.f32 %v741, %v1462
    %v1551 = vmax.f32 %v742, %v1463
    %v1552 = vmax.f32 %v743, %v1464
    %v1553 = vmax.f32 %v744, %v1465
    %v1554 = vmax.f32 %v745, %v1466
    %v1555 = vmax.f32 %v746, %v1467
    %v1556 = vmax.f32 %v747, %v1468
    %v1557 = vmax.f32 %v748, %v1469
    %v1558 = vmax.f32 %v749, %v1470
    %v1559 = vmax.f32 %v750, %v1471
    %v1560 = vmax.f32 %v751, %v1472
    %v1561 = vmax.f32 %v752, %v1473
    %v1562 = vmax.f32 %v753, %v1474
    %v1563 = vmax.f32 %v754, %v1475
    %v1564 = vmax.f32 %v755, %v1476
    %v1565 = vmax.f32 %v756, %v1477
    %v1566 = vmax.f32 %v757, %v1478
    %v1567 = vmax.f32 %v758, %v1479
    %v1568 = vmax.f32 %v759, %v1480
    %v1569 = vmax.f32 %v760, %v1481
    %v1570 = vmax.f32 %v761, %v1482
    %v1571 = vmax.f32 %v762, %v1483
    %v1572 = vmax.f32 %v763, %v1484
    %v1573 = vmax.f32 %v764, %v1485
    %v1574 = vmax.f32 %v765, %v1486
    %v1575 = vmax.f32 %v766, %v1487
    %vm1576 = vcmask 261120
    %1577 = vst.msk [vmem:[%s4] sm:$0xff] %vm1576, %v1488
    %1578 = vst.msk [vmem:[%s4 + $0x8] sm:$0xff] %vm1576, %v1489
    %1579 = vst.msk [vmem:[%s4 + $0x10] sm:$0xff] %vm1576, %v1490
    %1580 = vst.msk [vmem:[%s4 + $0x18] sm:$0xff] %vm1576, %v1491
    %1581 = vst.msk [vmem:[%s4 + $0x20] sm:$0xff] %vm1576, %v1492
    %1582 = vst.msk [vmem:[%s4 + $0x28] sm:$0xff] %vm1576, %v1493
    %1583 = vst.msk [vmem:[%s4 + $0x30] sm:$0xff] %vm1576, %v1494
    %1584 = vst.msk [vmem:[%s4 + $0x38] sm:$0xff] %vm1576, %v1495
    %1585 = vst.msk [vmem:[%s4 + $0x40] sm:$0xff] %vm1576, %v1496
    %1586 = vst.msk [vmem:[%s4 + $0x48] sm:$0xff] %vm1576, %v1497
    %1587 = vst.msk [vmem:[%s4 + $0x50] sm:$0xff] %vm1576, %v1498
    %1588 = vst.msk [vmem:[%s4 + $0x58] sm:$0xff] %vm1576, %v1499
    %1589 = vst.msk [vmem:[%s4 + $0x60] sm:$0xff] %vm1576, %v1500
    %1590 = vst.msk [vmem:[%s4 + $0x68] sm:$0xff] %vm1576, %v1501
    %1591 = vst.msk [vmem:[%s4 + $0x70] sm:$0xff] %vm1576, %v1502
    %1592 = vst.msk [vmem:[%s4 + $0x78] sm:$0xff] %vm1576, %v1503
    %1593 = vst.msk [vmem:[%s4 + $0x80] sm:$0xff] %vm1576, %v1504
    %1594 = vst.msk [vmem:[%s4 + $0x88] sm:$0xff] %vm1576, %v1505
    %1595 = vst.msk [vmem:[%s4 + $0x90] sm:$0xff] %vm1576, %v1506
    %1596 = vst.msk [vmem:[%s4 + $0x98] sm:$0xff] %vm1576, %v1507
    %1597 = vst.msk [vmem:[%s4 + $0xa0] sm:$0xff] %vm1576, %v1508
    %1598 = vst.msk [vmem:[%s4 + $0xa8] sm:$0xff] %vm1576, %v1509
    %1599 = vst.msk [vmem:[%s4 + $0xb0] sm:$0xff] %vm1576, %v1510
    %1600 = vst.msk [vmem:[%s4 + $0xb8] sm:$0xff] %vm1576, %v1511
    %1601 = vst.msk [vmem:[%s4 + $0xc0] sm:$0xff] %vm1576, %v1512
    %1602 = vst.msk [vmem:[%s4 + $0xc8] sm:$0xff] %vm1576, %v1513
    %1603 = vst.msk [vmem:[%s4 + $0xd0] sm:$0xff] %vm1576, %v1514
    %1604 = vst.msk [vmem:[%s4 + $0xd8] sm:$0xff] %vm1576, %v1515
    %1605 = vst.msk [vmem:[%s4 + $0xe0] sm:$0xff] %vm1576, %v1516
    %1606 = vst.msk [vmem:[%s4 + $0xe8] sm:$0xff] %vm1576, %v1517
    %1607 = vst.msk [vmem:[%s4 + $0xf0] sm:$0xff] %vm1576, %v1518
    %1608 = vst.msk [vmem:[%s4 + $0xf8] sm:$0xff] %vm1576, %v1519
    %1609 = vst.msk [vmem:[%s4 + $0x100] sm:$0xff] %vm1576, %v1520
    %1610 = vst.msk [vmem:[%s4 + $0x108] sm:$0xff] %vm1576, %v1521
    %1611 = vst.msk [vmem:[%s4 + $0x110] sm:$0xff] %vm1576, %v1522
    %1612 = vst.msk [vmem:[%s4 + $0x118] sm:$0xff] %vm1576, %v1523
    %1613 = vst.msk [vmem:[%s4 + $0x120] sm:$0xff] %vm1576, %v1524
    %1614 = vst.msk [vmem:[%s4 + $0x128] sm:$0xff] %vm1576, %v1525
    %1615 = vst.msk [vmem:[%s4 + $0x130] sm:$0xff] %vm1576, %v1526
    %1616 = vst.msk [vmem:[%s4 + $0x138] sm:$0xff] %vm1576, %v1527
    %1617 = vst.msk [vmem:[%s4 + $0x140] sm:$0xff] %vm1576, %v1528
    %1618 = vst.msk [vmem:[%s4 + $0x148] sm:$0xff] %vm1576, %v1529
    %1619 = vst.msk [vmem:[%s4 + $0x150] sm:$0xff] %vm1576, %v1530
    %1620 = vst.msk [vmem:[%s4 + $0x158] sm:$0xff] %vm1576, %v1531
    %1621 = vst.msk [vmem:[%s4 + $0x160] sm:$0xff] %vm1576, %v1532
    %1622 = vst.msk [vmem:[%s4 + $0x168] sm:$0xff] %vm1576, %v1533
    %1623 = vst.msk [vmem:[%s4 + $0x170] sm:$0xff] %vm1576, %v1534
    %1624 = vst.msk [vmem:[%s4 + $0x178] sm:$0xff] %vm1576, %v1535
    %1625 = vst.msk [vmem:[%s4 + $0x180] sm:$0xff] %vm1576, %v1536
    %1626 = vst.msk [vmem:[%s4 + $0x188] sm:$0xff] %vm1576, %v1537
    %1627 = vst.msk [vmem:[%s4 + $0x190] sm:$0xff] %vm1576, %v1538
    %1628 = vst.msk [vmem:[%s4 + $0x198] sm:$0xff] %vm1576, %v1539
    %1629 = vst.msk [vmem:[%s4 + $0x1a0] sm:$0xff] %vm1576, %v1540
    %1630 = vst.msk [vmem:[%s4 + $0x1a8] sm:$0xff] %vm1576, %v1541
    %1631 = vst.msk [vmem:[%s4 + $0x1b0] sm:$0xff] %vm1576, %v1542
    %1632 = vst.msk [vmem:[%s4 + $0x1b8] sm:$0xff] %vm1576, %v1543
    %1633 = vst.msk [vmem:[%s4 + $0x1c0] sm:$0xff] %vm1576, %v1544
    %1634 = vst.msk [vmem:[%s4 + $0x1c8] sm:$0xff] %vm1576, %v1545
    %1635 = vst.msk [vmem:[%s4 + $0x1d0] sm:$0xff] %vm1576, %v1546
    %1636 = vst.msk [vmem:[%s4 + $0x1d8] sm:$0xff] %vm1576, %v1547
    %1637 = vst.msk [vmem:[%s4 + $0x1e0] sm:$0xff] %vm1576, %v1548
    %1638 = vst.msk [vmem:[%s4 + $0x1e8] sm:$0xff] %vm1576, %v1549
    %1639 = vst.msk [vmem:[%s4 + $0x1f0] sm:$0xff] %vm1576, %v1550
    %1640 = vst.msk [vmem:[%s4 + $0x1f8] sm:$0xff] %vm1576, %v1551
    %1641 = vst.msk [vmem:[%s4 + $0x200] sm:$0xff] %vm1576, %v1552
    %1642 = vst.msk [vmem:[%s4 + $0x208] sm:$0xff] %vm1576, %v1553
    %1643 = vst.msk [vmem:[%s4 + $0x210] sm:$0xff] %vm1576, %v1554
    %1644 = vst.msk [vmem:[%s4 + $0x218] sm:$0xff] %vm1576, %v1555
    %1645 = vst.msk [vmem:[%s4 + $0x220] sm:$0xff] %vm1576, %v1556
    %1646 = vst.msk [vmem:[%s4 + $0x228] sm:$0xff] %vm1576, %v1557
    %1647 = vst.msk [vmem:[%s4 + $0x230] sm:$0xff] %vm1576, %v1558
    %1648 = vst.msk [vmem:[%s4 + $0x238] sm:$0xff] %vm1576, %v1559
    %1649 = vst.msk [vmem:[%s4 + $0x240] sm:$0xff] %vm1576, %v1560
    %1650 = vst.msk [vmem:[%s4 + $0x248] sm:$0xff] %vm1576, %v1561
    %1651 = vst.msk [vmem:[%s4 + $0x250] sm:$0xff] %vm1576, %v1562
    %1652 = vst.msk [vmem:[%s4 + $0x258] sm:$0xff] %vm1576, %v1563
    %1653 = vst.msk [vmem:[%s4 + $0x260] sm:$0xff] %vm1576, %v1564
    %1654 = vst.msk [vmem:[%s4 + $0x268] sm:$0xff] %vm1576, %v1565
    %1655 = vst.msk [vmem:[%s4 + $0x270] sm:$0xff] %vm1576, %v1566
    %1656 = vst.msk [vmem:[%s4 + $0x278] sm:$0xff] %vm1576, %v1567
    %1657 = vst.msk [vmem:[%s4 + $0x280] sm:$0xff] %vm1576, %v1568
    %1658 = vst.msk [vmem:[%s4 + $0x288] sm:$0xff] %vm1576, %v1569
    %1659 = vst.msk [vmem:[%s4 + $0x290] sm:$0xff] %vm1576, %v1570
    %1660 = vst.msk [vmem:[%s4 + $0x298] sm:$0xff] %vm1576, %v1571
    %1661 = vst.msk [vmem:[%s4 + $0x2a0] sm:$0xff] %vm1576, %v1572
    %1662 = vst.msk [vmem:[%s4 + $0x2a8] sm:$0xff] %vm1576, %v1573
    %1663 = vst.msk [vmem:[%s4 + $0x2b0] sm:$0xff] %vm1576, %v1574
    %vm1664 = vcmask 254976
    %1665 = vst.msk [vmem:[%s4 + $0x2b8] sm:$0x3] %vm1664, %v1575
    // Predicated region
    $region22: #{conv_lstm_forward.5} parent=1 // pred_check
      _
    $region23: #{conv_lstm_forward.5} parent=1 // pred_check_branch
      %1667 = sbr.rel (0) target = $region25
    $region24: #{conv_lstm_forward.5} parent=1 // pred_region
      _
    $region25: #{conv_lstm_forward.5} parent=1 // pred_fallthru
      _
    // Predicated region
    $region26: #{conv_lstm_forward.5} parent=1 // pred_check
      _
    $region27: #{conv_lstm_forward.5} parent=1 // pred_check_branch
      %1669 = sbr.rel (0) target = $region29
    $region28: #{conv_lstm_forward.5} parent=1 // pred_region
      _
    $region29: #{conv_lstm_forward.5} parent=1 // pred_fallthru
      _
    %1670 = vsyncpa [#allocation3], 1

// kernel: conv_lstm_forward.7
$region0: #{conv_lstm_forward.7}
  #allocation0 [shape = 'u32[]', space=smem, size = 0x4, offset = 0x4, fixed_abs, tag = 'smem constant byte address 0x4 - core index']
  #allocation1 [shape = 'u32[72,128]{1,0:T(1,128)}', space=vmem, size = 0x9000, scoped, tag = 'internal scratch']
  %s0 = inlined_call_operand.vmem [shape: f32[2,128], index: 0, kind: input, shape index: {}]
  %s1 = inlined_call_operand.hbm [shape: f32[128,256], index: 1, kind: input, shape index: {}]
  %s2 = inlined_call_operand.hbm [shape: f32[1,256], index: 2, kind: input, shape index: {}]
  %s3 = inlined_call_operand.hbm [shape: f32[256,128], index: 3, kind: input, shape index: {}]
  %s4 = inlined_call_operand.hbm [shape: f32[1,128], index: 4, kind: input, shape index: {}]
  %s5 = inlined_call_operand.hbm [shape: f32[128,128], index: 5, kind: input, shape index: {}]
  %s6 = inlined_call_operand.hbm [shape: f32[1,128], index: 6, kind: input, shape index: {}]
  %s7 = inlined_call_operand.hbm [shape: f32[2,128], index: 7, kind: output, shape index: {}]
  %s8 = sld [smem:[#allocation0]]
  $region62: #{conv_lstm_forward.7} parent=0
    _
  %s10 = ssub.s32 1, %s8
  %s11 = scalar_select 0, %s10, %s8
  $region1: #{conv_lstm_forward.7} parent=0
    #allocation2 [shape = 'u8[131072]{0}', space=vmem, size = 0x20000, scoped, tag = 'input window, operand 1, single buffered']
    #allocation3 [shape = 's32[1]{0}', space=sflag, size = 0x4, scoped, tag = 'scoped memory for conv_lstm_forward.7']
    #allocation4 [shape = 's32[1]{0}', space=sflag, size = 0x4, scoped, tag = 'scoped memory for conv_lstm_forward.7']
    #allocation5 [shape = 'u8[1024]{0}', space=vmem, size = 0x400, scoped, tag = 'input window, operand 2, single buffered']
    #allocation6 [shape = 's32[1]{0}', space=sflag, size = 0x4, scoped, tag = 'scoped memory for conv_lstm_forward.7']
    #allocation7 [shape = 'u8[131072]{0}', space=vmem, size = 0x20000, scoped, tag = 'input window, operand 3, single buffered']
    #allocation8 [shape = 'u8[512]{0}', space=vmem, size = 0x400, scoped, tag = 'input window, operand 4, single buffered']
    #allocation9 [shape = 's32[1]{0}', space=sflag, size = 0x4, scoped, tag = 'scoped memory for conv_lstm_forward.7']
    #allocation10 [shape = 'u8[65536]{0}', space=vmem, size = 0x10000, scoped, tag = 'input window, operand 5, single buffered']
    #allocation11 [shape = 'u8[512]{0}', space=vmem, size = 0x400, scoped, tag = 'input window, operand 6, single buffered']
    #allocation12 [shape = 's32[1]{0}', space=sflag, size = 0x4, scoped, tag = 'scoped memory for conv_lstm_forward.7']
    #allocation13 [shape = 'u8[1024]{0}', space=vmem, size = 0x400, scoped, tag = 'output window, operand 0, single buffered']
    %12 = vsyncpa [#allocation3], 0
    %13 = vsyncpa [#allocation6], 0
    %14 = vsyncpa [#allocation9], 0
    %15 = vsyncpa [#allocation12], 0
    %16 = vsyncpa [#allocation4], 0
    // Predicated region
    $region2: #{conv_lstm_forward.7} parent=1 // pred_check
      _
    $region3: #{conv_lstm_forward.7} parent=1 // pred_check_branch
      %18 = sbr.rel (0) target = $region5
    $region4: #{conv_lstm_forward.7} parent=1 // pred_region
      _
    $region5: #{conv_lstm_forward.7} parent=1 // pred_fallthru
      _
    // Predicated region
    $region6: #{conv_lstm_forward.7} parent=1 // pred_check
      _
    $region7: #{conv_lstm_forward.7} parent=1 // pred_check_branch
      %20 = sbr.rel (0) target = $region9
    $region8: #{conv_lstm_forward.7} parent=1 // pred_region
      %22 = vsyncadd [#allocation3], 0
      %s23 = sshll.u32 %s1, 4
      %s24 = int_to_ptr.hbm [resolvable:$true] %s23
      %s25 = sshll.u32 [#allocation2], 4
      %s26 = int_to_ptr.vmem [resolvable:$true] %s25
      %31 = dma.hbm_to_vmem [thread:$0]  %s24, 4096, %s26, [#allocation3], 256, 256, 16
    $region9: #{conv_lstm_forward.7} parent=1 // pred_fallthru
      _
    // Predicated region
    $region10: #{conv_lstm_forward.7} parent=1 // pred_check
      _
    $region11: #{conv_lstm_forward.7} parent=1 // pred_check_branch
      %33 = sbr.rel (0) target = $region13
    $region12: #{conv_lstm_forward.7} parent=1 // pred_region
      %35 = vsyncadd [#allocation6], 0
      %s37 = sshll.u32 %s2, 4
      %s38 = int_to_ptr.hbm [resolvable:$true] %s37
      %s39 = sshll.u32 [#allocation5], 4
      %s40 = int_to_ptr.vmem [resolvable:$true] %s39
      %42 = dma.hbm_to_vmem [thread:$0]  %s38, 32, %s40, [#allocation6]
    $region13: #{conv_lstm_forward.7} parent=1 // pred_fallthru
      _
    // Predicated region
    $region14: #{conv_lstm_forward.7} parent=1 // pred_check
      _
    $region15: #{conv_lstm_forward.7} parent=1 // pred_check_branch
      %44 = sbr.rel (0) target = $region17
    $region16: #{conv_lstm_forward.7} parent=1 // pred_region
      %46 = vsyncadd [#allocation6], 0
      %s47 = sshll.u32 %s3, 4
      %s48 = int_to_ptr.hbm [resolvable:$true] %s47
      %s49 = sshll.u32 [#allocation7], 4
      %s50 = int_to_ptr.vmem [resolvable:$true] %s49
      %55 = dma.hbm_to_vmem [thread:$0]  %s48, 4096, %s50, [#allocation6], 128, 128, 8
    $region17: #{conv_lstm_forward.7} parent=1 // pred_fallthru
      _
    // Predicated region
    $region18: #{conv_lstm_forward.7} parent=1 // pred_check
      _
    $region19: #{conv_lstm_forward.7} parent=1 // pred_check_branch
      %57 = sbr.rel (0) target = $region21
    $region20: #{conv_lstm_forward.7} parent=1 // pred_region
      %59 = vsyncadd [#allocation9], 0
      %s61 = sshll.u32 %s4, 4
      %s62 = int_to_ptr.hbm [resolvable:$true] %s61
      %s63 = sshll.u32 [#allocation8], 4
      %s64 = int_to_ptr.vmem [resolvable:$true] %s63
      %66 = dma.hbm_to_vmem [thread:$0]  %s62, 16, %s64, [#allocation9]
    $region21: #{conv_lstm_forward.7} parent=1 // pred_fallthru
      _
    // Predicated region
    $region22: #{conv_lstm_forward.7} parent=1 // pred_check
      _
    $region23: #{conv_lstm_forward.7} parent=1 // pred_check_branch
      %68 = sbr.rel (0) target = $region25
    $region24: #{conv_lstm_forward.7} parent=1 // pred_region
      %70 = vsyncadd [#allocation9], 0
      %s71 = sshll.u32 %s5, 4
      %s72 = int_to_ptr.hbm [resolvable:$true] %s71
      %s73 = sshll.u32 [#allocation10], 4
      %s74 = int_to_ptr.vmem [resolvable:$true] %s73
      %79 = dma.hbm_to_vmem [thread:$0]  %s72, 2048, %s74, [#allocation9], 128, 128, 8
    $region25: #{conv_lstm_forward.7} parent=1 // pred_fallthru
      _
    // Predicated region
    $region26: #{conv_lstm_forward.7} parent=1 // pred_check
      _
    $region27: #{conv_lstm_forward.7} parent=1 // pred_check_branch
      %81 = sbr.rel (0) target = $region29
    $region28: #{conv_lstm_forward.7} parent=1 // pred_region
      %83 = vsyncadd [#allocation12], 0
      %s85 = sshll.u32 %s6, 4
      %s86 = int_to_ptr.hbm [resolvable:$true] %s85
      %s87 = sshll.u32 [#allocation11], 4
      %s88 = int_to_ptr.vmem [resolvable:$true] %s87
      %90 = dma.hbm_to_vmem [thread:$0]  %s86, 16, %s88, [#allocation12]
    $region29: #{conv_lstm_forward.7} parent=1 // pred_fallthru
      _
    // Predicated region
    $region30: #{conv_lstm_forward.7} parent=1 // pred_check
      _
    $region31: #{conv_lstm_forward.7} parent=1 // pred_check_branch
      %92 = sbr.rel (0) target = $region33
    $region32: #{conv_lstm_forward.7} parent=1 // pred_region
      %94 = dma.done [#allocation3], 4096
    $region33: #{conv_lstm_forward.7} parent=1 // pred_fallthru
      _
    // Predicated region
    $region34: #{conv_lstm_forward.7} parent=1 // pred_check
      _
    $region35: #{conv_lstm_forward.7} parent=1 // pred_check_branch
      %96 = sbr.rel (0) target = $region37
    $region36: #{conv_lstm_forward.7} parent=1 // pred_region
      %98 = dma.done [#allocation6], 32
    $region37: #{conv_lstm_forward.7} parent=1 // pred_fallthru
      _
    // Predicated region
    $region38: #{conv_lstm_forward.7} parent=1 // pred_check
      _
    $region39: #{conv_lstm_forward.7} parent=1 // pred_check_branch
      %100 = sbr.rel (0) target = $region41
    $region40: #{conv_lstm_forward.7} parent=1 // pred_region
      %102 = dma.done [#allocation6], 4096
    $region41: #{conv_lstm_forward.7} parent=1 // pred_fallthru
      _
    // Predicated region
    $region42: #{conv_lstm_forward.7} parent=1 // pred_check
      _
    $region43: #{conv_lstm_forward.7} parent=1 // pred_check_branch
      %104 = sbr.rel (0) target = $region45
    $region44: #{conv_lstm_forward.7} parent=1 // pred_region
      %106 = dma.done [#allocation9], 16
    $region45: #{conv_lstm_forward.7} parent=1 // pred_fallthru
      _
    // Predicated region
    $region46: #{conv_lstm_forward.7} parent=1 // pred_check
      _
    $region47: #{conv_lstm_forward.7} parent=1 // pred_check_branch
      %108 = sbr.rel (0) target = $region49
    $region48: #{conv_lstm_forward.7} parent=1 // pred_region
      %110 = dma.done [#allocation9], 2048
    $region49: #{conv_lstm_forward.7} parent=1 // pred_fallthru
      _
    // Predicated region
    $region50: #{conv_lstm_forward.7} parent=1 // pred_check
      _
    $region51: #{conv_lstm_forward.7} parent=1 // pred_check_branch
      %112 = sbr.rel (0) target = $region53
    $region52: #{conv_lstm_forward.7} parent=1 // pred_region
      %114 = dma.done [#allocation12], 16
    $region53: #{conv_lstm_forward.7} parent=1 // pred_fallthru
      _
    %v115 = vld [vmem:[%s0] sm:$0x3]
    %v116 = vld [vmem:[#allocation2] sm:$0xff]
    %v117 = vld [vmem:[#allocation2 + $0x8] sm:$0xff]
    %v118 = vld [vmem:[#allocation2 + $0x10] sm:$0xff]
    %v119 = vld [vmem:[#allocation2 + $0x18] sm:$0xff]
    %v120 = vld [vmem:[#allocation2 + $0x20] sm:$0xff]
    %v121 = vld [vmem:[#allocation2 + $0x28] sm:$0xff]
    %v122 = vld [vmem:[#allocation2 + $0x30] sm:$0xff]
    %v123 = vld [vmem:[#allocation2 + $0x38] sm:$0xff]
    %v124 = vld [vmem:[#allocation2 + $0x40] sm:$0xff]
    %v125 = vld [vmem:[#allocation2 + $0x48] sm:$0xff]
    %v126 = vld [vmem:[#allocation2 + $0x50] sm:$0xff]
    %v127 = vld [vmem:[#allocation2 + $0x58] sm:$0xff]
    %v128 = vld [vmem:[#allocation2 + $0x60] sm:$0xff]
    %v129 = vld [vmem:[#allocation2 + $0x68] sm:$0xff]
    %v130 = vld [vmem:[#allocation2 + $0x70] sm:$0xff]
    %v131 = vld [vmem:[#allocation2 + $0x78] sm:$0xff]
    %v132 = vld [vmem:[#allocation2 + $0x80] sm:$0xff]
    %v133 = vld [vmem:[#allocation2 + $0x88] sm:$0xff]
    %v134 = vld [vmem:[#allocation2 + $0x90] sm:$0xff]
    %v135 = vld [vmem:[#allocation2 + $0x98] sm:$0xff]
    %v136 = vld [vmem:[#allocation2 + $0xa0] sm:$0xff]
    %v137 = vld [vmem:[#allocation2 + $0xa8] sm:$0xff]
    %v138 = vld [vmem:[#allocation2 + $0xb0] sm:$0xff]
    %v139 = vld [vmem:[#allocation2 + $0xb8] sm:$0xff]
    %v140 = vld [vmem:[#allocation2 + $0xc0] sm:$0xff]
    %v141 = vld [vmem:[#allocation2 + $0xc8] sm:$0xff]
    %v142 = vld [vmem:[#allocation2 + $0xd0] sm:$0xff]
    %v143 = vld [vmem:[#allocation2 + $0xd8] sm:$0xff]
    %v144 = vld [vmem:[#allocation2 + $0xe0] sm:$0xff]
    %v145 = vld [vmem:[#allocation2 + $0xe8] sm:$0xff]
    %v146 = vld [vmem:[#allocation2 + $0xf0] sm:$0xff]
    %v147 = vld [vmem:[#allocation2 + $0xf8] sm:$0xff]
    %v148 = vld [vmem:[#allocation5] sm:$0x3]
    %v150 = vperm.slane %v148, 0
    %v151 = vperm.slane %v148, 1
    %154 = vmatpush.msra.mxu0 %v146
    %155 = vmatpush.msra.mxu0 %v144
    %156 = vmatpush.msra.mxu0 %v142
    %157 = vmatpush.msra.mxu0 %v140
    %158 = vmatpush.msra.mxu0 %v138
    %159 = vmatpush.msra.mxu0 %v136
    %160 = vmatpush.msra.mxu0 %v134
    %161 = vmatpush.msra.mxu0 %v132
    %162 = vmatpush.msra.mxu0 %v130
    %163 = vmatpush.msra.mxu0 %v128
    %164 = vmatpush.msra.mxu0 %v126
    %165 = vmatpush.msra.mxu0 %v124
    %166 = vmatpush.msra.mxu0 %v122
    %167 = vmatpush.msra.mxu0 %v120
    %168 = vmatpush.msra.mxu0 %v118
    %169 = vmatpush.msra.mxu0 %v116
    %170 = vmatmul.f32.gmra.mxu0 %v115
    %v171 = vpop.f32.mrf.mxu0
    %v172 = vadd.f32 %v150, %v171
    %173 = vdwg.mxu0
    %174 = vmatpush.msra.mxu0 %v147
    %175 = vmatpush.msra.mxu0 %v145
    %176 = vmatpush.msra.mxu0 %v143
    %177 = vmatpush.msra.mxu0 %v141
    %178 = vmatpush.msra.mxu0 %v139
    %179 = vmatpush.msra.mxu0 %v137
    %180 = vmatpush.msra.mxu0 %v135
    %181 = vmatpush.msra.mxu0 %v133
    %182 = vmatpush.msra.mxu0 %v131
    %183 = vmatpush.msra.mxu0 %v129
    %184 = vmatpush.msra.mxu0 %v127
    %185 = vmatpush.msra.mxu0 %v125
    %186 = vmatpush.msra.mxu0 %v123
    %187 = vmatpush.msra.mxu0 %v121
    %188 = vmatpush.msra.mxu0 %v119
    %189 = vmatpush.msra.mxu0 %v117
    %190 = vmatmul.f32.gmra.mxu0 %v115
    %v191 = vpop.f32.mrf.mxu0
    %v192 = vadd.f32 %v151, %v191
    %193 = vdwg.mxu0
    %v194 = vld [vmem:[#allocation7] sm:$0xff]
    %v195 = vld [vmem:[#allocation7 + $0x8] sm:$0xff]
    %v196 = vld [vmem:[#allocation7 + $0x10] sm:$0xff]
    %v197 = vld [vmem:[#allocation7 + $0x18] sm:$0xff]
    %v198 = vld [vmem:[#allocation7 + $0x20] sm:$0xff]
    %v199 = vld [vmem:[#allocation7 + $0x28] sm:$0xff]
    %v200 = vld [vmem:[#allocation7 + $0x30] sm:$0xff]
    %v201 = vld [vmem:[#allocation7 + $0x38] sm:$0xff]
    %v202 = vld [vmem:[#allocation7 + $0x40] sm:$0xff]
    %v203 = vld [vmem:[#allocation7 + $0x48] sm:$0xff]
    %v204 = vld [vmem:[#allocation7 + $0x50] sm:$0xff]
    %v205 = vld [vmem:[#allocation7 + $0x58] sm:$0xff]
    %v206 = vld [vmem:[#allocation7 + $0x60] sm:$0xff]
    %v207 = vld [vmem:[#allocation7 + $0x68] sm:$0xff]
    %v208 = vld [vmem:[#allocation7 + $0x70] sm:$0xff]
    %v209 = vld [vmem:[#allocation7 + $0x78] sm:$0xff]
    %v210 = vld [vmem:[#allocation7 + $0x80] sm:$0xff]
    %v211 = vld [vmem:[#allocation7 + $0x88] sm:$0xff]
    %v212 = vld [vmem:[#allocation7 + $0x90] sm:$0xff]
    %v213 = vld [vmem:[#allocation7 + $0x98] sm:$0xff]
    %v214 = vld [vmem:[#allocation7 + $0xa0] sm:$0xff]
    %v215 = vld [vmem:[#allocation7 + $0xa8] sm:$0xff]
    %v216 = vld [vmem:[#allocation7 + $0xb0] sm:$0xff]
    %v217 = vld [vmem:[#allocation7 + $0xb8] sm:$0xff]
    %v218 = vld [vmem:[#allocation7 + $0xc0] sm:$0xff]
    %v219 = vld [vmem:[#allocation7 + $0xc8] sm:$0xff]
    %v220 = vld [vmem:[#allocation7 + $0xd0] sm:$0xff]
    %v221 = vld [vmem:[#allocation7 + $0xd8] sm:$0xff]
    %v222 = vld [vmem:[#allocation7 + $0xe0] sm:$0xff]
    %v223 = vld [vmem:[#allocation7 + $0xe8] sm:$0xff]
    %v224 = vld [vmem:[#allocation7 + $0xf0] sm:$0xff]
    %v225 = vld [vmem:[#allocation7 + $0xf8] sm:$0xff]
    %v226 = vld [vmem:[#allocation8] sm:$0x1]
    %v228 = vperm.slane %v226, 0
    %230 = vmatpush.msra.mxu0 %v209
    %231 = vmatpush.msra.mxu0 %v208
    %232 = vmatpush.msra.mxu0 %v207
    %233 = vmatpush.msra.mxu0 %v206
    %234 = vmatpush.msra.mxu0 %v205
    %235 = vmatpush.msra.mxu0 %v204
    %236 = vmatpush.msra.mxu0 %v203
    %237 = vmatpush.msra.mxu0 %v202
    %238 = vmatpush.msra.mxu0 %v201
    %239 = vmatpush.msra.mxu0 %v200
    %240 = vmatpush.msra.mxu0 %v199
    %241 = vmatpush.msra.mxu0 %v198
    %242 = vmatpush.msra.mxu0 %v197
    %243 = vmatpush.msra.mxu0 %v196
    %244 = vmatpush.msra.mxu0 %v195
    %245 = vmatpush.msra.mxu0 %v194
    %246 = vmatmul.f32.gmra.mxu0 %v172
    %v247 = vpop.f32.mrf.mxu0
    %v248 = vadd.f32 %v228, %v247
    %249 = vdwg.mxu0
    %250 = vmatpush.msra.mxu0 %v225
    %251 = vmatpush.msra.mxu0 %v224
    %252 = vmatpush.msra.mxu0 %v223
    %253 = vmatpush.msra.mxu0 %v222
    %254 = vmatpush.msra.mxu0 %v221
    %255 = vmatpush.msra.mxu0 %v220
    %256 = vmatpush.msra.mxu0 %v219
    %257 = vmatpush.msra.mxu0 %v218
    %258 = vmatpush.msra.mxu0 %v217
    %259 = vmatpush.msra.mxu0 %v216
    %260 = vmatpush.msra.mxu0 %v215
    %261 = vmatpush.msra.mxu0 %v214
    %262 = vmatpush.msra.mxu0 %v213
    %263 = vmatpush.msra.mxu0 %v212
    %264 = vmatpush.msra.mxu0 %v211
    %265 = vmatpush.msra.mxu0 %v210
    %266 = vmatmul.f32.gmra.mxu0 %v192
    %v267 = vpop.f32.mrf.mxu0
    %v268 = vadd.f32 %v248, %v267
    %269 = vdwg.mxu0
    %v270 = vld [vmem:[#allocation10] sm:$0xff]
    %v271 = vld [vmem:[#allocation10 + $0x8] sm:$0xff]
    %v272 = vld [vmem:[#allocation10 + $0x10] sm:$0xff]
    %v273 = vld [vmem:[#allocation10 + $0x18] sm:$0xff]
    %v274 = vld [vmem:[#allocation10 + $0x20] sm:$0xff]
    %v275 = vld [vmem:[#allocation10 + $0x28] sm:$0xff]
    %v276 = vld [vmem:[#allocation10 + $0x30] sm:$0xff]
    %v277 = vld [vmem:[#allocation10 + $0x38] sm:$0xff]
    %v278 = vld [vmem:[#allocation10 + $0x40] sm:$0xff]
    %v279 = vld [vmem:[#allocation10 + $0x48] sm:$0xff]
    %v280 = vld [vmem:[#allocation10 + $0x50] sm:$0xff]
    %v281 = vld [vmem:[#allocation10 + $0x58] sm:$0xff]
    %v282 = vld [vmem:[#allocation10 + $0x60] sm:$0xff]
    %v283 = vld [vmem:[#allocation10 + $0x68] sm:$0xff]
    %v284 = vld [vmem:[#allocation10 + $0x70] sm:$0xff]
    %v285 = vld [vmem:[#allocation10 + $0x78] sm:$0xff]
    %v286 = vld [vmem:[#allocation11] sm:$0x1]
    %v288 = vperm.slane %v286, 0
    %290 = vmatpush.msra.mxu0 %v285
    %291 = vmatpush.msra.mxu0 %v284
    %292 = vmatpush.msra.mxu0 %v283
    %293 = vmatpush.msra.mxu0 %v282
    %294 = vmatpush.msra.mxu0 %v281
    %295 = vmatpush.msra.mxu0 %v280
    %296 = vmatpush.msra.mxu0 %v279
    %297 = vmatpush.msra.mxu0 %v278
    %298 = vmatpush.msra.mxu0 %v277
    %299 = vmatpush.msra.mxu0 %v276
    %300 = vmatpush.msra.mxu0 %v275
    %301 = vmatpush.msra.mxu0 %v274
    %302 = vmatpush.msra.mxu0 %v273
    %303 = vmatpush.msra.mxu0 %v272
    %304 = vmatpush.msra.mxu0 %v271
    %305 = vmatpush.msra.mxu0 %v270
    %306 = vmatmul.f32.gmra.mxu0 %v268
    %v307 = vpop.f32.mrf.mxu0
    %v308 = vadd.f32 %v288, %v307
    %309 = vdwg.mxu0
    %310 = vst [vmem:[#allocation13] sm:$0x3] %v308
    // Predicated region
    $region54: #{conv_lstm_forward.7} parent=1 // pred_check
      _
    $region55: #{conv_lstm_forward.7} parent=1 // pred_check_branch
      %312 = sbr.rel (0) target = $region57
    $region56: #{conv_lstm_forward.7} parent=1 // pred_region
      %314 = vsyncadd [#allocation4], 0
      %s316 = sshll.u32 [#allocation13], 4
      %s317 = int_to_ptr.vmem [resolvable:$true] %s316
      %s318 = sshll.u32 %s7, 4
      %s319 = int_to_ptr.hbm [resolvable:$true] %s318
      %321 = dma.vmem_to_hbm [thread:$0]  %s317, 32, %s319, [#allocation4]
    $region57: #{conv_lstm_forward.7} parent=1 // pred_fallthru
      _
    // Predicated region
    $region58: #{conv_lstm_forward.7} parent=1 // pred_check
      _
    $region59: #{conv_lstm_forward.7} parent=1 // pred_check_branch
      %323 = sbr.rel (0) target = $region61
    $region60: #{conv_lstm_forward.7} parent=1 // pred_region
      %325 = dma.done [#allocation4], 32
    $region61: #{conv_lstm_forward.7} parent=1 // pred_fallthru
      _
    %326 = vsyncpa [#allocation3], 1
    %327 = vsyncpa [#allocation6], 1
    %328 = vsyncpa [#allocation9], 1
    %329 = vsyncpa [#allocation12], 1
    %330 = vsyncpa [#allocation4], 1

// kernel: conv_lstm_forward.6
$region0: #{conv_lstm_forward.6}
  #allocation0 [shape = 'u32[]', space=smem, size = 0x4, offset = 0x4, fixed_abs, tag = 'smem constant byte address 0x4 - core index']
  #allocation1 [shape = 'u32[72,128]{1,0:T(1,128)}', space=vmem, size = 0x9000, scoped, tag = 'internal scratch']
  #allocation2 [shape = 'f32[2,384]{1,0:T(2,128)}', space=vmem, size = 0xc00, scoped, tag = 'scratch operand']
  %s0 = inlined_call_operand.vmem [shape: f32[2,11264], index: 0, kind: input, shape index: {}]
  %s1 = inlined_call_operand.hbm [shape: f32[11264,384], index: 1, kind: input, shape index: {}]
  %s2 = inlined_call_operand.hbm [shape: f32[1,384], index: 2, kind: input, shape index: {}]
  %s3 = inlined_call_operand.vmem [shape: f32[2,128], index: 3, kind: output, shape index: {}]
  %s4 = sld [smem:[#allocation0]]
  $region61: #{conv_lstm_forward.6} parent=0
    _
  %s6 = ssub.s32 1, %s4
  %s7 = scalar_select 0, %s6, %s4
  $region1: #{conv_lstm_forward.6} parent=0
    #allocation3 [shape = 'u8[8650752]{0}', space=vmem, size = 0x840000, scoped, tag = 'input window, operand 1']
    #allocation4 [shape = 's32[2]{0}', space=sflag, size = 0x8, scoped, tag = 'scoped memory for conv_lstm_forward.6']
    #allocation5 [shape = 'u8[1536]{0}', space=vmem, size = 0x800, scoped, tag = 'input window, operand 2, single buffered']
    #allocation6 [shape = 's32[1]{0}', space=sflag, size = 0x4, scoped, tag = 'scoped memory for conv_lstm_forward.6']
    %8 = vsyncpa [#allocation4], 0
    %s9 = scalar_lea.sflag [#allocation4], 1
    %10 = vsyncpa %s9, 0
    %11 = vsyncpa [#allocation6], 0
    loop: start=0, step=1, limit=6
    $region2: #{conv_lstm_forward.6} parent=1 // loop_pre_header
      _
    $region3: #{conv_lstm_forward.6} parent=1 // loop_header
      %s13 = sphi 0, %s17
      %p14 = scmp.ge.s32.totalorder %s13, 6
      %s23 = sphi 0, %s25
      %s26 = sphi 0, %s23
      %s27 = sphi 0, %s26
      %s43 = sphi 0, %s27
      %s49 = sphi 0, %s51
      %s52 = sphi 0, %s49
      %s53 = sphi 0, %s52
      %s69 = sphi 0, %s53
      %s73 = sphi 0, %s73
      %s75 = sphi 0, %s73
      %s76 = sphi 0, %s75
      %s90 = sphi 0, %s76
      %s94 = sphi 0, %s94
      %s96 = sphi 0, %s94
      %s97 = sphi 0, %s96
      %s111 = sphi 0, %s97
    $region4: #{conv_lstm_forward.6} parent=1 // loop_header_branch
      %16 = sbr.rel (%p14) target = $region8
    $region5: #{conv_lstm_forward.6} parent=1 // loop_body
      %s18 = ssub.s32 %s13, 1
      %s19 = ssub.s32 %s13, 2
      %s20 = sadd.s32 %s13, 1
      %s21 = ssub.s32 %s13, %s20
      %p22 = scmp.eq.s32.totalorder %s21, 0
      %s24 = sadd.s32 %s23, 1
      %s25 = scalar_select %p22, %s23, %s24
      %p28 = pneg %p22
      %p29 = scmp.eq.s32.totalorder %s13, 3
      %p30 = por %p28, %p29
      %p31 = scmp.ne.s32.totalorder %s23, %s26
      %p32 = scmp.eq.s32.totalorder %s13, 0
      %p33 = por %p31, %p32
      %p34 = scmp.ne.s32.totalorder %s23, %s26
      %p35 = scmp.eq.s32.totalorder %s18, 3
      %p36 = por %p34, %p35
      %p37 = scmp.ne.s32.totalorder %s26, %s27
      %p38 = scmp.eq.s32.totalorder %s18, 0
      %p39 = por %p37, %p38
      %p40 = scmp.ne.s32.totalorder %s26, %s27
      %p41 = scmp.eq.s32.totalorder %s19, 3
      %p42 = por %p40, %p41
      %p44 = scmp.ne.s32.totalorder %s27, %s43
      %p45 = scmp.eq.s32.totalorder %s19, 0
      %p46 = por %p44, %p45
      %s47 = ssub.s32 %s13, %s20
      %p48 = scmp.eq.s32.totalorder %s47, 0
      %s50 = sadd.s32 %s49, 1
      %s51 = scalar_select %p48, %s49, %s50
      %p54 = pneg %p48
      %p55 = scmp.eq.s32.totalorder %s13, 3
      %p56 = por %p54, %p55
      %p57 = scmp.ne.s32.totalorder %s49, %s52
      %p58 = scmp.eq.s32.totalorder %s13, 0
      %p59 = por %p57, %p58
      %p60 = scmp.ne.s32.totalorder %s49, %s52
      %p61 = scmp.eq.s32.totalorder %s18, 3
      %p62 = por %p60, %p61
      %p63 = scmp.ne.s32.totalorder %s52, %s53
      %p64 = scmp.eq.s32.totalorder %s18, 0
      %p65 = por %p63, %p64
      %p66 = scmp.ne.s32.totalorder %s52, %s53
      %p67 = scmp.eq.s32.totalorder %s19, 3
      %p68 = por %p66, %p67
      %p70 = scmp.ne.s32.totalorder %s53, %s69
      %p71 = scmp.eq.s32.totalorder %s19, 0
      %p72 = por %p70, %p71
      %s74 = sadd.s32 %s73, 1
      %p77 = scmp.eq.s32.totalorder %s13, 3
      %p78 = scmp.ne.s32.totalorder %s73, %s75
      %p79 = scmp.eq.s32.totalorder %s13, 0
      %p80 = por %p78, %p79
      %p81 = scmp.ne.s32.totalorder %s73, %s75
      %p82 = scmp.eq.s32.totalorder %s18, 3
      %p83 = por %p81, %p82
      %p84 = scmp.ne.s32.totalorder %s75, %s76
      %p85 = scmp.eq.s32.totalorder %s18, 0
      %p86 = por %p84, %p85
      %p87 = scmp.ne.s32.totalorder %s75, %s76
      %p88 = scmp.eq.s32.totalorder %s19, 3
      %p89 = por %p87, %p88
      %p91 = scmp.ne.s32.totalorder %s76, %s90
      %p92 = scmp.eq.s32.totalorder %s19, 0
      %p93 = por %p91, %p92
      %s95 = sadd.s32 %s94, 1
      %p98 = scmp.eq.s32.totalorder %s13, 3
      %p99 = scmp.ne.s32.totalorder %s94, %s96
      %p100 = scmp.eq.s32.totalorder %s13, 0
      %p101 = por %p99, %p100
      %p102 = scmp.ne.s32.totalorder %s94, %s96
      %p103 = scmp.eq.s32.totalorder %s18, 3
      %p104 = por %p102, %p103
      %p105 = scmp.ne.s32.totalorder %s96, %s97
      %p106 = scmp.eq.s32.totalorder %s18, 0
      %p107 = por %p105, %p106
      %p108 = scmp.ne.s32.totalorder %s96, %s97
      %p109 = scmp.eq.s32.totalorder %s19, 3
      %p110 = por %p108, %p109
      %p112 = scmp.ne.s32.totalorder %s97, %s111
      %p113 = scmp.eq.s32.totalorder %s19, 0
      %p114 = por %p112, %p113
      %p115 = scmp.le.s32.totalorder 1, %s13
      %p116 = scmp.lt.s32.totalorder %s13, 5
      %p117 = pnand %p115, %p116
      %p118 = pneg %p117
      // Predicated region
      $region9: #{conv_lstm_forward.6} parent=5 // pred_check
        _
      $region10: #{conv_lstm_forward.6} parent=5 // pred_check_branch
        %120 = sbr.rel (%p117) target = $region12
      $region11: #{conv_lstm_forward.6} parent=5 // pred_region
        %s121 = ssub.s32 %s13, 1
        // Predicated region
        $region13: #{conv_lstm_forward.6} parent=11 // pred_check
          %p122 = pneg %p86
        $region14: #{conv_lstm_forward.6} parent=11 // pred_check_branch
          %124 = sbr.rel (%p122) target = $region16
        $region15: #{conv_lstm_forward.6} parent=11 // pred_region
          %126 = vsyncadd [#allocation6], 0
          %s128 = sshll.u32 %s2, 4
          %s129 = int_to_ptr.hbm [resolvable:$true] %s128
          %s130 = sshll.u32 [#allocation5], 4
          %s131 = int_to_ptr.vmem [resolvable:$true] %s130
          %133 = dma.hbm_to_vmem [thread:$0]  %s129, 48, %s131, [#allocation6]
        $region16: #{conv_lstm_forward.6} parent=11 // pred_fallthru
          _
      $region12: #{conv_lstm_forward.6} parent=5 // pred_fallthru
        _
      %p134 = scmp.lt.s32.totalorder %s13, 4
      // Predicated region
      $region17: #{conv_lstm_forward.6} parent=5 // pred_check
        %p135 = pneg %p134
      $region18: #{conv_lstm_forward.6} parent=5 // pred_check_branch
        %137 = sbr.rel (%p135) target = $region20
      $region19: #{conv_lstm_forward.6} parent=5 // pred_region
        // Predicated region
        $region21: #{conv_lstm_forward.6} parent=19 // pred_check
          %p138 = pneg %p33
        $region22: #{conv_lstm_forward.6} parent=19 // pred_check_branch
          %140 = sbr.rel (%p138) target = $region24
        $region23: #{conv_lstm_forward.6} parent=19 // pred_region
          %s141 = smul.u32 22, %s13
          %p142 = scmp.lt.s32.totalorder %s141, 87
          %s143 = scalar_select %p142, %s141, 87
          %s144 = smul.addr %s143, 2
          %s145 = scalar_lea.vmem %s0, %s144
          %s146 = smul.u32 22, %s13
        $region24: #{conv_lstm_forward.6} parent=19 // pred_fallthru
          _
        // Predicated region
        $region25: #{conv_lstm_forward.6} parent=19 // pred_check
          %p147 = pneg %p59
        $region26: #{conv_lstm_forward.6} parent=19 // pred_check_branch
          %149 = sbr.rel (%p147) target = $region28
        $region27: #{conv_lstm_forward.6} parent=19 // pred_region
          %s150 = sand.u32 %s49, 1
          %s151 = scalar_lea.sflag [#allocation4], %s150
          %s152 = sand.u32 %s49, 1
          %s153 = smul.addr %s152, 8448
          %s154 = scalar_lea.vmem [#allocation3], %s153
          %s155 = smul.u32 352, %s13
          %157 = vsyncadd %s151, 0
          %s158 = smul.addr %s155, 3
          %s159 = smul.addr %s158, 8
          %s160 = scalar_lea.hbm %s1, %s159
          %s161 = sshll.u32 %s160, 4
          %s162 = int_to_ptr.hbm [resolvable:$true] %s161
          %s163 = sshll.u32 %s154, 4
          %s164 = int_to_ptr.vmem [resolvable:$true] %s163
          %169 = dma.hbm_to_vmem [thread:$0]  %s162, 135168, %s164, %s151, 384, 384, 24
        $region28: #{conv_lstm_forward.6} parent=19 // pred_fallthru
          _
      $region20: #{conv_lstm_forward.6} parent=5 // pred_fallthru
        _
      %p170 = scmp.le.s32.totalorder 1, %s13
      %p171 = scmp.lt.s32.totalorder %s13, 5
      %p172 = pnand %p170, %p171
      %p173 = pneg %p172
      // Predicated region
      $region29: #{conv_lstm_forward.6} parent=5 // pred_check
        _
      $region30: #{conv_lstm_forward.6} parent=5 // pred_check_branch
        %175 = sbr.rel (%p172) target = $region32
      $region31: #{conv_lstm_forward.6} parent=5 // pred_region
        %s176 = ssub.s32 %s13, 1
        %s177 = sand.u32 %s52, 1
        %s178 = scalar_lea.sflag [#allocation4], %s177
        %s179 = sand.u32 %s52, 1
        %s180 = smul.addr %s179, 8448
        %s181 = scalar_lea.vmem [#allocation3], %s180
        // Predicated region
        $region33: #{conv_lstm_forward.6} parent=31 // pred_check
          %p182 = pneg %p65
        $region34: #{conv_lstm_forward.6} parent=31 // pred_check_branch
          %184 = sbr.rel (%p182) target = $region36
        $region35: #{conv_lstm_forward.6} parent=31 // pred_region
          %186 = dma.done %s178, 135168
        $region36: #{conv_lstm_forward.6} parent=31 // pred_fallthru
          _
        // Predicated region
        $region37: #{conv_lstm_forward.6} parent=31 // pred_check
          %p187 = pneg %p86
        $region38: #{conv_lstm_forward.6} parent=31 // pred_check_branch
          %189 = sbr.rel (%p187) target = $region40
        $region39: #{conv_lstm_forward.6} parent=31 // pred_region
          %191 = dma.done [#allocation6], 48
        $region40: #{conv_lstm_forward.6} parent=31 // pred_fallthru
          _
        %s192 = smul.u32 22, %s18
        %p193 = scmp.lt.s32.totalorder %s192, 87
        %s194 = scalar_select %p193, %s192, 87
        %s195 = smul.addr %s194, 2
        %s196 = scalar_lea.vmem %s0, %s195
        %p197 = pneg %p39
        %p198 = pneg %p36
        %s199 = sand.u32 %s52, 1
        %s200 = scalar_lea.sflag [#allocation4], %s199
        %s201 = sand.u32 %s52, 1
        %s202 = smul.addr %s201, 8448
        %s203 = scalar_lea.vmem [#allocation3], %s202
        %p204 = pneg %p65
        %p205 = pneg %p62
        %p206 = pneg %p86
        %p207 = pneg %p83
        %p208 = pneg %p107
        %p209 = pneg %p104
        %s210 = smul.u32 22, %s18
        %p211 = scmp.lt.s32.totalorder %s210, 87
        %s212 = scalar_select %p211, %s210, 87
        %s213 = smul.addr %s212, 2
        %s214 = scalar_lea.vmem %s0, %s213
        %s215 = smul.u32 22, %s18
        %s216 = smul.u32 352, %s18
        %p217 = scmp.eq.s32.totalorder %s18, 0
        // Predicated region
        $region41: #{conv_lstm_forward.6} parent=31 // pred_check
          %p218 = pneg %p217
        $region42: #{conv_lstm_forward.6} parent=31 // pred_check_branch
          %220 = sbr.rel (%p218) target = $region44
        $region43: #{conv_lstm_forward.6} parent=31 // pred_region
          %221 = vst [vmem:[#allocation2] sm:$0x3f] 0.0
        $region44: #{conv_lstm_forward.6} parent=31 // pred_fallthru
          _
        %v222 = vld [vmem:[#allocation2] sm:$0x3f]
        %v223 = vld [vmem:[%s214] sm:$0xff]
        %v224 = vld [vmem:[%s214 + $0x8] sm:$0xff]
        %v225 = vld [vmem:[%s214 + $0x10] sm:$0xff]
        %v226 = vld [vmem:[%s214 + $0x18] sm:$0xff]
        %v227 = vld [vmem:[%s214 + $0x20] sm:$0xff]
        %v228 = vld [vmem:[%s214 + $0x28] sm:$0xf]
        %v229 = vld [vmem:[%s181] sm:$0xff]
        %v230 = vld [vmem:[%s181 + $0x8] sm:$0xff]
        %v231 = vld [vmem:[%s181 + $0x10] sm:$0xff]
        %v232 = vld [vmem:[%s181 + $0x18] sm:$0xff]
        %v233 = vld [vmem:[%s181 + $0x20] sm:$0xff]
        %v234 = vld [vmem:[%s181 + $0x28] sm:$0xff]
        %v235 = vld [vmem:[%s181 + $0x30] sm:$0xff]
        %v236 = vld [vmem:[%s181 + $0x38] sm:$0xff]
        %v237 = vld [vmem:[%s181 + $0x40] sm:$0xff]
        %v238 = vld [vmem:[%s181 + $0x48] sm:$0xff]
        %v239 = vld [vmem:[%s181 + $0x50] sm:$0xff]
        %v240 = vld [vmem:[%s181 + $0x58] sm:$0xff]
        %v241 = vld [vmem:[%s181 + $0x60] sm:$0xff]
        %v242 = vld [vmem:[%s181 + $0x68] sm:$0xff]
        %v243 = vld [vmem:[%s181 + $0x70] sm:$0xff]
        %v244 = vld [vmem:[%s181 + $0x78] sm:$0xff]
        %v245 = vld [vmem:[%s181 + $0x80] sm:$0xff]
        %v246 = vld [vmem:[%s181 + $0x88] sm:$0xff]
        %v247 = vld [vmem:[%s181 + $0x90] sm:$0xff]
        %v248 = vld [vmem:[%s181 + $0x98] sm:$0xff]
        %v249 = vld [vmem:[%s181 + $0xa0] sm:$0xff]
        %v250 = vld [vmem:[%s181 + $0xa8] sm:$0xff]
        %v251 = vld [vmem:[%s181 + $0xb0] sm:$0xff]
        %v252 = vld [vmem:[%s181 + $0xb8] sm:$0xff]
        %v253 = vld [vmem:[%s181 + $0xc0] sm:$0xff]
        %v254 = vld [vmem:[%s181 + $0xc8] sm:$0xff]
        %v255 = vld [vmem:[%s181 + $0xd0] sm:$0xff]
        %v256 = vld [vmem:[%s181 + $0xd8] sm:$0xff]
        %v257 = vld [vmem:[%s181 + $0xe0] sm:$0xff]
        %v258 = vld [vmem:[%s181 + $0xe8] sm:$0xff]
        %v259 = vld [vmem:[%s181 + $0xf0] sm:$0xff]
        %v260 = vld [vmem:[%s181 + $0xf8] sm:$0xff]
        %v261 = vld [vmem:[%s181 + $0x100] sm:$0xff]
        %v262 = vld [vmem:[%s181 + $0x108] sm:$0xff]
        %v263 = vld [vmem:[%s181 + $0x110] sm:$0xff]
        %v264 = vld [vmem:[%s181 + $0x118] sm:$0xff]
        %v265 = vld [vmem:[%s181 + $0x120] sm:$0xff]
        %v266 = vld [vmem:[%s181 + $0x128] sm:$0xff]
        %v267 = vld [vmem:[%s181 + $0x130] sm:$0xff]
        %v268 = vld [vmem:[%s181 + $0x138] sm:$0xff]
        %v269 = vld [vmem:[%s181 + $0x140] sm:$0xff]
        %v270 = vld [vmem:[%s181 + $0x148] sm:$0xff]
        %v271 = vld [vmem:[%s181 + $0x150] sm:$0xff]
        %v272 = vld [vmem:[%s181 + $0x158] sm:$0xff]
        %v273 = vld [vmem:[%s181 + $0x160] sm:$0xff]
        %v274 = vld [vmem:[%s181 + $0x168] sm:$0xff]
        %v275 = vld [vmem:[%s181 + $0x170] sm:$0xff]
        %v276 = vld [vmem:[%s181 + $0x178] sm:$0xff]
        %v277 = vld [vmem:[%s181 + $0x180] sm:$0xff]
        %v278 = vld [vmem:[%s181 + $0x188] sm:$0xff]
        %v279 = vld [vmem:[%s181 + $0x190] sm:$0xff]
        %v280 = vld [vmem:[%s181 + $0x198] sm:$0xff]
        %v281 = vld [vmem:[%s181 + $0x1a0] sm:$0xff]
        %v282 = vld [vmem:[%s181 + $0x1a8] sm:$0xff]
        %v283 = vld [vmem:[%s181 + $0x1b0] sm:$0xff]
        %v284 = vld [vmem:[%s181 + $0x1b8] sm:$0xff]
        %v285 = vld [vmem:[%s181 + $0x1c0] sm:$0xff]
        %v286 = vld [vmem:[%s181 + $0x1c8] sm:$0xff]
        %v287 = vld [vmem:[%s181 + $0x1d0] sm:$0xff]
        %v288 = vld [vmem:[%s181 + $0x1d8] sm:$0xff]
        %v289 = vld [vmem:[%s181 + $0x1e0] sm:$0xff]
        %v290 = vld [vmem:[%s181 + $0x1e8] sm:$0xff]
        %v291 = vld [vmem:[%s181 + $0x1f0] sm:$0xff]
        %v292 = vld [vmem:[%s181 + $0x1f8] sm:$0xff]
        %v293 = vld [vmem:[%s181 + $0x200] sm:$0xff]
        %v294 = vld [vmem:[%s181 + $0x208] sm:$0xff]
        %v295 = vld [vmem:[%s181 + $0x210] sm:$0xff]
        %v296 = vld [vmem:[%s181 + $0x218] sm:$0xff]
        %v297 = vld [vmem:[%s181 + $0x220] sm:$0xff]
        %v298 = vld [vmem:[%s181 + $0x228] sm:$0xff]
        %v299 = vld [vmem:[%s181 + $0x230] sm:$0xff]
        %v300 = vld [vmem:[%s181 + $0x238] sm:$0xff]
        %v301 = vld [vmem:[%s181 + $0x240] sm:$0xff]
        %v302 = vld [vmem:[%s181 + $0x248] sm:$0xff]
        %v303 = vld [vmem:[%s181 + $0x250] sm:$0xff]
        %v304 = vld [vmem:[%s181 + $0x258] sm:$0xff]
        %v305 = vld [vmem:[%s181 + $0x260] sm:$0xff]
        %v306 = vld [vmem:[%s181 + $0x268] sm:$0xff]
        %v307 = vld [vmem:[%s181 + $0x270] sm:$0xff]
        %v308 = vld [vmem:[%s181 + $0x278] sm:$0xff]
        %v309 = vld [vmem:[%s181 + $0x280] sm:$0xff]
        %v310 = vld [vmem:[%s181 + $0x288] sm:$0xff]
        %v311 = vld [vmem:[%s181 + $0x290] sm:$0xff]
        %v312 = vld [vmem:[%s181 + $0x298] sm:$0xff]
        %v313 = vld [vmem:[%s181 + $0x2a0] sm:$0xff]
        %v314 = vld [vmem:[%s181 + $0x2a8] sm:$0xff]
        %v315 = vld [vmem:[%s181 + $0x2b0] sm:$0xff]
        %v316 = vld [vmem:[%s181 + $0x2b8] sm:$0xff]
        %v317 = vld [vmem:[%s181 + $0x2c0] sm:$0xff]
        %v318 = vld [vmem:[%s181 + $0x2c8] sm:$0xff]
        %v319 = vld [vmem:[%s181 + $0x2d0] sm:$0xff]
        %v320 = vld [vmem:[%s181 + $0x2d8] sm:$0xff]
        %v321 = vld [vmem:[%s181 + $0x2e0] sm:$0xff]
        %v322 = vld [vmem:[%s181 + $0x2e8] sm:$0xff]
        %v323 = vld [vmem:[%s181 + $0x2f0] sm:$0xff]
        %v324 = vld [vmem:[%s181 + $0x2f8] sm:$0xff]
        %v325 = vld [vmem:[%s181 + $0x300] sm:$0xff]
        %v326 = vld [vmem:[%s181 + $0x308] sm:$0xff]
        %v327 = vld [vmem:[%s181 + $0x310] sm:$0xff]
        %v328 = vld [vmem:[%s181 + $0x318] sm:$0xff]
        %v329 = vld [vmem:[%s181 + $0x320] sm:$0xff]
        %v330 = vld [vmem:[%s181 + $0x328] sm:$0xff]
        %v331 = vld [vmem:[%s181 + $0x330] sm:$0xff]
        %v332 = vld [vmem:[%s181 + $0x338] sm:$0xff]
        %v333 = vld [vmem:[%s181 + $0x340] sm:$0xff]
        %v334 = vld [vmem:[%s181 + $0x348] sm:$0xff]
        %v335 = vld [vmem:[%s181 + $0x350] sm:$0xff]
        %v336 = vld [vmem:[%s181 + $0x358] sm:$0xff]
        %v337 = vld [vmem:[%s181 + $0x360] sm:$0xff]
        %v338 = vld [vmem:[%s181 + $0x368] sm:$0xff]
        %v339 = vld [vmem:[%s181 + $0x370] sm:$0xff]
        %v340 = vld [vmem:[%s181 + $0x378] sm:$0xff]
        %v341 = vld [vmem:[%s181 + $0x380] sm:$0xff]
        %v342 = vld [vmem:[%s181 + $0x388] sm:$0xff]
        %v343 = vld [vmem:[%s181 + $0x390] sm:$0xff]
        %v344 = vld [vmem:[%s181 + $0x398] sm:$0xff]
        %v345 = vld [vmem:[%s181 + $0x3a0] sm:$0xff]
        %v346 = vld [vmem:[%s181 + $0x3a8] sm:$0xff]
        %v347 = vld [vmem:[%s181 + $0x3b0] sm:$0xff]
        %v348 = vld [vmem:[%s181 + $0x3b8] sm:$0xff]
        %v349 = vld [vmem:[%s181 + $0x3c0] sm:$0xff]
        %v350 = vld [vmem:[%s181 + $0x3c8] sm:$0xff]
        %v351 = vld [vmem:[%s181 + $0x3d0] sm:$0xff]
        %v352 = vld [vmem:[%s181 + $0x3d8] sm:$0xff]
        %v353 = vld [vmem:[%s181 + $0x3e0] sm:$0xff]
        %v354 = vld [vmem:[%s181 + $0x3e8] sm:$0xff]
        %v355 = vld [vmem:[%s181 + $0x3f0] sm:$0xff]
        %v356 = vld [vmem:[%s181 + $0x3f8] sm:$0xff]
        %v357 = vld [vmem:[%s181 + $0x400] sm:$0xff]
        %v358 = vld [vmem:[%s181 + $0x408] sm:$0xff]
        %v359 = vld [vmem:[%s181 + $0x410] sm:$0xff]
        %v360 = vld [vmem:[%s181 + $0x418] sm:$0xff]
        %v361 = vld [vmem:[%s181 + $0x420] sm:$0xff]
        %v362 = vld [vmem:[%s181 + $0x428] sm:$0xff]
        %v363 = vld [vmem:[%s181 + $0x430] sm:$0xff]
        %v364 = vld [vmem:[%s181 + $0x438] sm:$0xff]
        %v365 = vld [vmem:[%s181 + $0x440] sm:$0xff]
        %v366 = vld [vmem:[%s181 + $0x448] sm:$0xff]
        %v367 = vld [vmem:[%s181 + $0x450] sm:$0xff]
        %v368 = vld [vmem:[%s181 + $0x458] sm:$0xff]
        %v369 = vld [vmem:[%s181 + $0x460] sm:$0xff]
        %v370 = vld [vmem:[%s181 + $0x468] sm:$0xff]
        %v371 = vld [vmem:[%s181 + $0x470] sm:$0xff]
        %v372 = vld [vmem:[%s181 + $0x478] sm:$0xff]
        %v373 = vld [vmem:[%s181 + $0x480] sm:$0xff]
        %v374 = vld [vmem:[%s181 + $0x488] sm:$0xff]
        %v375 = vld [vmem:[%s181 + $0x490] sm:$0xff]
        %v376 = vld [vmem:[%s181 + $0x498] sm:$0xff]
        %v377 = vld [vmem:[%s181 + $0x4a0] sm:$0xff]
        %v378 = vld [vmem:[%s181 + $0x4a8] sm:$0xff]
        %v379 = vld [vmem:[%s181 + $0x4b0] sm:$0xff]
        %v380 = vld [vmem:[%s181 + $0x4b8] sm:$0xff]
        %v381 = vld [vmem:[%s181 + $0x4c0] sm:$0xff]
        %v382 = vld [vmem:[%s181 + $0x4c8] sm:$0xff]
        %v383 = vld [vmem:[%s181 + $0x4d0] sm:$0xff]
        %v384 = vld [vmem:[%s181 + $0x4d8] sm:$0xff]
        %v385 = vld [vmem:[%s181 + $0x4e0] sm:$0xff]
        %v386 = vld [vmem:[%s181 + $0x4e8] sm:$0xff]
        %v387 = vld [vmem:[%s181 + $0x4f0] sm:$0xff]
        %v388 = vld [vmem:[%s181 + $0x4f8] sm:$0xff]
        %v389 = vld [vmem:[%s181 + $0x500] sm:$0xff]
        %v390 = vld [vmem:[%s181 + $0x508] sm:$0xff]
        %v391 = vld [vmem:[%s181 + $0x510] sm:$0xff]
        %v392 = vld [vmem:[%s181 + $0x518] sm:$0xff]
        %v393 = vld [vmem:[%s181 + $0x520] sm:$0xff]
        %v394 = vld [vmem:[%s181 + $0x528] sm:$0xff]
        %v395 = vld [vmem:[%s181 + $0x530] sm:$0xff]
        %v396 = vld [vmem:[%s181 + $0x538] sm:$0xff]
        %v397 = vld [vmem:[%s181 + $0x540] sm:$0xff]
        %v398 = vld [vmem:[%s181 + $0x548] sm:$0xff]
        %v399 = vld [vmem:[%s181 + $0x550] sm:$0xff]
        %v400 = vld [vmem:[%s181 + $0x558] sm:$0xff]
        %v401 = vld [vmem:[%s181 + $0x560] sm:$0xff]
        %v402 = vld [vmem:[%s181 + $0x568] sm:$0xff]
        %v403 = vld [vmem:[%s181 + $0x570] sm:$0xff]
        %v404 = vld [vmem:[%s181 + $0x578] sm:$0xff]
        %v405 = vld [vmem:[%s181 + $0x580] sm:$0xff]
        %v406 = vld [vmem:[%s181 + $0x588] sm:$0xff]
        %v407 = vld [vmem:[%s181 + $0x590] sm:$0xff]
        %v408 = vld [vmem:[%s181 + $0x598] sm:$0xff]
        %v409 = vld [vmem:[%s181 + $0x5a0] sm:$0xff]
        %v410 = vld [vmem:[%s181 + $0x5a8] sm:$0xff]
        %v411 = vld [vmem:[%s181 + $0x5b0] sm:$0xff]
        %v412 = vld [vmem:[%s181 + $0x5b8] sm:$0xff]
        %v413 = vld [vmem:[%s181 + $0x5c0] sm:$0xff]
        %v414 = vld [vmem:[%s181 + $0x5c8] sm:$0xff]
        %v415 = vld [vmem:[%s181 + $0x5d0] sm:$0xff]
        %v416 = vld [vmem:[%s181 + $0x5d8] sm:$0xff]
        %v417 = vld [vmem:[%s181 + $0x5e0] sm:$0xff]
        %v418 = vld [vmem:[%s181 + $0x5e8] sm:$0xff]
        %v419 = vld [vmem:[%s181 + $0x5f0] sm:$0xff]
        %v420 = vld [vmem:[%s181 + $0x5f8] sm:$0xff]
        %v421 = vld [vmem:[%s181 + $0x600] sm:$0xff]
        %v422 = vld [vmem:[%s181 + $0x608] sm:$0xff]
        %v423 = vld [vmem:[%s181 + $0x610] sm:$0xff]
        %v424 = vld [vmem:[%s181 + $0x618] sm:$0xff]
        %v425 = vld [vmem:[%s181 + $0x620] sm:$0xff]
        %v426 = vld [vmem:[%s181 + $0x628] sm:$0xff]
        %v427 = vld [vmem:[%s181 + $0x630] sm:$0xff]
        %v428 = vld [vmem:[%s181 + $0x638] sm:$0xff]
        %v429 = vld [vmem:[%s181 + $0x640] sm:$0xff]
        %v430 = vld [vmem:[%s181 + $0x648] sm:$0xff]
        %v431 = vld [vmem:[%s181 + $0x650] sm:$0xff]
        %v432 = vld [vmem:[%s181 + $0x658] sm:$0xff]
        %v433 = vld [vmem:[%s181 + $0x660] sm:$0xff]
        %v434 = vld [vmem:[%s181 + $0x668] sm:$0xff]
        %v435 = vld [vmem:[%s181 + $0x670] sm:$0xff]
        %v436 = vld [vmem:[%s181 + $0x678] sm:$0xff]
        %v437 = vld [vmem:[%s181 + $0x680] sm:$0xff]
        %v438 = vld [vmem:[%s181 + $0x688] sm:$0xff]
        %v439 = vld [vmem:[%s181 + $0x690] sm:$0xff]
        %v440 = vld [vmem:[%s181 + $0x698] sm:$0xff]
        %v441 = vld [vmem:[%s181 + $0x6a0] sm:$0xff]
        %v442 = vld [vmem:[%s181 + $0x6a8] sm:$0xff]
        %v443 = vld [vmem:[%s181 + $0x6b0] sm:$0xff]
        %v444 = vld [vmem:[%s181 + $0x6b8] sm:$0xff]
        %v445 = vld [vmem:[%s181 + $0x6c0] sm:$0xff]
        %v446 = vld [vmem:[%s181 + $0x6c8] sm:$0xff]
        %v447 = vld [vmem:[%s181 + $0x6d0] sm:$0xff]
        %v448 = vld [vmem:[%s181 + $0x6d8] sm:$0xff]
        %v449 = vld [vmem:[%s181 + $0x6e0] sm:$0xff]
        %v450 = vld [vmem:[%s181 + $0x6e8] sm:$0xff]
        %v451 = vld [vmem:[%s181 + $0x6f0] sm:$0xff]
        %v452 = vld [vmem:[%s181 + $0x6f8] sm:$0xff]
        %v453 = vld [vmem:[%s181 + $0x700] sm:$0xff]
        %v454 = vld [vmem:[%s181 + $0x708] sm:$0xff]
        %v455 = vld [vmem:[%s181 + $0x710] sm:$0xff]
        %v456 = vld [vmem:[%s181 + $0x718] sm:$0xff]
        %v457 = vld [vmem:[%s181 + $0x720] sm:$0xff]
        %v458 = vld [vmem:[%s181 + $0x728] sm:$0xff]
        %v459 = vld [vmem:[%s181 + $0x730] sm:$0xff]
        %v460 = vld [vmem:[%s181 + $0x738] sm:$0xff]
        %v461 = vld [vmem:[%s181 + $0x740] sm:$0xff]
        %v462 = vld [vmem:[%s181 + $0x748] sm:$0xff]
        %v463 = vld [vmem:[%s181 + $0x750] sm:$0xff]
        %v464 = vld [vmem:[%s181 + $0x758] sm:$0xff]
        %v465 = vld [vmem:[%s181 + $0x760] sm:$0xff]
        %v466 = vld [vmem:[%s181 + $0x768] sm:$0xff]
        %v467 = vld [vmem:[%s181 + $0x770] sm:$0xff]
        %v468 = vld [vmem:[%s181 + $0x778] sm:$0xff]
        %v469 = vld [vmem:[%s181 + $0x780] sm:$0xff]
        %v470 = vld [vmem:[%s181 + $0x788] sm:$0xff]
        %v471 = vld [vmem:[%s181 + $0x790] sm:$0xff]
        %v472 = vld [vmem:[%s181 + $0x798] sm:$0xff]
        %v473 = vld [vmem:[%s181 + $0x7a0] sm:$0xff]
        %v474 = vld [vmem:[%s181 + $0x7a8] sm:$0xff]
        %v475 = vld [vmem:[%s181 + $0x7b0] sm:$0xff]
        %v476 = vld [vmem:[%s181 + $0x7b8] sm:$0xff]
        %v477 = vld [vmem:[%s181 + $0x7c0] sm:$0xff]
        %v478 = vld [vmem:[%s181 + $0x7c8] sm:$0xff]
        %v479 = vld [vmem:[%s181 + $0x7d0] sm:$0xff]
        %v480 = vld [vmem:[%s181 + $0x7d8] sm:$0xff]
        %v481 = vld [vmem:[%s181 + $0x7e0] sm:$0xff]
        %v482 = vld [vmem:[%s181 + $0x7e8] sm:$0xff]
        %v483 = vld [vmem:[%s181 + $0x7f0] sm:$0xff]
        %v484 = vld [vmem:[%s181 + $0x7f8] sm:$0xff]
        %v485 = vld [vmem:[%s181 + $0x800] sm:$0xff]
        %v486 = vld [vmem:[%s181 + $0x808] sm:$0xff]
        %v487 = vld [vmem:[%s181 + $0x810] sm:$0xff]
        %v488 = vld [vmem:[%s181 + $0x818] sm:$0xff]
        %v489 = vld [vmem:[%s181 + $0x820] sm:$0xff]
        %v490 = vld [vmem:[%s181 + $0x828] sm:$0xff]
        %v491 = vld [vmem:[%s181 + $0x830] sm:$0xff]
        %v492 = vld [vmem:[%s181 + $0x838] sm:$0xff]
        %v493 = vld [vmem:[%s181 + $0x840] sm:$0xff]
        %v494 = vld [vmem:[%s181 + $0x848] sm:$0xff]
        %v495 = vld [vmem:[%s181 + $0x850] sm:$0xff]
        %v496 = vld [vmem:[%s181 + $0x858] sm:$0xff]
        %v497 = vld [vmem:[%s181 + $0x860] sm:$0xff]
        %v498 = vld [vmem:[%s181 + $0x868] sm:$0xff]
        %v499 = vld [vmem:[%s181 + $0x870] sm:$0xff]
        %v500 = vld [vmem:[%s181 + $0x878] sm:$0xff]
        %v501 = vld [vmem:[%s181 + $0x880] sm:$0xff]
        %v502 = vld [vmem:[%s181 + $0x888] sm:$0xff]
        %v503 = vld [vmem:[%s181 + $0x890] sm:$0xff]
        %v504 = vld [vmem:[%s181 + $0x898] sm:$0xff]
        %v505 = vld [vmem:[%s181 + $0x8a0] sm:$0xff]
        %v506 = vld [vmem:[%s181 + $0x8a8] sm:$0xff]
        %v507 = vld [vmem:[%s181 + $0x8b0] sm:$0xff]
        %v508 = vld [vmem:[%s181 + $0x8b8] sm:$0xff]
        %v509 = vld [vmem:[%s181 + $0x8c0] sm:$0xff]
        %v510 = vld [vmem:[%s181 + $0x8c8] sm:$0xff]
        %v511 = vld [vmem:[%s181 + $0x8d0] sm:$0xff]
        %v512 = vld [vmem:[%s181 + $0x8d8] sm:$0xff]
        %v513 = vld [vmem:[%s181 + $0x8e0] sm:$0xff]
        %v514 = vld [vmem:[%s181 + $0x8e8] sm:$0xff]
        %v515 = vld [vmem:[%s181 + $0x8f0] sm:$0xff]
        %v516 = vld [vmem:[%s181 + $0x8f8] sm:$0xff]
        %v517 = vld [vmem:[%s181 + $0x900] sm:$0xff]
        %v518 = vld [vmem:[%s181 + $0x908] sm:$0xff]
        %v519 = vld [vmem:[%s181 + $0x910] sm:$0xff]
        %v520 = vld [vmem:[%s181 + $0x918] sm:$0xff]
        %v521 = vld [vmem:[%s181 + $0x920] sm:$0xff]
        %v522 = vld [vmem:[%s181 + $0x928] sm:$0xff]
        %v523 = vld [vmem:[%s181 + $0x930] sm:$0xff]
        %v524 = vld [vmem:[%s181 + $0x938] sm:$0xff]
        %v525 = vld [vmem:[%s181 + $0x940] sm:$0xff]
        %v526 = vld [vmem:[%s181 + $0x948] sm:$0xff]
        %v527 = vld [vmem:[%s181 + $0x950] sm:$0xff]
        %v528 = vld [vmem:[%s181 + $0x958] sm:$0xff]
        %v529 = vld [vmem:[%s181 + $0x960] sm:$0xff]
        %v530 = vld [vmem:[%s181 + $0x968] sm:$0xff]
        %v531 = vld [vmem:[%s181 + $0x970] sm:$0xff]
        %v532 = vld [vmem:[%s181 + $0x978] sm:$0xff]
        %v533 = vld [vmem:[%s181 + $0x980] sm:$0xff]
        %v534 = vld [vmem:[%s181 + $0x988] sm:$0xff]
        %v535 = vld [vmem:[%s181 + $0x990] sm:$0xff]
        %v536 = vld [vmem:[%s181 + $0x998] sm:$0xff]
        %v537 = vld [vmem:[%s181 + $0x9a0] sm:$0xff]
        %v538 = vld [vmem:[%s181 + $0x9a8] sm:$0xff]
        %v539 = vld [vmem:[%s181 + $0x9b0] sm:$0xff]
        %v540 = vld [vmem:[%s181 + $0x9b8] sm:$0xff]
        %v541 = vld [vmem:[%s181 + $0x9c0] sm:$0xff]
        %v542 = vld [vmem:[%s181 + $0x9c8] sm:$0xff]
        %v543 = vld [vmem:[%s181 + $0x9d0] sm:$0xff]
        %v544 = vld [vmem:[%s181 + $0x9d8] sm:$0xff]
        %v545 = vld [vmem:[%s181 + $0x9e0] sm:$0xff]
        %v546 = vld [vmem:[%s181 + $0x9e8] sm:$0xff]
        %v547 = vld [vmem:[%s181 + $0x9f0] sm:$0xff]
        %v548 = vld [vmem:[%s181 + $0x9f8] sm:$0xff]
        %v549 = vld [vmem:[%s181 + $0xa00] sm:$0xff]
        %v550 = vld [vmem:[%s181 + $0xa08] sm:$0xff]
        %v551 = vld [vmem:[%s181 + $0xa10] sm:$0xff]
        %v552 = vld [vmem:[%s181 + $0xa18] sm:$0xff]
        %v553 = vld [vmem:[%s181 + $0xa20] sm:$0xff]
        %v554 = vld [vmem:[%s181 + $0xa28] sm:$0xff]
        %v555 = vld [vmem:[%s181 + $0xa30] sm:$0xff]
        %v556 = vld [vmem:[%s181 + $0xa38] sm:$0xff]
        %v557 = vld [vmem:[%s181 + $0xa40] sm:$0xff]
        %v558 = vld [vmem:[%s181 + $0xa48] sm:$0xff]
        %v559 = vld [vmem:[%s181 + $0xa50] sm:$0xff]
        %v560 = vld [vmem:[%s181 + $0xa58] sm:$0xff]
        %v561 = vld [vmem:[%s181 + $0xa60] sm:$0xff]
        %v562 = vld [vmem:[%s181 + $0xa68] sm:$0xff]
        %v563 = vld [vmem:[%s181 + $0xa70] sm:$0xff]
        %v564 = vld [vmem:[%s181 + $0xa78] sm:$0xff]
        %v565 = vld [vmem:[%s181 + $0xa80] sm:$0xff]
        %v566 = vld [vmem:[%s181 + $0xa88] sm:$0xff]
        %v567 = vld [vmem:[%s181 + $0xa90] sm:$0xff]
        %v568 = vld [vmem:[%s181 + $0xa98] sm:$0xff]
        %v569 = vld [vmem:[%s181 + $0xaa0] sm:$0xff]
        %v570 = vld [vmem:[%s181 + $0xaa8] sm:$0xff]
        %v571 = vld [vmem:[%s181 + $0xab0] sm:$0xff]
        %v572 = vld [vmem:[%s181 + $0xab8] sm:$0xff]
        %v573 = vld [vmem:[%s181 + $0xac0] sm:$0xff]
        %v574 = vld [vmem:[%s181 + $0xac8] sm:$0xff]
        %v575 = vld [vmem:[%s181 + $0xad0] sm:$0xff]
        %v576 = vld [vmem:[%s181 + $0xad8] sm:$0xff]
        %v577 = vld [vmem:[%s181 + $0xae0] sm:$0xff]
        %v578 = vld [vmem:[%s181 + $0xae8] sm:$0xff]
        %v579 = vld [vmem:[%s181 + $0xaf0] sm:$0xff]
        %v580 = vld [vmem:[%s181 + $0xaf8] sm:$0xff]
        %v581 = vld [vmem:[%s181 + $0xb00] sm:$0xff]
        %v582 = vld [vmem:[%s181 + $0xb08] sm:$0xff]
        %v583 = vld [vmem:[%s181 + $0xb10] sm:$0xff]
        %v584 = vld [vmem:[%s181 + $0xb18] sm:$0xff]
        %v585 = vld [vmem:[%s181 + $0xb20] sm:$0xff]
        %v586 = vld [vmem:[%s181 + $0xb28] sm:$0xff]
        %v587 = vld [vmem:[%s181 + $0xb30] sm:$0xff]
        %v588 = vld [vmem:[%s181 + $0xb38] sm:$0xff]
        %v589 = vld [vmem:[%s181 + $0xb40] sm:$0xff]
        %v590 = vld [vmem:[%s181 + $0xb48] sm:$0xff]
        %v591 = vld [vmem:[%s181 + $0xb50] sm:$0xff]
        %v592 = vld [vmem:[%s181 + $0xb58] sm:$0xff]
        %v593 = vld [vmem:[%s181 + $0xb60] sm:$0xff]
        %v594 = vld [vmem:[%s181 + $0xb68] sm:$0xff]
        %v595 = vld [vmem:[%s181 + $0xb70] sm:$0xff]
        %v596 = vld [vmem:[%s181 + $0xb78] sm:$0xff]
        %v597 = vld [vmem:[%s181 + $0xb80] sm:$0xff]
        %v598 = vld [vmem:[%s181 + $0xb88] sm:$0xff]
        %v599 = vld [vmem:[%s181 + $0xb90] sm:$0xff]
        %v600 = vld [vmem:[%s181 + $0xb98] sm:$0xff]
        %v601 = vld [vmem:[%s181 + $0xba0] sm:$0xff]
        %v602 = vld [vmem:[%s181 + $0xba8] sm:$0xff]
        %v603 = vld [vmem:[%s181 + $0xbb0] sm:$0xff]
        %v604 = vld [vmem:[%s181 + $0xbb8] sm:$0xff]
        %v605 = vld [vmem:[%s181 + $0xbc0] sm:$0xff]
        %v606 = vld [vmem:[%s181 + $0xbc8] sm:$0xff]
        %v607 = vld [vmem:[%s181 + $0xbd0] sm:$0xff]
        %v608 = vld [vmem:[%s181 + $0xbd8] sm:$0xff]
        %v609 = vld [vmem:[%s181 + $0xbe0] sm:$0xff]
        %v610 = vld [vmem:[%s181 + $0xbe8] sm:$0xff]
        %v611 = vld [vmem:[%s181 + $0xbf0] sm:$0xff]
        %v612 = vld [vmem:[%s181 + $0xbf8] sm:$0xff]
        %v613 = vld [vmem:[%s181 + $0xc00] sm:$0xff]
        %v614 = vld [vmem:[%s181 + $0xc08] sm:$0xff]
        %v615 = vld [vmem:[%s181 + $0xc10] sm:$0xff]
        %v616 = vld [vmem:[%s181 + $0xc18] sm:$0xff]
        %v617 = vld [vmem:[%s181 + $0xc20] sm:$0xff]
        %v618 = vld [vmem:[%s181 + $0xc28] sm:$0xff]
        %v619 = vld [vmem:[%s181 + $0xc30] sm:$0xff]
        %v620 = vld [vmem:[%s181 + $0xc38] sm:$0xff]
        %v621 = vld [vmem:[%s181 + $0xc40] sm:$0xff]
        %v622 = vld [vmem:[%s181 + $0xc48] sm:$0xff]
        %v623 = vld [vmem:[%s181 + $0xc50] sm:$0xff]
        %v624 = vld [vmem:[%s181 + $0xc58] sm:$0xff]
        %v625 = vld [vmem:[%s181 + $0xc60] sm:$0xff]
        %v626 = vld [vmem:[%s181 + $0xc68] sm:$0xff]
        %v627 = vld [vmem:[%s181 + $0xc70] sm:$0xff]
        %v628 = vld [vmem:[%s181 + $0xc78] sm:$0xff]
        %v629 = vld [vmem:[%s181 + $0xc80] sm:$0xff]
        %v630 = vld [vmem:[%s181 + $0xc88] sm:$0xff]
        %v631 = vld [vmem:[%s181 + $0xc90] sm:$0xff]
        %v632 = vld [vmem:[%s181 + $0xc98] sm:$0xff]
        %v633 = vld [vmem:[%s181 + $0xca0] sm:$0xff]
        %v634 = vld [vmem:[%s181 + $0xca8] sm:$0xff]
        %v635 = vld [vmem:[%s181 + $0xcb0] sm:$0xff]
        %v636 = vld [vmem:[%s181 + $0xcb8] sm:$0xff]
        %v637 = vld [vmem:[%s181 + $0xcc0] sm:$0xff]
        %v638 = vld [vmem:[%s181 + $0xcc8] sm:$0xff]
        %v639 = vld [vmem:[%s181 + $0xcd0] sm:$0xff]
        %v640 = vld [vmem:[%s181 + $0xcd8] sm:$0xff]
        %v641 = vld [vmem:[%s181 + $0xce0] sm:$0xff]
        %v642 = vld [vmem:[%s181 + $0xce8] sm:$0xff]
        %v643 = vld [vmem:[%s181 + $0xcf0] sm:$0xff]
        %v644 = vld [vmem:[%s181 + $0xcf8] sm:$0xff]
        %v645 = vld [vmem:[%s181 + $0xd00] sm:$0xff]
        %v646 = vld [vmem:[%s181 + $0xd08] sm:$0xff]
        %v647 = vld [vmem:[%s181 + $0xd10] sm:$0xff]
        %v648 = vld [vmem:[%s181 + $0xd18] sm:$0xff]
        %v649 = vld [vmem:[%s181 + $0xd20] sm:$0xff]
        %v650 = vld [vmem:[%s181 + $0xd28] sm:$0xff]
        %v651 = vld [vmem:[%s181 + $0xd30] sm:$0xff]
        %v652 = vld [vmem:[%s181 + $0xd38] sm:$0xff]
        %v653 = vld [vmem:[%s181 + $0xd40] sm:$0xff]
        %v654 = vld [vmem:[%s181 + $0xd48] sm:$0xff]
        %v655 = vld [vmem:[%s181 + $0xd50] sm:$0xff]
        %v656 = vld [vmem:[%s181 + $0xd58] sm:$0xff]
        %v657 = vld [vmem:[%s181 + $0xd60] sm:$0xff]
        %v658 = vld [vmem:[%s181 + $0xd68] sm:$0xff]
        %v659 = vld [vmem:[%s181 + $0xd70] sm:$0xff]
        %v660 = vld [vmem:[%s181 + $0xd78] sm:$0xff]
        %v661 = vld [vmem:[%s181 + $0xd80] sm:$0xff]
        %v662 = vld [vmem:[%s181 + $0xd88] sm:$0xff]
        %v663 = vld [vmem:[%s181 + $0xd90] sm:$0xff]
        %v664 = vld [vmem:[%s181 + $0xd98] sm:$0xff]
        %v665 = vld [vmem:[%s181 + $0xda0] sm:$0xff]
        %v666 = vld [vmem:[%s181 + $0xda8] sm:$0xff]
        %v667 = vld [vmem:[%s181 + $0xdb0] sm:$0xff]
        %v668 = vld [vmem:[%s181 + $0xdb8] sm:$0xff]
        %v669 = vld [vmem:[%s181 + $0xdc0] sm:$0xff]
        %v670 = vld [vmem:[%s181 + $0xdc8] sm:$0xff]
        %v671 = vld [vmem:[%s181 + $0xdd0] sm:$0xff]
        %v672 = vld [vmem:[%s181 + $0xdd8] sm:$0xff]
        %v673 = vld [vmem:[%s181 + $0xde0] sm:$0xff]
        %v674 = vld [vmem:[%s181 + $0xde8] sm:$0xff]
        %v675 = vld [vmem:[%s181 + $0xdf0] sm:$0xff]
        %v676 = vld [vmem:[%s181 + $0xdf8] sm:$0xff]
        %v677 = vld [vmem:[%s181 + $0xe00] sm:$0xff]
        %v678 = vld [vmem:[%s181 + $0xe08] sm:$0xff]
        %v679 = vld [vmem:[%s181 + $0xe10] sm:$0xff]
        %v680 = vld [vmem:[%s181 + $0xe18] sm:$0xff]
        %v681 = vld [vmem:[%s181 + $0xe20] sm:$0xff]
        %v682 = vld [vmem:[%s181 + $0xe28] sm:$0xff]
        %v683 = vld [vmem:[%s181 + $0xe30] sm:$0xff]
        %v684 = vld [vmem:[%s181 + $0xe38] sm:$0xff]
        %v685 = vld [vmem:[%s181 + $0xe40] sm:$0xff]
        %v686 = vld [vmem:[%s181 + $0xe48] sm:$0xff]
        %v687 = vld [vmem:[%s181 + $0xe50] sm:$0xff]
        %v688 = vld [vmem:[%s181 + $0xe58] sm:$0xff]
        %v689 = vld [vmem:[%s181 + $0xe60] sm:$0xff]
        %v690 = vld [vmem:[%s181 + $0xe68] sm:$0xff]
        %v691 = vld [vmem:[%s181 + $0xe70] sm:$0xff]
        %v692 = vld [vmem:[%s181 + $0xe78] sm:$0xff]
        %v693 = vld [vmem:[%s181 + $0xe80] sm:$0xff]
        %v694 = vld [vmem:[%s181 + $0xe88] sm:$0xff]
        %v695 = vld [vmem:[%s181 + $0xe90] sm:$0xff]
        %v696 = vld [vmem:[%s181 + $0xe98] sm:$0xff]
        %v697 = vld [vmem:[%s181 + $0xea0] sm:$0xff]
        %v698 = vld [vmem:[%s181 + $0xea8] sm:$0xff]
        %v699 = vld [vmem:[%s181 + $0xeb0] sm:$0xff]
        %v700 = vld [vmem:[%s181 + $0xeb8] sm:$0xff]
        %v701 = vld [vmem:[%s181 + $0xec0] sm:$0xff]
        %v702 = vld [vmem:[%s181 + $0xec8] sm:$0xff]
        %v703 = vld [vmem:[%s181 + $0xed0] sm:$0xff]
        %v704 = vld [vmem:[%s181 + $0xed8] sm:$0xff]
        %v705 = vld [vmem:[%s181 + $0xee0] sm:$0xff]
        %v706 = vld [vmem:[%s181 + $0xee8] sm:$0xff]
        %v707 = vld [vmem:[%s181 + $0xef0] sm:$0xff]
        %v708 = vld [vmem:[%s181 + $0xef8] sm:$0xff]
        %v709 = vld [vmem:[%s181 + $0xf00] sm:$0xff]
        %v710 = vld [vmem:[%s181 + $0xf08] sm:$0xff]
        %v711 = vld [vmem:[%s181 + $0xf10] sm:$0xff]
        %v712 = vld [vmem:[%s181 + $0xf18] sm:$0xff]
        %v713 = vld [vmem:[%s181 + $0xf20] sm:$0xff]
        %v714 = vld [vmem:[%s181 + $0xf28] sm:$0xff]
        %v715 = vld [vmem:[%s181 + $0xf30] sm:$0xff]
        %v716 = vld [vmem:[%s181 + $0xf38] sm:$0xff]
        %v717 = vld [vmem:[%s181 + $0xf40] sm:$0xff]
        %v718 = vld [vmem:[%s181 + $0xf48] sm:$0xff]
        %v719 = vld [vmem:[%s181 + $0xf50] sm:$0xff]
        %v720 = vld [vmem:[%s181 + $0xf58] sm:$0xff]
        %v721 = vld [vmem:[%s181 + $0xf60] sm:$0xff]
        %v722 = vld [vmem:[%s181 + $0xf68] sm:$0xff]
        %v723 = vld [vmem:[%s181 + $0xf70] sm:$0xff]
        %v724 = vld [vmem:[%s181 + $0xf78] sm:$0xff]
        %v725 = vld [vmem:[%s181 + $0xf80] sm:$0xff]
        %v726 = vld [vmem:[%s181 + $0xf88] sm:$0xff]
        %v727 = vld [vmem:[%s181 + $0xf90] sm:$0xff]
        %v728 = vld [vmem:[%s181 + $0xf98] sm:$0xff]
        %v729 = vld [vmem:[%s181 + $0xfa0] sm:$0xff]
        %v730 = vld [vmem:[%s181 + $0xfa8] sm:$0xff]
        %v731 = vld [vmem:[%s181 + $0xfb0] sm:$0xff]
        %v732 = vld [vmem:[%s181 + $0xfb8] sm:$0xff]
        %v733 = vld [vmem:[%s181 + $0xfc0] sm:$0xff]
        %v734 = vld [vmem:[%s181 + $0xfc8] sm:$0xff]
        %v735 = vld [vmem:[%s181 + $0xfd0] sm:$0xff]
        %v736 = vld [vmem:[%s181 + $0xfd8] sm:$0xff]
        %v737 = vld [vmem:[%s181 + $0xfe0] sm:$0xff]
        %v738 = vld [vmem:[%s181 + $0xfe8] sm:$0xff]
        %v739 = vld [vmem:[%s181 + $0xff0] sm:$0xff]
        %v740 = vld [vmem:[%s181 + $0xff8] sm:$0xff]
        %v741 = vld [vmem:[%s181 + $0x1000] sm:$0xff]
        %v742 = vld [vmem:[%s181 + $0x1008] sm:$0xff]
        %v743 = vld [vmem:[%s181 + $0x1010] sm:$0xff]
        %v744 = vld [vmem:[%s181 + $0x1018] sm:$0xff]
        %v745 = vld [vmem:[%s181 + $0x1020] sm:$0xff]
        %v746 = vld [vmem:[%s181 + $0x1028] sm:$0xff]
        %v747 = vld [vmem:[%s181 + $0x1030] sm:$0xff]
        %v748 = vld [vmem:[%s181 + $0x1038] sm:$0xff]
        %v749 = vld [vmem:[%s181 + $0x1040] sm:$0xff]
        %v750 = vld [vmem:[%s181 + $0x1048] sm:$0xff]
        %v751 = vld [vmem:[%s181 + $0x1050] sm:$0xff]
        %v752 = vld [vmem:[%s181 + $0x1058] sm:$0xff]
        %v753 = vld [vmem:[%s181 + $0x1060] sm:$0xff]
        %v754 = vld [vmem:[%s181 + $0x1068] sm:$0xff]
        %v755 = vld [vmem:[%s181 + $0x1070] sm:$0xff]
        %v756 = vld [vmem:[%s181 + $0x1078] sm:$0xff]
        %v757 = vld [vmem:[%s181 + $0x1080] sm:$0xff]
        %v758 = vld [vmem:[%s181 + $0x1088] sm:$0xff]
        %v759 = vld [vmem:[%s181 + $0x1090] sm:$0xff]
        %v760 = vld [vmem:[%s181 + $0x1098] sm:$0xff]
        %v761 = vld [vmem:[%s181 + $0x10a0] sm:$0xff]
        %v762 = vld [vmem:[%s181 + $0x10a8] sm:$0xff]
        %v763 = vld [vmem:[%s181 + $0x10b0] sm:$0xff]
        %v764 = vld [vmem:[%s181 + $0x10b8] sm:$0xff]
        %v765 = vld [vmem:[%s181 + $0x10c0] sm:$0xff]
        %v766 = vld [vmem:[%s181 + $0x10c8] sm:$0xff]
        %v767 = vld [vmem:[%s181 + $0x10d0] sm:$0xff]
        %v768 = vld [vmem:[%s181 + $0x10d8] sm:$0xff]
        %v769 = vld [vmem:[%s181 + $0x10e0] sm:$0xff]
        %v770 = vld [vmem:[%s181 + $0x10e8] sm:$0xff]
        %v771 = vld [vmem:[%s181 + $0x10f0] sm:$0xff]
        %v772 = vld [vmem:[%s181 + $0x10f8] sm:$0xff]
        %v773 = vld [vmem:[%s181 + $0x1100] sm:$0xff]
        %v774 = vld [vmem:[%s181 + $0x1108] sm:$0xff]
        %v775 = vld [vmem:[%s181 + $0x1110] sm:$0xff]
        %v776 = vld [vmem:[%s181 + $0x1118] sm:$0xff]
        %v777 = vld [vmem:[%s181 + $0x1120] sm:$0xff]
        %v778 = vld [vmem:[%s181 + $0x1128] sm:$0xff]
        %v779 = vld [vmem:[%s181 + $0x1130] sm:$0xff]
        %v780 = vld [vmem:[%s181 + $0x1138] sm:$0xff]
        %v781 = vld [vmem:[%s181 + $0x1140] sm:$0xff]
        %v782 = vld [vmem:[%s181 + $0x1148] sm:$0xff]
        %v783 = vld [vmem:[%s181 + $0x1150] sm:$0xff]
        %v784 = vld [vmem:[%s181 + $0x1158] sm:$0xff]
        %v785 = vld [vmem:[%s181 + $0x1160] sm:$0xff]
        %v786 = vld [vmem:[%s181 + $0x1168] sm:$0xff]
        %v787 = vld [vmem:[%s181 + $0x1170] sm:$0xff]
        %v788 = vld [vmem:[%s181 + $0x1178] sm:$0xff]
        %v789 = vld [vmem:[%s181 + $0x1180] sm:$0xff]
        %v790 = vld [vmem:[%s181 + $0x1188] sm:$0xff]
        %v791 = vld [vmem:[%s181 + $0x1190] sm:$0xff]
        %v792 = vld [vmem:[%s181 + $0x1198] sm:$0xff]
        %v793 = vld [vmem:[%s181 + $0x11a0] sm:$0xff]
        %v794 = vld [vmem:[%s181 + $0x11a8] sm:$0xff]
        %v795 = vld [vmem:[%s181 + $0x11b0] sm:$0xff]
        %v796 = vld [vmem:[%s181 + $0x11b8] sm:$0xff]
        %v797 = vld [vmem:[%s181 + $0x11c0] sm:$0xff]
        %v798 = vld [vmem:[%s181 + $0x11c8] sm:$0xff]
        %v799 = vld [vmem:[%s181 + $0x11d0] sm:$0xff]
        %v800 = vld [vmem:[%s181 + $0x11d8] sm:$0xff]
        %v801 = vld [vmem:[%s181 + $0x11e0] sm:$0xff]
        %v802 = vld [vmem:[%s181 + $0x11e8] sm:$0xff]
        %v803 = vld [vmem:[%s181 + $0x11f0] sm:$0xff]
        %v804 = vld [vmem:[%s181 + $0x11f8] sm:$0xff]
        %v805 = vld [vmem:[%s181 + $0x1200] sm:$0xff]
        %v806 = vld [vmem:[%s181 + $0x1208] sm:$0xff]
        %v807 = vld [vmem:[%s181 + $0x1210] sm:$0xff]
        %v808 = vld [vmem:[%s181 + $0x1218] sm:$0xff]
        %v809 = vld [vmem:[%s181 + $0x1220] sm:$0xff]
        %v810 = vld [vmem:[%s181 + $0x1228] sm:$0xff]
        %v811 = vld [vmem:[%s181 + $0x1230] sm:$0xff]
        %v812 = vld [vmem:[%s181 + $0x1238] sm:$0xff]
        %v813 = vld [vmem:[%s181 + $0x1240] sm:$0xff]
        %v814 = vld [vmem:[%s181 + $0x1248] sm:$0xff]
        %v815 = vld [vmem:[%s181 + $0x1250] sm:$0xff]
        %v816 = vld [vmem:[%s181 + $0x1258] sm:$0xff]
        %v817 = vld [vmem:[%s181 + $0x1260] sm:$0xff]
        %v818 = vld [vmem:[%s181 + $0x1268] sm:$0xff]
        %v819 = vld [vmem:[%s181 + $0x1270] sm:$0xff]
        %v820 = vld [vmem:[%s181 + $0x1278] sm:$0xff]
        %v821 = vld [vmem:[%s181 + $0x1280] sm:$0xff]
        %v822 = vld [vmem:[%s181 + $0x1288] sm:$0xff]
        %v823 = vld [vmem:[%s181 + $0x1290] sm:$0xff]
        %v824 = vld [vmem:[%s181 + $0x1298] sm:$0xff]
        %v825 = vld [vmem:[%s181 + $0x12a0] sm:$0xff]
        %v826 = vld [vmem:[%s181 + $0x12a8] sm:$0xff]
        %v827 = vld [vmem:[%s181 + $0x12b0] sm:$0xff]
        %v828 = vld [vmem:[%s181 + $0x12b8] sm:$0xff]
        %v829 = vld [vmem:[%s181 + $0x12c0] sm:$0xff]
        %v830 = vld [vmem:[%s181 + $0x12c8] sm:$0xff]
        %v831 = vld [vmem:[%s181 + $0x12d0] sm:$0xff]
        %v832 = vld [vmem:[%s181 + $0x12d8] sm:$0xff]
        %v833 = vld [vmem:[%s181 + $0x12e0] sm:$0xff]
        %v834 = vld [vmem:[%s181 + $0x12e8] sm:$0xff]
        %v835 = vld [vmem:[%s181 + $0x12f0] sm:$0xff]
        %v836 = vld [vmem:[%s181 + $0x12f8] sm:$0xff]
        %v837 = vld [vmem:[%s181 + $0x1300] sm:$0xff]
        %v838 = vld [vmem:[%s181 + $0x1308] sm:$0xff]
        %v839 = vld [vmem:[%s181 + $0x1310] sm:$0xff]
        %v840 = vld [vmem:[%s181 + $0x1318] sm:$0xff]
        %v841 = vld [vmem:[%s181 + $0x1320] sm:$0xff]
        %v842 = vld [vmem:[%s181 + $0x1328] sm:$0xff]
        %v843 = vld [vmem:[%s181 + $0x1330] sm:$0xff]
        %v844 = vld [vmem:[%s181 + $0x1338] sm:$0xff]
        %v845 = vld [vmem:[%s181 + $0x1340] sm:$0xff]
        %v846 = vld [vmem:[%s181 + $0x1348] sm:$0xff]
        %v847 = vld [vmem:[%s181 + $0x1350] sm:$0xff]
        %v848 = vld [vmem:[%s181 + $0x1358] sm:$0xff]
        %v849 = vld [vmem:[%s181 + $0x1360] sm:$0xff]
        %v850 = vld [vmem:[%s181 + $0x1368] sm:$0xff]
        %v851 = vld [vmem:[%s181 + $0x1370] sm:$0xff]
        %v852 = vld [vmem:[%s181 + $0x1378] sm:$0xff]
        %v853 = vld [vmem:[%s181 + $0x1380] sm:$0xff]
        %v854 = vld [vmem:[%s181 + $0x1388] sm:$0xff]
        %v855 = vld [vmem:[%s181 + $0x1390] sm:$0xff]
        %v856 = vld [vmem:[%s181 + $0x1398] sm:$0xff]
        %v857 = vld [vmem:[%s181 + $0x13a0] sm:$0xff]
        %v858 = vld [vmem:[%s181 + $0x13a8] sm:$0xff]
        %v859 = vld [vmem:[%s181 + $0x13b0] sm:$0xff]
        %v860 = vld [vmem:[%s181 + $0x13b8] sm:$0xff]
        %v861 = vld [vmem:[%s181 + $0x13c0] sm:$0xff]
        %v862 = vld [vmem:[%s181 + $0x13c8] sm:$0xff]
        %v863 = vld [vmem:[%s181 + $0x13d0] sm:$0xff]
        %v864 = vld [vmem:[%s181 + $0x13d8] sm:$0xff]
        %v865 = vld [vmem:[%s181 + $0x13e0] sm:$0xff]
        %v866 = vld [vmem:[%s181 + $0x13e8] sm:$0xff]
        %v867 = vld [vmem:[%s181 + $0x13f0] sm:$0xff]
        %v868 = vld [vmem:[%s181 + $0x13f8] sm:$0xff]
        %v869 = vld [vmem:[%s181 + $0x1400] sm:$0xff]
        %v870 = vld [vmem:[%s181 + $0x1408] sm:$0xff]
        %v871 = vld [vmem:[%s181 + $0x1410] sm:$0xff]
        %v872 = vld [vmem:[%s181 + $0x1418] sm:$0xff]
        %v873 = vld [vmem:[%s181 + $0x1420] sm:$0xff]
        %v874 = vld [vmem:[%s181 + $0x1428] sm:$0xff]
        %v875 = vld [vmem:[%s181 + $0x1430] sm:$0xff]
        %v876 = vld [vmem:[%s181 + $0x1438] sm:$0xff]
        %v877 = vld [vmem:[%s181 + $0x1440] sm:$0xff]
        %v878 = vld [vmem:[%s181 + $0x1448] sm:$0xff]
        %v879 = vld [vmem:[%s181 + $0x1450] sm:$0xff]
        %v880 = vld [vmem:[%s181 + $0x1458] sm:$0xff]
        %v881 = vld [vmem:[%s181 + $0x1460] sm:$0xff]
        %v882 = vld [vmem:[%s181 + $0x1468] sm:$0xff]
        %v883 = vld [vmem:[%s181 + $0x1470] sm:$0xff]
        %v884 = vld [vmem:[%s181 + $0x1478] sm:$0xff]
        %v885 = vld [vmem:[%s181 + $0x1480] sm:$0xff]
        %v886 = vld [vmem:[%s181 + $0x1488] sm:$0xff]
        %v887 = vld [vmem:[%s181 + $0x1490] sm:$0xff]
        %v888 = vld [vmem:[%s181 + $0x1498] sm:$0xff]
        %v889 = vld [vmem:[%s181 + $0x14a0] sm:$0xff]
        %v890 = vld [vmem:[%s181 + $0x14a8] sm:$0xff]
        %v891 = vld [vmem:[%s181 + $0x14b0] sm:$0xff]
        %v892 = vld [vmem:[%s181 + $0x14b8] sm:$0xff]
        %v893 = vld [vmem:[%s181 + $0x14c0] sm:$0xff]
        %v894 = vld [vmem:[%s181 + $0x14c8] sm:$0xff]
        %v895 = vld [vmem:[%s181 + $0x14d0] sm:$0xff]
        %v896 = vld [vmem:[%s181 + $0x14d8] sm:$0xff]
        %v897 = vld [vmem:[%s181 + $0x14e0] sm:$0xff]
        %v898 = vld [vmem:[%s181 + $0x14e8] sm:$0xff]
        %v899 = vld [vmem:[%s181 + $0x14f0] sm:$0xff]
        %v900 = vld [vmem:[%s181 + $0x14f8] sm:$0xff]
        %v901 = vld [vmem:[%s181 + $0x1500] sm:$0xff]
        %v902 = vld [vmem:[%s181 + $0x1508] sm:$0xff]
        %v903 = vld [vmem:[%s181 + $0x1510] sm:$0xff]
        %v904 = vld [vmem:[%s181 + $0x1518] sm:$0xff]
        %v905 = vld [vmem:[%s181 + $0x1520] sm:$0xff]
        %v906 = vld [vmem:[%s181 + $0x1528] sm:$0xff]
        %v907 = vld [vmem:[%s181 + $0x1530] sm:$0xff]
        %v908 = vld [vmem:[%s181 + $0x1538] sm:$0xff]
        %v909 = vld [vmem:[%s181 + $0x1540] sm:$0xff]
        %v910 = vld [vmem:[%s181 + $0x1548] sm:$0xff]
        %v911 = vld [vmem:[%s181 + $0x1550] sm:$0xff]
        %v912 = vld [vmem:[%s181 + $0x1558] sm:$0xff]
        %v913 = vld [vmem:[%s181 + $0x1560] sm:$0xff]
        %v914 = vld [vmem:[%s181 + $0x1568] sm:$0xff]
        %v915 = vld [vmem:[%s181 + $0x1570] sm:$0xff]
        %v916 = vld [vmem:[%s181 + $0x1578] sm:$0xff]
        %v917 = vld [vmem:[%s181 + $0x1580] sm:$0xff]
        %v918 = vld [vmem:[%s181 + $0x1588] sm:$0xff]
        %v919 = vld [vmem:[%s181 + $0x1590] sm:$0xff]
        %v920 = vld [vmem:[%s181 + $0x1598] sm:$0xff]
        %v921 = vld [vmem:[%s181 + $0x15a0] sm:$0xff]
        %v922 = vld [vmem:[%s181 + $0x15a8] sm:$0xff]
        %v923 = vld [vmem:[%s181 + $0x15b0] sm:$0xff]
        %v924 = vld [vmem:[%s181 + $0x15b8] sm:$0xff]
        %v925 = vld [vmem:[%s181 + $0x15c0] sm:$0xff]
        %v926 = vld [vmem:[%s181 + $0x15c8] sm:$0xff]
        %v927 = vld [vmem:[%s181 + $0x15d0] sm:$0xff]
        %v928 = vld [vmem:[%s181 + $0x15d8] sm:$0xff]
        %v929 = vld [vmem:[%s181 + $0x15e0] sm:$0xff]
        %v930 = vld [vmem:[%s181 + $0x15e8] sm:$0xff]
        %v931 = vld [vmem:[%s181 + $0x15f0] sm:$0xff]
        %v932 = vld [vmem:[%s181 + $0x15f8] sm:$0xff]
        %v933 = vld [vmem:[%s181 + $0x1600] sm:$0xff]
        %v934 = vld [vmem:[%s181 + $0x1608] sm:$0xff]
        %v935 = vld [vmem:[%s181 + $0x1610] sm:$0xff]
        %v936 = vld [vmem:[%s181 + $0x1618] sm:$0xff]
        %v937 = vld [vmem:[%s181 + $0x1620] sm:$0xff]
        %v938 = vld [vmem:[%s181 + $0x1628] sm:$0xff]
        %v939 = vld [vmem:[%s181 + $0x1630] sm:$0xff]
        %v940 = vld [vmem:[%s181 + $0x1638] sm:$0xff]
        %v941 = vld [vmem:[%s181 + $0x1640] sm:$0xff]
        %v942 = vld [vmem:[%s181 + $0x1648] sm:$0xff]
        %v943 = vld [vmem:[%s181 + $0x1650] sm:$0xff]
        %v944 = vld [vmem:[%s181 + $0x1658] sm:$0xff]
        %v945 = vld [vmem:[%s181 + $0x1660] sm:$0xff]
        %v946 = vld [vmem:[%s181 + $0x1668] sm:$0xff]
        %v947 = vld [vmem:[%s181 + $0x1670] sm:$0xff]
        %v948 = vld [vmem:[%s181 + $0x1678] sm:$0xff]
        %v949 = vld [vmem:[%s181 + $0x1680] sm:$0xff]
        %v950 = vld [vmem:[%s181 + $0x1688] sm:$0xff]
        %v951 = vld [vmem:[%s181 + $0x1690] sm:$0xff]
        %v952 = vld [vmem:[%s181 + $0x1698] sm:$0xff]
        %v953 = vld [vmem:[%s181 + $0x16a0] sm:$0xff]
        %v954 = vld [vmem:[%s181 + $0x16a8] sm:$0xff]
        %v955 = vld [vmem:[%s181 + $0x16b0] sm:$0xff]
        %v956 = vld [vmem:[%s181 + $0x16b8] sm:$0xff]
        %v957 = vld [vmem:[%s181 + $0x16c0] sm:$0xff]
        %v958 = vld [vmem:[%s181 + $0x16c8] sm:$0xff]
        %v959 = vld [vmem:[%s181 + $0x16d0] sm:$0xff]
        %v960 = vld [vmem:[%s181 + $0x16d8] sm:$0xff]
        %v961 = vld [vmem:[%s181 + $0x16e0] sm:$0xff]
        %v962 = vld [vmem:[%s181 + $0x16e8] sm:$0xff]
        %v963 = vld [vmem:[%s181 + $0x16f0] sm:$0xff]
        %v964 = vld [vmem:[%s181 + $0x16f8] sm:$0xff]
        %v965 = vld [vmem:[%s181 + $0x1700] sm:$0xff]
        %v966 = vld [vmem:[%s181 + $0x1708] sm:$0xff]
        %v967 = vld [vmem:[%s181 + $0x1710] sm:$0xff]
        %v968 = vld [vmem:[%s181 + $0x1718] sm:$0xff]
        %v969 = vld [vmem:[%s181 + $0x1720] sm:$0xff]
        %v970 = vld [vmem:[%s181 + $0x1728] sm:$0xff]
        %v971 = vld [vmem:[%s181 + $0x1730] sm:$0xff]
        %v972 = vld [vmem:[%s181 + $0x1738] sm:$0xff]
        %v973 = vld [vmem:[%s181 + $0x1740] sm:$0xff]
        %v974 = vld [vmem:[%s181 + $0x1748] sm:$0xff]
        %v975 = vld [vmem:[%s181 + $0x1750] sm:$0xff]
        %v976 = vld [vmem:[%s181 + $0x1758] sm:$0xff]
        %v977 = vld [vmem:[%s181 + $0x1760] sm:$0xff]
        %v978 = vld [vmem:[%s181 + $0x1768] sm:$0xff]
        %v979 = vld [vmem:[%s181 + $0x1770] sm:$0xff]
        %v980 = vld [vmem:[%s181 + $0x1778] sm:$0xff]
        %v981 = vld [vmem:[%s181 + $0x1780] sm:$0xff]
        %v982 = vld [vmem:[%s181 + $0x1788] sm:$0xff]
        %v983 = vld [vmem:[%s181 + $0x1790] sm:$0xff]
        %v984 = vld [vmem:[%s181 + $0x1798] sm:$0xff]
        %v985 = vld [vmem:[%s181 + $0x17a0] sm:$0xff]
        %v986 = vld [vmem:[%s181 + $0x17a8] sm:$0xff]
        %v987 = vld [vmem:[%s181 + $0x17b0] sm:$0xff]
        %v988 = vld [vmem:[%s181 + $0x17b8] sm:$0xff]
        %v989 = vld [vmem:[%s181 + $0x17c0] sm:$0xff]
        %v990 = vld [vmem:[%s181 + $0x17c8] sm:$0xff]
        %v991 = vld [vmem:[%s181 + $0x17d0] sm:$0xff]
        %v992 = vld [vmem:[%s181 + $0x17d8] sm:$0xff]
        %v993 = vld [vmem:[%s181 + $0x17e0] sm:$0xff]
        %v994 = vld [vmem:[%s181 + $0x17e8] sm:$0xff]
        %v995 = vld [vmem:[%s181 + $0x17f0] sm:$0xff]
        %v996 = vld [vmem:[%s181 + $0x17f8] sm:$0xff]
        %v997 = vld [vmem:[%s181 + $0x1800] sm:$0xff]
        %v998 = vld [vmem:[%s181 + $0x1808] sm:$0xff]
        %v999 = vld [vmem:[%s181 + $0x1810] sm:$0xff]
        %v1000 = vld [vmem:[%s181 + $0x1818] sm:$0xff]
        %v1001 = vld [vmem:[%s181 + $0x1820] sm:$0xff]
        %v1002 = vld [vmem:[%s181 + $0x1828] sm:$0xff]
        %v1003 = vld [vmem:[%s181 + $0x1830] sm:$0xff]
        %v1004 = vld [vmem:[%s181 + $0x1838] sm:$0xff]
        %v1005 = vld [vmem:[%s181 + $0x1840] sm:$0xff]
        %v1006 = vld [vmem:[%s181 + $0x1848] sm:$0xff]
        %v1007 = vld [vmem:[%s181 + $0x1850] sm:$0xff]
        %v1008 = vld [vmem:[%s181 + $0x1858] sm:$0xff]
        %v1009 = vld [vmem:[%s181 + $0x1860] sm:$0xff]
        %v1010 = vld [vmem:[%s181 + $0x1868] sm:$0xff]
        %v1011 = vld [vmem:[%s181 + $0x1870] sm:$0xff]
        %v1012 = vld [vmem:[%s181 + $0x1878] sm:$0xff]
        %v1013 = vld [vmem:[%s181 + $0x1880] sm:$0xff]
        %v1014 = vld [vmem:[%s181 + $0x1888] sm:$0xff]
        %v1015 = vld [vmem:[%s181 + $0x1890] sm:$0xff]
        %v1016 = vld [vmem:[%s181 + $0x1898] sm:$0xff]
        %v1017 = vld [vmem:[%s181 + $0x18a0] sm:$0xff]
        %v1018 = vld [vmem:[%s181 + $0x18a8] sm:$0xff]
        %v1019 = vld [vmem:[%s181 + $0x18b0] sm:$0xff]
        %v1020 = vld [vmem:[%s181 + $0x18b8] sm:$0xff]
        %v1021 = vld [vmem:[%s181 + $0x18c0] sm:$0xff]
        %v1022 = vld [vmem:[%s181 + $0x18c8] sm:$0xff]
        %v1023 = vld [vmem:[%s181 + $0x18d0] sm:$0xff]
        %v1024 = vld [vmem:[%s181 + $0x18d8] sm:$0xff]
        %v1025 = vld [vmem:[%s181 + $0x18e0] sm:$0xff]
        %v1026 = vld [vmem:[%s181 + $0x18e8] sm:$0xff]
        %v1027 = vld [vmem:[%s181 + $0x18f0] sm:$0xff]
        %v1028 = vld [vmem:[%s181 + $0x18f8] sm:$0xff]
        %v1029 = vld [vmem:[%s181 + $0x1900] sm:$0xff]
        %v1030 = vld [vmem:[%s181 + $0x1908] sm:$0xff]
        %v1031 = vld [vmem:[%s181 + $0x1910] sm:$0xff]
        %v1032 = vld [vmem:[%s181 + $0x1918] sm:$0xff]
        %v1033 = vld [vmem:[%s181 + $0x1920] sm:$0xff]
        %v1034 = vld [vmem:[%s181 + $0x1928] sm:$0xff]
        %v1035 = vld [vmem:[%s181 + $0x1930] sm:$0xff]
        %v1036 = vld [vmem:[%s181 + $0x1938] sm:$0xff]
        %v1037 = vld [vmem:[%s181 + $0x1940] sm:$0xff]
        %v1038 = vld [vmem:[%s181 + $0x1948] sm:$0xff]
        %v1039 = vld [vmem:[%s181 + $0x1950] sm:$0xff]
        %v1040 = vld [vmem:[%s181 + $0x1958] sm:$0xff]
        %v1041 = vld [vmem:[%s181 + $0x1960] sm:$0xff]
        %v1042 = vld [vmem:[%s181 + $0x1968] sm:$0xff]
        %v1043 = vld [vmem:[%s181 + $0x1970] sm:$0xff]
        %v1044 = vld [vmem:[%s181 + $0x1978] sm:$0xff]
        %v1045 = vld [vmem:[%s181 + $0x1980] sm:$0xff]
        %v1046 = vld [vmem:[%s181 + $0x1988] sm:$0xff]
        %v1047 = vld [vmem:[%s181 + $0x1990] sm:$0xff]
        %v1048 = vld [vmem:[%s181 + $0x1998] sm:$0xff]
        %v1049 = vld [vmem:[%s181 + $0x19a0] sm:$0xff]
        %v1050 = vld [vmem:[%s181 + $0x19a8] sm:$0xff]
        %v1051 = vld [vmem:[%s181 + $0x19b0] sm:$0xff]
        %v1052 = vld [vmem:[%s181 + $0x19b8] sm:$0xff]
        %v1053 = vld [vmem:[%s181 + $0x19c0] sm:$0xff]
        %v1054 = vld [vmem:[%s181 + $0x19c8] sm:$0xff]
        %v1055 = vld [vmem:[%s181 + $0x19d0] sm:$0xff]
        %v1056 = vld [vmem:[%s181 + $0x19d8] sm:$0xff]
        %v1057 = vld [vmem:[%s181 + $0x19e0] sm:$0xff]
        %v1058 = vld [vmem:[%s181 + $0x19e8] sm:$0xff]
        %v1059 = vld [vmem:[%s181 + $0x19f0] sm:$0xff]
        %v1060 = vld [vmem:[%s181 + $0x19f8] sm:$0xff]
        %v1061 = vld [vmem:[%s181 + $0x1a00] sm:$0xff]
        %v1062 = vld [vmem:[%s181 + $0x1a08] sm:$0xff]
        %v1063 = vld [vmem:[%s181 + $0x1a10] sm:$0xff]
        %v1064 = vld [vmem:[%s181 + $0x1a18] sm:$0xff]
        %v1065 = vld [vmem:[%s181 + $0x1a20] sm:$0xff]
        %v1066 = vld [vmem:[%s181 + $0x1a28] sm:$0xff]
        %v1067 = vld [vmem:[%s181 + $0x1a30] sm:$0xff]
        %v1068 = vld [vmem:[%s181 + $0x1a38] sm:$0xff]
        %v1069 = vld [vmem:[%s181 + $0x1a40] sm:$0xff]
        %v1070 = vld [vmem:[%s181 + $0x1a48] sm:$0xff]
        %v1071 = vld [vmem:[%s181 + $0x1a50] sm:$0xff]
        %v1072 = vld [vmem:[%s181 + $0x1a58] sm:$0xff]
        %v1073 = vld [vmem:[%s181 + $0x1a60] sm:$0xff]
        %v1074 = vld [vmem:[%s181 + $0x1a68] sm:$0xff]
        %v1075 = vld [vmem:[%s181 + $0x1a70] sm:$0xff]
        %v1076 = vld [vmem:[%s181 + $0x1a78] sm:$0xff]
        %v1077 = vld [vmem:[%s181 + $0x1a80] sm:$0xff]
        %v1078 = vld [vmem:[%s181 + $0x1a88] sm:$0xff]
        %v1079 = vld [vmem:[%s181 + $0x1a90] sm:$0xff]
        %v1080 = vld [vmem:[%s181 + $0x1a98] sm:$0xff]
        %v1081 = vld [vmem:[%s181 + $0x1aa0] sm:$0xff]
        %v1082 = vld [vmem:[%s181 + $0x1aa8] sm:$0xff]
        %v1083 = vld [vmem:[%s181 + $0x1ab0] sm:$0xff]
        %v1084 = vld [vmem:[%s181 + $0x1ab8] sm:$0xff]
        %v1085 = vld [vmem:[%s181 + $0x1ac0] sm:$0xff]
        %v1086 = vld [vmem:[%s181 + $0x1ac8] sm:$0xff]
        %v1087 = vld [vmem:[%s181 + $0x1ad0] sm:$0xff]
        %v1088 = vld [vmem:[%s181 + $0x1ad8] sm:$0xff]
        %v1089 = vld [vmem:[%s181 + $0x1ae0] sm:$0xff]
        %v1090 = vld [vmem:[%s181 + $0x1ae8] sm:$0xff]
        %v1091 = vld [vmem:[%s181 + $0x1af0] sm:$0xff]
        %v1092 = vld [vmem:[%s181 + $0x1af8] sm:$0xff]
        %v1093 = vld [vmem:[%s181 + $0x1b00] sm:$0xff]
        %v1094 = vld [vmem:[%s181 + $0x1b08] sm:$0xff]
        %v1095 = vld [vmem:[%s181 + $0x1b10] sm:$0xff]
        %v1096 = vld [vmem:[%s181 + $0x1b18] sm:$0xff]
        %v1097 = vld [vmem:[%s181 + $0x1b20] sm:$0xff]
        %v1098 = vld [vmem:[%s181 + $0x1b28] sm:$0xff]
        %v1099 = vld [vmem:[%s181 + $0x1b30] sm:$0xff]
        %v1100 = vld [vmem:[%s181 + $0x1b38] sm:$0xff]
        %v1101 = vld [vmem:[%s181 + $0x1b40] sm:$0xff]
        %v1102 = vld [vmem:[%s181 + $0x1b48] sm:$0xff]
        %v1103 = vld [vmem:[%s181 + $0x1b50] sm:$0xff]
        %v1104 = vld [vmem:[%s181 + $0x1b58] sm:$0xff]
        %v1105 = vld [vmem:[%s181 + $0x1b60] sm:$0xff]
        %v1106 = vld [vmem:[%s181 + $0x1b68] sm:$0xff]
        %v1107 = vld [vmem:[%s181 + $0x1b70] sm:$0xff]
        %v1108 = vld [vmem:[%s181 + $0x1b78] sm:$0xff]
        %v1109 = vld [vmem:[%s181 + $0x1b80] sm:$0xff]
        %v1110 = vld [vmem:[%s181 + $0x1b88] sm:$0xff]
        %v1111 = vld [vmem:[%s181 + $0x1b90] sm:$0xff]
        %v1112 = vld [vmem:[%s181 + $0x1b98] sm:$0xff]
        %v1113 = vld [vmem:[%s181 + $0x1ba0] sm:$0xff]
        %v1114 = vld [vmem:[%s181 + $0x1ba8] sm:$0xff]
        %v1115 = vld [vmem:[%s181 + $0x1bb0] sm:$0xff]
        %v1116 = vld [vmem:[%s181 + $0x1bb8] sm:$0xff]
        %v1117 = vld [vmem:[%s181 + $0x1bc0] sm:$0xff]
        %v1118 = vld [vmem:[%s181 + $0x1bc8] sm:$0xff]
        %v1119 = vld [vmem:[%s181 + $0x1bd0] sm:$0xff]
        %v1120 = vld [vmem:[%s181 + $0x1bd8] sm:$0xff]
        %v1121 = vld [vmem:[%s181 + $0x1be0] sm:$0xff]
        %v1122 = vld [vmem:[%s181 + $0x1be8] sm:$0xff]
        %v1123 = vld [vmem:[%s181 + $0x1bf0] sm:$0xff]
        %v1124 = vld [vmem:[%s181 + $0x1bf8] sm:$0xff]
        %v1125 = vld [vmem:[%s181 + $0x1c00] sm:$0xff]
        %v1126 = vld [vmem:[%s181 + $0x1c08] sm:$0xff]
        %v1127 = vld [vmem:[%s181 + $0x1c10] sm:$0xff]
        %v1128 = vld [vmem:[%s181 + $0x1c18] sm:$0xff]
        %v1129 = vld [vmem:[%s181 + $0x1c20] sm:$0xff]
        %v1130 = vld [vmem:[%s181 + $0x1c28] sm:$0xff]
        %v1131 = vld [vmem:[%s181 + $0x1c30] sm:$0xff]
        %v1132 = vld [vmem:[%s181 + $0x1c38] sm:$0xff]
        %v1133 = vld [vmem:[%s181 + $0x1c40] sm:$0xff]
        %v1134 = vld [vmem:[%s181 + $0x1c48] sm:$0xff]
        %v1135 = vld [vmem:[%s181 + $0x1c50] sm:$0xff]
        %v1136 = vld [vmem:[%s181 + $0x1c58] sm:$0xff]
        %v1137 = vld [vmem:[%s181 + $0x1c60] sm:$0xff]
        %v1138 = vld [vmem:[%s181 + $0x1c68] sm:$0xff]
        %v1139 = vld [vmem:[%s181 + $0x1c70] sm:$0xff]
        %v1140 = vld [vmem:[%s181 + $0x1c78] sm:$0xff]
        %v1141 = vld [vmem:[%s181 + $0x1c80] sm:$0xff]
        %v1142 = vld [vmem:[%s181 + $0x1c88] sm:$0xff]
        %v1143 = vld [vmem:[%s181 + $0x1c90] sm:$0xff]
        %v1144 = vld [vmem:[%s181 + $0x1c98] sm:$0xff]
        %v1145 = vld [vmem:[%s181 + $0x1ca0] sm:$0xff]
        %v1146 = vld [vmem:[%s181 + $0x1ca8] sm:$0xff]
        %v1147 = vld [vmem:[%s181 + $0x1cb0] sm:$0xff]
        %v1148 = vld [vmem:[%s181 + $0x1cb8] sm:$0xff]
        %v1149 = vld [vmem:[%s181 + $0x1cc0] sm:$0xff]
        %v1150 = vld [vmem:[%s181 + $0x1cc8] sm:$0xff]
        %v1151 = vld [vmem:[%s181 + $0x1cd0] sm:$0xff]
        %v1152 = vld [vmem:[%s181 + $0x1cd8] sm:$0xff]
        %v1153 = vld [vmem:[%s181 + $0x1ce0] sm:$0xff]
        %v1154 = vld [vmem:[%s181 + $0x1ce8] sm:$0xff]
        %v1155 = vld [vmem:[%s181 + $0x1cf0] sm:$0xff]
        %v1156 = vld [vmem:[%s181 + $0x1cf8] sm:$0xff]
        %v1157 = vld [vmem:[%s181 + $0x1d00] sm:$0xff]
        %v1158 = vld [vmem:[%s181 + $0x1d08] sm:$0xff]
        %v1159 = vld [vmem:[%s181 + $0x1d10] sm:$0xff]
        %v1160 = vld [vmem:[%s181 + $0x1d18] sm:$0xff]
        %v1161 = vld [vmem:[%s181 + $0x1d20] sm:$0xff]
        %v1162 = vld [vmem:[%s181 + $0x1d28] sm:$0xff]
        %v1163 = vld [vmem:[%s181 + $0x1d30] sm:$0xff]
        %v1164 = vld [vmem:[%s181 + $0x1d38] sm:$0xff]
        %v1165 = vld [vmem:[%s181 + $0x1d40] sm:$0xff]
        %v1166 = vld [vmem:[%s181 + $0x1d48] sm:$0xff]
        %v1167 = vld [vmem:[%s181 + $0x1d50] sm:$0xff]
        %v1168 = vld [vmem:[%s181 + $0x1d58] sm:$0xff]
        %v1169 = vld [vmem:[%s181 + $0x1d60] sm:$0xff]
        %v1170 = vld [vmem:[%s181 + $0x1d68] sm:$0xff]
        %v1171 = vld [vmem:[%s181 + $0x1d70] sm:$0xff]
        %v1172 = vld [vmem:[%s181 + $0x1d78] sm:$0xff]
        %v1173 = vld [vmem:[%s181 + $0x1d80] sm:$0xff]
        %v1174 = vld [vmem:[%s181 + $0x1d88] sm:$0xff]
        %v1175 = vld [vmem:[%s181 + $0x1d90] sm:$0xff]
        %v1176 = vld [vmem:[%s181 + $0x1d98] sm:$0xff]
        %v1177 = vld [vmem:[%s181 + $0x1da0] sm:$0xff]
        %v1178 = vld [vmem:[%s181 + $0x1da8] sm:$0xff]
        %v1179 = vld [vmem:[%s181 + $0x1db0] sm:$0xff]
        %v1180 = vld [vmem:[%s181 + $0x1db8] sm:$0xff]
        %v1181 = vld [vmem:[%s181 + $0x1dc0] sm:$0xff]
        %v1182 = vld [vmem:[%s181 + $0x1dc8] sm:$0xff]
        %v1183 = vld [vmem:[%s181 + $0x1dd0] sm:$0xff]
        %v1184 = vld [vmem:[%s181 + $0x1dd8] sm:$0xff]
        %v1185 = vld [vmem:[%s181 + $0x1de0] sm:$0xff]
        %v1186 = vld [vmem:[%s181 + $0x1de8] sm:$0xff]
        %v1187 = vld [vmem:[%s181 + $0x1df0] sm:$0xff]
        %v1188 = vld [vmem:[%s181 + $0x1df8] sm:$0xff]
        %v1189 = vld [vmem:[%s181 + $0x1e00] sm:$0xff]
        %v1190 = vld [vmem:[%s181 + $0x1e08] sm:$0xff]
        %v1191 = vld [vmem:[%s181 + $0x1e10] sm:$0xff]
        %v1192 = vld [vmem:[%s181 + $0x1e18] sm:$0xff]
        %v1193 = vld [vmem:[%s181 + $0x1e20] sm:$0xff]
        %v1194 = vld [vmem:[%s181 + $0x1e28] sm:$0xff]
        %v1195 = vld [vmem:[%s181 + $0x1e30] sm:$0xff]
        %v1196 = vld [vmem:[%s181 + $0x1e38] sm:$0xff]
        %v1197 = vld [vmem:[%s181 + $0x1e40] sm:$0xff]
        %v1198 = vld [vmem:[%s181 + $0x1e48] sm:$0xff]
        %v1199 = vld [vmem:[%s181 + $0x1e50] sm:$0xff]
        %v1200 = vld [vmem:[%s181 + $0x1e58] sm:$0xff]
        %v1201 = vld [vmem:[%s181 + $0x1e60] sm:$0xff]
        %v1202 = vld [vmem:[%s181 + $0x1e68] sm:$0xff]
        %v1203 = vld [vmem:[%s181 + $0x1e70] sm:$0xff]
        %v1204 = vld [vmem:[%s181 + $0x1e78] sm:$0xff]
        %v1205 = vld [vmem:[%s181 + $0x1e80] sm:$0xff]
        %v1206 = vld [vmem:[%s181 + $0x1e88] sm:$0xff]
        %v1207 = vld [vmem:[%s181 + $0x1e90] sm:$0xff]
        %v1208 = vld [vmem:[%s181 + $0x1e98] sm:$0xff]
        %v1209 = vld [vmem:[%s181 + $0x1ea0] sm:$0xff]
        %v1210 = vld [vmem:[%s181 + $0x1ea8] sm:$0xff]
        %v1211 = vld [vmem:[%s181 + $0x1eb0] sm:$0xff]
        %v1212 = vld [vmem:[%s181 + $0x1eb8] sm:$0xff]
        %v1213 = vld [vmem:[%s181 + $0x1ec0] sm:$0xff]
        %v1214 = vld [vmem:[%s181 + $0x1ec8] sm:$0xff]
        %v1215 = vld [vmem:[%s181 + $0x1ed0] sm:$0xff]
        %v1216 = vld [vmem:[%s181 + $0x1ed8] sm:$0xff]
        %v1217 = vld [vmem:[%s181 + $0x1ee0] sm:$0xff]
        %v1218 = vld [vmem:[%s181 + $0x1ee8] sm:$0xff]
        %v1219 = vld [vmem:[%s181 + $0x1ef0] sm:$0xff]
        %v1220 = vld [vmem:[%s181 + $0x1ef8] sm:$0xff]
        %v1221 = vld [vmem:[%s181 + $0x1f00] sm:$0xff]
        %v1222 = vld [vmem:[%s181 + $0x1f08] sm:$0xff]
        %v1223 = vld [vmem:[%s181 + $0x1f10] sm:$0xff]
        %v1224 = vld [vmem:[%s181 + $0x1f18] sm:$0xff]
        %v1225 = vld [vmem:[%s181 + $0x1f20] sm:$0xff]
        %v1226 = vld [vmem:[%s181 + $0x1f28] sm:$0xff]
        %v1227 = vld [vmem:[%s181 + $0x1f30] sm:$0xff]
        %v1228 = vld [vmem:[%s181 + $0x1f38] sm:$0xff]
        %v1229 = vld [vmem:[%s181 + $0x1f40] sm:$0xff]
        %v1230 = vld [vmem:[%s181 + $0x1f48] sm:$0xff]
        %v1231 = vld [vmem:[%s181 + $0x1f50] sm:$0xff]
        %v1232 = vld [vmem:[%s181 + $0x1f58] sm:$0xff]
        %v1233 = vld [vmem:[%s181 + $0x1f60] sm:$0xff]
        %v1234 = vld [vmem:[%s181 + $0x1f68] sm:$0xff]
        %v1235 = vld [vmem:[%s181 + $0x1f70] sm:$0xff]
        %v1236 = vld [vmem:[%s181 + $0x1f78] sm:$0xff]
        %v1237 = vld [vmem:[%s181 + $0x1f80] sm:$0xff]
        %v1238 = vld [vmem:[%s181 + $0x1f88] sm:$0xff]
        %v1239 = vld [vmem:[%s181 + $0x1f90] sm:$0xff]
        %v1240 = vld [vmem:[%s181 + $0x1f98] sm:$0xff]
        %v1241 = vld [vmem:[%s181 + $0x1fa0] sm:$0xff]
        %v1242 = vld [vmem:[%s181 + $0x1fa8] sm:$0xff]
        %v1243 = vld [vmem:[%s181 + $0x1fb0] sm:$0xff]
        %v1244 = vld [vmem:[%s181 + $0x1fb8] sm:$0xff]
        %v1245 = vld [vmem:[%s181 + $0x1fc0] sm:$0xff]
        %v1246 = vld [vmem:[%s181 + $0x1fc8] sm:$0xff]
        %v1247 = vld [vmem:[%s181 + $0x1fd0] sm:$0xff]
        %v1248 = vld [vmem:[%s181 + $0x1fd8] sm:$0xff]
        %v1249 = vld [vmem:[%s181 + $0x1fe0] sm:$0xff]
        %v1250 = vld [vmem:[%s181 + $0x1fe8] sm:$0xff]
        %v1251 = vld [vmem:[%s181 + $0x1ff0] sm:$0xff]
        %v1252 = vld [vmem:[%s181 + $0x1ff8] sm:$0xff]
        %v1253 = vld [vmem:[%s181 + $0x2000] sm:$0xff]
        %v1254 = vld [vmem:[%s181 + $0x2008] sm:$0xff]
        %v1255 = vld [vmem:[%s181 + $0x2010] sm:$0xff]
        %v1256 = vld [vmem:[%s181 + $0x2018] sm:$0xff]
        %v1257 = vld [vmem:[%s181 + $0x2020] sm:$0xff]
        %v1258 = vld [vmem:[%s181 + $0x2028] sm:$0xff]
        %v1259 = vld [vmem:[%s181 + $0x2030] sm:$0xff]
        %v1260 = vld [vmem:[%s181 + $0x2038] sm:$0xff]
        %v1261 = vld [vmem:[%s181 + $0x2040] sm:$0xff]
        %v1262 = vld [vmem:[%s181 + $0x2048] sm:$0xff]
        %v1263 = vld [vmem:[%s181 + $0x2050] sm:$0xff]
        %v1264 = vld [vmem:[%s181 + $0x2058] sm:$0xff]
        %v1265 = vld [vmem:[%s181 + $0x2060] sm:$0xff]
        %v1266 = vld [vmem:[%s181 + $0x2068] sm:$0xff]
        %v1267 = vld [vmem:[%s181 + $0x2070] sm:$0xff]
        %v1268 = vld [vmem:[%s181 + $0x2078] sm:$0xff]
        %v1269 = vld [vmem:[%s181 + $0x2080] sm:$0xff]
        %v1270 = vld [vmem:[%s181 + $0x2088] sm:$0xff]
        %v1271 = vld [vmem:[%s181 + $0x2090] sm:$0xff]
        %v1272 = vld [vmem:[%s181 + $0x2098] sm:$0xff]
        %v1273 = vld [vmem:[%s181 + $0x20a0] sm:$0xff]
        %v1274 = vld [vmem:[%s181 + $0x20a8] sm:$0xff]
        %v1275 = vld [vmem:[%s181 + $0x20b0] sm:$0xff]
        %v1276 = vld [vmem:[%s181 + $0x20b8] sm:$0xff]
        %v1277 = vld [vmem:[%s181 + $0x20c0] sm:$0xff]
        %v1278 = vld [vmem:[%s181 + $0x20c8] sm:$0xff]
        %v1279 = vld [vmem:[%s181 + $0x20d0] sm:$0xff]
        %v1280 = vld [vmem:[%s181 + $0x20d8] sm:$0xff]
        %v1281 = vld [vmem:[%s181 + $0x20e0] sm:$0xff]
        %v1282 = vld [vmem:[%s181 + $0x20e8] sm:$0xff]
        %v1283 = vld [vmem:[%s181 + $0x20f0] sm:$0xff]
        %v1284 = vld [vmem:[%s181 + $0x20f8] sm:$0xff]
        %1291 = vst [vmem:[#allocation1] ss:$4 sm:$0xff] %v223
        %s1292 = scalar_lea.vmem [#allocation1], 32
        %1293 = vst [vmem:[%s1292] ss:$4 sm:$0xff] %v224
        %v1294 = vld.sshfl [vmem:[#allocation1] sm:$0xff pattern:$0x73625140]
        %v1295 = vld.sshfl [vmem:[#allocation1 + $0x8] sm:$0xff pattern:$0x73625140]
        %v1296 = vld.sshfl [vmem:[#allocation1 + $0x10] sm:$0xff pattern:$0x73625140]
        %v1297 = vld.sshfl [vmem:[#allocation1 + $0x18] sm:$0xff pattern:$0x73625140]
        %v1298 = vld.sshfl [vmem:[#allocation1 + $0x20] sm:$0xff pattern:$0x73625140]
        %v1299 = vld.sshfl [vmem:[#allocation1 + $0x28] sm:$0xff pattern:$0x73625140]
        %v1300 = vld.sshfl [vmem:[#allocation1 + $0x30] sm:$0xff pattern:$0x73625140]
        %v1301 = vld.sshfl [vmem:[#allocation1 + $0x38] sm:$0xff pattern:$0x73625140]
        %1302 = vst [vmem:[#allocation1] ss:$4 sm:$0xff] %v225
        %1303 = vst [vmem:[%s1292] ss:$4 sm:$0xff] %v226
        %v1304 = vld.sshfl [vmem:[#allocation1] sm:$0xff pattern:$0x73625140]
        %v1305 = vld.sshfl [vmem:[#allocation1 + $0x8] sm:$0xff pattern:$0x73625140]
        %v1306 = vld.sshfl [vmem:[#allocation1 + $0x10] sm:$0xff pattern:$0x73625140]
        %v1307 = vld.sshfl [vmem:[#allocation1 + $0x18] sm:$0xff pattern:$0x73625140]
        %v1308 = vld.sshfl [vmem:[#allocation1 + $0x20] sm:$0xff pattern:$0x73625140]
        %v1309 = vld.sshfl [vmem:[#allocation1 + $0x28] sm:$0xff pattern:$0x73625140]
        %v1310 = vld.sshfl [vmem:[#allocation1 + $0x30] sm:$0xff pattern:$0x73625140]
        %v1311 = vld.sshfl [vmem:[#allocation1 + $0x38] sm:$0xff pattern:$0x73625140]
        %1312 = vst [vmem:[#allocation1] ss:$4 sm:$0xff] %v227
        %1313 = vst [vmem:[%s1292] ss:$4 sm:$0xff] %v228
        %v1314 = vld.sshfl [vmem:[#allocation1] sm:$0xff pattern:$0x73625140]
        %v1315 = vld.sshfl [vmem:[#allocation1 + $0x8] sm:$0xff pattern:$0x73625140]
        %v1316 = vld.sshfl [vmem:[#allocation1 + $0x10] sm:$0xff pattern:$0x73625140]
        %v1317 = vld.sshfl [vmem:[#allocation1 + $0x18] sm:$0xff pattern:$0x73625140]
        %v1318 = vld.sshfl [vmem:[#allocation1 + $0x20] sm:$0xff pattern:$0x73625140]
        %v1319 = vld.sshfl [vmem:[#allocation1 + $0x28] sm:$0xff pattern:$0x73625140]
        %1342 = vmatpush.msra.mxu0 %v274
        %1343 = vmatpush.msra.mxu0 %v271
        %1344 = vmatpush.msra.mxu0 %v268
        %1345 = vmatpush.msra.mxu0 %v265
        %1346 = vmatpush.msra.mxu0 %v262
        %1347 = vmatpush.msra.mxu0 %v259
        %1348 = vmatpush.msra.mxu0 %v256
        %1349 = vmatpush.msra.mxu0 %v253
        %1350 = vmatpush.msra.mxu0 %v250
        %1351 = vmatpush.msra.mxu0 %v247
        %1352 = vmatpush.msra.mxu0 %v244
        %1353 = vmatpush.msra.mxu0 %v241
        %1354 = vmatpush.msra.mxu0 %v238
        %1355 = vmatpush.msra.mxu0 %v235
        %1356 = vmatpush.msra.mxu0 %v232
        %1357 = vmatpush.msra.mxu0 %v229
        %1358 = vmatmul.f32.gmra.mxu0 %v1294
        %v1359 = vpop.f32.mrf.mxu0
        %v1360 = vadd.f32 0.0, %v1359
        %1361 = vdwg.mxu0
        %1362 = vmatpush.msra.mxu0 %v322
        %1363 = vmatpush.msra.mxu0 %v319
        %1364 = vmatpush.msra.mxu0 %v316
        %1365 = vmatpush.msra.mxu0 %v313
        %1366 = vmatpush.msra.mxu0 %v310
        %1367 = vmatpush.msra.mxu0 %v307
        %1368 = vmatpush.msra.mxu0 %v304
        %1369 = vmatpush.msra.mxu0 %v301
        %1370 = vmatpush.msra.mxu0 %v298
        %1371 = vmatpush.msra.mxu0 %v295
        %1372 = vmatpush.msra.mxu0 %v292
        %1373 = vmatpush.msra.mxu0 %v289
        %1374 = vmatpush.msra.mxu0 %v286
        %1375 = vmatpush.msra.mxu0 %v283
        %1376 = vmatpush.msra.mxu0 %v280
        %1377 = vmatpush.msra.mxu0 %v277
        %1378 = vmatmul.f32.gmra.mxu0 %v1295
        %v1379 = vpop.f32.mrf.mxu0
        %v1380 = vadd.f32 %v1360, %v1379
        %1381 = vdwg.mxu0
        %1382 = vmatpush.msra.mxu0 %v370
        %1383 = vmatpush.msra.mxu0 %v367
        %1384 = vmatpush.msra.mxu0 %v364
        %1385 = vmatpush.msra.mxu0 %v361
        %1386 = vmatpush.msra.mxu0 %v358
        %1387 = vmatpush.msra.mxu0 %v355
        %1388 = vmatpush.msra.mxu0 %v352
        %1389 = vmatpush.msra.mxu0 %v349
        %1390 = vmatpush.msra.mxu0 %v346
        %1391 = vmatpush.msra.mxu0 %v343
        %1392 = vmatpush.msra.mxu0 %v340
        %1393 = vmatpush.msra.mxu0 %v337
        %1394 = vmatpush.msra.mxu0 %v334
        %1395 = vmatpush.msra.mxu0 %v331
        %1396 = vmatpush.msra.mxu0 %v328
        %1397 = vmatpush.msra.mxu0 %v325
        %1398 = vmatmul.f32.gmra.mxu0 %v1296
        %v1399 = vpop.f32.mrf.mxu0
        %v1400 = vadd.f32 %v1380, %v1399
        %1401 = vdwg.mxu0
        %1402 = vmatpush.msra.mxu0 %v418
        %1403 = vmatpush.msra.mxu0 %v415
        %1404 = vmatpush.msra.mxu0 %v412
        %1405 = vmatpush.msra.mxu0 %v409
        %1406 = vmatpush.msra.mxu0 %v406
        %1407 = vmatpush.msra.mxu0 %v403
        %1408 = vmatpush.msra.mxu0 %v400
        %1409 = vmatpush.msra.mxu0 %v397
        %1410 = vmatpush.msra.mxu0 %v394
        %1411 = vmatpush.msra.mxu0 %v391
        %1412 = vmatpush.msra.mxu0 %v388
        %1413 = vmatpush.msra.mxu0 %v385
        %1414 = vmatpush.msra.mxu0 %v382
        %1415 = vmatpush.msra.mxu0 %v379
        %1416 = vmatpush.msra.mxu0 %v376
        %1417 = vmatpush.msra.mxu0 %v373
        %1418 = vmatmul.f32.gmra.mxu0 %v1297
        %v1419 = vpop.f32.mrf.mxu0
        %v1420 = vadd.f32 %v1400, %v1419
        %1421 = vdwg.mxu0
        %1422 = vmatpush.msra.mxu0 %v466
        %1423 = vmatpush.msra.mxu0 %v463
        %1424 = vmatpush.msra.mxu0 %v460
        %1425 = vmatpush.msra.mxu0 %v457
        %1426 = vmatpush.msra.mxu0 %v454
        %1427 = vmatpush.msra.mxu0 %v451
        %1428 = vmatpush.msra.mxu0 %v448
        %1429 = vmatpush.msra.mxu0 %v445
        %1430 = vmatpush.msra.mxu0 %v442
        %1431 = vmatpush.msra.mxu0 %v439
        %1432 = vmatpush.msra.mxu0 %v436
        %1433 = vmatpush.msra.mxu0 %v433
        %1434 = vmatpush.msra.mxu0 %v430
        %1435 = vmatpush.msra.mxu0 %v427
        %1436 = vmatpush.msra.mxu0 %v424
        %1437 = vmatpush.msra.mxu0 %v421
        %1438 = vmatmul.f32.gmra.mxu0 %v1298
        %v1439 = vpop.f32.mrf.mxu0
        %v1440 = vadd.f32 %v1420, %v1439
        %1441 = vdwg.mxu0
        %1442 = vmatpush.msra.mxu0 %v514
        %1443 = vmatpush.msra.mxu0 %v511
        %1444 = vmatpush.msra.mxu0 %v508
        %1445 = vmatpush.msra.mxu0 %v505
        %1446 = vmatpush.msra.mxu0 %v502
        %1447 = vmatpush.msra.mxu0 %v499
        %1448 = vmatpush.msra.mxu0 %v496
        %1449 = vmatpush.msra.mxu0 %v493
        %1450 = vmatpush.msra.mxu0 %v490
        %1451 = vmatpush.msra.mxu0 %v487
        %1452 = vmatpush.msra.mxu0 %v484
        %1453 = vmatpush.msra.mxu0 %v481
        %1454 = vmatpush.msra.mxu0 %v478
        %1455 = vmatpush.msra.mxu0 %v475
        %1456 = vmatpush.msra.mxu0 %v472
        %1457 = vmatpush.msra.mxu0 %v469
        %1458 = vmatmul.f32.gmra.mxu0 %v1299
        %v1459 = vpop.f32.mrf.mxu0
        %v1460 = vadd.f32 %v1440, %v1459
        %1461 = vdwg.mxu0
        %1462 = vmatpush.msra.mxu0 %v562
        %1463 = vmatpush.msra.mxu0 %v559
        %1464 = vmatpush.msra.mxu0 %v556
        %1465 = vmatpush.msra.mxu0 %v553
        %1466 = vmatpush.msra.mxu0 %v550
        %1467 = vmatpush.msra.mxu0 %v547
        %1468 = vmatpush.msra.mxu0 %v544
        %1469 = vmatpush.msra.mxu0 %v541
        %1470 = vmatpush.msra.mxu0 %v538
        %1471 = vmatpush.msra.mxu0 %v535
        %1472 = vmatpush.msra.mxu0 %v532
        %1473 = vmatpush.msra.mxu0 %v529
        %1474 = vmatpush.msra.mxu0 %v526
        %1475 = vmatpush.msra.mxu0 %v523
        %1476 = vmatpush.msra.mxu0 %v520
        %1477 = vmatpush.msra.mxu0 %v517
        %1478 = vmatmul.f32.gmra.mxu0 %v1300
        %v1479 = vpop.f32.mrf.mxu0
        %v1480 = vadd.f32 %v1460, %v1479
        %1481 = vdwg.mxu0
        %1482 = vmatpush.msra.mxu0 %v610
        %1483 = vmatpush.msra.mxu0 %v607
        %1484 = vmatpush.msra.mxu0 %v604
        %1485 = vmatpush.msra.mxu0 %v601
        %1486 = vmatpush.msra.mxu0 %v598
        %1487 = vmatpush.msra.mxu0 %v595
        %1488 = vmatpush.msra.mxu0 %v592
        %1489 = vmatpush.msra.mxu0 %v589
        %1490 = vmatpush.msra.mxu0 %v586
        %1491 = vmatpush.msra.mxu0 %v583
        %1492 = vmatpush.msra.mxu0 %v580
        %1493 = vmatpush.msra.mxu0 %v577
        %1494 = vmatpush.msra.mxu0 %v574
        %1495 = vmatpush.msra.mxu0 %v571
        %1496 = vmatpush.msra.mxu0 %v568
        %1497 = vmatpush.msra.mxu0 %v565
        %1498 = vmatmul.f32.gmra.mxu0 %v1301
        %v1499 = vpop.f32.mrf.mxu0
        %v1500 = vadd.f32 %v1480, %v1499
        %1501 = vdwg.mxu0
        %1502 = vmatpush.msra.mxu0 %v658
        %1503 = vmatpush.msra.mxu0 %v655
        %1504 = vmatpush.msra.mxu0 %v652
        %1505 = vmatpush.msra.mxu0 %v649
        %1506 = vmatpush.msra.mxu0 %v646
        %1507 = vmatpush.msra.mxu0 %v643
        %1508 = vmatpush.msra.mxu0 %v640
        %1509 = vmatpush.msra.mxu0 %v637
        %1510 = vmatpush.msra.mxu0 %v634
        %1511 = vmatpush.msra.mxu0 %v631
        %1512 = vmatpush.msra.mxu0 %v628
        %1513 = vmatpush.msra.mxu0 %v625
        %1514 = vmatpush.msra.mxu0 %v622
        %1515 = vmatpush.msra.mxu0 %v619
        %1516 = vmatpush.msra.mxu0 %v616
        %1517 = vmatpush.msra.mxu0 %v613
        %1518 = vmatmul.f32.gmra.mxu0 %v1304
        %v1519 = vpop.f32.mrf.mxu0
        %v1520 = vadd.f32 %v1500, %v1519
        %1521 = vdwg.mxu0
        %1522 = vmatpush.msra.mxu0 %v706
        %1523 = vmatpush.msra.mxu0 %v703
        %1524 = vmatpush.msra.mxu0 %v700
        %1525 = vmatpush.msra.mxu0 %v697
        %1526 = vmatpush.msra.mxu0 %v694
        %1527 = vmatpush.msra.mxu0 %v691
        %1528 = vmatpush.msra.mxu0 %v688
        %1529 = vmatpush.msra.mxu0 %v685
        %1530 = vmatpush.msra.mxu0 %v682
        %1531 = vmatpush.msra.mxu0 %v679
        %1532 = vmatpush.msra.mxu0 %v676
        %1533 = vmatpush.msra.mxu0 %v673
        %1534 = vmatpush.msra.mxu0 %v670
        %1535 = vmatpush.msra.mxu0 %v667
        %1536 = vmatpush.msra.mxu0 %v664
        %1537 = vmatpush.msra.mxu0 %v661
        %1538 = vmatmul.f32.gmra.mxu0 %v1305
        %v1539 = vpop.f32.mrf.mxu0
        %v1540 = vadd.f32 %v1520, %v1539
        %1541 = vdwg.mxu0
        %1542 = vmatpush.msra.mxu0 %v754
        %1543 = vmatpush.msra.mxu0 %v751
        %1544 = vmatpush.msra.mxu0 %v748
        %1545 = vmatpush.msra.mxu0 %v745
        %1546 = vmatpush.msra.mxu0 %v742
        %1547 = vmatpush.msra.mxu0 %v739
        %1548 = vmatpush.msra.mxu0 %v736
        %1549 = vmatpush.msra.mxu0 %v733
        %1550 = vmatpush.msra.mxu0 %v730
        %1551 = vmatpush.msra.mxu0 %v727
        %1552 = vmatpush.msra.mxu0 %v724
        %1553 = vmatpush.msra.mxu0 %v721
        %1554 = vmatpush.msra.mxu0 %v718
        %1555 = vmatpush.msra.mxu0 %v715
        %1556 = vmatpush.msra.mxu0 %v712
        %1557 = vmatpush.msra.mxu0 %v709
        %1558 = vmatmul.f32.gmra.mxu0 %v1306
        %v1559 = vpop.f32.mrf.mxu0
        %v1560 = vadd.f32 %v1540, %v1559
        %1561 = vdwg.mxu0
        %1562 = vmatpush.msra.mxu0 %v802
        %1563 = vmatpush.msra.mxu0 %v799
        %1564 = vmatpush.msra.mxu0 %v796
        %1565 = vmatpush.msra.mxu0 %v793
        %1566 = vmatpush.msra.mxu0 %v790
        %1567 = vmatpush.msra.mxu0 %v787
        %1568 = vmatpush.msra.mxu0 %v784
        %1569 = vmatpush.msra.mxu0 %v781
        %1570 = vmatpush.msra.mxu0 %v778
        %1571 = vmatpush.msra.mxu0 %v775
        %1572 = vmatpush.msra.mxu0 %v772
        %1573 = vmatpush.msra.mxu0 %v769
        %1574 = vmatpush.msra.mxu0 %v766
        %1575 = vmatpush.msra.mxu0 %v763
        %1576 = vmatpush.msra.mxu0 %v760
        %1577 = vmatpush.msra.mxu0 %v757
        %1578 = vmatmul.f32.gmra.mxu0 %v1307
        %v1579 = vpop.f32.mrf.mxu0
        %v1580 = vadd.f32 %v1560, %v1579
        %1581 = vdwg.mxu0
        %1582 = vmatpush.msra.mxu0 %v850
        %1583 = vmatpush.msra.mxu0 %v847
        %1584 = vmatpush.msra.mxu0 %v844
        %1585 = vmatpush.msra.mxu0 %v841
        %1586 = vmatpush.msra.mxu0 %v838
        %1587 = vmatpush.msra.mxu0 %v835
        %1588 = vmatpush.msra.mxu0 %v832
        %1589 = vmatpush.msra.mxu0 %v829
        %1590 = vmatpush.msra.mxu0 %v826
        %1591 = vmatpush.msra.mxu0 %v823
        %1592 = vmatpush.msra.mxu0 %v820
        %1593 = vmatpush.msra.mxu0 %v817
        %1594 = vmatpush.msra.mxu0 %v814
        %1595 = vmatpush.msra.mxu0 %v811
        %1596 = vmatpush.msra.mxu0 %v808
        %1597 = vmatpush.msra.mxu0 %v805
        %1598 = vmatmul.f32.gmra.mxu0 %v1308
        %v1599 = vpop.f32.mrf.mxu0
        %v1600 = vadd.f32 %v1580, %v1599
        %1601 = vdwg.mxu0
        %1602 = vmatpush.msra.mxu0 %v898
        %1603 = vmatpush.msra.mxu0 %v895
        %1604 = vmatpush.msra.mxu0 %v892
        %1605 = vmatpush.msra.mxu0 %v889
        %1606 = vmatpush.msra.mxu0 %v886
        %1607 = vmatpush.msra.mxu0 %v883
        %1608 = vmatpush.msra.mxu0 %v880
        %1609 = vmatpush.msra.mxu0 %v877
        %1610 = vmatpush.msra.mxu0 %v874
        %1611 = vmatpush.msra.mxu0 %v871
        %1612 = vmatpush.msra.mxu0 %v868
        %1613 = vmatpush.msra.mxu0 %v865
        %1614 = vmatpush.msra.mxu0 %v862
        %1615 = vmatpush.msra.mxu0 %v859
        %1616 = vmatpush.msra.mxu0 %v856
        %1617 = vmatpush.msra.mxu0 %v853
        %1618 = vmatmul.f32.gmra.mxu0 %v1309
        %v1619 = vpop.f32.mrf.mxu0
        %v1620 = vadd.f32 %v1600, %v1619
        %1621 = vdwg.mxu0
        %1622 = vmatpush.msra.mxu0 %v946
        %1623 = vmatpush.msra.mxu0 %v943
        %1624 = vmatpush.msra.mxu0 %v940
        %1625 = vmatpush.msra.mxu0 %v937
        %1626 = vmatpush.msra.mxu0 %v934
        %1627 = vmatpush.msra.mxu0 %v931
        %1628 = vmatpush.msra.mxu0 %v928
        %1629 = vmatpush.msra.mxu0 %v925
        %1630 = vmatpush.msra.mxu0 %v922
        %1631 = vmatpush.msra.mxu0 %v919
        %1632 = vmatpush.msra.mxu0 %v916
        %1633 = vmatpush.msra.mxu0 %v913
        %1634 = vmatpush.msra.mxu0 %v910
        %1635 = vmatpush.msra.mxu0 %v907
        %1636 = vmatpush.msra.mxu0 %v904
        %1637 = vmatpush.msra.mxu0 %v901
        %1638 = vmatmul.f32.gmra.mxu0 %v1310
        %v1639 = vpop.f32.mrf.mxu0
        %v1640 = vadd.f32 %v1620, %v1639
        %1641 = vdwg.mxu0
        %1642 = vmatpush.msra.mxu0 %v994
        %1643 = vmatpush.msra.mxu0 %v991
        %1644 = vmatpush.msra.mxu0 %v988
        %1645 = vmatpush.msra.mxu0 %v985
        %1646 = vmatpush.msra.mxu0 %v982
        %1647 = vmatpush.msra.mxu0 %v979
        %1648 = vmatpush.msra.mxu0 %v976
        %1649 = vmatpush.msra.mxu0 %v973
        %1650 = vmatpush.msra.mxu0 %v970
        %1651 = vmatpush.msra.mxu0 %v967
        %1652 = vmatpush.msra.mxu0 %v964
        %1653 = vmatpush.msra.mxu0 %v961
        %1654 = vmatpush.msra.mxu0 %v958
        %1655 = vmatpush.msra.mxu0 %v955
        %1656 = vmatpush.msra.mxu0 %v952
        %1657 = vmatpush.msra.mxu0 %v949
        %1658 = vmatmul.f32.gmra.mxu0 %v1311
        %v1659 = vpop.f32.mrf.mxu0
        %v1660 = vadd.f32 %v1640, %v1659
        %1661 = vdwg.mxu0
        %1662 = vmatpush.msra.mxu0 %v1042
        %1663 = vmatpush.msra.mxu0 %v1039
        %1664 = vmatpush.msra.mxu0 %v1036
        %1665 = vmatpush.msra.mxu0 %v1033
        %1666 = vmatpush.msra.mxu0 %v1030
        %1667 = vmatpush.msra.mxu0 %v1027
        %1668 = vmatpush.msra.mxu0 %v1024
        %1669 = vmatpush.msra.mxu0 %v1021
        %1670 = vmatpush.msra.mxu0 %v1018
        %1671 = vmatpush.msra.mxu0 %v1015
        %1672 = vmatpush.msra.mxu0 %v1012
        %1673 = vmatpush.msra.mxu0 %v1009
        %1674 = vmatpush.msra.mxu0 %v1006
        %1675 = vmatpush.msra.mxu0 %v1003
        %1676 = vmatpush.msra.mxu0 %v1000
        %1677 = vmatpush.msra.mxu0 %v997
        %1678 = vmatmul.f32.gmra.mxu0 %v1314
        %v1679 = vpop.f32.mrf.mxu0
        %v1680 = vadd.f32 %v1660, %v1679
        %1681 = vdwg.mxu0
        %1682 = vmatpush.msra.mxu0 %v1090
        %1683 = vmatpush.msra.mxu0 %v1087
        %1684 = vmatpush.msra.mxu0 %v1084
        %1685 = vmatpush.msra.mxu0 %v1081
        %1686 = vmatpush.msra.mxu0 %v1078
        %1687 = vmatpush.msra.mxu0 %v1075
        %1688 = vmatpush.msra.mxu0 %v1072
        %1689 = vmatpush.msra.mxu0 %v1069
        %1690 = vmatpush.msra.mxu0 %v1066
        %1691 = vmatpush.msra.mxu0 %v1063
        %1692 = vmatpush.msra.mxu0 %v1060
        %1693 = vmatpush.msra.mxu0 %v1057
        %1694 = vmatpush.msra.mxu0 %v1054
        %1695 = vmatpush.msra.mxu0 %v1051
        %1696 = vmatpush.msra.mxu0 %v1048
        %1697 = vmatpush.msra.mxu0 %v1045
        %1698 = vmatmul.f32.gmra.mxu0 %v1315
        %v1699 = vpop.f32.mrf.mxu0
        %v1700 = vadd.f32 %v1680, %v1699
        %1701 = vdwg.mxu0
        %1702 = vmatpush.msra.mxu0 %v1138
        %1703 = vmatpush.msra.mxu0 %v1135
        %1704 = vmatpush.msra.mxu0 %v1132
        %1705 = vmatpush.msra.mxu0 %v1129
        %1706 = vmatpush.msra.mxu0 %v1126
        %1707 = vmatpush.msra.mxu0 %v1123
        %1708 = vmatpush.msra.mxu0 %v1120
        %1709 = vmatpush.msra.mxu0 %v1117
        %1710 = vmatpush.msra.mxu0 %v1114
        %1711 = vmatpush.msra.mxu0 %v1111
        %1712 = vmatpush.msra.mxu0 %v1108
        %1713 = vmatpush.msra.mxu0 %v1105
        %1714 = vmatpush.msra.mxu0 %v1102
        %1715 = vmatpush.msra.mxu0 %v1099
        %1716 = vmatpush.msra.mxu0 %v1096
        %1717 = vmatpush.msra.mxu0 %v1093
        %1718 = vmatmul.f32.gmra.mxu0 %v1316
        %v1719 = vpop.f32.mrf.mxu0
        %v1720 = vadd.f32 %v1700, %v1719
        %1721 = vdwg.mxu0
        %1722 = vmatpush.msra.mxu0 %v1186
        %1723 = vmatpush.msra.mxu0 %v1183
        %1724 = vmatpush.msra.mxu0 %v1180
        %1725 = vmatpush.msra.mxu0 %v1177
        %1726 = vmatpush.msra.mxu0 %v1174
        %1727 = vmatpush.msra.mxu0 %v1171
        %1728 = vmatpush.msra.mxu0 %v1168
        %1729 = vmatpush.msra.mxu0 %v1165
        %1730 = vmatpush.msra.mxu0 %v1162
        %1731 = vmatpush.msra.mxu0 %v1159
        %1732 = vmatpush.msra.mxu0 %v1156
        %1733 = vmatpush.msra.mxu0 %v1153
        %1734 = vmatpush.msra.mxu0 %v1150
        %1735 = vmatpush.msra.mxu0 %v1147
        %1736 = vmatpush.msra.mxu0 %v1144
        %1737 = vmatpush.msra.mxu0 %v1141
        %1738 = vmatmul.f32.gmra.mxu0 %v1317
        %v1739 = vpop.f32.mrf.mxu0
        %v1740 = vadd.f32 %v1720, %v1739
        %1741 = vdwg.mxu0
        %1742 = vmatpush.msra.mxu0 %v1234
        %1743 = vmatpush.msra.mxu0 %v1231
        %1744 = vmatpush.msra.mxu0 %v1228
        %1745 = vmatpush.msra.mxu0 %v1225
        %1746 = vmatpush.msra.mxu0 %v1222
        %1747 = vmatpush.msra.mxu0 %v1219
        %1748 = vmatpush.msra.mxu0 %v1216
        %1749 = vmatpush.msra.mxu0 %v1213
        %1750 = vmatpush.msra.mxu0 %v1210
        %1751 = vmatpush.msra.mxu0 %v1207
        %1752 = vmatpush.msra.mxu0 %v1204
        %1753 = vmatpush.msra.mxu0 %v1201
        %1754 = vmatpush.msra.mxu0 %v1198
        %1755 = vmatpush.msra.mxu0 %v1195
        %1756 = vmatpush.msra.mxu0 %v1192
        %1757 = vmatpush.msra.mxu0 %v1189
        %1758 = vmatmul.f32.gmra.mxu0 %v1318
        %v1759 = vpop.f32.mrf.mxu0
        %v1760 = vadd.f32 %v1740, %v1759
        %1761 = vdwg.mxu0
        %1762 = vmatpush.msra.mxu0 %v1282
        %1763 = vmatpush.msra.mxu0 %v1279
        %1764 = vmatpush.msra.mxu0 %v1276
        %1765 = vmatpush.msra.mxu0 %v1273
        %1766 = vmatpush.msra.mxu0 %v1270
        %1767 = vmatpush.msra.mxu0 %v1267
        %1768 = vmatpush.msra.mxu0 %v1264
        %1769 = vmatpush.msra.mxu0 %v1261
        %1770 = vmatpush.msra.mxu0 %v1258
        %1771 = vmatpush.msra.mxu0 %v1255
        %1772 = vmatpush.msra.mxu0 %v1252
        %1773 = vmatpush.msra.mxu0 %v1249
        %1774 = vmatpush.msra.mxu0 %v1246
        %1775 = vmatpush.msra.mxu0 %v1243
        %1776 = vmatpush.msra.mxu0 %v1240
        %1777 = vmatpush.msra.mxu0 %v1237
        %1778 = vmatmul.f32.gmra.mxu0 %v1319
        %v1779 = vpop.f32.mrf.mxu0
        %v1780 = vadd.f32 %v1760, %v1779
        %1781 = vdwg.mxu0
        %1782 = vmatpush.msra.mxu0 %v275
        %1783 = vmatpush.msra.mxu0 %v272
        %1784 = vmatpush.msra.mxu0 %v269
        %1785 = vmatpush.msra.mxu0 %v266
        %1786 = vmatpush.msra.mxu0 %v263
        %1787 = vmatpush.msra.mxu0 %v260
        %1788 = vmatpush.msra.mxu0 %v257
        %1789 = vmatpush.msra.mxu0 %v254
        %1790 = vmatpush.msra.mxu0 %v251
        %1791 = vmatpush.msra.mxu0 %v248
        %1792 = vmatpush.msra.mxu0 %v245
        %1793 = vmatpush.msra.mxu0 %v242
        %1794 = vmatpush.msra.mxu0 %v239
        %1795 = vmatpush.msra.mxu0 %v236
        %1796 = vmatpush.msra.mxu0 %v233
        %1797 = vmatpush.msra.mxu0 %v230
        %1798 = vmatmul.f32.gmra.mxu0 %v1294
        %v1799 = vpop.f32.mrf.mxu0
        %v1800 = vadd.f32 0.0, %v1799
        %1801 = vdwg.mxu0
        %1802 = vmatpush.msra.mxu0 %v323
        %1803 = vmatpush.msra.mxu0 %v320
        %1804 = vmatpush.msra.mxu0 %v317
        %1805 = vmatpush.msra.mxu0 %v314
        %1806 = vmatpush.msra.mxu0 %v311
        %1807 = vmatpush.msra.mxu0 %v308
        %1808 = vmatpush.msra.mxu0 %v305
        %1809 = vmatpush.msra.mxu0 %v302
        %1810 = vmatpush.msra.mxu0 %v299
        %1811 = vmatpush.msra.mxu0 %v296
        %1812 = vmatpush.msra.mxu0 %v293
        %1813 = vmatpush.msra.mxu0 %v290
        %1814 = vmatpush.msra.mxu0 %v287
        %1815 = vmatpush.msra.mxu0 %v284
        %1816 = vmatpush.msra.mxu0 %v281
        %1817 = vmatpush.msra.mxu0 %v278
        %1818 = vmatmul.f32.gmra.mxu0 %v1295
        %v1819 = vpop.f32.mrf.mxu0
        %v1820 = vadd.f32 %v1800, %v1819
        %1821 = vdwg.mxu0
        %1822 = vmatpush.msra.mxu0 %v371
        %1823 = vmatpush.msra.mxu0 %v368
        %1824 = vmatpush.msra.mxu0 %v365
        %1825 = vmatpush.msra.mxu0 %v362
        %1826 = vmatpush.msra.mxu0 %v359
        %1827 = vmatpush.msra.mxu0 %v356
        %1828 = vmatpush.msra.mxu0 %v353
        %1829 = vmatpush.msra.mxu0 %v350
        %1830 = vmatpush.msra.mxu0 %v347
        %1831 = vmatpush.msra.mxu0 %v344
        %1832 = vmatpush.msra.mxu0 %v341
        %1833 = vmatpush.msra.mxu0 %v338
        %1834 = vmatpush.msra.mxu0 %v335
        %1835 = vmatpush.msra.mxu0 %v332
        %1836 = vmatpush.msra.mxu0 %v329
        %1837 = vmatpush.msra.mxu0 %v326
        %1838 = vmatmul.f32.gmra.mxu0 %v1296
        %v1839 = vpop.f32.mrf.mxu0
        %v1840 = vadd.f32 %v1820, %v1839
        %1841 = vdwg.mxu0
        %1842 = vmatpush.msra.mxu0 %v419
        %1843 = vmatpush.msra.mxu0 %v416
        %1844 = vmatpush.msra.mxu0 %v413
        %1845 = vmatpush.msra.mxu0 %v410
        %1846 = vmatpush.msra.mxu0 %v407
        %1847 = vmatpush.msra.mxu0 %v404
        %1848 = vmatpush.msra.mxu0 %v401
        %1849 = vmatpush.msra.mxu0 %v398
        %1850 = vmatpush.msra.mxu0 %v395
        %1851 = vmatpush.msra.mxu0 %v392
        %1852 = vmatpush.msra.mxu0 %v389
        %1853 = vmatpush.msra.mxu0 %v386
        %1854 = vmatpush.msra.mxu0 %v383
        %1855 = vmatpush.msra.mxu0 %v380
        %1856 = vmatpush.msra.mxu0 %v377
        %1857 = vmatpush.msra.mxu0 %v374
        %1858 = vmatmul.f32.gmra.mxu0 %v1297
        %v1859 = vpop.f32.mrf.mxu0
        %v1860 = vadd.f32 %v1840, %v1859
        %1861 = vdwg.mxu0
        %1862 = vmatpush.msra.mxu0 %v467
        %1863 = vmatpush.msra.mxu0 %v464
        %1864 = vmatpush.msra.mxu0 %v461
        %1865 = vmatpush.msra.mxu0 %v458
        %1866 = vmatpush.msra.mxu0 %v455
        %1867 = vmatpush.msra.mxu0 %v452
        %1868 = vmatpush.msra.mxu0 %v449
        %1869 = vmatpush.msra.mxu0 %v446
        %1870 = vmatpush.msra.mxu0 %v443
        %1871 = vmatpush.msra.mxu0 %v440
        %1872 = vmatpush.msra.mxu0 %v437
        %1873 = vmatpush.msra.mxu0 %v434
        %1874 = vmatpush.msra.mxu0 %v431
        %1875 = vmatpush.msra.mxu0 %v428
        %1876 = vmatpush.msra.mxu0 %v425
        %1877 = vmatpush.msra.mxu0 %v422
        %1878 = vmatmul.f32.gmra.mxu0 %v1298
        %v1879 = vpop.f32.mrf.mxu0
        %v1880 = vadd.f32 %v1860, %v1879
        %1881 = vdwg.mxu0
        %1882 = vmatpush.msra.mxu0 %v515
        %1883 = vmatpush.msra.mxu0 %v512
        %1884 = vmatpush.msra.mxu0 %v509
        %1885 = vmatpush.msra.mxu0 %v506
        %1886 = vmatpush.msra.mxu0 %v503
        %1887 = vmatpush.msra.mxu0 %v500
        %1888 = vmatpush.msra.mxu0 %v497
        %1889 = vmatpush.msra.mxu0 %v494
        %1890 = vmatpush.msra.mxu0 %v491
        %1891 = vmatpush.msra.mxu0 %v488
        %1892 = vmatpush.msra.mxu0 %v485
        %1893 = vmatpush.msra.mxu0 %v482
        %1894 = vmatpush.msra.mxu0 %v479
        %1895 = vmatpush.msra.mxu0 %v476
        %1896 = vmatpush.msra.mxu0 %v473
        %1897 = vmatpush.msra.mxu0 %v470
        %1898 = vmatmul.f32.gmra.mxu0 %v1299
        %v1899 = vpop.f32.mrf.mxu0
        %v1900 = vadd.f32 %v1880, %v1899
        %1901 = vdwg.mxu0
        %1902 = vmatpush.msra.mxu0 %v563
        %1903 = vmatpush.msra.mxu0 %v560
        %1904 = vmatpush.msra.mxu0 %v557
        %1905 = vmatpush.msra.mxu0 %v554
        %1906 = vmatpush.msra.mxu0 %v551
        %1907 = vmatpush.msra.mxu0 %v548
        %1908 = vmatpush.msra.mxu0 %v545
        %1909 = vmatpush.msra.mxu0 %v542
        %1910 = vmatpush.msra.mxu0 %v539
        %1911 = vmatpush.msra.mxu0 %v536
        %1912 = vmatpush.msra.mxu0 %v533
        %1913 = vmatpush.msra.mxu0 %v530
        %1914 = vmatpush.msra.mxu0 %v527
        %1915 = vmatpush.msra.mxu0 %v524
        %1916 = vmatpush.msra.mxu0 %v521
        %1917 = vmatpush.msra.mxu0 %v518
        %1918 = vmatmul.f32.gmra.mxu0 %v1300
        %v1919 = vpop.f32.mrf.mxu0
        %v1920 = vadd.f32 %v1900, %v1919
        %1921 = vdwg.mxu0
        %1922 = vmatpush.msra.mxu0 %v611
        %1923 = vmatpush.msra.mxu0 %v608
        %1924 = vmatpush.msra.mxu0 %v605
        %1925 = vmatpush.msra.mxu0 %v602
        %1926 = vmatpush.msra.mxu0 %v599
        %1927 = vmatpush.msra.mxu0 %v596
        %1928 = vmatpush.msra.mxu0 %v593
        %1929 = vmatpush.msra.mxu0 %v590
        %1930 = vmatpush.msra.mxu0 %v587
        %1931 = vmatpush.msra.mxu0 %v584
        %1932 = vmatpush.msra.mxu0 %v581
        %1933 = vmatpush.msra.mxu0 %v578
        %1934 = vmatpush.msra.mxu0 %v575
        %1935 = vmatpush.msra.mxu0 %v572
        %1936 = vmatpush.msra.mxu0 %v569
        %1937 = vmatpush.msra.mxu0 %v566
        %1938 = vmatmul.f32.gmra.mxu0 %v1301
        %v1939 = vpop.f32.mrf.mxu0
        %v1940 = vadd.f32 %v1920, %v1939
        %1941 = vdwg.mxu0
        %1942 = vmatpush.msra.mxu0 %v659
        %1943 = vmatpush.msra.mxu0 %v656
        %1944 = vmatpush.msra.mxu0 %v653
        %1945 = vmatpush.msra.mxu0 %v650
        %1946 = vmatpush.msra.mxu0 %v647
        %1947 = vmatpush.msra.mxu0 %v644
        %1948 = vmatpush.msra.mxu0 %v641
        %1949 = vmatpush.msra.mxu0 %v638
        %1950 = vmatpush.msra.mxu0 %v635
        %1951 = vmatpush.msra.mxu0 %v632
        %1952 = vmatpush.msra.mxu0 %v629
        %1953 = vmatpush.msra.mxu0 %v626
        %1954 = vmatpush.msra.mxu0 %v623
        %1955 = vmatpush.msra.mxu0 %v620
        %1956 = vmatpush.msra.mxu0 %v617
        %1957 = vmatpush.msra.mxu0 %v614
        %1958 = vmatmul.f32.gmra.mxu0 %v1304
        %v1959 = vpop.f32.mrf.mxu0
        %v1960 = vadd.f32 %v1940, %v1959
        %1961 = vdwg.mxu0
        %1962 = vmatpush.msra.mxu0 %v707
        %1963 = vmatpush.msra.mxu0 %v704
        %1964 = vmatpush.msra.mxu0 %v701
        %1965 = vmatpush.msra.mxu0 %v698
        %1966 = vmatpush.msra.mxu0 %v695
        %1967 = vmatpush.msra.mxu0 %v692
        %1968 = vmatpush.msra.mxu0 %v689
        %1969 = vmatpush.msra.mxu0 %v686
        %1970 = vmatpush.msra.mxu0 %v683
        %1971 = vmatpush.msra.mxu0 %v680
        %1972 = vmatpush.msra.mxu0 %v677
        %1973 = vmatpush.msra.mxu0 %v674
        %1974 = vmatpush.msra.mxu0 %v671
        %1975 = vmatpush.msra.mxu0 %v668
        %1976 = vmatpush.msra.mxu0 %v665
        %1977 = vmatpush.msra.mxu0 %v662
        %1978 = vmatmul.f32.gmra.mxu0 %v1305
        %v1979 = vpop.f32.mrf.mxu0
        %v1980 = vadd.f32 %v1960, %v1979
        %1981 = vdwg.mxu0
        %1982 = vmatpush.msra.mxu0 %v755
        %1983 = vmatpush.msra.mxu0 %v752
        %1984 = vmatpush.msra.mxu0 %v749
        %1985 = vmatpush.msra.mxu0 %v746
        %1986 = vmatpush.msra.mxu0 %v743
        %1987 = vmatpush.msra.mxu0 %v740
        %1988 = vmatpush.msra.mxu0 %v737
        %1989 = vmatpush.msra.mxu0 %v734
        %1990 = vmatpush.msra.mxu0 %v731
        %1991 = vmatpush.msra.mxu0 %v728
        %1992 = vmatpush.msra.mxu0 %v725
        %1993 = vmatpush.msra.mxu0 %v722
        %1994 = vmatpush.msra.mxu0 %v719
        %1995 = vmatpush.msra.mxu0 %v716
        %1996 = vmatpush.msra.mxu0 %v713
        %1997 = vmatpush.msra.mxu0 %v710
        %1998 = vmatmul.f32.gmra.mxu0 %v1306
        %v1999 = vpop.f32.mrf.mxu0
        %v2000 = vadd.f32 %v1980, %v1999
        %2001 = vdwg.mxu0
        %2002 = vmatpush.msra.mxu0 %v803
        %2003 = vmatpush.msra.mxu0 %v800
        %2004 = vmatpush.msra.mxu0 %v797
        %2005 = vmatpush.msra.mxu0 %v794
        %2006 = vmatpush.msra.mxu0 %v791
        %2007 = vmatpush.msra.mxu0 %v788
        %2008 = vmatpush.msra.mxu0 %v785
        %2009 = vmatpush.msra.mxu0 %v782
        %2010 = vmatpush.msra.mxu0 %v779
        %2011 = vmatpush.msra.mxu0 %v776
        %2012 = vmatpush.msra.mxu0 %v773
        %2013 = vmatpush.msra.mxu0 %v770
        %2014 = vmatpush.msra.mxu0 %v767
        %2015 = vmatpush.msra.mxu0 %v764
        %2016 = vmatpush.msra.mxu0 %v761
        %2017 = vmatpush.msra.mxu0 %v758
        %2018 = vmatmul.f32.gmra.mxu0 %v1307
        %v2019 = vpop.f32.mrf.mxu0
        %v2020 = vadd.f32 %v2000, %v2019
        %2021 = vdwg.mxu0
        %2022 = vmatpush.msra.mxu0 %v851
        %2023 = vmatpush.msra.mxu0 %v848
        %2024 = vmatpush.msra.mxu0 %v845
        %2025 = vmatpush.msra.mxu0 %v842
        %2026 = vmatpush.msra.mxu0 %v839
        %2027 = vmatpush.msra.mxu0 %v836
        %2028 = vmatpush.msra.mxu0 %v833
        %2029 = vmatpush.msra.mxu0 %v830
        %2030 = vmatpush.msra.mxu0 %v827
        %2031 = vmatpush.msra.mxu0 %v824
        %2032 = vmatpush.msra.mxu0 %v821
        %2033 = vmatpush.msra.mxu0 %v818
        %2034 = vmatpush.msra.mxu0 %v815
        %2035 = vmatpush.msra.mxu0 %v812
        %2036 = vmatpush.msra.mxu0 %v809
        %2037 = vmatpush.msra.mxu0 %v806
        %2038 = vmatmul.f32.gmra.mxu0 %v1308
        %v2039 = vpop.f32.mrf.mxu0
        %v2040 = vadd.f32 %v2020, %v2039
        %2041 = vdwg.mxu0
        %2042 = vmatpush.msra.mxu0 %v899
        %2043 = vmatpush.msra.mxu0 %v896
        %2044 = vmatpush.msra.mxu0 %v893
        %2045 = vmatpush.msra.mxu0 %v890
        %2046 = vmatpush.msra.mxu0 %v887
        %2047 = vmatpush.msra.mxu0 %v884
        %2048 = vmatpush.msra.mxu0 %v881
        %2049 = vmatpush.msra.mxu0 %v878
        %2050 = vmatpush.msra.mxu0 %v875
        %2051 = vmatpush.msra.mxu0 %v872
        %2052 = vmatpush.msra.mxu0 %v869
        %2053 = vmatpush.msra.mxu0 %v866
        %2054 = vmatpush.msra.mxu0 %v863
        %2055 = vmatpush.msra.mxu0 %v860
        %2056 = vmatpush.msra.mxu0 %v857
        %2057 = vmatpush.msra.mxu0 %v854
        %2058 = vmatmul.f32.gmra.mxu0 %v1309
        %v2059 = vpop.f32.mrf.mxu0
        %v2060 = vadd.f32 %v2040, %v2059
        %2061 = vdwg.mxu0
        %2062 = vmatpush.msra.mxu0 %v947
        %2063 = vmatpush.msra.mxu0 %v944
        %2064 = vmatpush.msra.mxu0 %v941
        %2065 = vmatpush.msra.mxu0 %v938
        %2066 = vmatpush.msra.mxu0 %v935
        %2067 = vmatpush.msra.mxu0 %v932
        %2068 = vmatpush.msra.mxu0 %v929
        %2069 = vmatpush.msra.mxu0 %v926
        %2070 = vmatpush.msra.mxu0 %v923
        %2071 = vmatpush.msra.mxu0 %v920
        %2072 = vmatpush.msra.mxu0 %v917
        %2073 = vmatpush.msra.mxu0 %v914
        %2074 = vmatpush.msra.mxu0 %v911
        %2075 = vmatpush.msra.mxu0 %v908
        %2076 = vmatpush.msra.mxu0 %v905
        %2077 = vmatpush.msra.mxu0 %v902
        %2078 = vmatmul.f32.gmra.mxu0 %v1310
        %v2079 = vpop.f32.mrf.mxu0
        %v2080 = vadd.f32 %v2060, %v2079
        %2081 = vdwg.mxu0
        %2082 = vmatpush.msra.mxu0 %v995
        %2083 = vmatpush.msra.mxu0 %v992
        %2084 = vmatpush.msra.mxu0 %v989
        %2085 = vmatpush.msra.mxu0 %v986
        %2086 = vmatpush.msra.mxu0 %v983
        %2087 = vmatpush.msra.mxu0 %v980
        %2088 = vmatpush.msra.mxu0 %v977
        %2089 = vmatpush.msra.mxu0 %v974
        %2090 = vmatpush.msra.mxu0 %v971
        %2091 = vmatpush.msra.mxu0 %v968
        %2092 = vmatpush.msra.mxu0 %v965
        %2093 = vmatpush.msra.mxu0 %v962
        %2094 = vmatpush.msra.mxu0 %v959
        %2095 = vmatpush.msra.mxu0 %v956
        %2096 = vmatpush.msra.mxu0 %v953
        %2097 = vmatpush.msra.mxu0 %v950
        %2098 = vmatmul.f32.gmra.mxu0 %v1311
        %v2099 = vpop.f32.mrf.mxu0
        %v2100 = vadd.f32 %v2080, %v2099
        %2101 = vdwg.mxu0
        %2102 = vmatpush.msra.mxu0 %v1043
        %2103 = vmatpush.msra.mxu0 %v1040
        %2104 = vmatpush.msra.mxu0 %v1037
        %2105 = vmatpush.msra.mxu0 %v1034
        %2106 = vmatpush.msra.mxu0 %v1031
        %2107 = vmatpush.msra.mxu0 %v1028
        %2108 = vmatpush.msra.mxu0 %v1025
        %2109 = vmatpush.msra.mxu0 %v1022
        %2110 = vmatpush.msra.mxu0 %v1019
        %2111 = vmatpush.msra.mxu0 %v1016
        %2112 = vmatpush.msra.mxu0 %v1013
        %2113 = vmatpush.msra.mxu0 %v1010
        %2114 = vmatpush.msra.mxu0 %v1007
        %2115 = vmatpush.msra.mxu0 %v1004
        %2116 = vmatpush.msra.mxu0 %v1001
        %2117 = vmatpush.msra.mxu0 %v998
        %2118 = vmatmul.f32.gmra.mxu0 %v1314
        %v2119 = vpop.f32.mrf.mxu0
        %v2120 = vadd.f32 %v2100, %v2119
        %2121 = vdwg.mxu0
        %2122 = vmatpush.msra.mxu0 %v1091
        %2123 = vmatpush.msra.mxu0 %v1088
        %2124 = vmatpush.msra.mxu0 %v1085
        %2125 = vmatpush.msra.mxu0 %v1082
        %2126 = vmatpush.msra.mxu0 %v1079
        %2127 = vmatpush.msra.mxu0 %v1076
        %2128 = vmatpush.msra.mxu0 %v1073
        %2129 = vmatpush.msra.mxu0 %v1070
        %2130 = vmatpush.msra.mxu0 %v1067
        %2131 = vmatpush.msra.mxu0 %v1064
        %2132 = vmatpush.msra.mxu0 %v1061
        %2133 = vmatpush.msra.mxu0 %v1058
        %2134 = vmatpush.msra.mxu0 %v1055
        %2135 = vmatpush.msra.mxu0 %v1052
        %2136 = vmatpush.msra.mxu0 %v1049
        %2137 = vmatpush.msra.mxu0 %v1046
        %2138 = vmatmul.f32.gmra.mxu0 %v1315
        %v2139 = vpop.f32.mrf.mxu0
        %v2140 = vadd.f32 %v2120, %v2139
        %2141 = vdwg.mxu0
        %2142 = vmatpush.msra.mxu0 %v1139
        %2143 = vmatpush.msra.mxu0 %v1136
        %2144 = vmatpush.msra.mxu0 %v1133
        %2145 = vmatpush.msra.mxu0 %v1130
        %2146 = vmatpush.msra.mxu0 %v1127
        %2147 = vmatpush.msra.mxu0 %v1124
        %2148 = vmatpush.msra.mxu0 %v1121
        %2149 = vmatpush.msra.mxu0 %v1118
        %2150 = vmatpush.msra.mxu0 %v1115
        %2151 = vmatpush.msra.mxu0 %v1112
        %2152 = vmatpush.msra.mxu0 %v1109
        %2153 = vmatpush.msra.mxu0 %v1106
        %2154 = vmatpush.msra.mxu0 %v1103
        %2155 = vmatpush.msra.mxu0 %v1100
        %2156 = vmatpush.msra.mxu0 %v1097
        %2157 = vmatpush.msra.mxu0 %v1094
        %2158 = vmatmul.f32.gmra.mxu0 %v1316
        %v2159 = vpop.f32.mrf.mxu0
        %v2160 = vadd.f32 %v2140, %v2159
        %2161 = vdwg.mxu0
        %2162 = vmatpush.msra.mxu0 %v1187
        %2163 = vmatpush.msra.mxu0 %v1184
        %2164 = vmatpush.msra.mxu0 %v1181
        %2165 = vmatpush.msra.mxu0 %v1178
        %2166 = vmatpush.msra.mxu0 %v1175
        %2167 = vmatpush.msra.mxu0 %v1172
        %2168 = vmatpush.msra.mxu0 %v1169
        %2169 = vmatpush.msra.mxu0 %v1166
        %2170 = vmatpush.msra.mxu0 %v1163
        %2171 = vmatpush.msra.mxu0 %v1160
        %2172 = vmatpush.msra.mxu0 %v1157
        %2173 = vmatpush.msra.mxu0 %v1154
        %2174 = vmatpush.msra.mxu0 %v1151
        %2175 = vmatpush.msra.mxu0 %v1148
        %2176 = vmatpush.msra.mxu0 %v1145
        %2177 = vmatpush.msra.mxu0 %v1142
        %2178 = vmatmul.f32.gmra.mxu0 %v1317
        %v2179 = vpop.f32.mrf.mxu0
        %v2180 = vadd.f32 %v2160, %v2179
        %2181 = vdwg.mxu0
        %2182 = vmatpush.msra.mxu0 %v1235
        %2183 = vmatpush.msra.mxu0 %v1232
        %2184 = vmatpush.msra.mxu0 %v1229
        %2185 = vmatpush.msra.mxu0 %v1226
        %2186 = vmatpush.msra.mxu0 %v1223
        %2187 = vmatpush.msra.mxu0 %v1220
        %2188 = vmatpush.msra.mxu0 %v1217
        %2189 = vmatpush.msra.mxu0 %v1214
        %2190 = vmatpush.msra.mxu0 %v1211
        %2191 = vmatpush.msra.mxu0 %v1208
        %2192 = vmatpush.msra.mxu0 %v1205
        %2193 = vmatpush.msra.mxu0 %v1202
        %2194 = vmatpush.msra.mxu0 %v1199
        %2195 = vmatpush.msra.mxu0 %v1196
        %2196 = vmatpush.msra.mxu0 %v1193
        %2197 = vmatpush.msra.mxu0 %v1190
        %2198 = vmatmul.f32.gmra.mxu0 %v1318
        %v2199 = vpop.f32.mrf.mxu0
        %v2200 = vadd.f32 %v2180, %v2199
        %2201 = vdwg.mxu0
        %2202 = vmatpush.msra.mxu0 %v1283
        %2203 = vmatpush.msra.mxu0 %v1280
        %2204 = vmatpush.msra.mxu0 %v1277
        %2205 = vmatpush.msra.mxu0 %v1274
        %2206 = vmatpush.msra.mxu0 %v1271
        %2207 = vmatpush.msra.mxu0 %v1268
        %2208 = vmatpush.msra.mxu0 %v1265
        %2209 = vmatpush.msra.mxu0 %v1262
        %2210 = vmatpush.msra.mxu0 %v1259
        %2211 = vmatpush.msra.mxu0 %v1256
        %2212 = vmatpush.msra.mxu0 %v1253
        %2213 = vmatpush.msra.mxu0 %v1250
        %2214 = vmatpush.msra.mxu0 %v1247
        %2215 = vmatpush.msra.mxu0 %v1244
        %2216 = vmatpush.msra.mxu0 %v1241
        %2217 = vmatpush.msra.mxu0 %v1238
        %2218 = vmatmul.f32.gmra.mxu0 %v1319
        %v2219 = vpop.f32.mrf.mxu0
        %v2220 = vadd.f32 %v2200, %v2219
        %2221 = vdwg.mxu0
        %2222 = vmatpush.msra.mxu0 %v276
        %2223 = vmatpush.msra.mxu0 %v273
        %2224 = vmatpush.msra.mxu0 %v270
        %2225 = vmatpush.msra.mxu0 %v267
        %2226 = vmatpush.msra.mxu0 %v264
        %2227 = vmatpush.msra.mxu0 %v261
        %2228 = vmatpush.msra.mxu0 %v258
        %2229 = vmatpush.msra.mxu0 %v255
        %2230 = vmatpush.msra.mxu0 %v252
        %2231 = vmatpush.msra.mxu0 %v249
        %2232 = vmatpush.msra.mxu0 %v246
        %2233 = vmatpush.msra.mxu0 %v243
        %2234 = vmatpush.msra.mxu0 %v240
        %2235 = vmatpush.msra.mxu0 %v237
        %2236 = vmatpush.msra.mxu0 %v234
        %2237 = vmatpush.msra.mxu0 %v231
        %2238 = vmatmul.f32.gmra.mxu0 %v1294
        %v2239 = vpop.f32.mrf.mxu0
        %v2240 = vadd.f32 0.0, %v2239
        %2241 = vdwg.mxu0
        %2242 = vmatpush.msra.mxu0 %v324
        %2243 = vmatpush.msra.mxu0 %v321
        %2244 = vmatpush.msra.mxu0 %v318
        %2245 = vmatpush.msra.mxu0 %v315
        %2246 = vmatpush.msra.mxu0 %v312
        %2247 = vmatpush.msra.mxu0 %v309
        %2248 = vmatpush.msra.mxu0 %v306
        %2249 = vmatpush.msra.mxu0 %v303
        %2250 = vmatpush.msra.mxu0 %v300
        %2251 = vmatpush.msra.mxu0 %v297
        %2252 = vmatpush.msra.mxu0 %v294
        %2253 = vmatpush.msra.mxu0 %v291
        %2254 = vmatpush.msra.mxu0 %v288
        %2255 = vmatpush.msra.mxu0 %v285
        %2256 = vmatpush.msra.mxu0 %v282
        %2257 = vmatpush.msra.mxu0 %v279
        %2258 = vmatmul.f32.gmra.mxu0 %v1295
        %v2259 = vpop.f32.mrf.mxu0
        %v2260 = vadd.f32 %v2240, %v2259
        %2261 = vdwg.mxu0
        %2262 = vmatpush.msra.mxu0 %v372
        %2263 = vmatpush.msra.mxu0 %v369
        %2264 = vmatpush.msra.mxu0 %v366
        %2265 = vmatpush.msra.mxu0 %v363
        %2266 = vmatpush.msra.mxu0 %v360
        %2267 = vmatpush.msra.mxu0 %v357
        %2268 = vmatpush.msra.mxu0 %v354
        %2269 = vmatpush.msra.mxu0 %v351
        %2270 = vmatpush.msra.mxu0 %v348
        %2271 = vmatpush.msra.mxu0 %v345
        %2272 = vmatpush.msra.mxu0 %v342
        %2273 = vmatpush.msra.mxu0 %v339
        %2274 = vmatpush.msra.mxu0 %v336
        %2275 = vmatpush.msra.mxu0 %v333
        %2276 = vmatpush.msra.mxu0 %v330
        %2277 = vmatpush.msra.mxu0 %v327
        %2278 = vmatmul.f32.gmra.mxu0 %v1296
        %v2279 = vpop.f32.mrf.mxu0
        %v2280 = vadd.f32 %v2260, %v2279
        %2281 = vdwg.mxu0
        %2282 = vmatpush.msra.mxu0 %v420
        %2283 = vmatpush.msra.mxu0 %v417
        %2284 = vmatpush.msra.mxu0 %v414
        %2285 = vmatpush.msra.mxu0 %v411
        %2286 = vmatpush.msra.mxu0 %v408
        %2287 = vmatpush.msra.mxu0 %v405
        %2288 = vmatpush.msra.mxu0 %v402
        %2289 = vmatpush.msra.mxu0 %v399
        %2290 = vmatpush.msra.mxu0 %v396
        %2291 = vmatpush.msra.mxu0 %v393
        %2292 = vmatpush.msra.mxu0 %v390
        %2293 = vmatpush.msra.mxu0 %v387
        %2294 = vmatpush.msra.mxu0 %v384
        %2295 = vmatpush.msra.mxu0 %v381
        %2296 = vmatpush.msra.mxu0 %v378
        %2297 = vmatpush.msra.mxu0 %v375
        %2298 = vmatmul.f32.gmra.mxu0 %v1297
        %v2299 = vpop.f32.mrf.mxu0
        %v2300 = vadd.f32 %v2280, %v2299
        %2301 = vdwg.mxu0
        %2302 = vmatpush.msra.mxu0 %v468
        %2303 = vmatpush.msra.mxu0 %v465
        %2304 = vmatpush.msra.mxu0 %v462
        %2305 = vmatpush.msra.mxu0 %v459
        %2306 = vmatpush.msra.mxu0 %v456
        %2307 = vmatpush.msra.mxu0 %v453
        %2308 = vmatpush.msra.mxu0 %v450
        %2309 = vmatpush.msra.mxu0 %v447
        %2310 = vmatpush.msra.mxu0 %v444
        %2311 = vmatpush.msra.mxu0 %v441
        %2312 = vmatpush.msra.mxu0 %v438
        %2313 = vmatpush.msra.mxu0 %v435
        %2314 = vmatpush.msra.mxu0 %v432
        %2315 = vmatpush.msra.mxu0 %v429
        %2316 = vmatpush.msra.mxu0 %v426
        %2317 = vmatpush.msra.mxu0 %v423
        %2318 = vmatmul.f32.gmra.mxu0 %v1298
        %v2319 = vpop.f32.mrf.mxu0
        %v2320 = vadd.f32 %v2300, %v2319
        %2321 = vdwg.mxu0
        %2322 = vmatpush.msra.mxu0 %v516
        %2323 = vmatpush.msra.mxu0 %v513
        %2324 = vmatpush.msra.mxu0 %v510
        %2325 = vmatpush.msra.mxu0 %v507
        %2326 = vmatpush.msra.mxu0 %v504
        %2327 = vmatpush.msra.mxu0 %v501
        %2328 = vmatpush.msra.mxu0 %v498
        %2329 = vmatpush.msra.mxu0 %v495
        %2330 = vmatpush.msra.mxu0 %v492
        %2331 = vmatpush.msra.mxu0 %v489
        %2332 = vmatpush.msra.mxu0 %v486
        %2333 = vmatpush.msra.mxu0 %v483
        %2334 = vmatpush.msra.mxu0 %v480
        %2335 = vmatpush.msra.mxu0 %v477
        %2336 = vmatpush.msra.mxu0 %v474
        %2337 = vmatpush.msra.mxu0 %v471
        %2338 = vmatmul.f32.gmra.mxu0 %v1299
        %v2339 = vpop.f32.mrf.mxu0
        %v2340 = vadd.f32 %v2320, %v2339
        %2341 = vdwg.mxu0
        %2342 = vmatpush.msra.mxu0 %v564
        %2343 = vmatpush.msra.mxu0 %v561
        %2344 = vmatpush.msra.mxu0 %v558
        %2345 = vmatpush.msra.mxu0 %v555
        %2346 = vmatpush.msra.mxu0 %v552
        %2347 = vmatpush.msra.mxu0 %v549
        %2348 = vmatpush.msra.mxu0 %v546
        %2349 = vmatpush.msra.mxu0 %v543
        %2350 = vmatpush.msra.mxu0 %v540
        %2351 = vmatpush.msra.mxu0 %v537
        %2352 = vmatpush.msra.mxu0 %v534
        %2353 = vmatpush.msra.mxu0 %v531
        %2354 = vmatpush.msra.mxu0 %v528
        %2355 = vmatpush.msra.mxu0 %v525
        %2356 = vmatpush.msra.mxu0 %v522
        %2357 = vmatpush.msra.mxu0 %v519
        %2358 = vmatmul.f32.gmra.mxu0 %v1300
        %v2359 = vpop.f32.mrf.mxu0
        %v2360 = vadd.f32 %v2340, %v2359
        %2361 = vdwg.mxu0
        %2362 = vmatpush.msra.mxu0 %v612
        %2363 = vmatpush.msra.mxu0 %v609
        %2364 = vmatpush.msra.mxu0 %v606
        %2365 = vmatpush.msra.mxu0 %v603
        %2366 = vmatpush.msra.mxu0 %v600
        %2367 = vmatpush.msra.mxu0 %v597
        %2368 = vmatpush.msra.mxu0 %v594
        %2369 = vmatpush.msra.mxu0 %v591
        %2370 = vmatpush.msra.mxu0 %v588
        %2371 = vmatpush.msra.mxu0 %v585
        %2372 = vmatpush.msra.mxu0 %v582
        %2373 = vmatpush.msra.mxu0 %v579
        %2374 = vmatpush.msra.mxu0 %v576
        %2375 = vmatpush.msra.mxu0 %v573
        %2376 = vmatpush.msra.mxu0 %v570
        %2377 = vmatpush.msra.mxu0 %v567
        %2378 = vmatmul.f32.gmra.mxu0 %v1301
        %v2379 = vpop.f32.mrf.mxu0
        %v2380 = vadd.f32 %v2360, %v2379
        %2381 = vdwg.mxu0
        %2382 = vmatpush.msra.mxu0 %v660
        %2383 = vmatpush.msra.mxu0 %v657
        %2384 = vmatpush.msra.mxu0 %v654
        %2385 = vmatpush.msra.mxu0 %v651
        %2386 = vmatpush.msra.mxu0 %v648
        %2387 = vmatpush.msra.mxu0 %v645
        %2388 = vmatpush.msra.mxu0 %v642
        %2389 = vmatpush.msra.mxu0 %v639
        %2390 = vmatpush.msra.mxu0 %v636
        %2391 = vmatpush.msra.mxu0 %v633
        %2392 = vmatpush.msra.mxu0 %v630
        %2393 = vmatpush.msra.mxu0 %v627
        %2394 = vmatpush.msra.mxu0 %v624
        %2395 = vmatpush.msra.mxu0 %v621
        %2396 = vmatpush.msra.mxu0 %v618
        %2397 = vmatpush.msra.mxu0 %v615
        %2398 = vmatmul.f32.gmra.mxu0 %v1304
        %v2399 = vpop.f32.mrf.mxu0
        %v2400 = vadd.f32 %v2380, %v2399
        %2401 = vdwg.mxu0
        %2402 = vmatpush.msra.mxu0 %v708
        %2403 = vmatpush.msra.mxu0 %v705
        %2404 = vmatpush.msra.mxu0 %v702
        %2405 = vmatpush.msra.mxu0 %v699
        %2406 = vmatpush.msra.mxu0 %v696
        %2407 = vmatpush.msra.mxu0 %v693
        %2408 = vmatpush.msra.mxu0 %v690
        %2409 = vmatpush.msra.mxu0 %v687
        %2410 = vmatpush.msra.mxu0 %v684
        %2411 = vmatpush.msra.mxu0 %v681
        %2412 = vmatpush.msra.mxu0 %v678
        %2413 = vmatpush.msra.mxu0 %v675
        %2414 = vmatpush.msra.mxu0 %v672
        %2415 = vmatpush.msra.mxu0 %v669
        %2416 = vmatpush.msra.mxu0 %v666
        %2417 = vmatpush.msra.mxu0 %v663
        %2418 = vmatmul.f32.gmra.mxu0 %v1305
        %v2419 = vpop.f32.mrf.mxu0
        %v2420 = vadd.f32 %v2400, %v2419
        %2421 = vdwg.mxu0
        %2422 = vmatpush.msra.mxu0 %v756
        %2423 = vmatpush.msra.mxu0 %v753
        %2424 = vmatpush.msra.mxu0 %v750
        %2425 = vmatpush.msra.mxu0 %v747
        %2426 = vmatpush.msra.mxu0 %v744
        %2427 = vmatpush.msra.mxu0 %v741
        %2428 = vmatpush.msra.mxu0 %v738
        %2429 = vmatpush.msra.mxu0 %v735
        %2430 = vmatpush.msra.mxu0 %v732
        %2431 = vmatpush.msra.mxu0 %v729
        %2432 = vmatpush.msra.mxu0 %v726
        %2433 = vmatpush.msra.mxu0 %v723
        %2434 = vmatpush.msra.mxu0 %v720
        %2435 = vmatpush.msra.mxu0 %v717
        %2436 = vmatpush.msra.mxu0 %v714
        %2437 = vmatpush.msra.mxu0 %v711
        %2438 = vmatmul.f32.gmra.mxu0 %v1306
        %v2439 = vpop.f32.mrf.mxu0
        %v2440 = vadd.f32 %v2420, %v2439
        %2441 = vdwg.mxu0
        %2442 = vmatpush.msra.mxu0 %v804
        %2443 = vmatpush.msra.mxu0 %v801
        %2444 = vmatpush.msra.mxu0 %v798
        %2445 = vmatpush.msra.mxu0 %v795
        %2446 = vmatpush.msra.mxu0 %v792
        %2447 = vmatpush.msra.mxu0 %v789
        %2448 = vmatpush.msra.mxu0 %v786
        %2449 = vmatpush.msra.mxu0 %v783
        %2450 = vmatpush.msra.mxu0 %v780
        %2451 = vmatpush.msra.mxu0 %v777
        %2452 = vmatpush.msra.mxu0 %v774
        %2453 = vmatpush.msra.mxu0 %v771
        %2454 = vmatpush.msra.mxu0 %v768
        %2455 = vmatpush.msra.mxu0 %v765
        %2456 = vmatpush.msra.mxu0 %v762
        %2457 = vmatpush.msra.mxu0 %v759
        %2458 = vmatmul.f32.gmra.mxu0 %v1307
        %v2459 = vpop.f32.mrf.mxu0
        %v2460 = vadd.f32 %v2440, %v2459
        %2461 = vdwg.mxu0
        %2462 = vmatpush.msra.mxu0 %v852
        %2463 = vmatpush.msra.mxu0 %v849
        %2464 = vmatpush.msra.mxu0 %v846
        %2465 = vmatpush.msra.mxu0 %v843
        %2466 = vmatpush.msra.mxu0 %v840
        %2467 = vmatpush.msra.mxu0 %v837
        %2468 = vmatpush.msra.mxu0 %v834
        %2469 = vmatpush.msra.mxu0 %v831
        %2470 = vmatpush.msra.mxu0 %v828
        %2471 = vmatpush.msra.mxu0 %v825
        %2472 = vmatpush.msra.mxu0 %v822
        %2473 = vmatpush.msra.mxu0 %v819
        %2474 = vmatpush.msra.mxu0 %v816
        %2475 = vmatpush.msra.mxu0 %v813
        %2476 = vmatpush.msra.mxu0 %v810
        %2477 = vmatpush.msra.mxu0 %v807
        %2478 = vmatmul.f32.gmra.mxu0 %v1308
        %v2479 = vpop.f32.mrf.mxu0
        %v2480 = vadd.f32 %v2460, %v2479
        %2481 = vdwg.mxu0
        %2482 = vmatpush.msra.mxu0 %v900
        %2483 = vmatpush.msra.mxu0 %v897
        %2484 = vmatpush.msra.mxu0 %v894
        %2485 = vmatpush.msra.mxu0 %v891
        %2486 = vmatpush.msra.mxu0 %v888
        %2487 = vmatpush.msra.mxu0 %v885
        %2488 = vmatpush.msra.mxu0 %v882
        %2489 = vmatpush.msra.mxu0 %v879
        %2490 = vmatpush.msra.mxu0 %v876
        %2491 = vmatpush.msra.mxu0 %v873
        %2492 = vmatpush.msra.mxu0 %v870
        %2493 = vmatpush.msra.mxu0 %v867
        %2494 = vmatpush.msra.mxu0 %v864
        %2495 = vmatpush.msra.mxu0 %v861
        %2496 = vmatpush.msra.mxu0 %v858
        %2497 = vmatpush.msra.mxu0 %v855
        %2498 = vmatmul.f32.gmra.mxu0 %v1309
        %v2499 = vpop.f32.mrf.mxu0
        %v2500 = vadd.f32 %v2480, %v2499
        %2501 = vdwg.mxu0
        %2502 = vmatpush.msra.mxu0 %v948
        %2503 = vmatpush.msra.mxu0 %v945
        %2504 = vmatpush.msra.mxu0 %v942
        %2505 = vmatpush.msra.mxu0 %v939
        %2506 = vmatpush.msra.mxu0 %v936
        %2507 = vmatpush.msra.mxu0 %v933
        %2508 = vmatpush.msra.mxu0 %v930
        %2509 = vmatpush.msra.mxu0 %v927
        %2510 = vmatpush.msra.mxu0 %v924
        %2511 = vmatpush.msra.mxu0 %v921
        %2512 = vmatpush.msra.mxu0 %v918
        %2513 = vmatpush.msra.mxu0 %v915
        %2514 = vmatpush.msra.mxu0 %v912
        %2515 = vmatpush.msra.mxu0 %v909
        %2516 = vmatpush.msra.mxu0 %v906
        %2517 = vmatpush.msra.mxu0 %v903
        %2518 = vmatmul.f32.gmra.mxu0 %v1310
        %v2519 = vpop.f32.mrf.mxu0
        %v2520 = vadd.f32 %v2500, %v2519
        %2521 = vdwg.mxu0
        %2522 = vmatpush.msra.mxu0 %v996
        %2523 = vmatpush.msra.mxu0 %v993
        %2524 = vmatpush.msra.mxu0 %v990
        %2525 = vmatpush.msra.mxu0 %v987
        %2526 = vmatpush.msra.mxu0 %v984
        %2527 = vmatpush.msra.mxu0 %v981
        %2528 = vmatpush.msra.mxu0 %v978
        %2529 = vmatpush.msra.mxu0 %v975
        %2530 = vmatpush.msra.mxu0 %v972
        %2531 = vmatpush.msra.mxu0 %v969
        %2532 = vmatpush.msra.mxu0 %v966
        %2533 = vmatpush.msra.mxu0 %v963
        %2534 = vmatpush.msra.mxu0 %v960
        %2535 = vmatpush.msra.mxu0 %v957
        %2536 = vmatpush.msra.mxu0 %v954
        %2537 = vmatpush.msra.mxu0 %v951
        %2538 = vmatmul.f32.gmra.mxu0 %v1311
        %v2539 = vpop.f32.mrf.mxu0
        %v2540 = vadd.f32 %v2520, %v2539
        %2541 = vdwg.mxu0
        %2542 = vmatpush.msra.mxu0 %v1044
        %2543 = vmatpush.msra.mxu0 %v1041
        %2544 = vmatpush.msra.mxu0 %v1038
        %2545 = vmatpush.msra.mxu0 %v1035
        %2546 = vmatpush.msra.mxu0 %v1032
        %2547 = vmatpush.msra.mxu0 %v1029
        %2548 = vmatpush.msra.mxu0 %v1026
        %2549 = vmatpush.msra.mxu0 %v1023
        %2550 = vmatpush.msra.mxu0 %v1020
        %2551 = vmatpush.msra.mxu0 %v1017
        %2552 = vmatpush.msra.mxu0 %v1014
        %2553 = vmatpush.msra.mxu0 %v1011
        %2554 = vmatpush.msra.mxu0 %v1008
        %2555 = vmatpush.msra.mxu0 %v1005
        %2556 = vmatpush.msra.mxu0 %v1002
        %2557 = vmatpush.msra.mxu0 %v999
        %2558 = vmatmul.f32.gmra.mxu0 %v1314
        %v2559 = vpop.f32.mrf.mxu0
        %v2560 = vadd.f32 %v2540, %v2559
        %2561 = vdwg.mxu0
        %2562 = vmatpush.msra.mxu0 %v1092
        %2563 = vmatpush.msra.mxu0 %v1089
        %2564 = vmatpush.msra.mxu0 %v1086
        %2565 = vmatpush.msra.mxu0 %v1083
        %2566 = vmatpush.msra.mxu0 %v1080
        %2567 = vmatpush.msra.mxu0 %v1077
        %2568 = vmatpush.msra.mxu0 %v1074
        %2569 = vmatpush.msra.mxu0 %v1071
        %2570 = vmatpush.msra.mxu0 %v1068
        %2571 = vmatpush.msra.mxu0 %v1065
        %2572 = vmatpush.msra.mxu0 %v1062
        %2573 = vmatpush.msra.mxu0 %v1059
        %2574 = vmatpush.msra.mxu0 %v1056
        %2575 = vmatpush.msra.mxu0 %v1053
        %2576 = vmatpush.msra.mxu0 %v1050
        %2577 = vmatpush.msra.mxu0 %v1047
        %2578 = vmatmul.f32.gmra.mxu0 %v1315
        %v2579 = vpop.f32.mrf.mxu0
        %v2580 = vadd.f32 %v2560, %v2579
        %2581 = vdwg.mxu0
        %2582 = vmatpush.msra.mxu0 %v1140
        %2583 = vmatpush.msra.mxu0 %v1137
        %2584 = vmatpush.msra.mxu0 %v1134
        %2585 = vmatpush.msra.mxu0 %v1131
        %2586 = vmatpush.msra.mxu0 %v1128
        %2587 = vmatpush.msra.mxu0 %v1125
        %2588 = vmatpush.msra.mxu0 %v1122
        %2589 = vmatpush.msra.mxu0 %v1119
        %2590 = vmatpush.msra.mxu0 %v1116
        %2591 = vmatpush.msra.mxu0 %v1113
        %2592 = vmatpush.msra.mxu0 %v1110
        %2593 = vmatpush.msra.mxu0 %v1107
        %2594 = vmatpush.msra.mxu0 %v1104
        %2595 = vmatpush.msra.mxu0 %v1101
        %2596 = vmatpush.msra.mxu0 %v1098
        %2597 = vmatpush.msra.mxu0 %v1095
        %2598 = vmatmul.f32.gmra.mxu0 %v1316
        %v2599 = vpop.f32.mrf.mxu0
        %v2600 = vadd.f32 %v2580, %v2599
        %2601 = vdwg.mxu0
        %2602 = vmatpush.msra.mxu0 %v1188
        %2603 = vmatpush.msra.mxu0 %v1185
        %2604 = vmatpush.msra.mxu0 %v1182
        %2605 = vmatpush.msra.mxu0 %v1179
        %2606 = vmatpush.msra.mxu0 %v1176
        %2607 = vmatpush.msra.mxu0 %v1173
        %2608 = vmatpush.msra.mxu0 %v1170
        %2609 = vmatpush.msra.mxu0 %v1167
        %2610 = vmatpush.msra.mxu0 %v1164
        %2611 = vmatpush.msra.mxu0 %v1161
        %2612 = vmatpush.msra.mxu0 %v1158
        %2613 = vmatpush.msra.mxu0 %v1155
        %2614 = vmatpush.msra.mxu0 %v1152
        %2615 = vmatpush.msra.mxu0 %v1149
        %2616 = vmatpush.msra.mxu0 %v1146
        %2617 = vmatpush.msra.mxu0 %v1143
        %2618 = vmatmul.f32.gmra.mxu0 %v1317
        %v2619 = vpop.f32.mrf.mxu0
        %v2620 = vadd.f32 %v2600, %v2619
        %2621 = vdwg.mxu0
        %2622 = vmatpush.msra.mxu0 %v1236
        %2623 = vmatpush.msra.mxu0 %v1233
        %2624 = vmatpush.msra.mxu0 %v1230
        %2625 = vmatpush.msra.mxu0 %v1227
        %2626 = vmatpush.msra.mxu0 %v1224
        %2627 = vmatpush.msra.mxu0 %v1221
        %2628 = vmatpush.msra.mxu0 %v1218
        %2629 = vmatpush.msra.mxu0 %v1215
        %2630 = vmatpush.msra.mxu0 %v1212
        %2631 = vmatpush.msra.mxu0 %v1209
        %2632 = vmatpush.msra.mxu0 %v1206
        %2633 = vmatpush.msra.mxu0 %v1203
        %2634 = vmatpush.msra.mxu0 %v1200
        %2635 = vmatpush.msra.mxu0 %v1197
        %2636 = vmatpush.msra.mxu0 %v1194
        %2637 = vmatpush.msra.mxu0 %v1191
        %2638 = vmatmul.f32.gmra.mxu0 %v1318
        %v2639 = vpop.f32.mrf.mxu0
        %v2640 = vadd.f32 %v2620, %v2639
        %2641 = vdwg.mxu0
        %2642 = vmatpush.msra.mxu0 %v1284
        %2643 = vmatpush.msra.mxu0 %v1281
        %2644 = vmatpush.msra.mxu0 %v1278
        %2645 = vmatpush.msra.mxu0 %v1275
        %2646 = vmatpush.msra.mxu0 %v1272
        %2647 = vmatpush.msra.mxu0 %v1269
        %2648 = vmatpush.msra.mxu0 %v1266
        %2649 = vmatpush.msra.mxu0 %v1263
        %2650 = vmatpush.msra.mxu0 %v1260
        %2651 = vmatpush.msra.mxu0 %v1257
        %2652 = vmatpush.msra.mxu0 %v1254
        %2653 = vmatpush.msra.mxu0 %v1251
        %2654 = vmatpush.msra.mxu0 %v1248
        %2655 = vmatpush.msra.mxu0 %v1245
        %2656 = vmatpush.msra.mxu0 %v1242
        %2657 = vmatpush.msra.mxu0 %v1239
        %2658 = vmatmul.f32.gmra.mxu0 %v1319
        %v2659 = vpop.f32.mrf.mxu0
        %v2660 = vadd.f32 %v2640, %v2659
        %2661 = vdwg.mxu0
        %v2665 = vrot.slane %v2220, 6
        %v2666 = vrot.slane %v2660, 4
        %vm2667 = vcmask 1041408
        %v2668 = vsel %vm2667, %v1780, %v2665
        %vm2669 = vcmask 1043456
        %v2670 = vsel %vm2669, %v2668, %v2666
        %v2672 = vadd.f32 %v222, %v2670
        %2673 = vst [vmem:[#allocation2] sm:$0x3f] %v2672
        %p2674 = scmp.eq.s32.totalorder %s18, 3
        // Predicated region
        $region45: #{conv_lstm_forward.6} parent=31 // pred_check
          %p2675 = pneg %p2674
        $region46: #{conv_lstm_forward.6} parent=31 // pred_check_branch
          %2677 = sbr.rel (%p2675) target = $region48
        $region47: #{conv_lstm_forward.6} parent=31 // pred_region
          %v2678 = vld [vmem:[#allocation2] sm:$0x3f]
          %v2679 = vld [vmem:[#allocation5] sm:$0x7]
          %v2681 = vperm.slane %v2679, 0
          %v2682 = vperm.slane %v2679, 1
          %v2683 = vperm.slane %v2679, 2
          %v2684 = vrot.slane %v2682, 6
          %v2685 = vrot.slane %v2683, 4
          %v2686 = vsel %vm2667, %v2681, %v2684
          %v2687 = vsel %vm2669, %v2686, %v2685
          %v2689 = vadd.f32 %v2678, %v2687
          %v2690 = vxor.u32 %v2689, 2147483648
          %v2691 = vmul.f32 %v2690, 1.442695
          %v2692 = vpow.pop %v2691
          %v2693 = vadd.f32 %v2692, 1.0
          %v2694 = vrcp.pop %v2693
          %v2695 = vmul.f32 %v2693, %v2694
          %v2696 = vsub.f32 1.0, %v2695
          %v2697 = vmul.f32 %v2694, %v2696
          %v2698 = vadd.f32 %v2694, %v2697
          %vm2699 = vweird.f32 %v2693
          %vm2700 = vweird.f32 %v2694
          %vm2701 = vmor %vm2699, %vm2700
          %v2702 = vsel %vm2701, %v2694, %v2698
          %v2703 = vand.u32 2147483647, %v2693
          %vm2704 = vcmp.eq.f32.partialorder %v2703, 8.507059e+37
          %v2705 = vand.u32 %v2693, 2147483648
          %v2706 = vor.u32 1.1754944e-38, %v2705
          %v2707 = vsel %vm2704, %v2706, %v2702
          %v2708 = vmul.f32 1.0, %v2707
          %v2710 = vrot.slane %v2689, 2
          %v2712 = vtanh.pop %v2710
          %v2713 = vmul.f32 %v2708, %v2712
          %v2714 = vrot.slane %v2689, 4
          %v2716 = vxor.u32 %v2714, 2147483648
          %v2717 = vmul.f32 %v2716, 1.442695
          %v2718 = vpow.pop %v2717
          %v2719 = vadd.f32 %v2718, 1.0
          %v2720 = vrcp.pop %v2719
          %v2721 = vmul.f32 %v2719, %v2720
          %v2722 = vsub.f32 1.0, %v2721
          %v2723 = vmul.f32 %v2720, %v2722
          %v2724 = vadd.f32 %v2720, %v2723
          %vm2725 = vweird.f32 %v2719
          %vm2726 = vweird.f32 %v2720
          %vm2727 = vmor %vm2725, %vm2726
          %v2728 = vsel %vm2727, %v2720, %v2724
          %v2729 = vand.u32 2147483647, %v2719
          %vm2730 = vcmp.eq.f32.partialorder %v2729, 8.507059e+37
          %v2731 = vand.u32 %v2719, 2147483648
          %v2732 = vor.u32 1.1754944e-38, %v2731
          %v2733 = vsel %vm2730, %v2732, %v2728
          %v2734 = vmul.f32 1.0, %v2733
          %v2735 = vtanh.pop %v2713
          %v2736 = vmul.f32 %v2734, %v2735
          %2737 = vst [vmem:[%s3] sm:$0x3] %v2736
        $region48: #{conv_lstm_forward.6} parent=31 // pred_fallthru
          _
        // Predicated region
        $region49: #{conv_lstm_forward.6} parent=31 // pred_check
          %p2738 = pneg %p104
        $region50: #{conv_lstm_forward.6} parent=31 // pred_check_branch
          %2740 = sbr.rel (%p2738) target = $region52
        $region51: #{conv_lstm_forward.6} parent=31 // pred_region
          _
        $region52: #{conv_lstm_forward.6} parent=31 // pred_fallthru
          _
        // Predicated region
        $region53: #{conv_lstm_forward.6} parent=31 // pred_check
          %p2741 = pneg %p104
        $region54: #{conv_lstm_forward.6} parent=31 // pred_check_branch
          %2743 = sbr.rel (%p2741) target = $region56
        $region55: #{conv_lstm_forward.6} parent=31 // pred_region
          _
        $region56: #{conv_lstm_forward.6} parent=31 // pred_fallthru
          _
      $region32: #{conv_lstm_forward.6} parent=5 // pred_fallthru
        _
      %p2744 = scmp.le.s32.totalorder 2, %s13
      // Predicated region
      $region57: #{conv_lstm_forward.6} parent=5 // pred_check
        %p2745 = pneg %p2744
      $region58: #{conv_lstm_forward.6} parent=5 // pred_check_branch
        %2747 = sbr.rel (%p2745) target = $region60
      $region59: #{conv_lstm_forward.6} parent=5 // pred_region
        %s2748 = ssub.s32 %s13, 2
      $region60: #{conv_lstm_forward.6} parent=5 // pred_fallthru
        _
    $region6: #{conv_lstm_forward.6} parent=1 // loop_footer
      %s17 = sadd.s32 1, %s13
    $region7: #{conv_lstm_forward.6} parent=1 // loop_footer_branch
      %12 = sbr.rel target = $region3
    $region8: #{conv_lstm_forward.6} parent=1 // loop_exit
      _
    %2749 = vsyncpa [#allocation4], 1
    %s2750 = scalar_lea.sflag [#allocation4], 1
    %2751 = vsyncpa %s2750, 1
    %2752 = vsyncpa [#allocation6], 1

</llo_original>
